<compile_context>
chip_gen: v6e
topology: v6e:2x2x1
jax: 0.10.0
libtpu: 0.0.40
codegen_flags: <defaults>
</compile_context>

<pallas_src>
import functools

import jax
import jax.numpy as jnp
from jax import lax
from jax.experimental import pallas as pl
from jax.experimental.pallas import tpu as pltpu

_SC_TOKENS = 196
_NEG_INF = -1e30


def _nt_dot(a, b):
    """a @ b.T on the MXU with f32 accumulation (contract last dims, no transpose op)."""
    return lax.dot_general(a, b, (((1,), (1,)), ((), ())),
                           preferred_element_type=jnp.float32)


def self_attention_kernel(x_ref, wqkv_ref, wp_ref, bp_ref, ksc_ref, vsc_ref, o_ref,
                          *, nhead, n_tok, n_sc, scale):
    """One grid step = a tile of whole batch elements, flattened to (T, C) rows.

    x_ref    : (T, C)        T = bt * n_tok rows of the *kept* tokens only
    wqkv_ref : (C, 3C)       fused qkv weight (single-buffered, constant block)
    wp_ref   : (C, C)        output projection weight
    bp_ref   : (1, C)        output projection bias
    ksc_ref  : (nsc_pad, C)  batch-invariant K of sc tokens, zero-padded to 256 rows
    vsc_ref  : (nsc_pad, C)  batch-invariant V of sc tokens, zero-padded to 256 rows
    o_ref    : (T, C)
    """
    t, c = x_ref.shape
    hd = c // nhead
    bt = t // n_tok
    nsc_pad = ksc_ref.shape[0]
    cdt = x_ref.dtype            # MXU operand dtype (bf16 inputs -> bf16 MXU rate)

    x = x_ref[...]
    # Fused QKV projection: one (T, C) @ (C, 3C) MXU matmul instead of three.
    qkv = jnp.dot(x, wqkv_ref[...], preferred_element_type=jnp.float32)
    q = (qkv[:, :c] * scale).astype(cdt)       # scale folded into (small) Q
    kx = qkv[:, c:2 * c].astype(cdt)
    vx = qkv[:, 2 * c:].astype(cdt)
    ksc = ksc_ref[...]
    vsc = vsc_ref[...]

    # Key-axis bias over [own-batch x keys ++ padded sc keys]: only the zero-padded sc
    # rows are masked out.  Tiny (1, K) build, no (T, T) iota-divide mask anywhere.
    key_col = lax.broadcasted_iota(jnp.int32, (1, n_tok + nsc_pad), 1)
    key_bias = jnp.where(key_col < n_tok + n_sc,
                         jnp.float32(0.0), jnp.float32(_NEG_INF))

    block_outs = []
    for b in range(bt):                        # static loop over batch sub-blocks:
        r0 = b * n_tok                         # no (bt-1)/bt wasted cross-batch scores
        qb = q[r0:r0 + n_tok, :]
        # Keys/values for this batch element: own x keys ++ (shared, padded) sc keys.
        kb = jnp.concatenate([kx[r0:r0 + n_tok, :], ksc], axis=0)   # (n_tok+nsc_pad, C)
        vb = jnp.concatenate([vx[r0:r0 + n_tok, :], vsc], axis=0)
        head_outs = []
        for h in range(nhead):
            lo = h * hd
            # One score matmul / max / exp / sum / PV matmul per head.
            s = _nt_dot(qb[:, lo:lo + hd], kb[:, lo:lo + hd]) + key_bias
            m = jnp.max(s, axis=-1, keepdims=True)
            p = jnp.exp(s - m)
            inv = pl.reciprocal(jnp.sum(p, axis=-1, keepdims=True), approx=True)
            head_outs.append(
                jnp.dot(p.astype(cdt), vb[:, lo:lo + hd],
                        preferred_element_type=jnp.float32) * inv)
        block_outs.append(jnp.concatenate(head_outs, axis=-1))       # (n_tok, C) f32
    merged = block_outs[0] if bt == 1 else jnp.concatenate(block_outs, axis=0)

    out = jnp.dot(merged.astype(cdt), wp_ref[...], preferred_element_type=jnp.float32)
    out = out + bp_ref[...].astype(jnp.float32)
    o_ref[...] = out.astype(o_ref.dtype)       # single lane-dense (T, C) store


def _vmem_capacity_bytes():
    """Generation-aware VMEM capacity (64 MiB/core on v7x, 128 MiB on v5e/v6e)."""
    try:
        return int(pltpu.get_tpu_info().vmem_capacity_bytes)
    except Exception:
        return 64 << 20   # conservative fallback, safe on every generation


def _pick_batch_tile(batch, n_tok, channels, itemsize, nsc_pad, vmem_bytes):
    """Largest legal batch tile that fits the device VMEM budget, preferring >= 2
    grid steps so v7x's two TensorCores both get work on the 'parallel' axis."""
    legal = [bt for bt in range(1, batch + 1)
             if batch % bt == 0 and (bt == batch or (bt * n_tok) % 8 == 0)]

    big_vmem = vmem_bytes >= (96 << 20)        # v5e/v6e (128 MiB) vs v7x (64 MiB)
    t_cap = 1024 if big_vmem else 512
    budget = vmem_bytes // 2                   # leave room for double buffers / spills

    def footprint(bt):
        t = bt * n_tok
        io = 2 * 2 * t * channels * itemsize                 # x + out, double-buffered
        qkv = t * 3 * channels * 4                           # f32 qkv temporary
        merged = t * channels * 4                            # f32 merged head outputs
        score = 2 * n_tok * (n_tok + nsc_pad) * 4            # score + exp temporaries
        kv = 2 * (n_tok + nsc_pad) * channels * itemsize     # per-sub-block K/V concat
        return io + qkv + merged + score + kv

    fitting = [bt for bt in legal if bt * n_tok <= t_cap and footprint(bt) <= budget]
    if not fitting:
        return min(legal)
    multi = [bt for bt in fitting if batch // bt >= 2]       # keep >= 2 parallel steps
    return max(multi) if multi else max(fitting)


def _attention_call(x2, wqkv3, wp, bp, ksc, vsc, *, nhead, n_tok, n_sc, scale,
                    t_rows, vmem_limit, single_buffer_consts):
    rows, C = x2.shape
    nsc_pad = ksc.shape[0]
    dt = x2.dtype
    const_kw = {"pipeline_mode": pl.Buffered(1)} if single_buffer_consts else {}

    def const_spec(shape):
        # Grid-invariant block: constant index_map (+ single-buffered when supported).
        return pl.BlockSpec(shape, lambda i: (0, 0), **const_kw)

    kernel = functools.partial(self_attention_kernel, nhead=nhead, n_tok=n_tok,
                               n_sc=n_sc, scale=scale)
    return pl.pallas_call(
        kernel,
        out_shape=jax.ShapeDtypeStruct((rows, C), dt),
        grid_spec=pltpu.PrefetchScalarGridSpec(
            num_scalar_prefetch=0,
            grid=(rows // t_rows,),
            in_specs=[
                pl.BlockSpec((t_rows, C), lambda i: (i, 0)),   # x rows of this tile
                const_spec((C, 3 * C)),                        # fused Wqkv
                const_spec((C, C)),                            # Wproj
                const_spec((1, C)),                            # bproj
                const_spec((nsc_pad, C)),                      # K(sc_token), padded
                const_spec((nsc_pad, C)),                      # V(sc_token), padded
            ],
            out_specs=pl.BlockSpec((t_rows, C), lambda i: (i, 0)),
        ),
        compiler_params=pltpu.CompilerParams(
            dimension_semantics=("parallel",),
            vmem_limit_bytes=vmem_limit,
        ),
    )(x2, wqkv3, wp, bp, ksc, vsc)


def self_attention(x, sc_token, wqkv, wproj, bproj, *, nhead, batch_tile=None):
    """x: (B, N, C); sc_token: (1, 196, C); wqkv: (C, 3C); wproj: (C, C); bproj: (1, C) or (C,).

    MXU operands run in x.dtype (pass bf16 for the fast path); accumulation/softmax are f32.
    For production shapes, C should be a multiple of 128 and head_dim >= 64 — otherwise
    the kernel is layout/mask-bound and the MXU-side tuning here does not pay off.
    """
    B, N, C = x.shape
    assert C % nhead == 0, "d_model must be divisible by nhead"
    dt = x.dtype
    hd = C // nhead
    scale = float(hd) ** -0.5

    wqkv3 = wqkv.astype(dt)                       # fused (C, 3C) weight block
    wp = wproj.astype(dt)
    bp = jnp.reshape(bproj, (1, C)).astype(dt)

    # Batch-invariant sc-token K/V: project once here (plain-JAX glue), never inside the
    # per-batch grid.  sc tokens are never used as queries (their rows are discarded by
    # the module's final [:, :N] slice), so no (B, N+196, C) concat is ever built.
    sc = jnp.reshape(sc_token, (-1, C)).astype(dt)
    n_sc = sc.shape[0]
    wk = wqkv[:, C:2 * C].astype(dt)
    wv = wqkv[:, 2 * C:].astype(dt)
    ksc = jnp.dot(sc, wk, preferred_element_type=jnp.float32).astype(dt)
    vsc = jnp.dot(sc, wv, preferred_element_type=jnp.float32).astype(dt)
    # Pad sc keys/values to a multiple of 128 rows (196 -> 256) so the key tiles of the
    # score / PV matmuls are lane-dense; padded columns get a -1e30 bias in-kernel.
    nsc_pad = ((n_sc + 127) // 128) * 128
    if nsc_pad != n_sc:
        pad = jnp.zeros((nsc_pad - n_sc, C), dt)
        ksc = jnp.concatenate([ksc, pad], axis=0)
        vsc = jnp.concatenate([vsc, pad], axis=0)

    # Flatten to (B*N, C): several batch elements per grid step, 2-D blocks everywhere.
    x2 = jnp.reshape(x, (B * N, C))
    itemsize = x2.dtype.itemsize
    vmem_cap = _vmem_capacity_bytes()
    bt = (batch_tile if batch_tile is not None
          else _pick_batch_tile(B, N, C, itemsize, nsc_pad, vmem_cap))
    assert B % bt == 0
    t_rows = bt * N

    # Explicit VMEM limit from the real footprint (scoped defaults are 16/32 MiB),
    # clamped to this generation's physical capacity.
    weight_bytes = (C * 3 * C + C * C + C + 2 * nsc_pad * C) * itemsize  # single-buffered
    io_bytes = 2 * 2 * t_rows * C * itemsize                             # x/out, 2x buffered
    temp_bytes = ((t_rows * 3 * C + t_rows * C + 2 * N * (N + nsc_pad)) * 4
                  + 2 * (N + nsc_pad) * C * itemsize)
    est = weight_bytes + io_bytes + temp_bytes
    vmem_limit = int(min(vmem_cap - (2 << 20), max(2 * est + (8 << 20), 32 << 20)))

    call_kwargs = dict(nhead=nhead, n_tok=N, n_sc=n_sc, scale=scale,
                       t_rows=t_rows, vmem_limit=vmem_limit)
    try:
        out2 = _attention_call(x2, wqkv3, wp, bp, ksc, vsc,
                               single_buffer_consts=True, **call_kwargs)
    except Exception:
        # Fallback if this jax build rejects pl.Buffered(1) on pallas_call BlockSpecs.
        out2 = _attention_call(x2, wqkv3, wp, bp, ksc, vsc,
                               single_buffer_consts=False, **call_kwargs)
    return jnp.reshape(out2, (B, N, C))


def ref_forward(x, sc_token, wqkv, wproj, bproj, nhead):
    """Pure-JAX reference mirroring the PyTorch forward exactly (f32)."""
    B, N, C = x.shape
    hd = C // nhead
    xc = jnp.concatenate(
        [x, jnp.broadcast_to(sc_token, (B, sc_token.shape[1], C))], axis=1)
    N1 = xc.shape[1]
    qkv = xc @ wqkv                                         # (B, N1, 3C)
    qkv = qkv.reshape(B, N1, 3, nhead, hd).transpose(2, 0, 3, 1, 4)
    q, k, v = qkv[0], qkv[1], qkv[2]                        # (B, h, N1, hd)
    attn = (q @ jnp.swapaxes(k, -1, -2)) * (hd ** -0.5)
    attn = jax.nn.softmax(attn, axis=-1)
    out = (attn @ v).transpose(0, 2, 1, 3).reshape(B, N1, C)
    out = out[:, :N, :]
    return out @ wproj + bproj.reshape(1, C)


if __name__ == "__main__":
    # NOTE: deliberately tiny demo config (unrepresentative of production: C < 128,
    # head_dim = 4); it exercises correctness of the kernel, not its MXU efficiency.
    B, N, C, nhead = 2, 8, 32, 8        # d_model=32 divisible by nhead=8

    key = jax.random.PRNGKey(0)
    k_x, k_sc, k_qkv, k_proj, k_bias = jax.random.split(key, 5)

    x = jax.random.normal(k_x, (B, N, C), jnp.float32)
    # trunc_normal_(std=0.02) equivalent (deterministic, synthetic init).
    sc_token = 0.02 * jax.random.truncated_normal(k_sc, -2.0, 2.0, (1, _SC_TOKENS, C),
                                                  jnp.float32)
    # Synthetic weights stored as (in, out) so x @ W matches torch's x @ W.T.
    wqkv = 0.05 * jax.random.normal(k_qkv, (C, 3 * C), jnp.float32)
    wproj = 0.05 * jax.random.normal(k_proj, (C, C), jnp.float32)
    bproj = 0.05 * jax.random.normal(k_bias, (1, C), jnp.float32)

    ref = ref_forward(x, sc_token, wqkv, wproj, bproj, nhead)

    # f32 path (approx reciprocal in the softmax loosens the tolerance slightly vs exact).
    out = jax.block_until_ready(
        self_attention(x, sc_token, wqkv, wproj, bproj, nhead=nhead))
    assert out.shape == (B, N, C)
    assert jnp.allclose(out, ref, atol=5e-3, rtol=5e-3), "Pallas f32 output != reference"

    # bf16 fast path: bf16 MXU operands, f32 accumulation + f32 softmax.
    out_bf16 = jax.block_until_ready(
        self_attention(x.astype(jnp.bfloat16), sc_token.astype(jnp.bfloat16),
                       wqkv.astype(jnp.bfloat16), wproj.astype(jnp.bfloat16),
                       bproj.astype(jnp.bfloat16), nhead=nhead))
    assert out_bf16.shape == (B, N, C)
    assert jnp.allclose(out_bf16.astype(jnp.float32), ref, atol=3e-2, rtol=3e-2), \
        "Pallas bf16 output != reference"

    print("KERNEL_OK")
</pallas_src>

<mosaic_0001>
module attributes {stable_mosaic.version = 11 : i64} {
  func.func @self_attention_kernel(%arg0: i32, %arg1: memref<8x32xf32, #tpu.memory_space<vmem>>, %arg2: memref<32x96xf32, #tpu.memory_space<vmem>>, %arg3: memref<32x32xf32, #tpu.memory_space<vmem>>, %arg4: memref<1x32xf32, #tpu.memory_space<vmem>>, %arg5: memref<256x32xf32, #tpu.memory_space<vmem>>, %arg6: memref<256x32xf32, #tpu.memory_space<vmem>>, %arg7: memref<8x32xf32, #tpu.memory_space<vmem>>) attributes {dimension_semantics = [#tpu.dimension_semantics<parallel>], iteration_bounds = array<i64: 2>, scalar_prefetch = 0 : i64, scratch_operands = 0 : i64, tpu.core_type = #tpu.core_type<tc>, window_params = [{transform_indices = @transform_0, window_bounds = array<i64: 8, 32>}, {pipeline_mode = #tpu.pipeline_mode<synchronous>, transform_indices = @transform_1, window_bounds = array<i64: 32, 96>}, {pipeline_mode = #tpu.pipeline_mode<synchronous>, transform_indices = @transform_2, window_bounds = array<i64: 32, 32>}, {pipeline_mode = #tpu.pipeline_mode<synchronous>, transform_indices = @transform_3, window_bounds = array<i64: 1, 32>}, {pipeline_mode = #tpu.pipeline_mode<synchronous>, transform_indices = @transform_4, window_bounds = array<i64: 256, 32>}, {pipeline_mode = #tpu.pipeline_mode<synchronous>, transform_indices = @transform_5, window_bounds = array<i64: 256, 32>}, {transform_indices = @transform_6, window_bounds = array<i64: 8, 32>}]} {
    %c0 = arith.constant 0 : index
    %c0_0 = arith.constant 0 : index
    %0 = vector.load %arg1[%c0, %c0_0] : memref<8x32xf32, #tpu.memory_space<vmem>>, vector<8x32xf32>
    %c0_1 = arith.constant 0 : index
    %c0_2 = arith.constant 0 : index
    %1 = vector.load %arg2[%c0_1, %c0_2] : memref<32x96xf32, #tpu.memory_space<vmem>>, vector<32x96xf32>
    %cst = arith.constant dense<0.000000e+00> : vector<8x96xf32>
    %2 = tpu.matmul %0, %1, %cst {dimension_numbers = #tpu.dot_dimension_numbers<[1], [0], [0], [1], [0, 0, 1, 1], [], []>} : vector<8x32xf32>, vector<32x96xf32>, vector<8x96xf32> -> vector<8x96xf32>
    %3 = vector.extract_strided_slice %2 {offsets = [0, 0], sizes = [8, 32], strides = [1, 1]} : vector<8x96xf32> to vector<8x32xf32>
    %cst_3 = arith.constant 5.000000e-01 : f32
    %4 = vector.broadcast %cst_3 : f32 to vector<8x32xf32>
    %5 = arith.mulf %3, %4 : vector<8x32xf32>
    %6 = vector.extract_strided_slice %2 {offsets = [0, 32], sizes = [8, 32], strides = [1, 1]} : vector<8x96xf32> to vector<8x32xf32>
    %7 = vector.extract_strided_slice %2 {offsets = [0, 64], sizes = [8, 32], strides = [1, 1]} : vector<8x96xf32> to vector<8x32xf32>
    %c0_4 = arith.constant 0 : index
    %c0_5 = arith.constant 0 : index
    %8 = vector.load %arg5[%c0_4, %c0_5] : memref<256x32xf32, #tpu.memory_space<vmem>>, vector<256x32xf32>
    %c0_6 = arith.constant 0 : index
    %c0_7 = arith.constant 0 : index
    %9 = vector.load %arg6[%c0_6, %c0_7] : memref<256x32xf32, #tpu.memory_space<vmem>>, vector<256x32xf32>
    %10 = tpu.iota {dimensions = array<i32: 1>} : vector<1x264xi32>
    %c204_i32 = arith.constant 204 : i32
    %11 = vector.broadcast %c204_i32 : i32 to vector<1x264xi32>
    %12 = arith.cmpi slt, %10, %11 : vector<1x264xi32>
    %cst_8 = arith.constant 0.000000e+00 : f32
    %cst_9 = arith.constant -1.000000e+30 : f32
    %13 = vector.broadcast %cst_8 : f32 to vector<1x264xf32>
    %14 = vector.broadcast %cst_9 : f32 to vector<1x264xf32>
    %15 = arith.select %12, %13, %14 : vector<1x264xi1>, vector<1x264xf32>
    %16 = tpu.concatenate %6, %8 in 0 : vector<8x32xf32>, vector<256x32xf32> -> vector<264x32xf32>
    %17 = tpu.concatenate %7, %9 in 0 : vector<8x32xf32>, vector<256x32xf32> -> vector<264x32xf32>
    %18 = vector.extract_strided_slice %5 {offsets = [0, 0], sizes = [8, 4], strides = [1, 1]} : vector<8x32xf32> to vector<8x4xf32>
    %19 = vector.extract_strided_slice %16 {offsets = [0, 0], sizes = [264, 4], strides = [1, 1]} : vector<264x32xf32> to vector<264x4xf32>
    %cst_10 = arith.constant dense<0.000000e+00> : vector<8x264xf32>
    %20 = tpu.matmul %18, %19, %cst_10 {dimension_numbers = #tpu.dot_dimension_numbers<[1], [1], [0], [0], [0, 0, 1, 0], [], []>} : vector<8x4xf32>, vector<264x4xf32>, vector<8x264xf32> -> vector<8x264xf32>
    %21 = vector.broadcast %15 : vector<1x264xf32> to vector<8x264xf32>
    %22 = arith.addf %20, %21 : vector<8x264xf32>
    %cst_11 = arith.constant dense<0xFF800000> : vector<8xf32>
    %23 = vector.multi_reduction <maximumf>, %22, %cst_11 [1] : vector<8x264xf32> to vector<8xf32>
    %24 = vector.shape_cast %23 : vector<8xf32> to vector<8x1xf32>
    %25 = vector.broadcast %24 : vector<8x1xf32> to vector<8x264xf32>
    %26 = arith.subf %22, %25 : vector<8x264xf32>
    %27 = math.exp %26 : vector<8x264xf32>
    %cst_12 = arith.constant dense<0.000000e+00> : vector<8xf32>
    %28 = vector.multi_reduction <add>, %27, %cst_12 [1] : vector<8x264xf32> to vector<8xf32>
    %29 = vector.shape_cast %28 : vector<8xf32> to vector<8x1xf32>
    %30 = tpu.reciprocal %29 {approx = true} : vector<8x1xf32> -> vector<8x1xf32>
    %31 = vector.extract_strided_slice %17 {offsets = [0, 0], sizes = [264, 4], strides = [1, 1]} : vector<264x32xf32> to vector<264x4xf32>
    %cst_13 = arith.constant dense<0.000000e+00> : vector<8x4xf32>
    %32 = tpu.matmul %27, %31, %cst_13 {dimension_numbers = #tpu.dot_dimension_numbers<[1], [0], [0], [1], [0, 0, 1, 1], [], []>} : vector<8x264xf32>, vector<264x4xf32>, vector<8x4xf32> -> vector<8x4xf32>
    %33 = vector.broadcast %30 : vector<8x1xf32> to vector<8x4xf32>
    %34 = arith.mulf %32, %33 : vector<8x4xf32>
    %35 = vector.extract_strided_slice %5 {offsets = [0, 4], sizes = [8, 4], strides = [1, 1]} : vector<8x32xf32> to vector<8x4xf32>
    %36 = vector.extract_strided_slice %16 {offsets = [0, 4], sizes = [264, 4], strides = [1, 1]} : vector<264x32xf32> to vector<264x4xf32>
    %cst_14 = arith.constant dense<0.000000e+00> : vector<8x264xf32>
    %37 = tpu.matmul %35, %36, %cst_14 {dimension_numbers = #tpu.dot_dimension_numbers<[1], [1], [0], [0], [0, 0, 1, 0], [], []>} : vector<8x4xf32>, vector<264x4xf32>, vector<8x264xf32> -> vector<8x264xf32>
    %38 = vector.broadcast %15 : vector<1x264xf32> to vector<8x264xf32>
    %39 = arith.addf %37, %38 : vector<8x264xf32>
    %cst_15 = arith.constant dense<0xFF800000> : vector<8xf32>
    %40 = vector.multi_reduction <maximumf>, %39, %cst_15 [1] : vector<8x264xf32> to vector<8xf32>
    %41 = vector.shape_cast %40 : vector<8xf32> to vector<8x1xf32>
    %42 = vector.broadcast %41 : vector<8x1xf32> to vector<8x264xf32>
    %43 = arith.subf %39, %42 : vector<8x264xf32>
    %44 = math.exp %43 : vector<8x264xf32>
    %cst_16 = arith.constant dense<0.000000e+00> : vector<8xf32>
    %45 = vector.multi_reduction <add>, %44, %cst_16 [1] : vector<8x264xf32> to vector<8xf32>
    %46 = vector.shape_cast %45 : vector<8xf32> to vector<8x1xf32>
    %47 = tpu.reciprocal %46 {approx = true} : vector<8x1xf32> -> vector<8x1xf32>
    %48 = vector.extract_strided_slice %17 {offsets = [0, 4], sizes = [264, 4], strides = [1, 1]} : vector<264x32xf32> to vector<264x4xf32>
    %cst_17 = arith.constant dense<0.000000e+00> : vector<8x4xf32>
    %49 = tpu.matmul %44, %48, %cst_17 {dimension_numbers = #tpu.dot_dimension_numbers<[1], [0], [0], [1], [0, 0, 1, 1], [], []>} : vector<8x264xf32>, vector<264x4xf32>, vector<8x4xf32> -> vector<8x4xf32>
    %50 = vector.broadcast %47 : vector<8x1xf32> to vector<8x4xf32>
    %51 = arith.mulf %49, %50 : vector<8x4xf32>
    %52 = vector.extract_strided_slice %5 {offsets = [0, 8], sizes = [8, 4], strides = [1, 1]} : vector<8x32xf32> to vector<8x4xf32>
    %53 = vector.extract_strided_slice %16 {offsets = [0, 8], sizes = [264, 4], strides = [1, 1]} : vector<264x32xf32> to vector<264x4xf32>
    %cst_18 = arith.constant dense<0.000000e+00> : vector<8x264xf32>
    %54 = tpu.matmul %52, %53, %cst_18 {dimension_numbers = #tpu.dot_dimension_numbers<[1], [1], [0], [0], [0, 0, 1, 0], [], []>} : vector<8x4xf32>, vector<264x4xf32>, vector<8x264xf32> -> vector<8x264xf32>
    %55 = vector.broadcast %15 : vector<1x264xf32> to vector<8x264xf32>
    %56 = arith.addf %54, %55 : vector<8x264xf32>
    %cst_19 = arith.constant dense<0xFF800000> : vector<8xf32>
    %57 = vector.multi_reduction <maximumf>, %56, %cst_19 [1] : vector<8x264xf32> to vector<8xf32>
    %58 = vector.shape_cast %57 : vector<8xf32> to vector<8x1xf32>
    %59 = vector.broadcast %58 : vector<8x1xf32> to vector<8x264xf32>
    %60 = arith.subf %56, %59 : vector<8x264xf32>
    %61 = math.exp %60 : vector<8x264xf32>
    %cst_20 = arith.constant dense<0.000000e+00> : vector<8xf32>
    %62 = vector.multi_reduction <add>, %61, %cst_20 [1] : vector<8x264xf32> to vector<8xf32>
    %63 = vector.shape_cast %62 : vector<8xf32> to vector<8x1xf32>
    %64 = tpu.reciprocal %63 {approx = true} : vector<8x1xf32> -> vector<8x1xf32>
    %65 = vector.extract_strided_slice %17 {offsets = [0, 8], sizes = [264, 4], strides = [1, 1]} : vector<264x32xf32> to vector<264x4xf32>
    %cst_21 = arith.constant dense<0.000000e+00> : vector<8x4xf32>
    %66 = tpu.matmul %61, %65, %cst_21 {dimension_numbers = #tpu.dot_dimension_numbers<[1], [0], [0], [1], [0, 0, 1, 1], [], []>} : vector<8x264xf32>, vector<264x4xf32>, vector<8x4xf32> -> vector<8x4xf32>
    %67 = vector.broadcast %64 : vector<8x1xf32> to vector<8x4xf32>
    %68 = arith.mulf %66, %67 : vector<8x4xf32>
    %69 = vector.extract_strided_slice %5 {offsets = [0, 12], sizes = [8, 4], strides = [1, 1]} : vector<8x32xf32> to vector<8x4xf32>
    %70 = vector.extract_strided_slice %16 {offsets = [0, 12], sizes = [264, 4], strides = [1, 1]} : vector<264x32xf32> to vector<264x4xf32>
    %cst_22 = arith.constant dense<0.000000e+00> : vector<8x264xf32>
    %71 = tpu.matmul %69, %70, %cst_22 {dimension_numbers = #tpu.dot_dimension_numbers<[1], [1], [0], [0], [0, 0, 1, 0], [], []>} : vector<8x4xf32>, vector<264x4xf32>, vector<8x264xf32> -> vector<8x264xf32>
    %72 = vector.broadcast %15 : vector<1x264xf32> to vector<8x264xf32>
    %73 = arith.addf %71, %72 : vector<8x264xf32>
    %cst_23 = arith.constant dense<0xFF800000> : vector<8xf32>
    %74 = vector.multi_reduction <maximumf>, %73, %cst_23 [1] : vector<8x264xf32> to vector<8xf32>
    %75 = vector.shape_cast %74 : vector<8xf32> to vector<8x1xf32>
    %76 = vector.broadcast %75 : vector<8x1xf32> to vector<8x264xf32>
    %77 = arith.subf %73, %76 : vector<8x264xf32>
    %78 = math.exp %77 : vector<8x264xf32>
    %cst_24 = arith.constant dense<0.000000e+00> : vector<8xf32>
    %79 = vector.multi_reduction <add>, %78, %cst_24 [1] : vector<8x264xf32> to vector<8xf32>
    %80 = vector.shape_cast %79 : vector<8xf32> to vector<8x1xf32>
    %81 = tpu.reciprocal %80 {approx = true} : vector<8x1xf32> -> vector<8x1xf32>
    %82 = vector.extract_strided_slice %17 {offsets = [0, 12], sizes = [264, 4], strides = [1, 1]} : vector<264x32xf32> to vector<264x4xf32>
    %cst_25 = arith.constant dense<0.000000e+00> : vector<8x4xf32>
    %83 = tpu.matmul %78, %82, %cst_25 {dimension_numbers = #tpu.dot_dimension_numbers<[1], [0], [0], [1], [0, 0, 1, 1], [], []>} : vector<8x264xf32>, vector<264x4xf32>, vector<8x4xf32> -> vector<8x4xf32>
    %84 = vector.broadcast %81 : vector<8x1xf32> to vector<8x4xf32>
    %85 = arith.mulf %83, %84 : vector<8x4xf32>
    %86 = vector.extract_strided_slice %5 {offsets = [0, 16], sizes = [8, 4], strides = [1, 1]} : vector<8x32xf32> to vector<8x4xf32>
    %87 = vector.extract_strided_slice %16 {offsets = [0, 16], sizes = [264, 4], strides = [1, 1]} : vector<264x32xf32> to vector<264x4xf32>
    %cst_26 = arith.constant dense<0.000000e+00> : vector<8x264xf32>
    %88 = tpu.matmul %86, %87, %cst_26 {dimension_numbers = #tpu.dot_dimension_numbers<[1], [1], [0], [0], [0, 0, 1, 0], [], []>} : vector<8x4xf32>, vector<264x4xf32>, vector<8x264xf32> -> vector<8x264xf32>
    %89 = vector.broadcast %15 : vector<1x264xf32> to vector<8x264xf32>
    %90 = arith.addf %88, %89 : vector<8x264xf32>
    %cst_27 = arith.constant dense<0xFF800000> : vector<8xf32>
    %91 = vector.multi_reduction <maximumf>, %90, %cst_27 [1] : vector<8x264xf32> to vector<8xf32>
    %92 = vector.shape_cast %91 : vector<8xf32> to vector<8x1xf32>
    %93 = vector.broadcast %92 : vector<8x1xf32> to vector<8x264xf32>
    %94 = arith.subf %90, %93 : vector<8x264xf32>
    %95 = math.exp %94 : vector<8x264xf32>
    %cst_28 = arith.constant dense<0.000000e+00> : vector<8xf32>
    %96 = vector.multi_reduction <add>, %95, %cst_28 [1] : vector<8x264xf32> to vector<8xf32>
    %97 = vector.shape_cast %96 : vector<8xf32> to vector<8x1xf32>
    %98 = tpu.reciprocal %97 {approx = true} : vector<8x1xf32> -> vector<8x1xf32>
    %99 = vector.extract_strided_slice %17 {offsets = [0, 16], sizes = [264, 4], strides = [1, 1]} : vector<264x32xf32> to vector<264x4xf32>
    %cst_29 = arith.constant dense<0.000000e+00> : vector<8x4xf32>
    %100 = tpu.matmul %95, %99, %cst_29 {dimension_numbers = #tpu.dot_dimension_numbers<[1], [0], [0], [1], [0, 0, 1, 1], [], []>} : vector<8x264xf32>, vector<264x4xf32>, vector<8x4xf32> -> vector<8x4xf32>
    %101 = vector.broadcast %98 : vector<8x1xf32> to vector<8x4xf32>
    %102 = arith.mulf %100, %101 : vector<8x4xf32>
    %103 = vector.extract_strided_slice %5 {offsets = [0, 20], sizes = [8, 4], strides = [1, 1]} : vector<8x32xf32> to vector<8x4xf32>
    %104 = vector.extract_strided_slice %16 {offsets = [0, 20], sizes = [264, 4], strides = [1, 1]} : vector<264x32xf32> to vector<264x4xf32>
    %cst_30 = arith.constant dense<0.000000e+00> : vector<8x264xf32>
    %105 = tpu.matmul %103, %104, %cst_30 {dimension_numbers = #tpu.dot_dimension_numbers<[1], [1], [0], [0], [0, 0, 1, 0], [], []>} : vector<8x4xf32>, vector<264x4xf32>, vector<8x264xf32> -> vector<8x264xf32>
    %106 = vector.broadcast %15 : vector<1x264xf32> to vector<8x264xf32>
    %107 = arith.addf %105, %106 : vector<8x264xf32>
    %cst_31 = arith.constant dense<0xFF800000> : vector<8xf32>
    %108 = vector.multi_reduction <maximumf>, %107, %cst_31 [1] : vector<8x264xf32> to vector<8xf32>
    %109 = vector.shape_cast %108 : vector<8xf32> to vector<8x1xf32>
    %110 = vector.broadcast %109 : vector<8x1xf32> to vector<8x264xf32>
    %111 = arith.subf %107, %110 : vector<8x264xf32>
    %112 = math.exp %111 : vector<8x264xf32>
    %cst_32 = arith.constant dense<0.000000e+00> : vector<8xf32>
    %113 = vector.multi_reduction <add>, %112, %cst_32 [1] : vector<8x264xf32> to vector<8xf32>
    %114 = vector.shape_cast %113 : vector<8xf32> to vector<8x1xf32>
    %115 = tpu.reciprocal %114 {approx = true} : vector<8x1xf32> -> vector<8x1xf32>
    %116 = vector.extract_strided_slice %17 {offsets = [0, 20], sizes = [264, 4], strides = [1, 1]} : vector<264x32xf32> to vector<264x4xf32>
    %cst_33 = arith.constant dense<0.000000e+00> : vector<8x4xf32>
    %117 = tpu.matmul %112, %116, %cst_33 {dimension_numbers = #tpu.dot_dimension_numbers<[1], [0], [0], [1], [0, 0, 1, 1], [], []>} : vector<8x264xf32>, vector<264x4xf32>, vector<8x4xf32> -> vector<8x4xf32>
    %118 = vector.broadcast %115 : vector<8x1xf32> to vector<8x4xf32>
    %119 = arith.mulf %117, %118 : vector<8x4xf32>
    %120 = vector.extract_strided_slice %5 {offsets = [0, 24], sizes = [8, 4], strides = [1, 1]} : vector<8x32xf32> to vector<8x4xf32>
    %121 = vector.extract_strided_slice %16 {offsets = [0, 24], sizes = [264, 4], strides = [1, 1]} : vector<264x32xf32> to vector<264x4xf32>
    %cst_34 = arith.constant dense<0.000000e+00> : vector<8x264xf32>
    %122 = tpu.matmul %120, %121, %cst_34 {dimension_numbers = #tpu.dot_dimension_numbers<[1], [1], [0], [0], [0, 0, 1, 0], [], []>} : vector<8x4xf32>, vector<264x4xf32>, vector<8x264xf32> -> vector<8x264xf32>
    %123 = vector.broadcast %15 : vector<1x264xf32> to vector<8x264xf32>
    %124 = arith.addf %122, %123 : vector<8x264xf32>
    %cst_35 = arith.constant dense<0xFF800000> : vector<8xf32>
    %125 = vector.multi_reduction <maximumf>, %124, %cst_35 [1] : vector<8x264xf32> to vector<8xf32>
    %126 = vector.shape_cast %125 : vector<8xf32> to vector<8x1xf32>
    %127 = vector.broadcast %126 : vector<8x1xf32> to vector<8x264xf32>
    %128 = arith.subf %124, %127 : vector<8x264xf32>
    %129 = math.exp %128 : vector<8x264xf32>
    %cst_36 = arith.constant dense<0.000000e+00> : vector<8xf32>
    %130 = vector.multi_reduction <add>, %129, %cst_36 [1] : vector<8x264xf32> to vector<8xf32>
    %131 = vector.shape_cast %130 : vector<8xf32> to vector<8x1xf32>
    %132 = tpu.reciprocal %131 {approx = true} : vector<8x1xf32> -> vector<8x1xf32>
    %133 = vector.extract_strided_slice %17 {offsets = [0, 24], sizes = [264, 4], strides = [1, 1]} : vector<264x32xf32> to vector<264x4xf32>
    %cst_37 = arith.constant dense<0.000000e+00> : vector<8x4xf32>
    %134 = tpu.matmul %129, %133, %cst_37 {dimension_numbers = #tpu.dot_dimension_numbers<[1], [0], [0], [1], [0, 0, 1, 1], [], []>} : vector<8x264xf32>, vector<264x4xf32>, vector<8x4xf32> -> vector<8x4xf32>
    %135 = vector.broadcast %132 : vector<8x1xf32> to vector<8x4xf32>
    %136 = arith.mulf %134, %135 : vector<8x4xf32>
    %137 = vector.extract_strided_slice %5 {offsets = [0, 28], sizes = [8, 4], strides = [1, 1]} : vector<8x32xf32> to vector<8x4xf32>
    %138 = vector.extract_strided_slice %16 {offsets = [0, 28], sizes = [264, 4], strides = [1, 1]} : vector<264x32xf32> to vector<264x4xf32>
    %cst_38 = arith.constant dense<0.000000e+00> : vector<8x264xf32>
    %139 = tpu.matmul %137, %138, %cst_38 {dimension_numbers = #tpu.dot_dimension_numbers<[1], [1], [0], [0], [0, 0, 1, 0], [], []>} : vector<8x4xf32>, vector<264x4xf32>, vector<8x264xf32> -> vector<8x264xf32>
    %140 = vector.broadcast %15 : vector<1x264xf32> to vector<8x264xf32>
    %141 = arith.addf %139, %140 : vector<8x264xf32>
    %cst_39 = arith.constant dense<0xFF800000> : vector<8xf32>
    %142 = vector.multi_reduction <maximumf>, %141, %cst_39 [1] : vector<8x264xf32> to vector<8xf32>
    %143 = vector.shape_cast %142 : vector<8xf32> to vector<8x1xf32>
    %144 = vector.broadcast %143 : vector<8x1xf32> to vector<8x264xf32>
    %145 = arith.subf %141, %144 : vector<8x264xf32>
    %146 = math.exp %145 : vector<8x264xf32>
    %cst_40 = arith.constant dense<0.000000e+00> : vector<8xf32>
    %147 = vector.multi_reduction <add>, %146, %cst_40 [1] : vector<8x264xf32> to vector<8xf32>
    %148 = vector.shape_cast %147 : vector<8xf32> to vector<8x1xf32>
    %149 = tpu.reciprocal %148 {approx = true} : vector<8x1xf32> -> vector<8x1xf32>
    %150 = vector.extract_strided_slice %17 {offsets = [0, 28], sizes = [264, 4], strides = [1, 1]} : vector<264x32xf32> to vector<264x4xf32>
    %cst_41 = arith.constant dense<0.000000e+00> : vector<8x4xf32>
    %151 = tpu.matmul %146, %150, %cst_41 {dimension_numbers = #tpu.dot_dimension_numbers<[1], [0], [0], [1], [0, 0, 1, 1], [], []>} : vector<8x264xf32>, vector<264x4xf32>, vector<8x4xf32> -> vector<8x4xf32>
    %152 = vector.broadcast %149 : vector<8x1xf32> to vector<8x4xf32>
    %153 = arith.mulf %151, %152 : vector<8x4xf32>
    %154 = tpu.concatenate %34, %51, %68, %85, %102, %119, %136, %153 in 1 : vector<8x4xf32>, vector<8x4xf32>, vector<8x4xf32>, vector<8x4xf32>, vector<8x4xf32>, vector<8x4xf32>, vector<8x4xf32>, vector<8x4xf32> -> vector<8x32xf32>
    %c0_42 = arith.constant 0 : index
    %c0_43 = arith.constant 0 : index
    %155 = vector.load %arg3[%c0_42, %c0_43] : memref<32x32xf32, #tpu.memory_space<vmem>>, vector<32x32xf32>
    %cst_44 = arith.constant dense<0.000000e+00> : vector<8x32xf32>
    %156 = tpu.matmul %154, %155, %cst_44 {dimension_numbers = #tpu.dot_dimension_numbers<[1], [0], [0], [1], [0, 0, 1, 1], [], []>} : vector<8x32xf32>, vector<32x32xf32>, vector<8x32xf32> -> vector<8x32xf32>
    %c0_45 = arith.constant 0 : index
    %c0_46 = arith.constant 0 : index
    %157 = vector.load %arg4[%c0_45, %c0_46] : memref<1x32xf32, #tpu.memory_space<vmem>>, vector<1x32xf32>
    %158 = vector.broadcast %157 : vector<1x32xf32> to vector<8x32xf32>
    %159 = arith.addf %156, %158 : vector<8x32xf32>
    %c0_47 = arith.constant 0 : index
    %c0_48 = arith.constant 0 : index
    %160 = vector.load %arg7[%c0_47, %c0_48] : memref<8x32xf32, #tpu.memory_space<vmem>>, vector<8x32xf32>
    tpu.vector_store %arg7[%c0_47, %c0_48], %159 {strides = array<i32>} : memref<8x32xf32, #tpu.memory_space<vmem>>, vector<8x32xf32>,
    return
  }
  func.func @transform_0(%arg0: i32) -> (i32, i32) {
    %c0_i32 = arith.constant 0 : i32
    %c0_i32_0 = arith.constant 0 : i32
    return %arg0, %c0_i32 : i32, i32
  }
  func.func @transform_1(%arg0: i32) -> (i32, i32) {
    %c0_i32 = arith.constant 0 : i32
    %c0_i32_0 = arith.constant 0 : i32
    %c0_i32_1 = arith.constant 0 : i32
    return %c0_i32, %c0_i32_0 : i32, i32
  }
  func.func @transform_2(%arg0: i32) -> (i32, i32) {
    %c0_i32 = arith.constant 0 : i32
    %c0_i32_0 = arith.constant 0 : i32
    %c0_i32_1 = arith.constant 0 : i32
    return %c0_i32, %c0_i32_0 : i32, i32
  }
  func.func @transform_3(%arg0: i32) -> (i32, i32) {
    %c0_i32 = arith.constant 0 : i32
    %c0_i32_0 = arith.constant 0 : i32
    %c0_i32_1 = arith.constant 0 : i32
    return %c0_i32, %c0_i32_0 : i32, i32
  }
  func.func @transform_4(%arg0: i32) -> (i32, i32) {
    %c0_i32 = arith.constant 0 : i32
    %c0_i32_0 = arith.constant 0 : i32
    %c0_i32_1 = arith.constant 0 : i32
    return %c0_i32, %c0_i32_0 : i32, i32
  }
  func.func @transform_5(%arg0: i32) -> (i32, i32) {
    %c0_i32 = arith.constant 0 : i32
    %c0_i32_0 = arith.constant 0 : i32
    %c0_i32_1 = arith.constant 0 : i32
    return %c0_i32, %c0_i32_0 : i32, i32
  }
  func.func @transform_6(%arg0: i32) -> (i32, i32) {
    %c0_i32 = arith.constant 0 : i32
    %c0_i32_0 = arith.constant 0 : i32
    return %arg0, %c0_i32 : i32, i32
  }
}

module attributes {stable_mosaic.version = 11 : i64} {
  func.func @self_attention_kernel(%arg0: i32, %arg1: memref<8x32xf32, #tpu.memory_space<vmem>>, %arg2: memref<32x96xf32, #tpu.memory_space<vmem>>, %arg3: memref<32x32xf32, #tpu.memory_space<vmem>>, %arg4: memref<1x32xf32, #tpu.memory_space<vmem>>, %arg5: memref<256x32xf32, #tpu.memory_space<vmem>>, %arg6: memref<256x32xf32, #tpu.memory_space<vmem>>, %arg7: memref<8x32xf32, #tpu.memory_space<vmem>>) attributes {dimension_semantics = [#tpu.dimension_semantics<parallel>], iteration_bounds = array<i64: 2>, scalar_prefetch = 0 : i64, scratch_operands = 0 : i64, tpu.core_type = #tpu.core_type<tc>, window_params = [{transform_indices = @transform_0, window_bounds = array<i64: 8, 32>}, {pipeline_mode = #tpu.pipeline_mode<synchronous>, transform_indices = @transform_1, window_bounds = array<i64: 32, 96>}, {pipeline_mode = #tpu.pipeline_mode<synchronous>, transform_indices = @transform_2, window_bounds = array<i64: 32, 32>}, {pipeline_mode = #tpu.pipeline_mode<synchronous>, transform_indices = @transform_3, window_bounds = array<i64: 1, 32>}, {pipeline_mode = #tpu.pipeline_mode<synchronous>, transform_indices = @transform_4, window_bounds = array<i64: 256, 32>}, {pipeline_mode = #tpu.pipeline_mode<synchronous>, transform_indices = @transform_5, window_bounds = array<i64: 256, 32>}, {transform_indices = @transform_6, window_bounds = array<i64: 8, 32>}]} {
    %c0 = arith.constant 0 : index
    %c0_0 = arith.constant 0 : index
    %0 = vector.load %arg1[%c0, %c0_0] : memref<8x32xf32, #tpu.memory_space<vmem>>, vector<8x32xf32>
    %c0_1 = arith.constant 0 : index
    %c0_2 = arith.constant 0 : index
    %1 = vector.load %arg2[%c0_1, %c0_2] : memref<32x96xf32, #tpu.memory_space<vmem>>, vector<32x96xf32>
    %cst = arith.constant dense<0.000000e+00> : vector<8x96xf32>
    %2 = tpu.matmul %0, %1, %cst {dimension_numbers = #tpu.dot_dimension_numbers<[1], [0], [0], [1], [0, 0, 1, 1], [], []>} : vector<8x32xf32>, vector<32x96xf32>, vector<8x96xf32> -> vector<8x96xf32>
    %3 = vector.extract_strided_slice %2 {offsets = [0, 0], sizes = [8, 32], strides = [1, 1]} : vector<8x96xf32> to vector<8x32xf32>
    %cst_3 = arith.constant 5.000000e-01 : f32
    %4 = vector.broadcast %cst_3 : f32 to vector<8x32xf32>
    %5 = arith.mulf %3, %4 : vector<8x32xf32>
    %6 = vector.extract_strided_slice %2 {offsets = [0, 32], sizes = [8, 32], strides = [1, 1]} : vector<8x96xf32> to vector<8x32xf32>
    %7 = vector.extract_strided_slice %2 {offsets = [0, 64], sizes = [8, 32], strides = [1, 1]} : vector<8x96xf32> to vector<8x32xf32>
    %c0_4 = arith.constant 0 : index
    %c0_5 = arith.constant 0 : index
    %8 = vector.load %arg5[%c0_4, %c0_5] : memref<256x32xf32, #tpu.memory_space<vmem>>, vector<256x32xf32>
    %c0_6 = arith.constant 0 : index
    %c0_7 = arith.constant 0 : index
    %9 = vector.load %arg6[%c0_6, %c0_7] : memref<256x32xf32, #tpu.memory_space<vmem>>, vector<256x32xf32>
    %10 = tpu.iota {dimensions = array<i32: 1>} : vector<1x264xi32>
    %c204_i32 = arith.constant 204 : i32
    %11 = vector.broadcast %c204_i32 : i32 to vector<1x264xi32>
    %12 = arith.cmpi slt, %10, %11 : vector<1x264xi32>
    %cst_8 = arith.constant 0.000000e+00 : f32
    %cst_9 = arith.constant -1.000000e+30 : f32
    %13 = vector.broadcast %cst_8 : f32 to vector<1x264xf32>
    %14 = vector.broadcast %cst_9 : f32 to vector<1x264xf32>
    %15 = arith.select %12, %13, %14 : vector<1x264xi1>, vector<1x264xf32>
    %16 = tpu.concatenate %6, %8 in 0 : vector<8x32xf32>, vector<256x32xf32> -> vector<264x32xf32>
    %17 = tpu.concatenate %7, %9 in 0 : vector<8x32xf32>, vector<256x32xf32> -> vector<264x32xf32>
    %18 = vector.extract_strided_slice %5 {offsets = [0, 0], sizes = [8, 4], strides = [1, 1]} : vector<8x32xf32> to vector<8x4xf32>
    %19 = vector.extract_strided_slice %16 {offsets = [0, 0], sizes = [264, 4], strides = [1, 1]} : vector<264x32xf32> to vector<264x4xf32>
    %cst_10 = arith.constant dense<0.000000e+00> : vector<8x264xf32>
    %20 = tpu.matmul %18, %19, %cst_10 {dimension_numbers = #tpu.dot_dimension_numbers<[1], [1], [0], [0], [0, 0, 1, 0], [], []>} : vector<8x4xf32>, vector<264x4xf32>, vector<8x264xf32> -> vector<8x264xf32>
    %21 = vector.broadcast %15 : vector<1x264xf32> to vector<8x264xf32>
    %22 = arith.addf %20, %21 : vector<8x264xf32>
    %cst_11 = arith.constant dense<0xFF800000> : vector<8xf32>
    %23 = vector.multi_reduction <maximumf>, %22, %cst_11 [1] : vector<8x264xf32> to vector<8xf32>
    %24 = vector.shape_cast %23 : vector<8xf32> to vector<8x1xf32>
    %25 = vector.broadcast %24 : vector<8x1xf32> to vector<8x264xf32>
    %26 = arith.subf %22, %25 : vector<8x264xf32>
    %27 = math.exp %26 : vector<8x264xf32>
    %cst_12 = arith.constant dense<0.000000e+00> : vector<8xf32>
    %28 = vector.multi_reduction <add>, %27, %cst_12 [1] : vector<8x264xf32> to vector<8xf32>
    %29 = vector.shape_cast %28 : vector<8xf32> to vector<8x1xf32>
    %30 = tpu.reciprocal %29 {approx = true} : vector<8x1xf32> -> vector<8x1xf32>
    %31 = vector.extract_strided_slice %17 {offsets = [0, 0], sizes = [264, 4], strides = [1, 1]} : vector<264x32xf32> to vector<264x4xf32>
    %cst_13 = arith.constant dense<0.000000e+00> : vector<8x4xf32>
    %32 = tpu.matmul %27, %31, %cst_13 {dimension_numbers = #tpu.dot_dimension_numbers<[1], [0], [0], [1], [0, 0, 1, 1], [], []>} : vector<8x264xf32>, vector<264x4xf32>, vector<8x4xf32> -> vector<8x4xf32>
    %33 = vector.broadcast %30 : vector<8x1xf32> to vector<8x4xf32>
    %34 = arith.mulf %32, %33 : vector<8x4xf32>
    %35 = vector.extract_strided_slice %5 {offsets = [0, 4], sizes = [8, 4], strides = [1, 1]} : vector<8x32xf32> to vector<8x4xf32>
    %36 = vector.extract_strided_slice %16 {offsets = [0, 4], sizes = [264, 4], strides = [1, 1]} : vector<264x32xf32> to vector<264x4xf32>
    %cst_14 = arith.constant dense<0.000000e+00> : vector<8x264xf32>
    %37 = tpu.matmul %35, %36, %cst_14 {dimension_numbers = #tpu.dot_dimension_numbers<[1], [1], [0], [0], [0, 0, 1, 0], [], []>} : vector<8x4xf32>, vector<264x4xf32>, vector<8x264xf32> -> vector<8x264xf32>
    %38 = vector.broadcast %15 : vector<1x264xf32> to vector<8x264xf32>
    %39 = arith.addf %37, %38 : vector<8x264xf32>
    %cst_15 = arith.constant dense<0xFF800000> : vector<8xf32>
    %40 = vector.multi_reduction <maximumf>, %39, %cst_15 [1] : vector<8x264xf32> to vector<8xf32>
    %41 = vector.shape_cast %40 : vector<8xf32> to vector<8x1xf32>
    %42 = vector.broadcast %41 : vector<8x1xf32> to vector<8x264xf32>
    %43 = arith.subf %39, %42 : vector<8x264xf32>
    %44 = math.exp %43 : vector<8x264xf32>
    %cst_16 = arith.constant dense<0.000000e+00> : vector<8xf32>
    %45 = vector.multi_reduction <add>, %44, %cst_16 [1] : vector<8x264xf32> to vector<8xf32>
    %46 = vector.shape_cast %45 : vector<8xf32> to vector<8x1xf32>
    %47 = tpu.reciprocal %46 {approx = true} : vector<8x1xf32> -> vector<8x1xf32>
    %48 = vector.extract_strided_slice %17 {offsets = [0, 4], sizes = [264, 4], strides = [1, 1]} : vector<264x32xf32> to vector<264x4xf32>
    %cst_17 = arith.constant dense<0.000000e+00> : vector<8x4xf32>
    %49 = tpu.matmul %44, %48, %cst_17 {dimension_numbers = #tpu.dot_dimension_numbers<[1], [0], [0], [1], [0, 0, 1, 1], [], []>} : vector<8x264xf32>, vector<264x4xf32>, vector<8x4xf32> -> vector<8x4xf32>
    %50 = vector.broadcast %47 : vector<8x1xf32> to vector<8x4xf32>
    %51 = arith.mulf %49, %50 : vector<8x4xf32>
    %52 = vector.extract_strided_slice %5 {offsets = [0, 8], sizes = [8, 4], strides = [1, 1]} : vector<8x32xf32> to vector<8x4xf32>
    %53 = vector.extract_strided_slice %16 {offsets = [0, 8], sizes = [264, 4], strides = [1, 1]} : vector<264x32xf32> to vector<264x4xf32>
    %cst_18 = arith.constant dense<0.000000e+00> : vector<8x264xf32>
    %54 = tpu.matmul %52, %53, %cst_18 {dimension_numbers = #tpu.dot_dimension_numbers<[1], [1], [0], [0], [0, 0, 1, 0], [], []>} : vector<8x4xf32>, vector<264x4xf32>, vector<8x264xf32> -> vector<8x264xf32>
    %55 = vector.broadcast %15 : vector<1x264xf32> to vector<8x264xf32>
    %56 = arith.addf %54, %55 : vector<8x264xf32>
    %cst_19 = arith.constant dense<0xFF800000> : vector<8xf32>
    %57 = vector.multi_reduction <maximumf>, %56, %cst_19 [1] : vector<8x264xf32> to vector<8xf32>
    %58 = vector.shape_cast %57 : vector<8xf32> to vector<8x1xf32>
    %59 = vector.broadcast %58 : vector<8x1xf32> to vector<8x264xf32>
    %60 = arith.subf %56, %59 : vector<8x264xf32>
    %61 = math.exp %60 : vector<8x264xf32>
    %cst_20 = arith.constant dense<0.000000e+00> : vector<8xf32>
    %62 = vector.multi_reduction <add>, %61, %cst_20 [1] : vector<8x264xf32> to vector<8xf32>
    %63 = vector.shape_cast %62 : vector<8xf32> to vector<8x1xf32>
    %64 = tpu.reciprocal %63 {approx = true} : vector<8x1xf32> -> vector<8x1xf32>
    %65 = vector.extract_strided_slice %17 {offsets = [0, 8], sizes = [264, 4], strides = [1, 1]} : vector<264x32xf32> to vector<264x4xf32>
    %cst_21 = arith.constant dense<0.000000e+00> : vector<8x4xf32>
    %66 = tpu.matmul %61, %65, %cst_21 {dimension_numbers = #tpu.dot_dimension_numbers<[1], [0], [0], [1], [0, 0, 1, 1], [], []>} : vector<8x264xf32>, vector<264x4xf32>, vector<8x4xf32> -> vector<8x4xf32>
    %67 = vector.broadcast %64 : vector<8x1xf32> to vector<8x4xf32>
    %68 = arith.mulf %66, %67 : vector<8x4xf32>
    %69 = vector.extract_strided_slice %5 {offsets = [0, 12], sizes = [8, 4], strides = [1, 1]} : vector<8x32xf32> to vector<8x4xf32>
    %70 = vector.extract_strided_slice %16 {offsets = [0, 12], sizes = [264, 4], strides = [1, 1]} : vector<264x32xf32> to vector<264x4xf32>
    %cst_22 = arith.constant dense<0.000000e+00> : vector<8x264xf32>
    %71 = tpu.matmul %69, %70, %cst_22 {dimension_numbers = #tpu.dot_dimension_numbers<[1], [1], [0], [0], [0, 0, 1, 0], [], []>} : vector<8x4xf32>, vector<264x4xf32>, vector<8x264xf32> -> vector<8x264xf32>
    %72 = vector.broadcast %15 : vector<1x264xf32> to vector<8x264xf32>
    %73 = arith.addf %71, %72 : vector<8x264xf32>
    %cst_23 = arith.constant dense<0xFF800000> : vector<8xf32>
    %74 = vector.multi_reduction <maximumf>, %73, %cst_23 [1] : vector<8x264xf32> to vector<8xf32>
    %75 = vector.shape_cast %74 : vector<8xf32> to vector<8x1xf32>
    %76 = vector.broadcast %75 : vector<8x1xf32> to vector<8x264xf32>
    %77 = arith.subf %73, %76 : vector<8x264xf32>
    %78 = math.exp %77 : vector<8x264xf32>
    %cst_24 = arith.constant dense<0.000000e+00> : vector<8xf32>
    %79 = vector.multi_reduction <add>, %78, %cst_24 [1] : vector<8x264xf32> to vector<8xf32>
    %80 = vector.shape_cast %79 : vector<8xf32> to vector<8x1xf32>
    %81 = tpu.reciprocal %80 {approx = true} : vector<8x1xf32> -> vector<8x1xf32>
    %82 = vector.extract_strided_slice %17 {offsets = [0, 12], sizes = [264, 4], strides = [1, 1]} : vector<264x32xf32> to vector<264x4xf32>
    %cst_25 = arith.constant dense<0.000000e+00> : vector<8x4xf32>
    %83 = tpu.matmul %78, %82, %cst_25 {dimension_numbers = #tpu.dot_dimension_numbers<[1], [0], [0], [1], [0, 0, 1, 1], [], []>} : vector<8x264xf32>, vector<264x4xf32>, vector<8x4xf32> -> vector<8x4xf32>
    %84 = vector.broadcast %81 : vector<8x1xf32> to vector<8x4xf32>
    %85 = arith.mulf %83, %84 : vector<8x4xf32>
    %86 = vector.extract_strided_slice %5 {offsets = [0, 16], sizes = [8, 4], strides = [1, 1]} : vector<8x32xf32> to vector<8x4xf32>
    %87 = vector.extract_strided_slice %16 {offsets = [0, 16], sizes = [264, 4], strides = [1, 1]} : vector<264x32xf32> to vector<264x4xf32>
    %cst_26 = arith.constant dense<0.000000e+00> : vector<8x264xf32>
    %88 = tpu.matmul %86, %87, %cst_26 {dimension_numbers = #tpu.dot_dimension_numbers<[1], [1], [0], [0], [0, 0, 1, 0], [], []>} : vector<8x4xf32>, vector<264x4xf32>, vector<8x264xf32> -> vector<8x264xf32>
    %89 = vector.broadcast %15 : vector<1x264xf32> to vector<8x264xf32>
    %90 = arith.addf %88, %89 : vector<8x264xf32>
    %cst_27 = arith.constant dense<0xFF800000> : vector<8xf32>
    %91 = vector.multi_reduction <maximumf>, %90, %cst_27 [1] : vector<8x264xf32> to vector<8xf32>
    %92 = vector.shape_cast %91 : vector<8xf32> to vector<8x1xf32>
    %93 = vector.broadcast %92 : vector<8x1xf32> to vector<8x264xf32>
    %94 = arith.subf %90, %93 : vector<8x264xf32>
    %95 = math.exp %94 : vector<8x264xf32>
    %cst_28 = arith.constant dense<0.000000e+00> : vector<8xf32>
    %96 = vector.multi_reduction <add>, %95, %cst_28 [1] : vector<8x264xf32> to vector<8xf32>
    %97 = vector.shape_cast %96 : vector<8xf32> to vector<8x1xf32>
    %98 = tpu.reciprocal %97 {approx = true} : vector<8x1xf32> -> vector<8x1xf32>
    %99 = vector.extract_strided_slice %17 {offsets = [0, 16], sizes = [264, 4], strides = [1, 1]} : vector<264x32xf32> to vector<264x4xf32>
    %cst_29 = arith.constant dense<0.000000e+00> : vector<8x4xf32>
    %100 = tpu.matmul %95, %99, %cst_29 {dimension_numbers = #tpu.dot_dimension_numbers<[1], [0], [0], [1], [0, 0, 1, 1], [], []>} : vector<8x264xf32>, vector<264x4xf32>, vector<8x4xf32> -> vector<8x4xf32>
    %101 = vector.broadcast %98 : vector<8x1xf32> to vector<8x4xf32>
    %102 = arith.mulf %100, %101 : vector<8x4xf32>
    %103 = vector.extract_strided_slice %5 {offsets = [0, 20], sizes = [8, 4], strides = [1, 1]} : vector<8x32xf32> to vector<8x4xf32>
    %104 = vector.extract_strided_slice %16 {offsets = [0, 20], sizes = [264, 4], strides = [1, 1]} : vector<264x32xf32> to vector<264x4xf32>
    %cst_30 = arith.constant dense<0.000000e+00> : vector<8x264xf32>
    %105 = tpu.matmul %103, %104, %cst_30 {dimension_numbers = #tpu.dot_dimension_numbers<[1], [1], [0], [0], [0, 0, 1, 0], [], []>} : vector<8x4xf32>, vector<264x4xf32>, vector<8x264xf32> -> vector<8x264xf32>
    %106 = vector.broadcast %15 : vector<1x264xf32> to vector<8x264xf32>
    %107 = arith.addf %105, %106 : vector<8x264xf32>
    %cst_31 = arith.constant dense<0xFF800000> : vector<8xf32>
    %108 = vector.multi_reduction <maximumf>, %107, %cst_31 [1] : vector<8x264xf32> to vector<8xf32>
    %109 = vector.shape_cast %108 : vector<8xf32> to vector<8x1xf32>
    %110 = vector.broadcast %109 : vector<8x1xf32> to vector<8x264xf32>
    %111 = arith.subf %107, %110 : vector<8x264xf32>
    %112 = math.exp %111 : vector<8x264xf32>
    %cst_32 = arith.constant dense<0.000000e+00> : vector<8xf32>
    %113 = vector.multi_reduction <add>, %112, %cst_32 [1] : vector<8x264xf32> to vector<8xf32>
    %114 = vector.shape_cast %113 : vector<8xf32> to vector<8x1xf32>
    %115 = tpu.reciprocal %114 {approx = true} : vector<8x1xf32> -> vector<8x1xf32>
    %116 = vector.extract_strided_slice %17 {offsets = [0, 20], sizes = [264, 4], strides = [1, 1]} : vector<264x32xf32> to vector<264x4xf32>
    %cst_33 = arith.constant dense<0.000000e+00> : vector<8x4xf32>
    %117 = tpu.matmul %112, %116, %cst_33 {dimension_numbers = #tpu.dot_dimension_numbers<[1], [0], [0], [1], [0, 0, 1, 1], [], []>} : vector<8x264xf32>, vector<264x4xf32>, vector<8x4xf32> -> vector<8x4xf32>
    %118 = vector.broadcast %115 : vector<8x1xf32> to vector<8x4xf32>
    %119 = arith.mulf %117, %118 : vector<8x4xf32>
    %120 = vector.extract_strided_slice %5 {offsets = [0, 24], sizes = [8, 4], strides = [1, 1]} : vector<8x32xf32> to vector<8x4xf32>
    %121 = vector.extract_strided_slice %16 {offsets = [0, 24], sizes = [264, 4], strides = [1, 1]} : vector<264x32xf32> to vector<264x4xf32>
    %cst_34 = arith.constant dense<0.000000e+00> : vector<8x264xf32>
    %122 = tpu.matmul %120, %121, %cst_34 {dimension_numbers = #tpu.dot_dimension_numbers<[1], [1], [0], [0], [0, 0, 1, 0], [], []>} : vector<8x4xf32>, vector<264x4xf32>, vector<8x264xf32> -> vector<8x264xf32>
    %123 = vector.broadcast %15 : vector<1x264xf32> to vector<8x264xf32>
    %124 = arith.addf %122, %123 : vector<8x264xf32>
    %cst_35 = arith.constant dense<0xFF800000> : vector<8xf32>
    %125 = vector.multi_reduction <maximumf>, %124, %cst_35 [1] : vector<8x264xf32> to vector<8xf32>
    %126 = vector.shape_cast %125 : vector<8xf32> to vector<8x1xf32>
    %127 = vector.broadcast %126 : vector<8x1xf32> to vector<8x264xf32>
    %128 = arith.subf %124, %127 : vector<8x264xf32>
    %129 = math.exp %128 : vector<8x264xf32>
    %cst_36 = arith.constant dense<0.000000e+00> : vector<8xf32>
    %130 = vector.multi_reduction <add>, %129, %cst_36 [1] : vector<8x264xf32> to vector<8xf32>
    %131 = vector.shape_cast %130 : vector<8xf32> to vector<8x1xf32>
    %132 = tpu.reciprocal %131 {approx = true} : vector<8x1xf32> -> vector<8x1xf32>
    %133 = vector.extract_strided_slice %17 {offsets = [0, 24], sizes = [264, 4], strides = [1, 1]} : vector<264x32xf32> to vector<264x4xf32>
    %cst_37 = arith.constant dense<0.000000e+00> : vector<8x4xf32>
    %134 = tpu.matmul %129, %133, %cst_37 {dimension_numbers = #tpu.dot_dimension_numbers<[1], [0], [0], [1], [0, 0, 1, 1], [], []>} : vector<8x264xf32>, vector<264x4xf32>, vector<8x4xf32> -> vector<8x4xf32>
    %135 = vector.broadcast %132 : vector<8x1xf32> to vector<8x4xf32>
    %136 = arith.mulf %134, %135 : vector<8x4xf32>
    %137 = vector.extract_strided_slice %5 {offsets = [0, 28], sizes = [8, 4], strides = [1, 1]} : vector<8x32xf32> to vector<8x4xf32>
    %138 = vector.extract_strided_slice %16 {offsets = [0, 28], sizes = [264, 4], strides = [1, 1]} : vector<264x32xf32> to vector<264x4xf32>
    %cst_38 = arith.constant dense<0.000000e+00> : vector<8x264xf32>
    %139 = tpu.matmul %137, %138, %cst_38 {dimension_numbers = #tpu.dot_dimension_numbers<[1], [1], [0], [0], [0, 0, 1, 0], [], []>} : vector<8x4xf32>, vector<264x4xf32>, vector<8x264xf32> -> vector<8x264xf32>
    %140 = vector.broadcast %15 : vector<1x264xf32> to vector<8x264xf32>
    %141 = arith.addf %139, %140 : vector<8x264xf32>
    %cst_39 = arith.constant dense<0xFF800000> : vector<8xf32>
    %142 = vector.multi_reduction <maximumf>, %141, %cst_39 [1] : vector<8x264xf32> to vector<8xf32>
    %143 = vector.shape_cast %142 : vector<8xf32> to vector<8x1xf32>
    %144 = vector.broadcast %143 : vector<8x1xf32> to vector<8x264xf32>
    %145 = arith.subf %141, %144 : vector<8x264xf32>
    %146 = math.exp %145 : vector<8x264xf32>
    %cst_40 = arith.constant dense<0.000000e+00> : vector<8xf32>
    %147 = vector.multi_reduction <add>, %146, %cst_40 [1] : vector<8x264xf32> to vector<8xf32>
    %148 = vector.shape_cast %147 : vector<8xf32> to vector<8x1xf32>
    %149 = tpu.reciprocal %148 {approx = true} : vector<8x1xf32> -> vector<8x1xf32>
    %150 = vector.extract_strided_slice %17 {offsets = [0, 28], sizes = [264, 4], strides = [1, 1]} : vector<264x32xf32> to vector<264x4xf32>
    %cst_41 = arith.constant dense<0.000000e+00> : vector<8x4xf32>
    %151 = tpu.matmul %146, %150, %cst_41 {dimension_numbers = #tpu.dot_dimension_numbers<[1], [0], [0], [1], [0, 0, 1, 1], [], []>} : vector<8x264xf32>, vector<264x4xf32>, vector<8x4xf32> -> vector<8x4xf32>
    %152 = vector.broadcast %149 : vector<8x1xf32> to vector<8x4xf32>
    %153 = arith.mulf %151, %152 : vector<8x4xf32>
    %154 = tpu.concatenate %34, %51, %68, %85, %102, %119, %136, %153 in 1 : vector<8x4xf32>, vector<8x4xf32>, vector<8x4xf32>, vector<8x4xf32>, vector<8x4xf32>, vector<8x4xf32>, vector<8x4xf32>, vector<8x4xf32> -> vector<8x32xf32>
    %c0_42 = arith.constant 0 : index
    %c0_43 = arith.constant 0 : index
    %155 = vector.load %arg3[%c0_42, %c0_43] : memref<32x32xf32, #tpu.memory_space<vmem>>, vector<32x32xf32>
    %cst_44 = arith.constant dense<0.000000e+00> : vector<8x32xf32>
    %156 = tpu.matmul %154, %155, %cst_44 {dimension_numbers = #tpu.dot_dimension_numbers<[1], [0], [0], [1], [0, 0, 1, 1], [], []>} : vector<8x32xf32>, vector<32x32xf32>, vector<8x32xf32> -> vector<8x32xf32>
    %c0_45 = arith.constant 0 : index
    %c0_46 = arith.constant 0 : index
    %157 = vector.load %arg4[%c0_45, %c0_46] : memref<1x32xf32, #tpu.memory_space<vmem>>, vector<1x32xf32>
    %158 = vector.broadcast %157 : vector<1x32xf32> to vector<8x32xf32>
    %159 = arith.addf %156, %158 : vector<8x32xf32>
    %c0_47 = arith.constant 0 : index
    %c0_48 = arith.constant 0 : index
    %160 = vector.load %arg7[%c0_47, %c0_48] : memref<8x32xf32, #tpu.memory_space<vmem>>, vector<8x32xf32>
    tpu.vector_store %arg7[%c0_47, %c0_48], %159 {strides = array<i32>} : memref<8x32xf32, #tpu.memory_space<vmem>>, vector<8x32xf32>,
    return
  }
  func.func @transform_0(%arg0: i32) -> (i32, i32) {
    %c0_i32 = arith.constant 0 : i32
    %c0_i32_0 = arith.constant 0 : i32
    return %arg0, %c0_i32 : i32, i32
  }
  func.func @transform_1(%arg0: i32) -> (i32, i32) {
    %c0_i32 = arith.constant 0 : i32
    %c0_i32_0 = arith.constant 0 : i32
    %c0_i32_1 = arith.constant 0 : i32
    return %c0_i32, %c0_i32_0 : i32, i32
  }
  func.func @transform_2(%arg0: i32) -> (i32, i32) {
    %c0_i32 = arith.constant 0 : i32
    %c0_i32_0 = arith.constant 0 : i32
    %c0_i32_1 = arith.constant 0 : i32
    return %c0_i32, %c0_i32_0 : i32, i32
  }
  func.func @transform_3(%arg0: i32) -> (i32, i32) {
    %c0_i32 = arith.constant 0 : i32
    %c0_i32_0 = arith.constant 0 : i32
    %c0_i32_1 = arith.constant 0 : i32
    return %c0_i32, %c0_i32_0 : i32, i32
  }
  func.func @transform_4(%arg0: i32) -> (i32, i32) {
    %c0_i32 = arith.constant 0 : i32
    %c0_i32_0 = arith.constant 0 : i32
    %c0_i32_1 = arith.constant 0 : i32
    return %c0_i32, %c0_i32_0 : i32, i32
  }
  func.func @transform_5(%arg0: i32) -> (i32, i32) {
    %c0_i32 = arith.constant 0 : i32
    %c0_i32_0 = arith.constant 0 : i32
    %c0_i32_1 = arith.constant 0 : i32
    return %c0_i32, %c0_i32_0 : i32, i32
  }
  func.func @transform_6(%arg0: i32) -> (i32, i32) {
    %c0_i32 = arith.constant 0 : i32
    %c0_i32_0 = arith.constant 0 : i32
    return %arg0, %c0_i32 : i32, i32
  }
}

</mosaic_0001>

<llo_original>
// kernel: tpu_custom_call.1
$region0: #{tpu_custom_call.1}
  #allocation0 [shape = 'u32[]', space=smem, size = 0x4, offset = 0x4, fixed_abs, tag = 'smem constant byte address 0x4 - core index']
  #allocation1 [shape = 'u32[144,128]{1,0:T(1,128)}', space=vmem, size = 0x12000, scoped, tag = 'internal scratch']
  %s0 = inlined_call_operand.vmem [shape: f32[16,32], index: 0, kind: input, shape index: {}]
  %s1 = inlined_call_operand.vmem [shape: f32[32,96], index: 1, kind: input, shape index: {}]
  %s2 = inlined_call_operand.vmem [shape: f32[32,32], index: 2, kind: input, shape index: {}]
  %s3 = inlined_call_operand.vmem [shape: f32[1,32], index: 3, kind: input, shape index: {}]
  %s4 = inlined_call_operand.vmem [shape: f32[256,32], index: 4, kind: input, shape index: {}]
  %s5 = inlined_call_operand.vmem [shape: f32[256,32], index: 5, kind: input, shape index: {}]
  %s6 = inlined_call_operand.hbm [shape: f32[16,32], index: 6, kind: output, shape index: {}]
  %s7 = sld [smem:[#allocation0]]
  $region57: #{tpu_custom_call.1} parent=0
    _
  %s9 = ssub.s32 1, %s7
  %s10 = scalar_select 0, %s9, %s7
  $region1: #{tpu_custom_call.1} parent=0
    #allocation2 [shape = 'u8[8192]{0}', space=vmem, size = 0x2000, scoped, tag = 'output window, operand 0']
    #allocation3 [shape = 's32[2]{0}', space=sflag, size = 0x8, scoped, tag = 'scoped memory for tpu_custom_call.1']
    %11 = vsyncpa [#allocation3], 0
    %s12 = scalar_lea.sflag [#allocation3], 1
    %13 = vsyncpa %s12, 0
    loop: start=0, step=1, limit=4
    $region2: #{tpu_custom_call.1} parent=1 // loop_pre_header
      _
    $region3: #{tpu_custom_call.1} parent=1 // loop_header
      %s15 = sphi 0, %s19
      %p16 = scmp.ge.s32.totalorder %s15, 4
      %s25 = sphi 0, %s27
      %s28 = sphi 0, %s25
      %s29 = sphi 0, %s28
      %s45 = sphi 0, %s29
      %s49 = sphi 0, %s49
      %s51 = sphi 0, %s49
      %s52 = sphi 0, %s51
      %s66 = sphi 0, %s52
      %s70 = sphi 0, %s70
      %s72 = sphi 0, %s70
      %s73 = sphi 0, %s72
      %s87 = sphi 0, %s73
      %s91 = sphi 0, %s91
      %s93 = sphi 0, %s91
      %s94 = sphi 0, %s93
      %s108 = sphi 0, %s94
      %s112 = sphi 0, %s112
      %s114 = sphi 0, %s112
      %s115 = sphi 0, %s114
      %s129 = sphi 0, %s115
      %s133 = sphi 0, %s133
      %s135 = sphi 0, %s133
      %s136 = sphi 0, %s135
      %s150 = sphi 0, %s136
      %s156 = sphi 0, %s158
      %s159 = sphi 0, %s156
      %s160 = sphi 0, %s159
      %s176 = sphi 0, %s160
    $region4: #{tpu_custom_call.1} parent=1 // loop_header_branch
      %18 = sbr.rel (%p16) target = $region8
    $region5: #{tpu_custom_call.1} parent=1 // loop_body
      %s20 = ssub.s32 %s15, 1
      %s21 = ssub.s32 %s15, 2
      %s22 = sadd.s32 %s15, 1
      %s23 = ssub.s32 %s15, %s22
      %p24 = scmp.eq.s32.totalorder %s23, 0
      %s26 = sadd.s32 %s25, 1
      %s27 = scalar_select %p24, %s25, %s26
      %p30 = pneg %p24
      %p31 = scmp.eq.s32.totalorder %s15, 1
      %p32 = por %p30, %p31
      %p33 = scmp.ne.s32.totalorder %s25, %s28
      %p34 = scmp.eq.s32.totalorder %s15, 0
      %p35 = por %p33, %p34
      %p36 = scmp.ne.s32.totalorder %s25, %s28
      %p37 = scmp.eq.s32.totalorder %s20, 1
      %p38 = por %p36, %p37
      %p39 = scmp.ne.s32.totalorder %s28, %s29
      %p40 = scmp.eq.s32.totalorder %s20, 0
      %p41 = por %p39, %p40
      %p42 = scmp.ne.s32.totalorder %s28, %s29
      %p43 = scmp.eq.s32.totalorder %s21, 1
      %p44 = por %p42, %p43
      %p46 = scmp.ne.s32.totalorder %s29, %s45
      %p47 = scmp.eq.s32.totalorder %s21, 0
      %p48 = por %p46, %p47
      %s50 = sadd.s32 %s49, 1
      %p53 = scmp.eq.s32.totalorder %s15, 1
      %p54 = scmp.ne.s32.totalorder %s49, %s51
      %p55 = scmp.eq.s32.totalorder %s15, 0
      %p56 = por %p54, %p55
      %p57 = scmp.ne.s32.totalorder %s49, %s51
      %p58 = scmp.eq.s32.totalorder %s20, 1
      %p59 = por %p57, %p58
      %p60 = scmp.ne.s32.totalorder %s51, %s52
      %p61 = scmp.eq.s32.totalorder %s20, 0
      %p62 = por %p60, %p61
      %p63 = scmp.ne.s32.totalorder %s51, %s52
      %p64 = scmp.eq.s32.totalorder %s21, 1
      %p65 = por %p63, %p64
      %p67 = scmp.ne.s32.totalorder %s52, %s66
      %p68 = scmp.eq.s32.totalorder %s21, 0
      %p69 = por %p67, %p68
      %s71 = sadd.s32 %s70, 1
      %p74 = scmp.eq.s32.totalorder %s15, 1
      %p75 = scmp.ne.s32.totalorder %s70, %s72
      %p76 = scmp.eq.s32.totalorder %s15, 0
      %p77 = por %p75, %p76
      %p78 = scmp.ne.s32.totalorder %s70, %s72
      %p79 = scmp.eq.s32.totalorder %s20, 1
      %p80 = por %p78, %p79
      %p81 = scmp.ne.s32.totalorder %s72, %s73
      %p82 = scmp.eq.s32.totalorder %s20, 0
      %p83 = por %p81, %p82
      %p84 = scmp.ne.s32.totalorder %s72, %s73
      %p85 = scmp.eq.s32.totalorder %s21, 1
      %p86 = por %p84, %p85
      %p88 = scmp.ne.s32.totalorder %s73, %s87
      %p89 = scmp.eq.s32.totalorder %s21, 0
      %p90 = por %p88, %p89
      %s92 = sadd.s32 %s91, 1
      %p95 = scmp.eq.s32.totalorder %s15, 1
      %p96 = scmp.ne.s32.totalorder %s91, %s93
      %p97 = scmp.eq.s32.totalorder %s15, 0
      %p98 = por %p96, %p97
      %p99 = scmp.ne.s32.totalorder %s91, %s93
      %p100 = scmp.eq.s32.totalorder %s20, 1
      %p101 = por %p99, %p100
      %p102 = scmp.ne.s32.totalorder %s93, %s94
      %p103 = scmp.eq.s32.totalorder %s20, 0
      %p104 = por %p102, %p103
      %p105 = scmp.ne.s32.totalorder %s93, %s94
      %p106 = scmp.eq.s32.totalorder %s21, 1
      %p107 = por %p105, %p106
      %p109 = scmp.ne.s32.totalorder %s94, %s108
      %p110 = scmp.eq.s32.totalorder %s21, 0
      %p111 = por %p109, %p110
      %s113 = sadd.s32 %s112, 1
      %p116 = scmp.eq.s32.totalorder %s15, 1
      %p117 = scmp.ne.s32.totalorder %s112, %s114
      %p118 = scmp.eq.s32.totalorder %s15, 0
      %p119 = por %p117, %p118
      %p120 = scmp.ne.s32.totalorder %s112, %s114
      %p121 = scmp.eq.s32.totalorder %s20, 1
      %p122 = por %p120, %p121
      %p123 = scmp.ne.s32.totalorder %s114, %s115
      %p124 = scmp.eq.s32.totalorder %s20, 0
      %p125 = por %p123, %p124
      %p126 = scmp.ne.s32.totalorder %s114, %s115
      %p127 = scmp.eq.s32.totalorder %s21, 1
      %p128 = por %p126, %p127
      %p130 = scmp.ne.s32.totalorder %s115, %s129
      %p131 = scmp.eq.s32.totalorder %s21, 0
      %p132 = por %p130, %p131
      %s134 = sadd.s32 %s133, 1
      %p137 = scmp.eq.s32.totalorder %s15, 1
      %p138 = scmp.ne.s32.totalorder %s133, %s135
      %p139 = scmp.eq.s32.totalorder %s15, 0
      %p140 = por %p138, %p139
      %p141 = scmp.ne.s32.totalorder %s133, %s135
      %p142 = scmp.eq.s32.totalorder %s20, 1
      %p143 = por %p141, %p142
      %p144 = scmp.ne.s32.totalorder %s135, %s136
      %p145 = scmp.eq.s32.totalorder %s20, 0
      %p146 = por %p144, %p145
      %p147 = scmp.ne.s32.totalorder %s135, %s136
      %p148 = scmp.eq.s32.totalorder %s21, 1
      %p149 = por %p147, %p148
      %p151 = scmp.ne.s32.totalorder %s136, %s150
      %p152 = scmp.eq.s32.totalorder %s21, 0
      %p153 = por %p151, %p152
      %s154 = ssub.s32 %s15, %s22
      %p155 = scmp.eq.s32.totalorder %s154, 0
      %s157 = sadd.s32 %s156, 1
      %s158 = scalar_select %p155, %s156, %s157
      %p161 = pneg %p155
      %p162 = scmp.eq.s32.totalorder %s15, 1
      %p163 = por %p161, %p162
      %p164 = scmp.ne.s32.totalorder %s156, %s159
      %p165 = scmp.eq.s32.totalorder %s15, 0
      %p166 = por %p164, %p165
      %p167 = scmp.ne.s32.totalorder %s156, %s159
      %p168 = scmp.eq.s32.totalorder %s20, 1
      %p169 = por %p167, %p168
      %p170 = scmp.ne.s32.totalorder %s159, %s160
      %p171 = scmp.eq.s32.totalorder %s20, 0
      %p172 = por %p170, %p171
      %p173 = scmp.ne.s32.totalorder %s159, %s160
      %p174 = scmp.eq.s32.totalorder %s21, 1
      %p175 = por %p173, %p174
      %p177 = scmp.ne.s32.totalorder %s160, %s176
      %p178 = scmp.eq.s32.totalorder %s21, 0
      %p179 = por %p177, %p178
      %p180 = scmp.le.s32.totalorder 1, %s15
      %p181 = scmp.lt.s32.totalorder %s15, 3
      %p182 = pnand %p180, %p181
      %p183 = pneg %p182
      // Predicated region
      $region9: #{tpu_custom_call.1} parent=5 // pred_check
        _
      $region10: #{tpu_custom_call.1} parent=5 // pred_check_branch
        %185 = sbr.rel (%p182) target = $region12
      $region11: #{tpu_custom_call.1} parent=5 // pred_region
        %s186 = ssub.s32 %s15, 1
        // Predicated region
        $region13: #{tpu_custom_call.1} parent=11 // pred_check
          %p187 = pneg %p62
        $region14: #{tpu_custom_call.1} parent=11 // pred_check_branch
          %189 = sbr.rel (%p187) target = $region16
        $region15: #{tpu_custom_call.1} parent=11 // pred_region
          _
        $region16: #{tpu_custom_call.1} parent=11 // pred_fallthru
          _
        // Predicated region
        $region17: #{tpu_custom_call.1} parent=11 // pred_check
          %p190 = pneg %p83
        $region18: #{tpu_custom_call.1} parent=11 // pred_check_branch
          %192 = sbr.rel (%p190) target = $region20
        $region19: #{tpu_custom_call.1} parent=11 // pred_region
          _
        $region20: #{tpu_custom_call.1} parent=11 // pred_fallthru
          _
        // Predicated region
        $region21: #{tpu_custom_call.1} parent=11 // pred_check
          %p193 = pneg %p104
        $region22: #{tpu_custom_call.1} parent=11 // pred_check_branch
          %195 = sbr.rel (%p193) target = $region24
        $region23: #{tpu_custom_call.1} parent=11 // pred_region
          _
        $region24: #{tpu_custom_call.1} parent=11 // pred_fallthru
          _
        // Predicated region
        $region25: #{tpu_custom_call.1} parent=11 // pred_check
          %p196 = pneg %p125
        $region26: #{tpu_custom_call.1} parent=11 // pred_check_branch
          %198 = sbr.rel (%p196) target = $region28
        $region27: #{tpu_custom_call.1} parent=11 // pred_region
          _
        $region28: #{tpu_custom_call.1} parent=11 // pred_fallthru
          _
        // Predicated region
        $region29: #{tpu_custom_call.1} parent=11 // pred_check
          %p199 = pneg %p146
        $region30: #{tpu_custom_call.1} parent=11 // pred_check_branch
          %201 = sbr.rel (%p199) target = $region32
        $region31: #{tpu_custom_call.1} parent=11 // pred_region
          _
        $region32: #{tpu_custom_call.1} parent=11 // pred_fallthru
          _
      $region12: #{tpu_custom_call.1} parent=5 // pred_fallthru
        _
      %p202 = scmp.lt.s32.totalorder %s15, 2
      // Predicated region
      $region33: #{tpu_custom_call.1} parent=5 // pred_check
        %p203 = pneg %p202
      $region34: #{tpu_custom_call.1} parent=5 // pred_check_branch
        %205 = sbr.rel (%p203) target = $region36
      $region35: #{tpu_custom_call.1} parent=5 // pred_region
        // Predicated region
        $region37: #{tpu_custom_call.1} parent=35 // pred_check
          %p206 = pneg %p35
        $region38: #{tpu_custom_call.1} parent=35 // pred_check_branch
          %208 = sbr.rel (%p206) target = $region40
        $region39: #{tpu_custom_call.1} parent=35 // pred_region
          %p209 = scmp.lt.s32.totalorder %s15, 1
          %s210 = scalar_select %p209, %s15, 1
          %s211 = smul.addr %s210, 8
          %s212 = scalar_lea.vmem %s0, %s211
        $region40: #{tpu_custom_call.1} parent=35 // pred_fallthru
          _
      $region36: #{tpu_custom_call.1} parent=5 // pred_fallthru
        _
      %p213 = scmp.le.s32.totalorder 1, %s15
      %p214 = scmp.lt.s32.totalorder %s15, 3
      %p215 = pnand %p213, %p214
      %p216 = pneg %p215
      // Predicated region
      $region41: #{tpu_custom_call.1} parent=5 // pred_check
        _
      $region42: #{tpu_custom_call.1} parent=5 // pred_check_branch
        %218 = sbr.rel (%p215) target = $region44
      $region43: #{tpu_custom_call.1} parent=5 // pred_region
        %s219 = ssub.s32 %s15, 1
        %p220 = scmp.lt.s32.totalorder %s20, 1
        %s221 = scalar_select %p220, %s20, 1
        %s222 = smul.addr %s221, 8
        %s223 = scalar_lea.vmem %s0, %s222
        %p224 = pneg %p41
        %p225 = pneg %p38
        %p226 = pneg %p62
        %p227 = pneg %p59
        %p228 = pneg %p83
        %p229 = pneg %p80
        %p230 = pneg %p104
        %p231 = pneg %p101
        %p232 = pneg %p125
        %p233 = pneg %p122
        %p234 = pneg %p146
        %p235 = pneg %p143
        %p236 = pneg %p172
        %p237 = pneg %p169
        %s238 = sand.u32 %s159, 1
        %s239 = scalar_lea.sflag [#allocation3], %s238
        %s240 = sand.u32 %s159, 1
        %s241 = smul.addr %s240, 8
        %s242 = scalar_lea.vmem [#allocation2], %s241
        %p243 = scmp.lt.s32.totalorder %s20, 1
        %s244 = scalar_select %p243, %s20, 1
        %s245 = smul.addr %s244, 8
        %s246 = scalar_lea.vmem %s0, %s245
        %v247 = vld [vmem:[%s246] sm:$0xff]
        %v248 = vld [vmem:[%s1] sm:$0xff]
        %v249 = vld [vmem:[%s1 + $0x8] sm:$0xff]
        %v250 = vld [vmem:[%s1 + $0x10] sm:$0xff]
        %v251 = vld [vmem:[%s1 + $0x18] sm:$0xff]
        %vm252 = vcmask 261120
        %v254 = vsel %vm252, %v247, 0
        %256 = vmatprep.subr.mxu0 0.0
        %257 = vmatpush1.msra.mxu0 0.0
        %258 = vmatprep.subr.mxu0 0.0
        %259 = vmatpush1.msra.mxu0 0.0
        %260 = vmatprep.subr.mxu0 0.0
        %261 = vmatpush1.msra.mxu0 0.0
        %262 = vmatprep.subr.mxu0 0.0
        %263 = vmatpush1.msra.mxu0 0.0
        %264 = vmatprep.subr.mxu0 0.0
        %265 = vmatpush1.msra.mxu0 0.0
        %266 = vmatprep.subr.mxu0 0.0
        %267 = vmatpush1.msra.mxu0 0.0
        %268 = vmatprep.subr.mxu0 0.0
        %269 = vmatpush1.msra.mxu0 0.0
        %270 = vmatprep.subr.mxu0 0.0
        %271 = vmatpush1.msra.mxu0 0.0
        %272 = vmatprep.subr.mxu0 0.0
        %273 = vmatpush1.msra.mxu0 0.0
        %274 = vmatprep.subr.mxu0 0.0
        %275 = vmatpush1.msra.mxu0 0.0
        %276 = vmatprep.subr.mxu0 0.0
        %277 = vmatpush1.msra.mxu0 0.0
        %278 = vmatprep.subr.mxu0 0.0
        %279 = vmatpush1.msra.mxu0 0.0
        %280 = vmatprep.subr.mxu0 0.0
        %281 = vmatpush1.msra.mxu0 %v251
        %282 = vmatprep.subr.mxu0 0.0
        %283 = vmatpush1.msra.mxu0 %v250
        %284 = vmatprep.subr.mxu0 0.0
        %285 = vmatpush1.msra.mxu0 %v249
        %286 = vmatprep.subr.mxu0 0.0
        %287 = vmatpush1.msra.mxu0 %v248
        %288 = vmatprep.subr.mxu0 0.0
        %289 = vmatpush2.msra.mxu0 0.0
        %290 = vmatprep.subr.mxu0 0.0
        %291 = vmatpush2.msra.mxu0 0.0
        %292 = vmatprep.subr.mxu0 0.0
        %293 = vmatpush2.msra.mxu0 0.0
        %294 = vmatprep.subr.mxu0 0.0
        %295 = vmatpush2.msra.mxu0 0.0
        %296 = vmatprep.subr.mxu0 0.0
        %297 = vmatpush2.msra.mxu0 0.0
        %298 = vmatprep.subr.mxu0 0.0
        %299 = vmatpush2.msra.mxu0 0.0
        %300 = vmatprep.subr.mxu0 0.0
        %301 = vmatpush2.msra.mxu0 0.0
        %302 = vmatprep.subr.mxu0 0.0
        %303 = vmatpush2.msra.mxu0 0.0
        %304 = vmatprep.subr.mxu0 0.0
        %305 = vmatpush2.msra.mxu0 0.0
        %306 = vmatprep.subr.mxu0 0.0
        %307 = vmatpush2.msra.mxu0 0.0
        %308 = vmatprep.subr.mxu0 0.0
        %309 = vmatpush2.msra.mxu0 0.0
        %310 = vmatprep.subr.mxu0 0.0
        %311 = vmatpush2.msra.mxu0 0.0
        %312 = vmatprep.subr.mxu0 0.0
        %313 = vmatpush2.msra.mxu0 0.0
        %314 = vmatprep.subr.mxu0 0.0
        %315 = vmatpush2.msra.mxu0 0.0
        %316 = vmatprep.subr.mxu0 0.0
        %317 = vmatpush2.msra.mxu0 0.0
        %318 = vmatprep.subr.mxu0 0.0
        %319 = vmatpush2.msra.mxu0 0.0
        %320 = vmatprep.mubr.f32.mxu0 0.0
        %321 = vmatmul.mubr.f32.gmra.mxu0 %v254
        %v322 = vpop.f32.mrf.mxu0
        %v323 = vadd.f32 0.0, %v322
        %v324 = vpop.f32.mrf.mxu0
        %325 = vdwg.mxu0
        %v326 = vmul.f32 %v323, 0.5
        %v327 = vld [vmem:[%s4] sm:$0xff]
        %v328 = vld [vmem:[%s4 + $0x8] sm:$0xff]
        %v329 = vld [vmem:[%s4 + $0x10] sm:$0xff]
        %v330 = vld [vmem:[%s4 + $0x18] sm:$0xff]
        %v331 = vld [vmem:[%s4 + $0x20] sm:$0xff]
        %v332 = vld [vmem:[%s4 + $0x28] sm:$0xff]
        %v333 = vld [vmem:[%s4 + $0x30] sm:$0xff]
        %v334 = vld [vmem:[%s4 + $0x38] sm:$0xff]
        %v335 = vld [vmem:[%s4 + $0x40] sm:$0xff]
        %v336 = vld [vmem:[%s4 + $0x48] sm:$0xff]
        %v337 = vld [vmem:[%s4 + $0x50] sm:$0xff]
        %v338 = vld [vmem:[%s4 + $0x58] sm:$0xff]
        %v339 = vld [vmem:[%s4 + $0x60] sm:$0xff]
        %v340 = vld [vmem:[%s4 + $0x68] sm:$0xff]
        %v341 = vld [vmem:[%s4 + $0x70] sm:$0xff]
        %v342 = vld [vmem:[%s4 + $0x78] sm:$0xff]
        %v343 = vld [vmem:[%s4 + $0x80] sm:$0xff]
        %v344 = vld [vmem:[%s4 + $0x88] sm:$0xff]
        %v345 = vld [vmem:[%s4 + $0x90] sm:$0xff]
        %v346 = vld [vmem:[%s4 + $0x98] sm:$0xff]
        %v347 = vld [vmem:[%s4 + $0xa0] sm:$0xff]
        %v348 = vld [vmem:[%s4 + $0xa8] sm:$0xff]
        %v349 = vld [vmem:[%s4 + $0xb0] sm:$0xff]
        %v350 = vld [vmem:[%s4 + $0xb8] sm:$0xff]
        %v351 = vld [vmem:[%s4 + $0xc0] sm:$0xff]
        %v352 = vld [vmem:[%s4 + $0xc8] sm:$0xff]
        %v353 = vld [vmem:[%s4 + $0xd0] sm:$0xff]
        %v354 = vld [vmem:[%s4 + $0xd8] sm:$0xff]
        %v355 = vld [vmem:[%s4 + $0xe0] sm:$0xff]
        %v356 = vld [vmem:[%s4 + $0xe8] sm:$0xff]
        %v357 = vld [vmem:[%s4 + $0xf0] sm:$0xff]
        %v358 = vld [vmem:[%s4 + $0xf8] sm:$0xff]
        %v359 = vld [vmem:[%s5] sm:$0xff]
        %v360 = vld [vmem:[%s5 + $0x8] sm:$0xff]
        %v361 = vld [vmem:[%s5 + $0x10] sm:$0xff]
        %v362 = vld [vmem:[%s5 + $0x18] sm:$0xff]
        %v363 = vld [vmem:[%s5 + $0x20] sm:$0xff]
        %v364 = vld [vmem:[%s5 + $0x28] sm:$0xff]
        %v365 = vld [vmem:[%s5 + $0x30] sm:$0xff]
        %v366 = vld [vmem:[%s5 + $0x38] sm:$0xff]
        %v367 = vld [vmem:[%s5 + $0x40] sm:$0xff]
        %v368 = vld [vmem:[%s5 + $0x48] sm:$0xff]
        %v369 = vld [vmem:[%s5 + $0x50] sm:$0xff]
        %v370 = vld [vmem:[%s5 + $0x58] sm:$0xff]
        %v371 = vld [vmem:[%s5 + $0x60] sm:$0xff]
        %v372 = vld [vmem:[%s5 + $0x68] sm:$0xff]
        %v373 = vld [vmem:[%s5 + $0x70] sm:$0xff]
        %v374 = vld [vmem:[%s5 + $0x78] sm:$0xff]
        %v375 = vld [vmem:[%s5 + $0x80] sm:$0xff]
        %v376 = vld [vmem:[%s5 + $0x88] sm:$0xff]
        %v377 = vld [vmem:[%s5 + $0x90] sm:$0xff]
        %v378 = vld [vmem:[%s5 + $0x98] sm:$0xff]
        %v379 = vld [vmem:[%s5 + $0xa0] sm:$0xff]
        %v380 = vld [vmem:[%s5 + $0xa8] sm:$0xff]
        %v381 = vld [vmem:[%s5 + $0xb0] sm:$0xff]
        %v382 = vld [vmem:[%s5 + $0xb8] sm:$0xff]
        %v383 = vld [vmem:[%s5 + $0xc0] sm:$0xff]
        %v384 = vld [vmem:[%s5 + $0xc8] sm:$0xff]
        %v385 = vld [vmem:[%s5 + $0xd0] sm:$0xff]
        %v386 = vld [vmem:[%s5 + $0xd8] sm:$0xff]
        %v387 = vld [vmem:[%s5 + $0xe0] sm:$0xff]
        %v388 = vld [vmem:[%s5 + $0xe8] sm:$0xff]
        %v389 = vld [vmem:[%s5 + $0xf0] sm:$0xff]
        %v390 = vld [vmem:[%s5 + $0xf8] sm:$0xff]
        %v391 = vlaneseq
        %v392 = vand.u32 %v391, 127
        %v393 = vadd.s32 %v392, 128
        %v394 = vadd.s32 %v392, 256
        %vm395 = vcmp.lt.s32.totalorder %v392, 204
        %vm396 = vcmp.lt.s32.totalorder %v393, 204
        %vm397 = vcmp.lt.s32.totalorder %v394, 204
        %v398 = vsel %vm395, 0.0, -1e+30
        %v399 = vsel %vm396, 0.0, -1e+30
        %v400 = vsel %vm397, 0.0, -1e+30
        %433 = vrot.lane.b32.xlu0 %v327, 32
        %v434 = vpop.permute.xlu0 %433
        %435 = vrot.lane.b32.xlu0 %v328, 32
        %v436 = vpop.permute.xlu0 %435
        %437 = vrot.lane.b32.xlu0 %v329, 32
        %v438 = vpop.permute.xlu0 %437
        %439 = vrot.lane.b32.xlu0 %v330, 32
        %v440 = vpop.permute.xlu0 %439
        %441 = vrot.lane.b32.xlu0 %v331, 32
        %v442 = vpop.permute.xlu0 %441
        %443 = vrot.lane.b32.xlu0 %v332, 32
        %v444 = vpop.permute.xlu0 %443
        %445 = vrot.lane.b32.xlu0 %v333, 32
        %v446 = vpop.permute.xlu0 %445
        %447 = vrot.lane.b32.xlu0 %v334, 32
        %v448 = vpop.permute.xlu0 %447
        %449 = vrot.lane.b32.xlu0 %v335, 32
        %v450 = vpop.permute.xlu0 %449
        %451 = vrot.lane.b32.xlu0 %v336, 32
        %v452 = vpop.permute.xlu0 %451
        %453 = vrot.lane.b32.xlu0 %v337, 32
        %v454 = vpop.permute.xlu0 %453
        %455 = vrot.lane.b32.xlu0 %v338, 32
        %v456 = vpop.permute.xlu0 %455
        %457 = vrot.lane.b32.xlu0 %v339, 32
        %v458 = vpop.permute.xlu0 %457
        %459 = vrot.lane.b32.xlu0 %v340, 32
        %v460 = vpop.permute.xlu0 %459
        %461 = vrot.lane.b32.xlu0 %v341, 32
        %v462 = vpop.permute.xlu0 %461
        %463 = vrot.lane.b32.xlu0 %v342, 32
        %v464 = vpop.permute.xlu0 %463
        %465 = vrot.lane.b32.xlu0 %v343, 32
        %v466 = vpop.permute.xlu0 %465
        %467 = vrot.lane.b32.xlu0 %v344, 32
        %v468 = vpop.permute.xlu0 %467
        %469 = vrot.lane.b32.xlu0 %v345, 32
        %v470 = vpop.permute.xlu0 %469
        %471 = vrot.lane.b32.xlu0 %v346, 32
        %v472 = vpop.permute.xlu0 %471
        %473 = vrot.lane.b32.xlu0 %v347, 32
        %v474 = vpop.permute.xlu0 %473
        %475 = vrot.lane.b32.xlu0 %v348, 32
        %v476 = vpop.permute.xlu0 %475
        %477 = vrot.lane.b32.xlu0 %v349, 32
        %v478 = vpop.permute.xlu0 %477
        %479 = vrot.lane.b32.xlu0 %v350, 32
        %v480 = vpop.permute.xlu0 %479
        %481 = vrot.lane.b32.xlu0 %v351, 32
        %v482 = vpop.permute.xlu0 %481
        %483 = vrot.lane.b32.xlu0 %v352, 32
        %v484 = vpop.permute.xlu0 %483
        %485 = vrot.lane.b32.xlu0 %v353, 32
        %v486 = vpop.permute.xlu0 %485
        %487 = vrot.lane.b32.xlu0 %v354, 32
        %v488 = vpop.permute.xlu0 %487
        %489 = vrot.lane.b32.xlu0 %v355, 32
        %v490 = vpop.permute.xlu0 %489
        %491 = vrot.lane.b32.xlu0 %v356, 32
        %v492 = vpop.permute.xlu0 %491
        %493 = vrot.lane.b32.xlu0 %v357, 32
        %v494 = vpop.permute.xlu0 %493
        %495 = vrot.lane.b32.xlu0 %v358, 32
        %v496 = vpop.permute.xlu0 %495
        %529 = vrot.lane.b32.xlu0 %v359, 64
        %v530 = vpop.permute.xlu0 %529
        %531 = vrot.lane.b32.xlu0 %v360, 64
        %v532 = vpop.permute.xlu0 %531
        %533 = vrot.lane.b32.xlu0 %v361, 64
        %v534 = vpop.permute.xlu0 %533
        %535 = vrot.lane.b32.xlu0 %v362, 64
        %v536 = vpop.permute.xlu0 %535
        %537 = vrot.lane.b32.xlu0 %v363, 64
        %v538 = vpop.permute.xlu0 %537
        %539 = vrot.lane.b32.xlu0 %v364, 64
        %v540 = vpop.permute.xlu0 %539
        %541 = vrot.lane.b32.xlu0 %v365, 64
        %v542 = vpop.permute.xlu0 %541
        %543 = vrot.lane.b32.xlu0 %v366, 64
        %v544 = vpop.permute.xlu0 %543
        %545 = vrot.lane.b32.xlu0 %v367, 64
        %v546 = vpop.permute.xlu0 %545
        %547 = vrot.lane.b32.xlu0 %v368, 64
        %v548 = vpop.permute.xlu0 %547
        %549 = vrot.lane.b32.xlu0 %v369, 64
        %v550 = vpop.permute.xlu0 %549
        %551 = vrot.lane.b32.xlu0 %v370, 64
        %v552 = vpop.permute.xlu0 %551
        %553 = vrot.lane.b32.xlu0 %v371, 64
        %v554 = vpop.permute.xlu0 %553
        %555 = vrot.lane.b32.xlu0 %v372, 64
        %v556 = vpop.permute.xlu0 %555
        %557 = vrot.lane.b32.xlu0 %v373, 64
        %v558 = vpop.permute.xlu0 %557
        %559 = vrot.lane.b32.xlu0 %v374, 64
        %v560 = vpop.permute.xlu0 %559
        %561 = vrot.lane.b32.xlu0 %v375, 64
        %v562 = vpop.permute.xlu0 %561
        %563 = vrot.lane.b32.xlu0 %v376, 64
        %v564 = vpop.permute.xlu0 %563
        %565 = vrot.lane.b32.xlu0 %v377, 64
        %v566 = vpop.permute.xlu0 %565
        %567 = vrot.lane.b32.xlu0 %v378, 64
        %v568 = vpop.permute.xlu0 %567
        %569 = vrot.lane.b32.xlu0 %v379, 64
        %v570 = vpop.permute.xlu0 %569
        %571 = vrot.lane.b32.xlu0 %v380, 64
        %v572 = vpop.permute.xlu0 %571
        %573 = vrot.lane.b32.xlu0 %v381, 64
        %v574 = vpop.permute.xlu0 %573
        %575 = vrot.lane.b32.xlu0 %v382, 64
        %v576 = vpop.permute.xlu0 %575
        %577 = vrot.lane.b32.xlu0 %v383, 64
        %v578 = vpop.permute.xlu0 %577
        %579 = vrot.lane.b32.xlu0 %v384, 64
        %v580 = vpop.permute.xlu0 %579
        %581 = vrot.lane.b32.xlu0 %v385, 64
        %v582 = vpop.permute.xlu0 %581
        %583 = vrot.lane.b32.xlu0 %v386, 64
        %v584 = vpop.permute.xlu0 %583
        %585 = vrot.lane.b32.xlu0 %v387, 64
        %v586 = vpop.permute.xlu0 %585
        %587 = vrot.lane.b32.xlu0 %v388, 64
        %v588 = vpop.permute.xlu0 %587
        %589 = vrot.lane.b32.xlu0 %v389, 64
        %v590 = vpop.permute.xlu0 %589
        %591 = vrot.lane.b32.xlu0 %v390, 64
        %v592 = vpop.permute.xlu0 %591
        %594 = vrot.lane.b32.xlu0 %v323, 96
        %v595 = vpop.permute.xlu0 %594
        %596 = vrot.lane.b32.xlu0 %v434, 96
        %v597 = vpop.permute.xlu0 %596
        %598 = vrot.lane.b32.xlu0 %v436, 96
        %v599 = vpop.permute.xlu0 %598
        %600 = vrot.lane.b32.xlu0 %v438, 96
        %v601 = vpop.permute.xlu0 %600
        %602 = vrot.lane.b32.xlu0 %v440, 96
        %v603 = vpop.permute.xlu0 %602
        %604 = vrot.lane.b32.xlu0 %v442, 96
        %v605 = vpop.permute.xlu0 %604
        %606 = vrot.lane.b32.xlu0 %v444, 96
        %v607 = vpop.permute.xlu0 %606
        %608 = vrot.lane.b32.xlu0 %v446, 96
        %v609 = vpop.permute.xlu0 %608
        %610 = vrot.lane.b32.xlu0 %v448, 96
        %v611 = vpop.permute.xlu0 %610
        %612 = vrot.lane.b32.xlu0 %v450, 96
        %v613 = vpop.permute.xlu0 %612
        %614 = vrot.lane.b32.xlu0 %v452, 96
        %v615 = vpop.permute.xlu0 %614
        %616 = vrot.lane.b32.xlu0 %v454, 96
        %v617 = vpop.permute.xlu0 %616
        %618 = vrot.lane.b32.xlu0 %v456, 96
        %v619 = vpop.permute.xlu0 %618
        %620 = vrot.lane.b32.xlu0 %v458, 96
        %v621 = vpop.permute.xlu0 %620
        %622 = vrot.lane.b32.xlu0 %v460, 96
        %v623 = vpop.permute.xlu0 %622
        %624 = vrot.lane.b32.xlu0 %v462, 96
        %v625 = vpop.permute.xlu0 %624
        %626 = vrot.lane.b32.xlu0 %v464, 96
        %v627 = vpop.permute.xlu0 %626
        %628 = vrot.lane.b32.xlu0 %v466, 96
        %v629 = vpop.permute.xlu0 %628
        %630 = vrot.lane.b32.xlu0 %v468, 96
        %v631 = vpop.permute.xlu0 %630
        %632 = vrot.lane.b32.xlu0 %v470, 96
        %v633 = vpop.permute.xlu0 %632
        %634 = vrot.lane.b32.xlu0 %v472, 96
        %v635 = vpop.permute.xlu0 %634
        %636 = vrot.lane.b32.xlu0 %v474, 96
        %v637 = vpop.permute.xlu0 %636
        %638 = vrot.lane.b32.xlu0 %v476, 96
        %v639 = vpop.permute.xlu0 %638
        %640 = vrot.lane.b32.xlu0 %v478, 96
        %v641 = vpop.permute.xlu0 %640
        %642 = vrot.lane.b32.xlu0 %v480, 96
        %v643 = vpop.permute.xlu0 %642
        %644 = vrot.lane.b32.xlu0 %v482, 96
        %v645 = vpop.permute.xlu0 %644
        %646 = vrot.lane.b32.xlu0 %v484, 96
        %v647 = vpop.permute.xlu0 %646
        %648 = vrot.lane.b32.xlu0 %v486, 96
        %v649 = vpop.permute.xlu0 %648
        %650 = vrot.lane.b32.xlu0 %v488, 96
        %v651 = vpop.permute.xlu0 %650
        %652 = vrot.lane.b32.xlu0 %v490, 96
        %v653 = vpop.permute.xlu0 %652
        %654 = vrot.lane.b32.xlu0 %v492, 96
        %v655 = vpop.permute.xlu0 %654
        %656 = vrot.lane.b32.xlu0 %v494, 96
        %v657 = vpop.permute.xlu0 %656
        %658 = vrot.lane.b32.xlu0 %v496, 96
        %v659 = vpop.permute.xlu0 %658
        %vm660 = vcmask 31744
        %v662 = vsel %vm660, %v326, 0
        %v664 = vsel %vm660, %v595, 0
        %v666 = vsel %vm660, %v597, 0
        %v668 = vsel %vm660, %v599, 0
        %v670 = vsel %vm660, %v601, 0
        %v672 = vsel %vm660, %v603, 0
        %v674 = vsel %vm660, %v605, 0
        %v676 = vsel %vm660, %v607, 0
        %v678 = vsel %vm660, %v609, 0
        %v680 = vsel %vm660, %v611, 0
        %v682 = vsel %vm660, %v613, 0
        %v684 = vsel %vm660, %v615, 0
        %v686 = vsel %vm660, %v617, 0
        %v688 = vsel %vm660, %v619, 0
        %v690 = vsel %vm660, %v621, 0
        %v692 = vsel %vm660, %v623, 0
        %v694 = vsel %vm660, %v625, 0
        %v696 = vsel %vm660, %v627, 0
        %v698 = vsel %vm660, %v629, 0
        %v700 = vsel %vm660, %v631, 0
        %v702 = vsel %vm660, %v633, 0
        %v704 = vsel %vm660, %v635, 0
        %v706 = vsel %vm660, %v637, 0
        %v708 = vsel %vm660, %v639, 0
        %v710 = vsel %vm660, %v641, 0
        %v712 = vsel %vm660, %v643, 0
        %v714 = vsel %vm660, %v645, 0
        %v716 = vsel %vm660, %v647, 0
        %v718 = vsel %vm660, %v649, 0
        %v720 = vsel %vm660, %v651, 0
        %v722 = vsel %vm660, %v653, 0
        %v724 = vsel %vm660, %v655, 0
        %v726 = vsel %vm660, %v657, 0
        %v728 = vsel %vm660, %v659, 0
        %730 = vmatprep.subr.mxu0 0.0
        %731 = vmatpush1.xpose.msra.mxu0 %v694
        %732 = vmatprep.subr.mxu0 0.0
        %733 = vmatpush1.xpose.msra.mxu0 %v692
        %734 = vmatprep.subr.mxu0 0.0
        %735 = vmatpush1.xpose.msra.mxu0 %v690
        %736 = vmatprep.subr.mxu0 0.0
        %737 = vmatpush1.xpose.msra.mxu0 %v688
        %738 = vmatprep.subr.mxu0 0.0
        %739 = vmatpush1.xpose.msra.mxu0 %v686
        %740 = vmatprep.subr.mxu0 0.0
        %741 = vmatpush1.xpose.msra.mxu0 %v684
        %742 = vmatprep.subr.mxu0 0.0
        %743 = vmatpush1.xpose.msra.mxu0 %v682
        %744 = vmatprep.subr.mxu0 0.0
        %745 = vmatpush1.xpose.msra.mxu0 %v680
        %746 = vmatprep.subr.mxu0 0.0
        %747 = vmatpush1.xpose.msra.mxu0 %v678
        %748 = vmatprep.subr.mxu0 0.0
        %749 = vmatpush1.xpose.msra.mxu0 %v676
        %750 = vmatprep.subr.mxu0 0.0
        %751 = vmatpush1.xpose.msra.mxu0 %v674
        %752 = vmatprep.subr.mxu0 0.0
        %753 = vmatpush1.xpose.msra.mxu0 %v672
        %754 = vmatprep.subr.mxu0 0.0
        %755 = vmatpush1.xpose.msra.mxu0 %v670
        %756 = vmatprep.subr.mxu0 0.0
        %757 = vmatpush1.xpose.msra.mxu0 %v668
        %758 = vmatprep.subr.mxu0 0.0
        %759 = vmatpush1.xpose.msra.mxu0 %v666
        %760 = vmatprep.subr.mxu0 0.0
        %761 = vmatpush1.xpose.msra.mxu0 %v664
        %762 = vmatprep.subr.mxu0 0.0
        %763 = vmatpush2.xpose.msra.mxu0 %v726
        %764 = vmatprep.subr.mxu0 0.0
        %765 = vmatpush2.xpose.msra.mxu0 %v724
        %766 = vmatprep.subr.mxu0 0.0
        %767 = vmatpush2.xpose.msra.mxu0 %v722
        %768 = vmatprep.subr.mxu0 0.0
        %769 = vmatpush2.xpose.msra.mxu0 %v720
        %770 = vmatprep.subr.mxu0 0.0
        %771 = vmatpush2.xpose.msra.mxu0 %v718
        %772 = vmatprep.subr.mxu0 0.0
        %773 = vmatpush2.xpose.msra.mxu0 %v716
        %774 = vmatprep.subr.mxu0 0.0
        %775 = vmatpush2.xpose.msra.mxu0 %v714
        %776 = vmatprep.subr.mxu0 0.0
        %777 = vmatpush2.xpose.msra.mxu0 %v712
        %778 = vmatprep.subr.mxu0 0.0
        %779 = vmatpush2.xpose.msra.mxu0 %v710
        %780 = vmatprep.subr.mxu0 0.0
        %781 = vmatpush2.xpose.msra.mxu0 %v708
        %782 = vmatprep.subr.mxu0 0.0
        %783 = vmatpush2.xpose.msra.mxu0 %v706
        %784 = vmatprep.subr.mxu0 0.0
        %785 = vmatpush2.xpose.msra.mxu0 %v704
        %786 = vmatprep.subr.mxu0 0.0
        %787 = vmatpush2.xpose.msra.mxu0 %v702
        %788 = vmatprep.subr.mxu0 0.0
        %789 = vmatpush2.xpose.msra.mxu0 %v700
        %790 = vmatprep.subr.mxu0 0.0
        %791 = vmatpush2.xpose.msra.mxu0 %v698
        %792 = vmatprep.subr.mxu0 0.0
        %793 = vmatpush2.xpose.msra.mxu0 %v696
        %794 = vmatprep.mubr.f32.mxu0 0.0
        %795 = vmatmul.mubr.f32.gmra.mxu0 %v662
        %v796 = vpop.f32.mrf.mxu0
        %v797 = vadd.f32 %v398, %v796
        %v798 = vpop.f32.mrf.mxu0
        %v799 = vadd.f32 %v399, %v798
        %800 = vdwg.mxu0
        %801 = vmatprep.subr.mxu0 0.0
        %802 = vmatpush1.xpose.msra.mxu0 0.0
        %803 = vmatprep.subr.mxu0 0.0
        %804 = vmatpush1.xpose.msra.mxu0 0.0
        %805 = vmatprep.subr.mxu0 0.0
        %806 = vmatpush1.xpose.msra.mxu0 0.0
        %807 = vmatprep.subr.mxu0 0.0
        %808 = vmatpush1.xpose.msra.mxu0 0.0
        %809 = vmatprep.subr.mxu0 0.0
        %810 = vmatpush1.xpose.msra.mxu0 0.0
        %811 = vmatprep.subr.mxu0 0.0
        %812 = vmatpush1.xpose.msra.mxu0 0.0
        %813 = vmatprep.subr.mxu0 0.0
        %814 = vmatpush1.xpose.msra.mxu0 0.0
        %815 = vmatprep.subr.mxu0 0.0
        %816 = vmatpush1.xpose.msra.mxu0 0.0
        %817 = vmatprep.subr.mxu0 0.0
        %818 = vmatpush1.xpose.msra.mxu0 0.0
        %819 = vmatprep.subr.mxu0 0.0
        %820 = vmatpush1.xpose.msra.mxu0 0.0
        %821 = vmatprep.subr.mxu0 0.0
        %822 = vmatpush1.xpose.msra.mxu0 0.0
        %823 = vmatprep.subr.mxu0 0.0
        %824 = vmatpush1.xpose.msra.mxu0 0.0
        %825 = vmatprep.subr.mxu0 0.0
        %826 = vmatpush1.xpose.msra.mxu0 0.0
        %827 = vmatprep.subr.mxu0 0.0
        %828 = vmatpush1.xpose.msra.mxu0 0.0
        %829 = vmatprep.subr.mxu0 0.0
        %830 = vmatpush1.xpose.msra.mxu0 0.0
        %831 = vmatprep.subr.mxu0 0.0
        %832 = vmatpush1.xpose.msra.mxu0 %v728
        %833 = vmatprep.subr.mxu0 0.0
        %834 = vmatpush2.xpose.msra.mxu0 0.0
        %835 = vmatprep.subr.mxu0 0.0
        %836 = vmatpush2.xpose.msra.mxu0 0.0
        %837 = vmatprep.subr.mxu0 0.0
        %838 = vmatpush2.xpose.msra.mxu0 0.0
        %839 = vmatprep.subr.mxu0 0.0
        %840 = vmatpush2.xpose.msra.mxu0 0.0
        %841 = vmatprep.subr.mxu0 0.0
        %842 = vmatpush2.xpose.msra.mxu0 0.0
        %843 = vmatprep.subr.mxu0 0.0
        %844 = vmatpush2.xpose.msra.mxu0 0.0
        %845 = vmatprep.subr.mxu0 0.0
        %846 = vmatpush2.xpose.msra.mxu0 0.0
        %847 = vmatprep.subr.mxu0 0.0
        %848 = vmatpush2.xpose.msra.mxu0 0.0
        %849 = vmatprep.subr.mxu0 0.0
        %850 = vmatpush2.xpose.msra.mxu0 0.0
        %851 = vmatprep.subr.mxu0 0.0
        %852 = vmatpush2.xpose.msra.mxu0 0.0
        %853 = vmatprep.subr.mxu0 0.0
        %854 = vmatpush2.xpose.msra.mxu0 0.0
        %855 = vmatprep.subr.mxu0 0.0
        %856 = vmatpush2.xpose.msra.mxu0 0.0
        %857 = vmatprep.subr.mxu0 0.0
        %858 = vmatpush2.xpose.msra.mxu0 0.0
        %859 = vmatprep.subr.mxu0 0.0
        %860 = vmatpush2.xpose.msra.mxu0 0.0
        %861 = vmatprep.subr.mxu0 0.0
        %862 = vmatpush2.xpose.msra.mxu0 0.0
        %863 = vmatprep.subr.mxu0 0.0
        %864 = vmatpush2.xpose.msra.mxu0 0.0
        %865 = vmatprep.mubr.f32.mxu0 0.0
        %866 = vmatmul.mubr.f32.gmra.mxu0 %v662
        %v867 = vpop.f32.mrf.mxu0
        %v868 = vadd.f32 %v400, %v867
        %v869 = vpop.f32.mrf.mxu0
        %870 = vdwg.mxu0
        %vm871 = vcmask 64512
        %v872 = vsel %vm871, %v868, -inf
        %v873 = vmax.f32 %v797, %v799
        %v874 = vmax.f32 %v873, %v872
        %875 = vmax.xlane.f32.xlu0 %v874
        %v876 = vpop.xlane.xlu0 %875
        %v877 = vsub.f32 %v797, %v876
        %v878 = vsub.f32 %v799, %v876
        %v879 = vsub.f32 %v868, %v876
        %v880 = vmul.f32 %v877, 1.442695
        %v881 = vpow.pop %v880
        %v882 = vmul.f32 %v878, 1.442695
        %v883 = vpow.pop %v882
        %v884 = vmul.f32 %v879, 1.442695
        %v885 = vpow.pop %v884
        %v886 = vadd.f32 %v881, %v883
        %v887 = vsel %vm871, %v885, 0.0
        %v888 = vadd.f32 %v886, %v887
        %889 = vadd.xlane.f32.xlu0 %v888
        %v890 = vpop.xlane.xlu0 %889
        %v891 = vrcp.pop %v890
        %892 = vrot.lane.b32.xlu0 %v323, 64
        %v893 = vpop.permute.xlu0 %892
        %894 = vrot.lane.b32.xlu0 %v530, 64
        %v895 = vpop.permute.xlu0 %894
        %896 = vrot.lane.b32.xlu0 %v532, 64
        %v897 = vpop.permute.xlu0 %896
        %898 = vrot.lane.b32.xlu0 %v534, 64
        %v899 = vpop.permute.xlu0 %898
        %900 = vrot.lane.b32.xlu0 %v536, 64
        %v901 = vpop.permute.xlu0 %900
        %902 = vrot.lane.b32.xlu0 %v538, 64
        %v903 = vpop.permute.xlu0 %902
        %904 = vrot.lane.b32.xlu0 %v540, 64
        %v905 = vpop.permute.xlu0 %904
        %906 = vrot.lane.b32.xlu0 %v542, 64
        %v907 = vpop.permute.xlu0 %906
        %908 = vrot.lane.b32.xlu0 %v544, 64
        %v909 = vpop.permute.xlu0 %908
        %910 = vrot.lane.b32.xlu0 %v546, 64
        %v911 = vpop.permute.xlu0 %910
        %912 = vrot.lane.b32.xlu0 %v548, 64
        %v913 = vpop.permute.xlu0 %912
        %914 = vrot.lane.b32.xlu0 %v550, 64
        %v915 = vpop.permute.xlu0 %914
        %916 = vrot.lane.b32.xlu0 %v552, 64
        %v917 = vpop.permute.xlu0 %916
        %918 = vrot.lane.b32.xlu0 %v554, 64
        %v919 = vpop.permute.xlu0 %918
        %920 = vrot.lane.b32.xlu0 %v556, 64
        %v921 = vpop.permute.xlu0 %920
        %922 = vrot.lane.b32.xlu0 %v558, 64
        %v923 = vpop.permute.xlu0 %922
        %924 = vrot.lane.b32.xlu0 %v560, 64
        %v925 = vpop.permute.xlu0 %924
        %926 = vrot.lane.b32.xlu0 %v562, 64
        %v927 = vpop.permute.xlu0 %926
        %928 = vrot.lane.b32.xlu0 %v564, 64
        %v929 = vpop.permute.xlu0 %928
        %930 = vrot.lane.b32.xlu0 %v566, 64
        %v931 = vpop.permute.xlu0 %930
        %932 = vrot.lane.b32.xlu0 %v568, 64
        %v933 = vpop.permute.xlu0 %932
        %934 = vrot.lane.b32.xlu0 %v570, 64
        %v935 = vpop.permute.xlu0 %934
        %936 = vrot.lane.b32.xlu0 %v572, 64
        %v937 = vpop.permute.xlu0 %936
        %938 = vrot.lane.b32.xlu0 %v574, 64
        %v939 = vpop.permute.xlu0 %938
        %940 = vrot.lane.b32.xlu0 %v576, 64
        %v941 = vpop.permute.xlu0 %940
        %942 = vrot.lane.b32.xlu0 %v578, 64
        %v943 = vpop.permute.xlu0 %942
        %944 = vrot.lane.b32.xlu0 %v580, 64
        %v945 = vpop.permute.xlu0 %944
        %946 = vrot.lane.b32.xlu0 %v582, 64
        %v947 = vpop.permute.xlu0 %946
        %948 = vrot.lane.b32.xlu0 %v584, 64
        %v949 = vpop.permute.xlu0 %948
        %950 = vrot.lane.b32.xlu0 %v586, 64
        %v951 = vpop.permute.xlu0 %950
        %952 = vrot.lane.b32.xlu0 %v588, 64
        %v953 = vpop.permute.xlu0 %952
        %954 = vrot.lane.b32.xlu0 %v590, 64
        %v955 = vpop.permute.xlu0 %954
        %956 = vrot.lane.b32.xlu0 %v592, 64
        %v957 = vpop.permute.xlu0 %956
        %v992 = vsel %vm871, %v885, 0
        %994 = vmatprep.subr.mxu0 0.0
        %995 = vmatpush1.msra.mxu0 %v923
        %996 = vmatprep.subr.mxu0 0.0
        %997 = vmatpush1.msra.mxu0 %v921
        %998 = vmatprep.subr.mxu0 0.0
        %999 = vmatpush1.msra.mxu0 %v919
        %1000 = vmatprep.subr.mxu0 0.0
        %1001 = vmatpush1.msra.mxu0 %v917
        %1002 = vmatprep.subr.mxu0 0.0
        %1003 = vmatpush1.msra.mxu0 %v915
        %1004 = vmatprep.subr.mxu0 0.0
        %1005 = vmatpush1.msra.mxu0 %v913
        %1006 = vmatprep.subr.mxu0 0.0
        %1007 = vmatpush1.msra.mxu0 %v911
        %1008 = vmatprep.subr.mxu0 0.0
        %1009 = vmatpush1.msra.mxu0 %v909
        %1010 = vmatprep.subr.mxu0 0.0
        %1011 = vmatpush1.msra.mxu0 %v907
        %1012 = vmatprep.subr.mxu0 0.0
        %1013 = vmatpush1.msra.mxu0 %v905
        %1014 = vmatprep.subr.mxu0 0.0
        %1015 = vmatpush1.msra.mxu0 %v903
        %1016 = vmatprep.subr.mxu0 0.0
        %1017 = vmatpush1.msra.mxu0 %v901
        %1018 = vmatprep.subr.mxu0 0.0
        %1019 = vmatpush1.msra.mxu0 %v899
        %1020 = vmatprep.subr.mxu0 0.0
        %1021 = vmatpush1.msra.mxu0 %v897
        %1022 = vmatprep.subr.mxu0 0.0
        %1023 = vmatpush1.msra.mxu0 %v895
        %1024 = vmatprep.subr.mxu0 0.0
        %1025 = vmatpush1.msra.mxu0 %v893
        %1026 = vmatprep.subr.mxu0 0.0
        %1027 = vmatpush2.msra.mxu0 %v955
        %1028 = vmatprep.subr.mxu0 0.0
        %1029 = vmatpush2.msra.mxu0 %v953
        %1030 = vmatprep.subr.mxu0 0.0
        %1031 = vmatpush2.msra.mxu0 %v951
        %1032 = vmatprep.subr.mxu0 0.0
        %1033 = vmatpush2.msra.mxu0 %v949
        %1034 = vmatprep.subr.mxu0 0.0
        %1035 = vmatpush2.msra.mxu0 %v947
        %1036 = vmatprep.subr.mxu0 0.0
        %1037 = vmatpush2.msra.mxu0 %v945
        %1038 = vmatprep.subr.mxu0 0.0
        %1039 = vmatpush2.msra.mxu0 %v943
        %1040 = vmatprep.subr.mxu0 0.0
        %1041 = vmatpush2.msra.mxu0 %v941
        %1042 = vmatprep.subr.mxu0 0.0
        %1043 = vmatpush2.msra.mxu0 %v939
        %1044 = vmatprep.subr.mxu0 0.0
        %1045 = vmatpush2.msra.mxu0 %v937
        %1046 = vmatprep.subr.mxu0 0.0
        %1047 = vmatpush2.msra.mxu0 %v935
        %1048 = vmatprep.subr.mxu0 0.0
        %1049 = vmatpush2.msra.mxu0 %v933
        %1050 = vmatprep.subr.mxu0 0.0
        %1051 = vmatpush2.msra.mxu0 %v931
        %1052 = vmatprep.subr.mxu0 0.0
        %1053 = vmatpush2.msra.mxu0 %v929
        %1054 = vmatprep.subr.mxu0 0.0
        %1055 = vmatpush2.msra.mxu0 %v927
        %1056 = vmatprep.subr.mxu0 0.0
        %1057 = vmatpush2.msra.mxu0 %v925
        %1058 = vmatprep.mubr.f32.mxu0 %v883
        %1059 = vmatmul.mubr.f32.gmra.mxu0 %v881
        %v1060 = vpop.f32.mrf.mxu0
        %v1061 = vadd.f32 0.0, %v1060
        %v1062 = vpop.f32.mrf.mxu0
        %1063 = vdwg.mxu0
        %1064 = vmatprep.subr.mxu0 0.0
        %1065 = vmatpush1.msra.mxu0 0.0
        %1066 = vmatprep.subr.mxu0 0.0
        %1067 = vmatpush1.msra.mxu0 0.0
        %1068 = vmatprep.subr.mxu0 0.0
        %1069 = vmatpush1.msra.mxu0 0.0
        %1070 = vmatprep.subr.mxu0 0.0
        %1071 = vmatpush1.msra.mxu0 0.0
        %1072 = vmatprep.subr.mxu0 0.0
        %1073 = vmatpush1.msra.mxu0 0.0
        %1074 = vmatprep.subr.mxu0 0.0
        %1075 = vmatpush1.msra.mxu0 0.0
        %1076 = vmatprep.subr.mxu0 0.0
        %1077 = vmatpush1.msra.mxu0 0.0
        %1078 = vmatprep.subr.mxu0 0.0
        %1079 = vmatpush1.msra.mxu0 0.0
        %1080 = vmatprep.subr.mxu0 0.0
        %1081 = vmatpush1.msra.mxu0 0.0
        %1082 = vmatprep.subr.mxu0 0.0
        %1083 = vmatpush1.msra.mxu0 0.0
        %1084 = vmatprep.subr.mxu0 0.0
        %1085 = vmatpush1.msra.mxu0 0.0
        %1086 = vmatprep.subr.mxu0 0.0
        %1087 = vmatpush1.msra.mxu0 0.0
        %1088 = vmatprep.subr.mxu0 0.0
        %1089 = vmatpush1.msra.mxu0 0.0
        %1090 = vmatprep.subr.mxu0 0.0
        %1091 = vmatpush1.msra.mxu0 0.0
        %1092 = vmatprep.subr.mxu0 0.0
        %1093 = vmatpush1.msra.mxu0 0.0
        %1094 = vmatprep.subr.mxu0 0.0
        %1095 = vmatpush1.msra.mxu0 %v957
        %1096 = vmatprep.subr.mxu0 0.0
        %1097 = vmatpush2.msra.mxu0 0.0
        %1098 = vmatprep.subr.mxu0 0.0
        %1099 = vmatpush2.msra.mxu0 0.0
        %1100 = vmatprep.subr.mxu0 0.0
        %1101 = vmatpush2.msra.mxu0 0.0
        %1102 = vmatprep.subr.mxu0 0.0
        %1103 = vmatpush2.msra.mxu0 0.0
        %1104 = vmatprep.subr.mxu0 0.0
        %1105 = vmatpush2.msra.mxu0 0.0
        %1106 = vmatprep.subr.mxu0 0.0
        %1107 = vmatpush2.msra.mxu0 0.0
        %1108 = vmatprep.subr.mxu0 0.0
        %1109 = vmatpush2.msra.mxu0 0.0
        %1110 = vmatprep.subr.mxu0 0.0
        %1111 = vmatpush2.msra.mxu0 0.0
        %1112 = vmatprep.subr.mxu0 0.0
        %1113 = vmatpush2.msra.mxu0 0.0
        %1114 = vmatprep.subr.mxu0 0.0
        %1115 = vmatpush2.msra.mxu0 0.0
        %1116 = vmatprep.subr.mxu0 0.0
        %1117 = vmatpush2.msra.mxu0 0.0
        %1118 = vmatprep.subr.mxu0 0.0
        %1119 = vmatpush2.msra.mxu0 0.0
        %1120 = vmatprep.subr.mxu0 0.0
        %1121 = vmatpush2.msra.mxu0 0.0
        %1122 = vmatprep.subr.mxu0 0.0
        %1123 = vmatpush2.msra.mxu0 0.0
        %1124 = vmatprep.subr.mxu0 0.0
        %1125 = vmatpush2.msra.mxu0 0.0
        %1126 = vmatprep.subr.mxu0 0.0
        %1127 = vmatpush2.msra.mxu0 0.0
        %1128 = vmatprep.mubr.f32.mxu0 0.0
        %1129 = vmatmul.mubr.f32.gmra.mxu0 %v992
        %v1130 = vpop.f32.mrf.mxu0
        %v1131 = vadd.f32 %v1061, %v1130
        %v1132 = vpop.f32.mrf.mxu0
        %1133 = vdwg.mxu0
        %v1134 = vmul.f32 %v1131, %v891
        %1135 = vrot.lane.b32.xlu0 %v326, 124
        %v1136 = vpop.permute.xlu0 %1135
        %1137 = vrot.lane.b32.xlu0 %v323, 92
        %v1138 = vpop.permute.xlu0 %1137
        %1139 = vrot.lane.b32.xlu0 %v434, 92
        %v1140 = vpop.permute.xlu0 %1139
        %1141 = vrot.lane.b32.xlu0 %v436, 92
        %v1142 = vpop.permute.xlu0 %1141
        %1143 = vrot.lane.b32.xlu0 %v438, 92
        %v1144 = vpop.permute.xlu0 %1143
        %1145 = vrot.lane.b32.xlu0 %v440, 92
        %v1146 = vpop.permute.xlu0 %1145
        %1147 = vrot.lane.b32.xlu0 %v442, 92
        %v1148 = vpop.permute.xlu0 %1147
        %1149 = vrot.lane.b32.xlu0 %v444, 92
        %v1150 = vpop.permute.xlu0 %1149
        %1151 = vrot.lane.b32.xlu0 %v446, 92
        %v1152 = vpop.permute.xlu0 %1151
        %1153 = vrot.lane.b32.xlu0 %v448, 92
        %v1154 = vpop.permute.xlu0 %1153
        %1155 = vrot.lane.b32.xlu0 %v450, 92
        %v1156 = vpop.permute.xlu0 %1155
        %1157 = vrot.lane.b32.xlu0 %v452, 92
        %v1158 = vpop.permute.xlu0 %1157
        %1159 = vrot.lane.b32.xlu0 %v454, 92
        %v1160 = vpop.permute.xlu0 %1159
        %1161 = vrot.lane.b32.xlu0 %v456, 92
        %v1162 = vpop.permute.xlu0 %1161
        %1163 = vrot.lane.b32.xlu0 %v458, 92
        %v1164 = vpop.permute.xlu0 %1163
        %1165 = vrot.lane.b32.xlu0 %v460, 92
        %v1166 = vpop.permute.xlu0 %1165
        %1167 = vrot.lane.b32.xlu0 %v462, 92
        %v1168 = vpop.permute.xlu0 %1167
        %1169 = vrot.lane.b32.xlu0 %v464, 92
        %v1170 = vpop.permute.xlu0 %1169
        %1171 = vrot.lane.b32.xlu0 %v466, 92
        %v1172 = vpop.permute.xlu0 %1171
        %1173 = vrot.lane.b32.xlu0 %v468, 92
        %v1174 = vpop.permute.xlu0 %1173
        %1175 = vrot.lane.b32.xlu0 %v470, 92
        %v1176 = vpop.permute.xlu0 %1175
        %1177 = vrot.lane.b32.xlu0 %v472, 92
        %v1178 = vpop.permute.xlu0 %1177
        %1179 = vrot.lane.b32.xlu0 %v474, 92
        %v1180 = vpop.permute.xlu0 %1179
        %1181 = vrot.lane.b32.xlu0 %v476, 92
        %v1182 = vpop.permute.xlu0 %1181
        %1183 = vrot.lane.b32.xlu0 %v478, 92
        %v1184 = vpop.permute.xlu0 %1183
        %1185 = vrot.lane.b32.xlu0 %v480, 92
        %v1186 = vpop.permute.xlu0 %1185
        %1187 = vrot.lane.b32.xlu0 %v482, 92
        %v1188 = vpop.permute.xlu0 %1187
        %1189 = vrot.lane.b32.xlu0 %v484, 92
        %v1190 = vpop.permute.xlu0 %1189
        %1191 = vrot.lane.b32.xlu0 %v486, 92
        %v1192 = vpop.permute.xlu0 %1191
        %1193 = vrot.lane.b32.xlu0 %v488, 92
        %v1194 = vpop.permute.xlu0 %1193
        %1195 = vrot.lane.b32.xlu0 %v490, 92
        %v1196 = vpop.permute.xlu0 %1195
        %1197 = vrot.lane.b32.xlu0 %v492, 92
        %v1198 = vpop.permute.xlu0 %1197
        %1199 = vrot.lane.b32.xlu0 %v494, 92
        %v1200 = vpop.permute.xlu0 %1199
        %1201 = vrot.lane.b32.xlu0 %v496, 92
        %v1202 = vpop.permute.xlu0 %1201
        %v1203 = vsel %vm660, %v1136, 0
        %v1205 = vsel %vm660, %v1138, 0
        %v1207 = vsel %vm660, %v1140, 0
        %v1209 = vsel %vm660, %v1142, 0
        %v1211 = vsel %vm660, %v1144, 0
        %v1213 = vsel %vm660, %v1146, 0
        %v1215 = vsel %vm660, %v1148, 0
        %v1217 = vsel %vm660, %v1150, 0
        %v1219 = vsel %vm660, %v1152, 0
        %v1221 = vsel %vm660, %v1154, 0
        %v1223 = vsel %vm660, %v1156, 0
        %v1225 = vsel %vm660, %v1158, 0
        %v1227 = vsel %vm660, %v1160, 0
        %v1229 = vsel %vm660, %v1162, 0
        %v1231 = vsel %vm660, %v1164, 0
        %v1233 = vsel %vm660, %v1166, 0
        %v1235 = vsel %vm660, %v1168, 0
        %v1237 = vsel %vm660, %v1170, 0
        %v1239 = vsel %vm660, %v1172, 0
        %v1241 = vsel %vm660, %v1174, 0
        %v1243 = vsel %vm660, %v1176, 0
        %v1245 = vsel %vm660, %v1178, 0
        %v1247 = vsel %vm660, %v1180, 0
        %v1249 = vsel %vm660, %v1182, 0
        %v1251 = vsel %vm660, %v1184, 0
        %v1253 = vsel %vm660, %v1186, 0
        %v1255 = vsel %vm660, %v1188, 0
        %v1257 = vsel %vm660, %v1190, 0
        %v1259 = vsel %vm660, %v1192, 0
        %v1261 = vsel %vm660, %v1194, 0
        %v1263 = vsel %vm660, %v1196, 0
        %v1265 = vsel %vm660, %v1198, 0
        %v1267 = vsel %vm660, %v1200, 0
        %v1269 = vsel %vm660, %v1202, 0
        %1271 = vmatprep.subr.mxu0 0.0
        %1272 = vmatpush1.xpose.msra.mxu0 %v1235
        %1273 = vmatprep.subr.mxu0 0.0
        %1274 = vmatpush1.xpose.msra.mxu0 %v1233
        %1275 = vmatprep.subr.mxu0 0.0
        %1276 = vmatpush1.xpose.msra.mxu0 %v1231
        %1277 = vmatprep.subr.mxu0 0.0
        %1278 = vmatpush1.xpose.msra.mxu0 %v1229
        %1279 = vmatprep.subr.mxu0 0.0
        %1280 = vmatpush1.xpose.msra.mxu0 %v1227
        %1281 = vmatprep.subr.mxu0 0.0
        %1282 = vmatpush1.xpose.msra.mxu0 %v1225
        %1283 = vmatprep.subr.mxu0 0.0
        %1284 = vmatpush1.xpose.msra.mxu0 %v1223
        %1285 = vmatprep.subr.mxu0 0.0
        %1286 = vmatpush1.xpose.msra.mxu0 %v1221
        %1287 = vmatprep.subr.mxu0 0.0
        %1288 = vmatpush1.xpose.msra.mxu0 %v1219
        %1289 = vmatprep.subr.mxu0 0.0
        %1290 = vmatpush1.xpose.msra.mxu0 %v1217
        %1291 = vmatprep.subr.mxu0 0.0
        %1292 = vmatpush1.xpose.msra.mxu0 %v1215
        %1293 = vmatprep.subr.mxu0 0.0
        %1294 = vmatpush1.xpose.msra.mxu0 %v1213
        %1295 = vmatprep.subr.mxu0 0.0
        %1296 = vmatpush1.xpose.msra.mxu0 %v1211
        %1297 = vmatprep.subr.mxu0 0.0
        %1298 = vmatpush1.xpose.msra.mxu0 %v1209
        %1299 = vmatprep.subr.mxu0 0.0
        %1300 = vmatpush1.xpose.msra.mxu0 %v1207
        %1301 = vmatprep.subr.mxu0 0.0
        %1302 = vmatpush1.xpose.msra.mxu0 %v1205
        %1303 = vmatprep.subr.mxu0 0.0
        %1304 = vmatpush2.xpose.msra.mxu0 %v1267
        %1305 = vmatprep.subr.mxu0 0.0
        %1306 = vmatpush2.xpose.msra.mxu0 %v1265
        %1307 = vmatprep.subr.mxu0 0.0
        %1308 = vmatpush2.xpose.msra.mxu0 %v1263
        %1309 = vmatprep.subr.mxu0 0.0
        %1310 = vmatpush2.xpose.msra.mxu0 %v1261
        %1311 = vmatprep.subr.mxu0 0.0
        %1312 = vmatpush2.xpose.msra.mxu0 %v1259
        %1313 = vmatprep.subr.mxu0 0.0
        %1314 = vmatpush2.xpose.msra.mxu0 %v1257
        %1315 = vmatprep.subr.mxu0 0.0
        %1316 = vmatpush2.xpose.msra.mxu0 %v1255
        %1317 = vmatprep.subr.mxu0 0.0
        %1318 = vmatpush2.xpose.msra.mxu0 %v1253
        %1319 = vmatprep.subr.mxu0 0.0
        %1320 = vmatpush2.xpose.msra.mxu0 %v1251
        %1321 = vmatprep.subr.mxu0 0.0
        %1322 = vmatpush2.xpose.msra.mxu0 %v1249
        %1323 = vmatprep.subr.mxu0 0.0
        %1324 = vmatpush2.xpose.msra.mxu0 %v1247
        %1325 = vmatprep.subr.mxu0 0.0
        %1326 = vmatpush2.xpose.msra.mxu0 %v1245
        %1327 = vmatprep.subr.mxu0 0.0
        %1328 = vmatpush2.xpose.msra.mxu0 %v1243
        %1329 = vmatprep.subr.mxu0 0.0
        %1330 = vmatpush2.xpose.msra.mxu0 %v1241
        %1331 = vmatprep.subr.mxu0 0.0
        %1332 = vmatpush2.xpose.msra.mxu0 %v1239
        %1333 = vmatprep.subr.mxu0 0.0
        %1334 = vmatpush2.xpose.msra.mxu0 %v1237
        %1335 = vmatprep.mubr.f32.mxu0 0.0
        %1336 = vmatmul.mubr.f32.gmra.mxu0 %v1203
        %v1337 = vpop.f32.mrf.mxu0
        %v1338 = vadd.f32 %v398, %v1337
        %v1339 = vpop.f32.mrf.mxu0
        %v1340 = vadd.f32 %v399, %v1339
        %1341 = vdwg.mxu0
        %1342 = vmatprep.subr.mxu0 0.0
        %1343 = vmatpush1.xpose.msra.mxu0 0.0
        %1344 = vmatprep.subr.mxu0 0.0
        %1345 = vmatpush1.xpose.msra.mxu0 0.0
        %1346 = vmatprep.subr.mxu0 0.0
        %1347 = vmatpush1.xpose.msra.mxu0 0.0
        %1348 = vmatprep.subr.mxu0 0.0
        %1349 = vmatpush1.xpose.msra.mxu0 0.0
        %1350 = vmatprep.subr.mxu0 0.0
        %1351 = vmatpush1.xpose.msra.mxu0 0.0
        %1352 = vmatprep.subr.mxu0 0.0
        %1353 = vmatpush1.xpose.msra.mxu0 0.0
        %1354 = vmatprep.subr.mxu0 0.0
        %1355 = vmatpush1.xpose.msra.mxu0 0.0
        %1356 = vmatprep.subr.mxu0 0.0
        %1357 = vmatpush1.xpose.msra.mxu0 0.0
        %1358 = vmatprep.subr.mxu0 0.0
        %1359 = vmatpush1.xpose.msra.mxu0 0.0
        %1360 = vmatprep.subr.mxu0 0.0
        %1361 = vmatpush1.xpose.msra.mxu0 0.0
        %1362 = vmatprep.subr.mxu0 0.0
        %1363 = vmatpush1.xpose.msra.mxu0 0.0
        %1364 = vmatprep.subr.mxu0 0.0
        %1365 = vmatpush1.xpose.msra.mxu0 0.0
        %1366 = vmatprep.subr.mxu0 0.0
        %1367 = vmatpush1.xpose.msra.mxu0 0.0
        %1368 = vmatprep.subr.mxu0 0.0
        %1369 = vmatpush1.xpose.msra.mxu0 0.0
        %1370 = vmatprep.subr.mxu0 0.0
        %1371 = vmatpush1.xpose.msra.mxu0 0.0
        %1372 = vmatprep.subr.mxu0 0.0
        %1373 = vmatpush1.xpose.msra.mxu0 %v1269
        %1374 = vmatprep.subr.mxu0 0.0
        %1375 = vmatpush2.xpose.msra.mxu0 0.0
        %1376 = vmatprep.subr.mxu0 0.0
        %1377 = vmatpush2.xpose.msra.mxu0 0.0
        %1378 = vmatprep.subr.mxu0 0.0
        %1379 = vmatpush2.xpose.msra.mxu0 0.0
        %1380 = vmatprep.subr.mxu0 0.0
        %1381 = vmatpush2.xpose.msra.mxu0 0.0
        %1382 = vmatprep.subr.mxu0 0.0
        %1383 = vmatpush2.xpose.msra.mxu0 0.0
        %1384 = vmatprep.subr.mxu0 0.0
        %1385 = vmatpush2.xpose.msra.mxu0 0.0
        %1386 = vmatprep.subr.mxu0 0.0
        %1387 = vmatpush2.xpose.msra.mxu0 0.0
        %1388 = vmatprep.subr.mxu0 0.0
        %1389 = vmatpush2.xpose.msra.mxu0 0.0
        %1390 = vmatprep.subr.mxu0 0.0
        %1391 = vmatpush2.xpose.msra.mxu0 0.0
        %1392 = vmatprep.subr.mxu0 0.0
        %1393 = vmatpush2.xpose.msra.mxu0 0.0
        %1394 = vmatprep.subr.mxu0 0.0
        %1395 = vmatpush2.xpose.msra.mxu0 0.0
        %1396 = vmatprep.subr.mxu0 0.0
        %1397 = vmatpush2.xpose.msra.mxu0 0.0
        %1398 = vmatprep.subr.mxu0 0.0
        %1399 = vmatpush2.xpose.msra.mxu0 0.0
        %1400 = vmatprep.subr.mxu0 0.0
        %1401 = vmatpush2.xpose.msra.mxu0 0.0
        %1402 = vmatprep.subr.mxu0 0.0
        %1403 = vmatpush2.xpose.msra.mxu0 0.0
        %1404 = vmatprep.subr.mxu0 0.0
        %1405 = vmatpush2.xpose.msra.mxu0 0.0
        %1406 = vmatprep.mubr.f32.mxu0 0.0
        %1407 = vmatmul.mubr.f32.gmra.mxu0 %v1203
        %v1408 = vpop.f32.mrf.mxu0
        %v1409 = vadd.f32 %v400, %v1408
        %v1410 = vpop.f32.mrf.mxu0
        %1411 = vdwg.mxu0
        %v1412 = vsel %vm871, %v1409, -inf
        %v1413 = vmax.f32 %v1338, %v1340
        %v1414 = vmax.f32 %v1413, %v1412
        %1415 = vmax.xlane.f32.xlu0 %v1414
        %v1416 = vpop.xlane.xlu0 %1415
        %v1417 = vsub.f32 %v1338, %v1416
        %v1418 = vsub.f32 %v1340, %v1416
        %v1419 = vsub.f32 %v1409, %v1416
        %v1420 = vmul.f32 %v1417, 1.442695
        %v1421 = vpow.pop %v1420
        %v1422 = vmul.f32 %v1418, 1.442695
        %v1423 = vpow.pop %v1422
        %v1424 = vmul.f32 %v1419, 1.442695
        %v1425 = vpow.pop %v1424
        %v1426 = vadd.f32 %v1421, %v1423
        %v1427 = vsel %vm871, %v1425, 0.0
        %v1428 = vadd.f32 %v1426, %v1427
        %1429 = vadd.xlane.f32.xlu0 %v1428
        %v1430 = vpop.xlane.xlu0 %1429
        %v1431 = vrcp.pop %v1430
        %1432 = vrot.lane.b32.xlu0 %v323, 60
        %v1433 = vpop.permute.xlu0 %1432
        %1434 = vrot.lane.b32.xlu0 %v530, 60
        %v1435 = vpop.permute.xlu0 %1434
        %1436 = vrot.lane.b32.xlu0 %v532, 60
        %v1437 = vpop.permute.xlu0 %1436
        %1438 = vrot.lane.b32.xlu0 %v534, 60
        %v1439 = vpop.permute.xlu0 %1438
        %1440 = vrot.lane.b32.xlu0 %v536, 60
        %v1441 = vpop.permute.xlu0 %1440
        %1442 = vrot.lane.b32.xlu0 %v538, 60
        %v1443 = vpop.permute.xlu0 %1442
        %1444 = vrot.lane.b32.xlu0 %v540, 60
        %v1445 = vpop.permute.xlu0 %1444
        %1446 = vrot.lane.b32.xlu0 %v542, 60
        %v1447 = vpop.permute.xlu0 %1446
        %1448 = vrot.lane.b32.xlu0 %v544, 60
        %v1449 = vpop.permute.xlu0 %1448
        %1450 = vrot.lane.b32.xlu0 %v546, 60
        %v1451 = vpop.permute.xlu0 %1450
        %1452 = vrot.lane.b32.xlu0 %v548, 60
        %v1453 = vpop.permute.xlu0 %1452
        %1454 = vrot.lane.b32.xlu0 %v550, 60
        %v1455 = vpop.permute.xlu0 %1454
        %1456 = vrot.lane.b32.xlu0 %v552, 60
        %v1457 = vpop.permute.xlu0 %1456
        %1458 = vrot.lane.b32.xlu0 %v554, 60
        %v1459 = vpop.permute.xlu0 %1458
        %1460 = vrot.lane.b32.xlu0 %v556, 60
        %v1461 = vpop.permute.xlu0 %1460
        %1462 = vrot.lane.b32.xlu0 %v558, 60
        %v1463 = vpop.permute.xlu0 %1462
        %1464 = vrot.lane.b32.xlu0 %v560, 60
        %v1465 = vpop.permute.xlu0 %1464
        %1466 = vrot.lane.b32.xlu0 %v562, 60
        %v1467 = vpop.permute.xlu0 %1466
        %1468 = vrot.lane.b32.xlu0 %v564, 60
        %v1469 = vpop.permute.xlu0 %1468
        %1470 = vrot.lane.b32.xlu0 %v566, 60
        %v1471 = vpop.permute.xlu0 %1470
        %1472 = vrot.lane.b32.xlu0 %v568, 60
        %v1473 = vpop.permute.xlu0 %1472
        %1474 = vrot.lane.b32.xlu0 %v570, 60
        %v1475 = vpop.permute.xlu0 %1474
        %1476 = vrot.lane.b32.xlu0 %v572, 60
        %v1477 = vpop.permute.xlu0 %1476
        %1478 = vrot.lane.b32.xlu0 %v574, 60
        %v1479 = vpop.permute.xlu0 %1478
        %1480 = vrot.lane.b32.xlu0 %v576, 60
        %v1481 = vpop.permute.xlu0 %1480
        %1482 = vrot.lane.b32.xlu0 %v578, 60
        %v1483 = vpop.permute.xlu0 %1482
        %1484 = vrot.lane.b32.xlu0 %v580, 60
        %v1485 = vpop.permute.xlu0 %1484
        %1486 = vrot.lane.b32.xlu0 %v582, 60
        %v1487 = vpop.permute.xlu0 %1486
        %1488 = vrot.lane.b32.xlu0 %v584, 60
        %v1489 = vpop.permute.xlu0 %1488
        %1490 = vrot.lane.b32.xlu0 %v586, 60
        %v1491 = vpop.permute.xlu0 %1490
        %1492 = vrot.lane.b32.xlu0 %v588, 60
        %v1493 = vpop.permute.xlu0 %1492
        %1494 = vrot.lane.b32.xlu0 %v590, 60
        %v1495 = vpop.permute.xlu0 %1494
        %1496 = vrot.lane.b32.xlu0 %v592, 60
        %v1497 = vpop.permute.xlu0 %1496
        %v1532 = vsel %vm871, %v1425, 0
        %1534 = vmatprep.subr.mxu0 0.0
        %1535 = vmatpush1.msra.mxu0 %v1463
        %1536 = vmatprep.subr.mxu0 0.0
        %1537 = vmatpush1.msra.mxu0 %v1461
        %1538 = vmatprep.subr.mxu0 0.0
        %1539 = vmatpush1.msra.mxu0 %v1459
        %1540 = vmatprep.subr.mxu0 0.0
        %1541 = vmatpush1.msra.mxu0 %v1457
        %1542 = vmatprep.subr.mxu0 0.0
        %1543 = vmatpush1.msra.mxu0 %v1455
        %1544 = vmatprep.subr.mxu0 0.0
        %1545 = vmatpush1.msra.mxu0 %v1453
        %1546 = vmatprep.subr.mxu0 0.0
        %1547 = vmatpush1.msra.mxu0 %v1451
        %1548 = vmatprep.subr.mxu0 0.0
        %1549 = vmatpush1.msra.mxu0 %v1449
        %1550 = vmatprep.subr.mxu0 0.0
        %1551 = vmatpush1.msra.mxu0 %v1447
        %1552 = vmatprep.subr.mxu0 0.0
        %1553 = vmatpush1.msra.mxu0 %v1445
        %1554 = vmatprep.subr.mxu0 0.0
        %1555 = vmatpush1.msra.mxu0 %v1443
        %1556 = vmatprep.subr.mxu0 0.0
        %1557 = vmatpush1.msra.mxu0 %v1441
        %1558 = vmatprep.subr.mxu0 0.0
        %1559 = vmatpush1.msra.mxu0 %v1439
        %1560 = vmatprep.subr.mxu0 0.0
        %1561 = vmatpush1.msra.mxu0 %v1437
        %1562 = vmatprep.subr.mxu0 0.0
        %1563 = vmatpush1.msra.mxu0 %v1435
        %1564 = vmatprep.subr.mxu0 0.0
        %1565 = vmatpush1.msra.mxu0 %v1433
        %1566 = vmatprep.subr.mxu0 0.0
        %1567 = vmatpush2.msra.mxu0 %v1495
        %1568 = vmatprep.subr.mxu0 0.0
        %1569 = vmatpush2.msra.mxu0 %v1493
        %1570 = vmatprep.subr.mxu0 0.0
        %1571 = vmatpush2.msra.mxu0 %v1491
        %1572 = vmatprep.subr.mxu0 0.0
        %1573 = vmatpush2.msra.mxu0 %v1489
        %1574 = vmatprep.subr.mxu0 0.0
        %1575 = vmatpush2.msra.mxu0 %v1487
        %1576 = vmatprep.subr.mxu0 0.0
        %1577 = vmatpush2.msra.mxu0 %v1485
        %1578 = vmatprep.subr.mxu0 0.0
        %1579 = vmatpush2.msra.mxu0 %v1483
        %1580 = vmatprep.subr.mxu0 0.0
        %1581 = vmatpush2.msra.mxu0 %v1481
        %1582 = vmatprep.subr.mxu0 0.0
        %1583 = vmatpush2.msra.mxu0 %v1479
        %1584 = vmatprep.subr.mxu0 0.0
        %1585 = vmatpush2.msra.mxu0 %v1477
        %1586 = vmatprep.subr.mxu0 0.0
        %1587 = vmatpush2.msra.mxu0 %v1475
        %1588 = vmatprep.subr.mxu0 0.0
        %1589 = vmatpush2.msra.mxu0 %v1473
        %1590 = vmatprep.subr.mxu0 0.0
        %1591 = vmatpush2.msra.mxu0 %v1471
        %1592 = vmatprep.subr.mxu0 0.0
        %1593 = vmatpush2.msra.mxu0 %v1469
        %1594 = vmatprep.subr.mxu0 0.0
        %1595 = vmatpush2.msra.mxu0 %v1467
        %1596 = vmatprep.subr.mxu0 0.0
        %1597 = vmatpush2.msra.mxu0 %v1465
        %1598 = vmatprep.mubr.f32.mxu0 %v1423
        %1599 = vmatmul.mubr.f32.gmra.mxu0 %v1421
        %v1600 = vpop.f32.mrf.mxu0
        %v1601 = vadd.f32 0.0, %v1600
        %v1602 = vpop.f32.mrf.mxu0
        %1603 = vdwg.mxu0
        %1604 = vmatprep.subr.mxu0 0.0
        %1605 = vmatpush1.msra.mxu0 0.0
        %1606 = vmatprep.subr.mxu0 0.0
        %1607 = vmatpush1.msra.mxu0 0.0
        %1608 = vmatprep.subr.mxu0 0.0
        %1609 = vmatpush1.msra.mxu0 0.0
        %1610 = vmatprep.subr.mxu0 0.0
        %1611 = vmatpush1.msra.mxu0 0.0
        %1612 = vmatprep.subr.mxu0 0.0
        %1613 = vmatpush1.msra.mxu0 0.0
        %1614 = vmatprep.subr.mxu0 0.0
        %1615 = vmatpush1.msra.mxu0 0.0
        %1616 = vmatprep.subr.mxu0 0.0
        %1617 = vmatpush1.msra.mxu0 0.0
        %1618 = vmatprep.subr.mxu0 0.0
        %1619 = vmatpush1.msra.mxu0 0.0
        %1620 = vmatprep.subr.mxu0 0.0
        %1621 = vmatpush1.msra.mxu0 0.0
        %1622 = vmatprep.subr.mxu0 0.0
        %1623 = vmatpush1.msra.mxu0 0.0
        %1624 = vmatprep.subr.mxu0 0.0
        %1625 = vmatpush1.msra.mxu0 0.0
        %1626 = vmatprep.subr.mxu0 0.0
        %1627 = vmatpush1.msra.mxu0 0.0
        %1628 = vmatprep.subr.mxu0 0.0
        %1629 = vmatpush1.msra.mxu0 0.0
        %1630 = vmatprep.subr.mxu0 0.0
        %1631 = vmatpush1.msra.mxu0 0.0
        %1632 = vmatprep.subr.mxu0 0.0
        %1633 = vmatpush1.msra.mxu0 0.0
        %1634 = vmatprep.subr.mxu0 0.0
        %1635 = vmatpush1.msra.mxu0 %v1497
        %1636 = vmatprep.subr.mxu0 0.0
        %1637 = vmatpush2.msra.mxu0 0.0
        %1638 = vmatprep.subr.mxu0 0.0
        %1639 = vmatpush2.msra.mxu0 0.0
        %1640 = vmatprep.subr.mxu0 0.0
        %1641 = vmatpush2.msra.mxu0 0.0
        %1642 = vmatprep.subr.mxu0 0.0
        %1643 = vmatpush2.msra.mxu0 0.0
        %1644 = vmatprep.subr.mxu0 0.0
        %1645 = vmatpush2.msra.mxu0 0.0
        %1646 = vmatprep.subr.mxu0 0.0
        %1647 = vmatpush2.msra.mxu0 0.0
        %1648 = vmatprep.subr.mxu0 0.0
        %1649 = vmatpush2.msra.mxu0 0.0
        %1650 = vmatprep.subr.mxu0 0.0
        %1651 = vmatpush2.msra.mxu0 0.0
        %1652 = vmatprep.subr.mxu0 0.0
        %1653 = vmatpush2.msra.mxu0 0.0
        %1654 = vmatprep.subr.mxu0 0.0
        %1655 = vmatpush2.msra.mxu0 0.0
        %1656 = vmatprep.subr.mxu0 0.0
        %1657 = vmatpush2.msra.mxu0 0.0
        %1658 = vmatprep.subr.mxu0 0.0
        %1659 = vmatpush2.msra.mxu0 0.0
        %1660 = vmatprep.subr.mxu0 0.0
        %1661 = vmatpush2.msra.mxu0 0.0
        %1662 = vmatprep.subr.mxu0 0.0
        %1663 = vmatpush2.msra.mxu0 0.0
        %1664 = vmatprep.subr.mxu0 0.0
        %1665 = vmatpush2.msra.mxu0 0.0
        %1666 = vmatprep.subr.mxu0 0.0
        %1667 = vmatpush2.msra.mxu0 0.0
        %1668 = vmatprep.mubr.f32.mxu0 0.0
        %1669 = vmatmul.mubr.f32.gmra.mxu0 %v1532
        %v1670 = vpop.f32.mrf.mxu0
        %v1671 = vadd.f32 %v1601, %v1670
        %v1672 = vpop.f32.mrf.mxu0
        %1673 = vdwg.mxu0
        %v1674 = vmul.f32 %v1671, %v1431
        %1675 = vrot.lane.b32.xlu0 %v326, 120
        %v1676 = vpop.permute.xlu0 %1675
        %1677 = vrot.lane.b32.xlu0 %v323, 88
        %v1678 = vpop.permute.xlu0 %1677
        %1679 = vrot.lane.b32.xlu0 %v434, 88
        %v1680 = vpop.permute.xlu0 %1679
        %1681 = vrot.lane.b32.xlu0 %v436, 88
        %v1682 = vpop.permute.xlu0 %1681
        %1683 = vrot.lane.b32.xlu0 %v438, 88
        %v1684 = vpop.permute.xlu0 %1683
        %1685 = vrot.lane.b32.xlu0 %v440, 88
        %v1686 = vpop.permute.xlu0 %1685
        %1687 = vrot.lane.b32.xlu0 %v442, 88
        %v1688 = vpop.permute.xlu0 %1687
        %1689 = vrot.lane.b32.xlu0 %v444, 88
        %v1690 = vpop.permute.xlu0 %1689
        %1691 = vrot.lane.b32.xlu0 %v446, 88
        %v1692 = vpop.permute.xlu0 %1691
        %1693 = vrot.lane.b32.xlu0 %v448, 88
        %v1694 = vpop.permute.xlu0 %1693
        %1695 = vrot.lane.b32.xlu0 %v450, 88
        %v1696 = vpop.permute.xlu0 %1695
        %1697 = vrot.lane.b32.xlu0 %v452, 88
        %v1698 = vpop.permute.xlu0 %1697
        %1699 = vrot.lane.b32.xlu0 %v454, 88
        %v1700 = vpop.permute.xlu0 %1699
        %1701 = vrot.lane.b32.xlu0 %v456, 88
        %v1702 = vpop.permute.xlu0 %1701
        %1703 = vrot.lane.b32.xlu0 %v458, 88
        %v1704 = vpop.permute.xlu0 %1703
        %1705 = vrot.lane.b32.xlu0 %v460, 88
        %v1706 = vpop.permute.xlu0 %1705
        %1707 = vrot.lane.b32.xlu0 %v462, 88
        %v1708 = vpop.permute.xlu0 %1707
        %1709 = vrot.lane.b32.xlu0 %v464, 88
        %v1710 = vpop.permute.xlu0 %1709
        %1711 = vrot.lane.b32.xlu0 %v466, 88
        %v1712 = vpop.permute.xlu0 %1711
        %1713 = vrot.lane.b32.xlu0 %v468, 88
        %v1714 = vpop.permute.xlu0 %1713
        %1715 = vrot.lane.b32.xlu0 %v470, 88
        %v1716 = vpop.permute.xlu0 %1715
        %1717 = vrot.lane.b32.xlu0 %v472, 88
        %v1718 = vpop.permute.xlu0 %1717
        %1719 = vrot.lane.b32.xlu0 %v474, 88
        %v1720 = vpop.permute.xlu0 %1719
        %1721 = vrot.lane.b32.xlu0 %v476, 88
        %v1722 = vpop.permute.xlu0 %1721
        %1723 = vrot.lane.b32.xlu0 %v478, 88
        %v1724 = vpop.permute.xlu0 %1723
        %1725 = vrot.lane.b32.xlu0 %v480, 88
        %v1726 = vpop.permute.xlu0 %1725
        %1727 = vrot.lane.b32.xlu0 %v482, 88
        %v1728 = vpop.permute.xlu0 %1727
        %1729 = vrot.lane.b32.xlu0 %v484, 88
        %v1730 = vpop.permute.xlu0 %1729
        %1731 = vrot.lane.b32.xlu0 %v486, 88
        %v1732 = vpop.permute.xlu0 %1731
        %1733 = vrot.lane.b32.xlu0 %v488, 88
        %v1734 = vpop.permute.xlu0 %1733
        %1735 = vrot.lane.b32.xlu0 %v490, 88
        %v1736 = vpop.permute.xlu0 %1735
        %1737 = vrot.lane.b32.xlu0 %v492, 88
        %v1738 = vpop.permute.xlu0 %1737
        %1739 = vrot.lane.b32.xlu0 %v494, 88
        %v1740 = vpop.permute.xlu0 %1739
        %1741 = vrot.lane.b32.xlu0 %v496, 88
        %v1742 = vpop.permute.xlu0 %1741
        %v1743 = vsel %vm660, %v1676, 0
        %v1745 = vsel %vm660, %v1678, 0
        %v1747 = vsel %vm660, %v1680, 0
        %v1749 = vsel %vm660, %v1682, 0
        %v1751 = vsel %vm660, %v1684, 0
        %v1753 = vsel %vm660, %v1686, 0
        %v1755 = vsel %vm660, %v1688, 0
        %v1757 = vsel %vm660, %v1690, 0
        %v1759 = vsel %vm660, %v1692, 0
        %v1761 = vsel %vm660, %v1694, 0
        %v1763 = vsel %vm660, %v1696, 0
        %v1765 = vsel %vm660, %v1698, 0
        %v1767 = vsel %vm660, %v1700, 0
        %v1769 = vsel %vm660, %v1702, 0
        %v1771 = vsel %vm660, %v1704, 0
        %v1773 = vsel %vm660, %v1706, 0
        %v1775 = vsel %vm660, %v1708, 0
        %v1777 = vsel %vm660, %v1710, 0
        %v1779 = vsel %vm660, %v1712, 0
        %v1781 = vsel %vm660, %v1714, 0
        %v1783 = vsel %vm660, %v1716, 0
        %v1785 = vsel %vm660, %v1718, 0
        %v1787 = vsel %vm660, %v1720, 0
        %v1789 = vsel %vm660, %v1722, 0
        %v1791 = vsel %vm660, %v1724, 0
        %v1793 = vsel %vm660, %v1726, 0
        %v1795 = vsel %vm660, %v1728, 0
        %v1797 = vsel %vm660, %v1730, 0
        %v1799 = vsel %vm660, %v1732, 0
        %v1801 = vsel %vm660, %v1734, 0
        %v1803 = vsel %vm660, %v1736, 0
        %v1805 = vsel %vm660, %v1738, 0
        %v1807 = vsel %vm660, %v1740, 0
        %v1809 = vsel %vm660, %v1742, 0
        %1811 = vmatprep.subr.mxu0 0.0
        %1812 = vmatpush1.xpose.msra.mxu0 %v1775
        %1813 = vmatprep.subr.mxu0 0.0
        %1814 = vmatpush1.xpose.msra.mxu0 %v1773
        %1815 = vmatprep.subr.mxu0 0.0
        %1816 = vmatpush1.xpose.msra.mxu0 %v1771
        %1817 = vmatprep.subr.mxu0 0.0
        %1818 = vmatpush1.xpose.msra.mxu0 %v1769
        %1819 = vmatprep.subr.mxu0 0.0
        %1820 = vmatpush1.xpose.msra.mxu0 %v1767
        %1821 = vmatprep.subr.mxu0 0.0
        %1822 = vmatpush1.xpose.msra.mxu0 %v1765
        %1823 = vmatprep.subr.mxu0 0.0
        %1824 = vmatpush1.xpose.msra.mxu0 %v1763
        %1825 = vmatprep.subr.mxu0 0.0
        %1826 = vmatpush1.xpose.msra.mxu0 %v1761
        %1827 = vmatprep.subr.mxu0 0.0
        %1828 = vmatpush1.xpose.msra.mxu0 %v1759
        %1829 = vmatprep.subr.mxu0 0.0
        %1830 = vmatpush1.xpose.msra.mxu0 %v1757
        %1831 = vmatprep.subr.mxu0 0.0
        %1832 = vmatpush1.xpose.msra.mxu0 %v1755
        %1833 = vmatprep.subr.mxu0 0.0
        %1834 = vmatpush1.xpose.msra.mxu0 %v1753
        %1835 = vmatprep.subr.mxu0 0.0
        %1836 = vmatpush1.xpose.msra.mxu0 %v1751
        %1837 = vmatprep.subr.mxu0 0.0
        %1838 = vmatpush1.xpose.msra.mxu0 %v1749
        %1839 = vmatprep.subr.mxu0 0.0
        %1840 = vmatpush1.xpose.msra.mxu0 %v1747
        %1841 = vmatprep.subr.mxu0 0.0
        %1842 = vmatpush1.xpose.msra.mxu0 %v1745
        %1843 = vmatprep.subr.mxu0 0.0
        %1844 = vmatpush2.xpose.msra.mxu0 %v1807
        %1845 = vmatprep.subr.mxu0 0.0
        %1846 = vmatpush2.xpose.msra.mxu0 %v1805
        %1847 = vmatprep.subr.mxu0 0.0
        %1848 = vmatpush2.xpose.msra.mxu0 %v1803
        %1849 = vmatprep.subr.mxu0 0.0
        %1850 = vmatpush2.xpose.msra.mxu0 %v1801
        %1851 = vmatprep.subr.mxu0 0.0
        %1852 = vmatpush2.xpose.msra.mxu0 %v1799
        %1853 = vmatprep.subr.mxu0 0.0
        %1854 = vmatpush2.xpose.msra.mxu0 %v1797
        %1855 = vmatprep.subr.mxu0 0.0
        %1856 = vmatpush2.xpose.msra.mxu0 %v1795
        %1857 = vmatprep.subr.mxu0 0.0
        %1858 = vmatpush2.xpose.msra.mxu0 %v1793
        %1859 = vmatprep.subr.mxu0 0.0
        %1860 = vmatpush2.xpose.msra.mxu0 %v1791
        %1861 = vmatprep.subr.mxu0 0.0
        %1862 = vmatpush2.xpose.msra.mxu0 %v1789
        %1863 = vmatprep.subr.mxu0 0.0
        %1864 = vmatpush2.xpose.msra.mxu0 %v1787
        %1865 = vmatprep.subr.mxu0 0.0
        %1866 = vmatpush2.xpose.msra.mxu0 %v1785
        %1867 = vmatprep.subr.mxu0 0.0
        %1868 = vmatpush2.xpose.msra.mxu0 %v1783
        %1869 = vmatprep.subr.mxu0 0.0
        %1870 = vmatpush2.xpose.msra.mxu0 %v1781
        %1871 = vmatprep.subr.mxu0 0.0
        %1872 = vmatpush2.xpose.msra.mxu0 %v1779
        %1873 = vmatprep.subr.mxu0 0.0
        %1874 = vmatpush2.xpose.msra.mxu0 %v1777
        %1875 = vmatprep.mubr.f32.mxu0 0.0
        %1876 = vmatmul.mubr.f32.gmra.mxu0 %v1743
        %v1877 = vpop.f32.mrf.mxu0
        %v1878 = vadd.f32 %v398, %v1877
        %v1879 = vpop.f32.mrf.mxu0
        %v1880 = vadd.f32 %v399, %v1879
        %1881 = vdwg.mxu0
        %1882 = vmatprep.subr.mxu0 0.0
        %1883 = vmatpush1.xpose.msra.mxu0 0.0
        %1884 = vmatprep.subr.mxu0 0.0
        %1885 = vmatpush1.xpose.msra.mxu0 0.0
        %1886 = vmatprep.subr.mxu0 0.0
        %1887 = vmatpush1.xpose.msra.mxu0 0.0
        %1888 = vmatprep.subr.mxu0 0.0
        %1889 = vmatpush1.xpose.msra.mxu0 0.0
        %1890 = vmatprep.subr.mxu0 0.0
        %1891 = vmatpush1.xpose.msra.mxu0 0.0
        %1892 = vmatprep.subr.mxu0 0.0
        %1893 = vmatpush1.xpose.msra.mxu0 0.0
        %1894 = vmatprep.subr.mxu0 0.0
        %1895 = vmatpush1.xpose.msra.mxu0 0.0
        %1896 = vmatprep.subr.mxu0 0.0
        %1897 = vmatpush1.xpose.msra.mxu0 0.0
        %1898 = vmatprep.subr.mxu0 0.0
        %1899 = vmatpush1.xpose.msra.mxu0 0.0
        %1900 = vmatprep.subr.mxu0 0.0
        %1901 = vmatpush1.xpose.msra.mxu0 0.0
        %1902 = vmatprep.subr.mxu0 0.0
        %1903 = vmatpush1.xpose.msra.mxu0 0.0
        %1904 = vmatprep.subr.mxu0 0.0
        %1905 = vmatpush1.xpose.msra.mxu0 0.0
        %1906 = vmatprep.subr.mxu0 0.0
        %1907 = vmatpush1.xpose.msra.mxu0 0.0
        %1908 = vmatprep.subr.mxu0 0.0
        %1909 = vmatpush1.xpose.msra.mxu0 0.0
        %1910 = vmatprep.subr.mxu0 0.0
        %1911 = vmatpush1.xpose.msra.mxu0 0.0
        %1912 = vmatprep.subr.mxu0 0.0
        %1913 = vmatpush1.xpose.msra.mxu0 %v1809
        %1914 = vmatprep.subr.mxu0 0.0
        %1915 = vmatpush2.xpose.msra.mxu0 0.0
        %1916 = vmatprep.subr.mxu0 0.0
        %1917 = vmatpush2.xpose.msra.mxu0 0.0
        %1918 = vmatprep.subr.mxu0 0.0
        %1919 = vmatpush2.xpose.msra.mxu0 0.0
        %1920 = vmatprep.subr.mxu0 0.0
        %1921 = vmatpush2.xpose.msra.mxu0 0.0
        %1922 = vmatprep.subr.mxu0 0.0
        %1923 = vmatpush2.xpose.msra.mxu0 0.0
        %1924 = vmatprep.subr.mxu0 0.0
        %1925 = vmatpush2.xpose.msra.mxu0 0.0
        %1926 = vmatprep.subr.mxu0 0.0
        %1927 = vmatpush2.xpose.msra.mxu0 0.0
        %1928 = vmatprep.subr.mxu0 0.0
        %1929 = vmatpush2.xpose.msra.mxu0 0.0
        %1930 = vmatprep.subr.mxu0 0.0
        %1931 = vmatpush2.xpose.msra.mxu0 0.0
        %1932 = vmatprep.subr.mxu0 0.0
        %1933 = vmatpush2.xpose.msra.mxu0 0.0
        %1934 = vmatprep.subr.mxu0 0.0
        %1935 = vmatpush2.xpose.msra.mxu0 0.0
        %1936 = vmatprep.subr.mxu0 0.0
        %1937 = vmatpush2.xpose.msra.mxu0 0.0
        %1938 = vmatprep.subr.mxu0 0.0
        %1939 = vmatpush2.xpose.msra.mxu0 0.0
        %1940 = vmatprep.subr.mxu0 0.0
        %1941 = vmatpush2.xpose.msra.mxu0 0.0
        %1942 = vmatprep.subr.mxu0 0.0
        %1943 = vmatpush2.xpose.msra.mxu0 0.0
        %1944 = vmatprep.subr.mxu0 0.0
        %1945 = vmatpush2.xpose.msra.mxu0 0.0
        %1946 = vmatprep.mubr.f32.mxu0 0.0
        %1947 = vmatmul.mubr.f32.gmra.mxu0 %v1743
        %v1948 = vpop.f32.mrf.mxu0
        %v1949 = vadd.f32 %v400, %v1948
        %v1950 = vpop.f32.mrf.mxu0
        %1951 = vdwg.mxu0
        %v1952 = vsel %vm871, %v1949, -inf
        %v1953 = vmax.f32 %v1878, %v1880
        %v1954 = vmax.f32 %v1953, %v1952
        %1955 = vmax.xlane.f32.xlu0 %v1954
        %v1956 = vpop.xlane.xlu0 %1955
        %v1957 = vsub.f32 %v1878, %v1956
        %v1958 = vsub.f32 %v1880, %v1956
        %v1959 = vsub.f32 %v1949, %v1956
        %v1960 = vmul.f32 %v1957, 1.442695
        %v1961 = vpow.pop %v1960
        %v1962 = vmul.f32 %v1958, 1.442695
        %v1963 = vpow.pop %v1962
        %v1964 = vmul.f32 %v1959, 1.442695
        %v1965 = vpow.pop %v1964
        %v1966 = vadd.f32 %v1961, %v1963
        %v1967 = vsel %vm871, %v1965, 0.0
        %v1968 = vadd.f32 %v1966, %v1967
        %1969 = vadd.xlane.f32.xlu0 %v1968
        %v1970 = vpop.xlane.xlu0 %1969
        %v1971 = vrcp.pop %v1970
        %1972 = vrot.lane.b32.xlu0 %v323, 56
        %v1973 = vpop.permute.xlu0 %1972
        %1974 = vrot.lane.b32.xlu0 %v530, 56
        %v1975 = vpop.permute.xlu0 %1974
        %1976 = vrot.lane.b32.xlu0 %v532, 56
        %v1977 = vpop.permute.xlu0 %1976
        %1978 = vrot.lane.b32.xlu0 %v534, 56
        %v1979 = vpop.permute.xlu0 %1978
        %1980 = vrot.lane.b32.xlu0 %v536, 56
        %v1981 = vpop.permute.xlu0 %1980
        %1982 = vrot.lane.b32.xlu0 %v538, 56
        %v1983 = vpop.permute.xlu0 %1982
        %1984 = vrot.lane.b32.xlu0 %v540, 56
        %v1985 = vpop.permute.xlu0 %1984
        %1986 = vrot.lane.b32.xlu0 %v542, 56
        %v1987 = vpop.permute.xlu0 %1986
        %1988 = vrot.lane.b32.xlu0 %v544, 56
        %v1989 = vpop.permute.xlu0 %1988
        %1990 = vrot.lane.b32.xlu0 %v546, 56
        %v1991 = vpop.permute.xlu0 %1990
        %1992 = vrot.lane.b32.xlu0 %v548, 56
        %v1993 = vpop.permute.xlu0 %1992
        %1994 = vrot.lane.b32.xlu0 %v550, 56
        %v1995 = vpop.permute.xlu0 %1994
        %1996 = vrot.lane.b32.xlu0 %v552, 56
        %v1997 = vpop.permute.xlu0 %1996
        %1998 = vrot.lane.b32.xlu0 %v554, 56
        %v1999 = vpop.permute.xlu0 %1998
        %2000 = vrot.lane.b32.xlu0 %v556, 56
        %v2001 = vpop.permute.xlu0 %2000
        %2002 = vrot.lane.b32.xlu0 %v558, 56
        %v2003 = vpop.permute.xlu0 %2002
        %2004 = vrot.lane.b32.xlu0 %v560, 56
        %v2005 = vpop.permute.xlu0 %2004
        %2006 = vrot.lane.b32.xlu0 %v562, 56
        %v2007 = vpop.permute.xlu0 %2006
        %2008 = vrot.lane.b32.xlu0 %v564, 56
        %v2009 = vpop.permute.xlu0 %2008
        %2010 = vrot.lane.b32.xlu0 %v566, 56
        %v2011 = vpop.permute.xlu0 %2010
        %2012 = vrot.lane.b32.xlu0 %v568, 56
        %v2013 = vpop.permute.xlu0 %2012
        %2014 = vrot.lane.b32.xlu0 %v570, 56
        %v2015 = vpop.permute.xlu0 %2014
        %2016 = vrot.lane.b32.xlu0 %v572, 56
        %v2017 = vpop.permute.xlu0 %2016
        %2018 = vrot.lane.b32.xlu0 %v574, 56
        %v2019 = vpop.permute.xlu0 %2018
        %2020 = vrot.lane.b32.xlu0 %v576, 56
        %v2021 = vpop.permute.xlu0 %2020
        %2022 = vrot.lane.b32.xlu0 %v578, 56
        %v2023 = vpop.permute.xlu0 %2022
        %2024 = vrot.lane.b32.xlu0 %v580, 56
        %v2025 = vpop.permute.xlu0 %2024
        %2026 = vrot.lane.b32.xlu0 %v582, 56
        %v2027 = vpop.permute.xlu0 %2026
        %2028 = vrot.lane.b32.xlu0 %v584, 56
        %v2029 = vpop.permute.xlu0 %2028
        %2030 = vrot.lane.b32.xlu0 %v586, 56
        %v2031 = vpop.permute.xlu0 %2030
        %2032 = vrot.lane.b32.xlu0 %v588, 56
        %v2033 = vpop.permute.xlu0 %2032
        %2034 = vrot.lane.b32.xlu0 %v590, 56
        %v2035 = vpop.permute.xlu0 %2034
        %2036 = vrot.lane.b32.xlu0 %v592, 56
        %v2037 = vpop.permute.xlu0 %2036
        %v2072 = vsel %vm871, %v1965, 0
        %2074 = vmatprep.subr.mxu0 0.0
        %2075 = vmatpush1.msra.mxu0 %v2003
        %2076 = vmatprep.subr.mxu0 0.0
        %2077 = vmatpush1.msra.mxu0 %v2001
        %2078 = vmatprep.subr.mxu0 0.0
        %2079 = vmatpush1.msra.mxu0 %v1999
        %2080 = vmatprep.subr.mxu0 0.0
        %2081 = vmatpush1.msra.mxu0 %v1997
        %2082 = vmatprep.subr.mxu0 0.0
        %2083 = vmatpush1.msra.mxu0 %v1995
        %2084 = vmatprep.subr.mxu0 0.0
        %2085 = vmatpush1.msra.mxu0 %v1993
        %2086 = vmatprep.subr.mxu0 0.0
        %2087 = vmatpush1.msra.mxu0 %v1991
        %2088 = vmatprep.subr.mxu0 0.0
        %2089 = vmatpush1.msra.mxu0 %v1989
        %2090 = vmatprep.subr.mxu0 0.0
        %2091 = vmatpush1.msra.mxu0 %v1987
        %2092 = vmatprep.subr.mxu0 0.0
        %2093 = vmatpush1.msra.mxu0 %v1985
        %2094 = vmatprep.subr.mxu0 0.0
        %2095 = vmatpush1.msra.mxu0 %v1983
        %2096 = vmatprep.subr.mxu0 0.0
        %2097 = vmatpush1.msra.mxu0 %v1981
        %2098 = vmatprep.subr.mxu0 0.0
        %2099 = vmatpush1.msra.mxu0 %v1979
        %2100 = vmatprep.subr.mxu0 0.0
        %2101 = vmatpush1.msra.mxu0 %v1977
        %2102 = vmatprep.subr.mxu0 0.0
        %2103 = vmatpush1.msra.mxu0 %v1975
        %2104 = vmatprep.subr.mxu0 0.0
        %2105 = vmatpush1.msra.mxu0 %v1973
        %2106 = vmatprep.subr.mxu0 0.0
        %2107 = vmatpush2.msra.mxu0 %v2035
        %2108 = vmatprep.subr.mxu0 0.0
        %2109 = vmatpush2.msra.mxu0 %v2033
        %2110 = vmatprep.subr.mxu0 0.0
        %2111 = vmatpush2.msra.mxu0 %v2031
        %2112 = vmatprep.subr.mxu0 0.0
        %2113 = vmatpush2.msra.mxu0 %v2029
        %2114 = vmatprep.subr.mxu0 0.0
        %2115 = vmatpush2.msra.mxu0 %v2027
        %2116 = vmatprep.subr.mxu0 0.0
        %2117 = vmatpush2.msra.mxu0 %v2025
        %2118 = vmatprep.subr.mxu0 0.0
        %2119 = vmatpush2.msra.mxu0 %v2023
        %2120 = vmatprep.subr.mxu0 0.0
        %2121 = vmatpush2.msra.mxu0 %v2021
        %2122 = vmatprep.subr.mxu0 0.0
        %2123 = vmatpush2.msra.mxu0 %v2019
        %2124 = vmatprep.subr.mxu0 0.0
        %2125 = vmatpush2.msra.mxu0 %v2017
        %2126 = vmatprep.subr.mxu0 0.0
        %2127 = vmatpush2.msra.mxu0 %v2015
        %2128 = vmatprep.subr.mxu0 0.0
        %2129 = vmatpush2.msra.mxu0 %v2013
        %2130 = vmatprep.subr.mxu0 0.0
        %2131 = vmatpush2.msra.mxu0 %v2011
        %2132 = vmatprep.subr.mxu0 0.0
        %2133 = vmatpush2.msra.mxu0 %v2009
        %2134 = vmatprep.subr.mxu0 0.0
        %2135 = vmatpush2.msra.mxu0 %v2007
        %2136 = vmatprep.subr.mxu0 0.0
        %2137 = vmatpush2.msra.mxu0 %v2005
        %2138 = vmatprep.mubr.f32.mxu0 %v1963
        %2139 = vmatmul.mubr.f32.gmra.mxu0 %v1961
        %v2140 = vpop.f32.mrf.mxu0
        %v2141 = vadd.f32 0.0, %v2140
        %v2142 = vpop.f32.mrf.mxu0
        %2143 = vdwg.mxu0
        %2144 = vmatprep.subr.mxu0 0.0
        %2145 = vmatpush1.msra.mxu0 0.0
        %2146 = vmatprep.subr.mxu0 0.0
        %2147 = vmatpush1.msra.mxu0 0.0
        %2148 = vmatprep.subr.mxu0 0.0
        %2149 = vmatpush1.msra.mxu0 0.0
        %2150 = vmatprep.subr.mxu0 0.0
        %2151 = vmatpush1.msra.mxu0 0.0
        %2152 = vmatprep.subr.mxu0 0.0
        %2153 = vmatpush1.msra.mxu0 0.0
        %2154 = vmatprep.subr.mxu0 0.0
        %2155 = vmatpush1.msra.mxu0 0.0
        %2156 = vmatprep.subr.mxu0 0.0
        %2157 = vmatpush1.msra.mxu0 0.0
        %2158 = vmatprep.subr.mxu0 0.0
        %2159 = vmatpush1.msra.mxu0 0.0
        %2160 = vmatprep.subr.mxu0 0.0
        %2161 = vmatpush1.msra.mxu0 0.0
        %2162 = vmatprep.subr.mxu0 0.0
        %2163 = vmatpush1.msra.mxu0 0.0
        %2164 = vmatprep.subr.mxu0 0.0
        %2165 = vmatpush1.msra.mxu0 0.0
        %2166 = vmatprep.subr.mxu0 0.0
        %2167 = vmatpush1.msra.mxu0 0.0
        %2168 = vmatprep.subr.mxu0 0.0
        %2169 = vmatpush1.msra.mxu0 0.0
        %2170 = vmatprep.subr.mxu0 0.0
        %2171 = vmatpush1.msra.mxu0 0.0
        %2172 = vmatprep.subr.mxu0 0.0
        %2173 = vmatpush1.msra.mxu0 0.0
        %2174 = vmatprep.subr.mxu0 0.0
        %2175 = vmatpush1.msra.mxu0 %v2037
        %2176 = vmatprep.subr.mxu0 0.0
        %2177 = vmatpush2.msra.mxu0 0.0
        %2178 = vmatprep.subr.mxu0 0.0
        %2179 = vmatpush2.msra.mxu0 0.0
        %2180 = vmatprep.subr.mxu0 0.0
        %2181 = vmatpush2.msra.mxu0 0.0
        %2182 = vmatprep.subr.mxu0 0.0
        %2183 = vmatpush2.msra.mxu0 0.0
        %2184 = vmatprep.subr.mxu0 0.0
        %2185 = vmatpush2.msra.mxu0 0.0
        %2186 = vmatprep.subr.mxu0 0.0
        %2187 = vmatpush2.msra.mxu0 0.0
        %2188 = vmatprep.subr.mxu0 0.0
        %2189 = vmatpush2.msra.mxu0 0.0
        %2190 = vmatprep.subr.mxu0 0.0
        %2191 = vmatpush2.msra.mxu0 0.0
        %2192 = vmatprep.subr.mxu0 0.0
        %2193 = vmatpush2.msra.mxu0 0.0
        %2194 = vmatprep.subr.mxu0 0.0
        %2195 = vmatpush2.msra.mxu0 0.0
        %2196 = vmatprep.subr.mxu0 0.0
        %2197 = vmatpush2.msra.mxu0 0.0
        %2198 = vmatprep.subr.mxu0 0.0
        %2199 = vmatpush2.msra.mxu0 0.0
        %2200 = vmatprep.subr.mxu0 0.0
        %2201 = vmatpush2.msra.mxu0 0.0
        %2202 = vmatprep.subr.mxu0 0.0
        %2203 = vmatpush2.msra.mxu0 0.0
        %2204 = vmatprep.subr.mxu0 0.0
        %2205 = vmatpush2.msra.mxu0 0.0
        %2206 = vmatprep.subr.mxu0 0.0
        %2207 = vmatpush2.msra.mxu0 0.0
        %2208 = vmatprep.mubr.f32.mxu0 0.0
        %2209 = vmatmul.mubr.f32.gmra.mxu0 %v2072
        %v2210 = vpop.f32.mrf.mxu0
        %v2211 = vadd.f32 %v2141, %v2210
        %v2212 = vpop.f32.mrf.mxu0
        %2213 = vdwg.mxu0
        %v2214 = vmul.f32 %v2211, %v1971
        %2215 = vrot.lane.b32.xlu0 %v326, 116
        %v2216 = vpop.permute.xlu0 %2215
        %2217 = vrot.lane.b32.xlu0 %v323, 84
        %v2218 = vpop.permute.xlu0 %2217
        %2219 = vrot.lane.b32.xlu0 %v434, 84
        %v2220 = vpop.permute.xlu0 %2219
        %2221 = vrot.lane.b32.xlu0 %v436, 84
        %v2222 = vpop.permute.xlu0 %2221
        %2223 = vrot.lane.b32.xlu0 %v438, 84
        %v2224 = vpop.permute.xlu0 %2223
        %2225 = vrot.lane.b32.xlu0 %v440, 84
        %v2226 = vpop.permute.xlu0 %2225
        %2227 = vrot.lane.b32.xlu0 %v442, 84
        %v2228 = vpop.permute.xlu0 %2227
        %2229 = vrot.lane.b32.xlu0 %v444, 84
        %v2230 = vpop.permute.xlu0 %2229
        %2231 = vrot.lane.b32.xlu0 %v446, 84
        %v2232 = vpop.permute.xlu0 %2231
        %2233 = vrot.lane.b32.xlu0 %v448, 84
        %v2234 = vpop.permute.xlu0 %2233
        %2235 = vrot.lane.b32.xlu0 %v450, 84
        %v2236 = vpop.permute.xlu0 %2235
        %2237 = vrot.lane.b32.xlu0 %v452, 84
        %v2238 = vpop.permute.xlu0 %2237
        %2239 = vrot.lane.b32.xlu0 %v454, 84
        %v2240 = vpop.permute.xlu0 %2239
        %2241 = vrot.lane.b32.xlu0 %v456, 84
        %v2242 = vpop.permute.xlu0 %2241
        %2243 = vrot.lane.b32.xlu0 %v458, 84
        %v2244 = vpop.permute.xlu0 %2243
        %2245 = vrot.lane.b32.xlu0 %v460, 84
        %v2246 = vpop.permute.xlu0 %2245
        %2247 = vrot.lane.b32.xlu0 %v462, 84
        %v2248 = vpop.permute.xlu0 %2247
        %2249 = vrot.lane.b32.xlu0 %v464, 84
        %v2250 = vpop.permute.xlu0 %2249
        %2251 = vrot.lane.b32.xlu0 %v466, 84
        %v2252 = vpop.permute.xlu0 %2251
        %2253 = vrot.lane.b32.xlu0 %v468, 84
        %v2254 = vpop.permute.xlu0 %2253
        %2255 = vrot.lane.b32.xlu0 %v470, 84
        %v2256 = vpop.permute.xlu0 %2255
        %2257 = vrot.lane.b32.xlu0 %v472, 84
        %v2258 = vpop.permute.xlu0 %2257
        %2259 = vrot.lane.b32.xlu0 %v474, 84
        %v2260 = vpop.permute.xlu0 %2259
        %2261 = vrot.lane.b32.xlu0 %v476, 84
        %v2262 = vpop.permute.xlu0 %2261
        %2263 = vrot.lane.b32.xlu0 %v478, 84
        %v2264 = vpop.permute.xlu0 %2263
        %2265 = vrot.lane.b32.xlu0 %v480, 84
        %v2266 = vpop.permute.xlu0 %2265
        %2267 = vrot.lane.b32.xlu0 %v482, 84
        %v2268 = vpop.permute.xlu0 %2267
        %2269 = vrot.lane.b32.xlu0 %v484, 84
        %v2270 = vpop.permute.xlu0 %2269
        %2271 = vrot.lane.b32.xlu0 %v486, 84
        %v2272 = vpop.permute.xlu0 %2271
        %2273 = vrot.lane.b32.xlu0 %v488, 84
        %v2274 = vpop.permute.xlu0 %2273
        %2275 = vrot.lane.b32.xlu0 %v490, 84
        %v2276 = vpop.permute.xlu0 %2275
        %2277 = vrot.lane.b32.xlu0 %v492, 84
        %v2278 = vpop.permute.xlu0 %2277
        %2279 = vrot.lane.b32.xlu0 %v494, 84
        %v2280 = vpop.permute.xlu0 %2279
        %2281 = vrot.lane.b32.xlu0 %v496, 84
        %v2282 = vpop.permute.xlu0 %2281
        %v2283 = vsel %vm660, %v2216, 0
        %v2285 = vsel %vm660, %v2218, 0
        %v2287 = vsel %vm660, %v2220, 0
        %v2289 = vsel %vm660, %v2222, 0
        %v2291 = vsel %vm660, %v2224, 0
        %v2293 = vsel %vm660, %v2226, 0
        %v2295 = vsel %vm660, %v2228, 0
        %v2297 = vsel %vm660, %v2230, 0
        %v2299 = vsel %vm660, %v2232, 0
        %v2301 = vsel %vm660, %v2234, 0
        %v2303 = vsel %vm660, %v2236, 0
        %v2305 = vsel %vm660, %v2238, 0
        %v2307 = vsel %vm660, %v2240, 0
        %v2309 = vsel %vm660, %v2242, 0
        %v2311 = vsel %vm660, %v2244, 0
        %v2313 = vsel %vm660, %v2246, 0
        %v2315 = vsel %vm660, %v2248, 0
        %v2317 = vsel %vm660, %v2250, 0
        %v2319 = vsel %vm660, %v2252, 0
        %v2321 = vsel %vm660, %v2254, 0
        %v2323 = vsel %vm660, %v2256, 0
        %v2325 = vsel %vm660, %v2258, 0
        %v2327 = vsel %vm660, %v2260, 0
        %v2329 = vsel %vm660, %v2262, 0
        %v2331 = vsel %vm660, %v2264, 0
        %v2333 = vsel %vm660, %v2266, 0
        %v2335 = vsel %vm660, %v2268, 0
        %v2337 = vsel %vm660, %v2270, 0
        %v2339 = vsel %vm660, %v2272, 0
        %v2341 = vsel %vm660, %v2274, 0
        %v2343 = vsel %vm660, %v2276, 0
        %v2345 = vsel %vm660, %v2278, 0
        %v2347 = vsel %vm660, %v2280, 0
        %v2349 = vsel %vm660, %v2282, 0
        %2351 = vmatprep.subr.mxu0 0.0
        %2352 = vmatpush1.xpose.msra.mxu0 %v2315
        %2353 = vmatprep.subr.mxu0 0.0
        %2354 = vmatpush1.xpose.msra.mxu0 %v2313
        %2355 = vmatprep.subr.mxu0 0.0
        %2356 = vmatpush1.xpose.msra.mxu0 %v2311
        %2357 = vmatprep.subr.mxu0 0.0
        %2358 = vmatpush1.xpose.msra.mxu0 %v2309
        %2359 = vmatprep.subr.mxu0 0.0
        %2360 = vmatpush1.xpose.msra.mxu0 %v2307
        %2361 = vmatprep.subr.mxu0 0.0
        %2362 = vmatpush1.xpose.msra.mxu0 %v2305
        %2363 = vmatprep.subr.mxu0 0.0
        %2364 = vmatpush1.xpose.msra.mxu0 %v2303
        %2365 = vmatprep.subr.mxu0 0.0
        %2366 = vmatpush1.xpose.msra.mxu0 %v2301
        %2367 = vmatprep.subr.mxu0 0.0
        %2368 = vmatpush1.xpose.msra.mxu0 %v2299
        %2369 = vmatprep.subr.mxu0 0.0
        %2370 = vmatpush1.xpose.msra.mxu0 %v2297
        %2371 = vmatprep.subr.mxu0 0.0
        %2372 = vmatpush1.xpose.msra.mxu0 %v2295
        %2373 = vmatprep.subr.mxu0 0.0
        %2374 = vmatpush1.xpose.msra.mxu0 %v2293
        %2375 = vmatprep.subr.mxu0 0.0
        %2376 = vmatpush1.xpose.msra.mxu0 %v2291
        %2377 = vmatprep.subr.mxu0 0.0
        %2378 = vmatpush1.xpose.msra.mxu0 %v2289
        %2379 = vmatprep.subr.mxu0 0.0
        %2380 = vmatpush1.xpose.msra.mxu0 %v2287
        %2381 = vmatprep.subr.mxu0 0.0
        %2382 = vmatpush1.xpose.msra.mxu0 %v2285
        %2383 = vmatprep.subr.mxu0 0.0
        %2384 = vmatpush2.xpose.msra.mxu0 %v2347
        %2385 = vmatprep.subr.mxu0 0.0
        %2386 = vmatpush2.xpose.msra.mxu0 %v2345
        %2387 = vmatprep.subr.mxu0 0.0
        %2388 = vmatpush2.xpose.msra.mxu0 %v2343
        %2389 = vmatprep.subr.mxu0 0.0
        %2390 = vmatpush2.xpose.msra.mxu0 %v2341
        %2391 = vmatprep.subr.mxu0 0.0
        %2392 = vmatpush2.xpose.msra.mxu0 %v2339
        %2393 = vmatprep.subr.mxu0 0.0
        %2394 = vmatpush2.xpose.msra.mxu0 %v2337
        %2395 = vmatprep.subr.mxu0 0.0
        %2396 = vmatpush2.xpose.msra.mxu0 %v2335
        %2397 = vmatprep.subr.mxu0 0.0
        %2398 = vmatpush2.xpose.msra.mxu0 %v2333
        %2399 = vmatprep.subr.mxu0 0.0
        %2400 = vmatpush2.xpose.msra.mxu0 %v2331
        %2401 = vmatprep.subr.mxu0 0.0
        %2402 = vmatpush2.xpose.msra.mxu0 %v2329
        %2403 = vmatprep.subr.mxu0 0.0
        %2404 = vmatpush2.xpose.msra.mxu0 %v2327
        %2405 = vmatprep.subr.mxu0 0.0
        %2406 = vmatpush2.xpose.msra.mxu0 %v2325
        %2407 = vmatprep.subr.mxu0 0.0
        %2408 = vmatpush2.xpose.msra.mxu0 %v2323
        %2409 = vmatprep.subr.mxu0 0.0
        %2410 = vmatpush2.xpose.msra.mxu0 %v2321
        %2411 = vmatprep.subr.mxu0 0.0
        %2412 = vmatpush2.xpose.msra.mxu0 %v2319
        %2413 = vmatprep.subr.mxu0 0.0
        %2414 = vmatpush2.xpose.msra.mxu0 %v2317
        %2415 = vmatprep.mubr.f32.mxu0 0.0
        %2416 = vmatmul.mubr.f32.gmra.mxu0 %v2283
        %v2417 = vpop.f32.mrf.mxu0
        %v2418 = vadd.f32 %v398, %v2417
        %v2419 = vpop.f32.mrf.mxu0
        %v2420 = vadd.f32 %v399, %v2419
        %2421 = vdwg.mxu0
        %2422 = vmatprep.subr.mxu0 0.0
        %2423 = vmatpush1.xpose.msra.mxu0 0.0
        %2424 = vmatprep.subr.mxu0 0.0
        %2425 = vmatpush1.xpose.msra.mxu0 0.0
        %2426 = vmatprep.subr.mxu0 0.0
        %2427 = vmatpush1.xpose.msra.mxu0 0.0
        %2428 = vmatprep.subr.mxu0 0.0
        %2429 = vmatpush1.xpose.msra.mxu0 0.0
        %2430 = vmatprep.subr.mxu0 0.0
        %2431 = vmatpush1.xpose.msra.mxu0 0.0
        %2432 = vmatprep.subr.mxu0 0.0
        %2433 = vmatpush1.xpose.msra.mxu0 0.0
        %2434 = vmatprep.subr.mxu0 0.0
        %2435 = vmatpush1.xpose.msra.mxu0 0.0
        %2436 = vmatprep.subr.mxu0 0.0
        %2437 = vmatpush1.xpose.msra.mxu0 0.0
        %2438 = vmatprep.subr.mxu0 0.0
        %2439 = vmatpush1.xpose.msra.mxu0 0.0
        %2440 = vmatprep.subr.mxu0 0.0
        %2441 = vmatpush1.xpose.msra.mxu0 0.0
        %2442 = vmatprep.subr.mxu0 0.0
        %2443 = vmatpush1.xpose.msra.mxu0 0.0
        %2444 = vmatprep.subr.mxu0 0.0
        %2445 = vmatpush1.xpose.msra.mxu0 0.0
        %2446 = vmatprep.subr.mxu0 0.0
        %2447 = vmatpush1.xpose.msra.mxu0 0.0
        %2448 = vmatprep.subr.mxu0 0.0
        %2449 = vmatpush1.xpose.msra.mxu0 0.0
        %2450 = vmatprep.subr.mxu0 0.0
        %2451 = vmatpush1.xpose.msra.mxu0 0.0
        %2452 = vmatprep.subr.mxu0 0.0
        %2453 = vmatpush1.xpose.msra.mxu0 %v2349
        %2454 = vmatprep.subr.mxu0 0.0
        %2455 = vmatpush2.xpose.msra.mxu0 0.0
        %2456 = vmatprep.subr.mxu0 0.0
        %2457 = vmatpush2.xpose.msra.mxu0 0.0
        %2458 = vmatprep.subr.mxu0 0.0
        %2459 = vmatpush2.xpose.msra.mxu0 0.0
        %2460 = vmatprep.subr.mxu0 0.0
        %2461 = vmatpush2.xpose.msra.mxu0 0.0
        %2462 = vmatprep.subr.mxu0 0.0
        %2463 = vmatpush2.xpose.msra.mxu0 0.0
        %2464 = vmatprep.subr.mxu0 0.0
        %2465 = vmatpush2.xpose.msra.mxu0 0.0
        %2466 = vmatprep.subr.mxu0 0.0
        %2467 = vmatpush2.xpose.msra.mxu0 0.0
        %2468 = vmatprep.subr.mxu0 0.0
        %2469 = vmatpush2.xpose.msra.mxu0 0.0
        %2470 = vmatprep.subr.mxu0 0.0
        %2471 = vmatpush2.xpose.msra.mxu0 0.0
        %2472 = vmatprep.subr.mxu0 0.0
        %2473 = vmatpush2.xpose.msra.mxu0 0.0
        %2474 = vmatprep.subr.mxu0 0.0
        %2475 = vmatpush2.xpose.msra.mxu0 0.0
        %2476 = vmatprep.subr.mxu0 0.0
        %2477 = vmatpush2.xpose.msra.mxu0 0.0
        %2478 = vmatprep.subr.mxu0 0.0
        %2479 = vmatpush2.xpose.msra.mxu0 0.0
        %2480 = vmatprep.subr.mxu0 0.0
        %2481 = vmatpush2.xpose.msra.mxu0 0.0
        %2482 = vmatprep.subr.mxu0 0.0
        %2483 = vmatpush2.xpose.msra.mxu0 0.0
        %2484 = vmatprep.subr.mxu0 0.0
        %2485 = vmatpush2.xpose.msra.mxu0 0.0
        %2486 = vmatprep.mubr.f32.mxu0 0.0
        %2487 = vmatmul.mubr.f32.gmra.mxu0 %v2283
        %v2488 = vpop.f32.mrf.mxu0
        %v2489 = vadd.f32 %v400, %v2488
        %v2490 = vpop.f32.mrf.mxu0
        %2491 = vdwg.mxu0
        %v2492 = vsel %vm871, %v2489, -inf
        %v2493 = vmax.f32 %v2418, %v2420
        %v2494 = vmax.f32 %v2493, %v2492
        %2495 = vmax.xlane.f32.xlu0 %v2494
        %v2496 = vpop.xlane.xlu0 %2495
        %v2497 = vsub.f32 %v2418, %v2496
        %v2498 = vsub.f32 %v2420, %v2496
        %v2499 = vsub.f32 %v2489, %v2496
        %v2500 = vmul.f32 %v2497, 1.442695
        %v2501 = vpow.pop %v2500
        %v2502 = vmul.f32 %v2498, 1.442695
        %v2503 = vpow.pop %v2502
        %v2504 = vmul.f32 %v2499, 1.442695
        %v2505 = vpow.pop %v2504
        %v2506 = vadd.f32 %v2501, %v2503
        %v2507 = vsel %vm871, %v2505, 0.0
        %v2508 = vadd.f32 %v2506, %v2507
        %2509 = vadd.xlane.f32.xlu0 %v2508
        %v2510 = vpop.xlane.xlu0 %2509
        %v2511 = vrcp.pop %v2510
        %2512 = vrot.lane.b32.xlu0 %v323, 52
        %v2513 = vpop.permute.xlu0 %2512
        %2514 = vrot.lane.b32.xlu0 %v530, 52
        %v2515 = vpop.permute.xlu0 %2514
        %2516 = vrot.lane.b32.xlu0 %v532, 52
        %v2517 = vpop.permute.xlu0 %2516
        %2518 = vrot.lane.b32.xlu0 %v534, 52
        %v2519 = vpop.permute.xlu0 %2518
        %2520 = vrot.lane.b32.xlu0 %v536, 52
        %v2521 = vpop.permute.xlu0 %2520
        %2522 = vrot.lane.b32.xlu0 %v538, 52
        %v2523 = vpop.permute.xlu0 %2522
        %2524 = vrot.lane.b32.xlu0 %v540, 52
        %v2525 = vpop.permute.xlu0 %2524
        %2526 = vrot.lane.b32.xlu0 %v542, 52
        %v2527 = vpop.permute.xlu0 %2526
        %2528 = vrot.lane.b32.xlu0 %v544, 52
        %v2529 = vpop.permute.xlu0 %2528
        %2530 = vrot.lane.b32.xlu0 %v546, 52
        %v2531 = vpop.permute.xlu0 %2530
        %2532 = vrot.lane.b32.xlu0 %v548, 52
        %v2533 = vpop.permute.xlu0 %2532
        %2534 = vrot.lane.b32.xlu0 %v550, 52
        %v2535 = vpop.permute.xlu0 %2534
        %2536 = vrot.lane.b32.xlu0 %v552, 52
        %v2537 = vpop.permute.xlu0 %2536
        %2538 = vrot.lane.b32.xlu0 %v554, 52
        %v2539 = vpop.permute.xlu0 %2538
        %2540 = vrot.lane.b32.xlu0 %v556, 52
        %v2541 = vpop.permute.xlu0 %2540
        %2542 = vrot.lane.b32.xlu0 %v558, 52
        %v2543 = vpop.permute.xlu0 %2542
        %2544 = vrot.lane.b32.xlu0 %v560, 52
        %v2545 = vpop.permute.xlu0 %2544
        %2546 = vrot.lane.b32.xlu0 %v562, 52
        %v2547 = vpop.permute.xlu0 %2546
        %2548 = vrot.lane.b32.xlu0 %v564, 52
        %v2549 = vpop.permute.xlu0 %2548
        %2550 = vrot.lane.b32.xlu0 %v566, 52
        %v2551 = vpop.permute.xlu0 %2550
        %2552 = vrot.lane.b32.xlu0 %v568, 52
        %v2553 = vpop.permute.xlu0 %2552
        %2554 = vrot.lane.b32.xlu0 %v570, 52
        %v2555 = vpop.permute.xlu0 %2554
        %2556 = vrot.lane.b32.xlu0 %v572, 52
        %v2557 = vpop.permute.xlu0 %2556
        %2558 = vrot.lane.b32.xlu0 %v574, 52
        %v2559 = vpop.permute.xlu0 %2558
        %2560 = vrot.lane.b32.xlu0 %v576, 52
        %v2561 = vpop.permute.xlu0 %2560
        %2562 = vrot.lane.b32.xlu0 %v578, 52
        %v2563 = vpop.permute.xlu0 %2562
        %2564 = vrot.lane.b32.xlu0 %v580, 52
        %v2565 = vpop.permute.xlu0 %2564
        %2566 = vrot.lane.b32.xlu0 %v582, 52
        %v2567 = vpop.permute.xlu0 %2566
        %2568 = vrot.lane.b32.xlu0 %v584, 52
        %v2569 = vpop.permute.xlu0 %2568
        %2570 = vrot.lane.b32.xlu0 %v586, 52
        %v2571 = vpop.permute.xlu0 %2570
        %2572 = vrot.lane.b32.xlu0 %v588, 52
        %v2573 = vpop.permute.xlu0 %2572
        %2574 = vrot.lane.b32.xlu0 %v590, 52
        %v2575 = vpop.permute.xlu0 %2574
        %2576 = vrot.lane.b32.xlu0 %v592, 52
        %v2577 = vpop.permute.xlu0 %2576
        %v2612 = vsel %vm871, %v2505, 0
        %2614 = vmatprep.subr.mxu0 0.0
        %2615 = vmatpush1.msra.mxu0 %v2543
        %2616 = vmatprep.subr.mxu0 0.0
        %2617 = vmatpush1.msra.mxu0 %v2541
        %2618 = vmatprep.subr.mxu0 0.0
        %2619 = vmatpush1.msra.mxu0 %v2539
        %2620 = vmatprep.subr.mxu0 0.0
        %2621 = vmatpush1.msra.mxu0 %v2537
        %2622 = vmatprep.subr.mxu0 0.0
        %2623 = vmatpush1.msra.mxu0 %v2535
        %2624 = vmatprep.subr.mxu0 0.0
        %2625 = vmatpush1.msra.mxu0 %v2533
        %2626 = vmatprep.subr.mxu0 0.0
        %2627 = vmatpush1.msra.mxu0 %v2531
        %2628 = vmatprep.subr.mxu0 0.0
        %2629 = vmatpush1.msra.mxu0 %v2529
        %2630 = vmatprep.subr.mxu0 0.0
        %2631 = vmatpush1.msra.mxu0 %v2527
        %2632 = vmatprep.subr.mxu0 0.0
        %2633 = vmatpush1.msra.mxu0 %v2525
        %2634 = vmatprep.subr.mxu0 0.0
        %2635 = vmatpush1.msra.mxu0 %v2523
        %2636 = vmatprep.subr.mxu0 0.0
        %2637 = vmatpush1.msra.mxu0 %v2521
        %2638 = vmatprep.subr.mxu0 0.0
        %2639 = vmatpush1.msra.mxu0 %v2519
        %2640 = vmatprep.subr.mxu0 0.0
        %2641 = vmatpush1.msra.mxu0 %v2517
        %2642 = vmatprep.subr.mxu0 0.0
        %2643 = vmatpush1.msra.mxu0 %v2515
        %2644 = vmatprep.subr.mxu0 0.0
        %2645 = vmatpush1.msra.mxu0 %v2513
        %2646 = vmatprep.subr.mxu0 0.0
        %2647 = vmatpush2.msra.mxu0 %v2575
        %2648 = vmatprep.subr.mxu0 0.0
        %2649 = vmatpush2.msra.mxu0 %v2573
        %2650 = vmatprep.subr.mxu0 0.0
        %2651 = vmatpush2.msra.mxu0 %v2571
        %2652 = vmatprep.subr.mxu0 0.0
        %2653 = vmatpush2.msra.mxu0 %v2569
        %2654 = vmatprep.subr.mxu0 0.0
        %2655 = vmatpush2.msra.mxu0 %v2567
        %2656 = vmatprep.subr.mxu0 0.0
        %2657 = vmatpush2.msra.mxu0 %v2565
        %2658 = vmatprep.subr.mxu0 0.0
        %2659 = vmatpush2.msra.mxu0 %v2563
        %2660 = vmatprep.subr.mxu0 0.0
        %2661 = vmatpush2.msra.mxu0 %v2561
        %2662 = vmatprep.subr.mxu0 0.0
        %2663 = vmatpush2.msra.mxu0 %v2559
        %2664 = vmatprep.subr.mxu0 0.0
        %2665 = vmatpush2.msra.mxu0 %v2557
        %2666 = vmatprep.subr.mxu0 0.0
        %2667 = vmatpush2.msra.mxu0 %v2555
        %2668 = vmatprep.subr.mxu0 0.0
        %2669 = vmatpush2.msra.mxu0 %v2553
        %2670 = vmatprep.subr.mxu0 0.0
        %2671 = vmatpush2.msra.mxu0 %v2551
        %2672 = vmatprep.subr.mxu0 0.0
        %2673 = vmatpush2.msra.mxu0 %v2549
        %2674 = vmatprep.subr.mxu0 0.0
        %2675 = vmatpush2.msra.mxu0 %v2547
        %2676 = vmatprep.subr.mxu0 0.0
        %2677 = vmatpush2.msra.mxu0 %v2545
        %2678 = vmatprep.mubr.f32.mxu0 %v2503
        %2679 = vmatmul.mubr.f32.gmra.mxu0 %v2501
        %v2680 = vpop.f32.mrf.mxu0
        %v2681 = vadd.f32 0.0, %v2680
        %v2682 = vpop.f32.mrf.mxu0
        %2683 = vdwg.mxu0
        %2684 = vmatprep.subr.mxu0 0.0
        %2685 = vmatpush1.msra.mxu0 0.0
        %2686 = vmatprep.subr.mxu0 0.0
        %2687 = vmatpush1.msra.mxu0 0.0
        %2688 = vmatprep.subr.mxu0 0.0
        %2689 = vmatpush1.msra.mxu0 0.0
        %2690 = vmatprep.subr.mxu0 0.0
        %2691 = vmatpush1.msra.mxu0 0.0
        %2692 = vmatprep.subr.mxu0 0.0
        %2693 = vmatpush1.msra.mxu0 0.0
        %2694 = vmatprep.subr.mxu0 0.0
        %2695 = vmatpush1.msra.mxu0 0.0
        %2696 = vmatprep.subr.mxu0 0.0
        %2697 = vmatpush1.msra.mxu0 0.0
        %2698 = vmatprep.subr.mxu0 0.0
        %2699 = vmatpush1.msra.mxu0 0.0
        %2700 = vmatprep.subr.mxu0 0.0
        %2701 = vmatpush1.msra.mxu0 0.0
        %2702 = vmatprep.subr.mxu0 0.0
        %2703 = vmatpush1.msra.mxu0 0.0
        %2704 = vmatprep.subr.mxu0 0.0
        %2705 = vmatpush1.msra.mxu0 0.0
        %2706 = vmatprep.subr.mxu0 0.0
        %2707 = vmatpush1.msra.mxu0 0.0
        %2708 = vmatprep.subr.mxu0 0.0
        %2709 = vmatpush1.msra.mxu0 0.0
        %2710 = vmatprep.subr.mxu0 0.0
        %2711 = vmatpush1.msra.mxu0 0.0
        %2712 = vmatprep.subr.mxu0 0.0
        %2713 = vmatpush1.msra.mxu0 0.0
        %2714 = vmatprep.subr.mxu0 0.0
        %2715 = vmatpush1.msra.mxu0 %v2577
        %2716 = vmatprep.subr.mxu0 0.0
        %2717 = vmatpush2.msra.mxu0 0.0
        %2718 = vmatprep.subr.mxu0 0.0
        %2719 = vmatpush2.msra.mxu0 0.0
        %2720 = vmatprep.subr.mxu0 0.0
        %2721 = vmatpush2.msra.mxu0 0.0
        %2722 = vmatprep.subr.mxu0 0.0
        %2723 = vmatpush2.msra.mxu0 0.0
        %2724 = vmatprep.subr.mxu0 0.0
        %2725 = vmatpush2.msra.mxu0 0.0
        %2726 = vmatprep.subr.mxu0 0.0
        %2727 = vmatpush2.msra.mxu0 0.0
        %2728 = vmatprep.subr.mxu0 0.0
        %2729 = vmatpush2.msra.mxu0 0.0
        %2730 = vmatprep.subr.mxu0 0.0
        %2731 = vmatpush2.msra.mxu0 0.0
        %2732 = vmatprep.subr.mxu0 0.0
        %2733 = vmatpush2.msra.mxu0 0.0
        %2734 = vmatprep.subr.mxu0 0.0
        %2735 = vmatpush2.msra.mxu0 0.0
        %2736 = vmatprep.subr.mxu0 0.0
        %2737 = vmatpush2.msra.mxu0 0.0
        %2738 = vmatprep.subr.mxu0 0.0
        %2739 = vmatpush2.msra.mxu0 0.0
        %2740 = vmatprep.subr.mxu0 0.0
        %2741 = vmatpush2.msra.mxu0 0.0
        %2742 = vmatprep.subr.mxu0 0.0
        %2743 = vmatpush2.msra.mxu0 0.0
        %2744 = vmatprep.subr.mxu0 0.0
        %2745 = vmatpush2.msra.mxu0 0.0
        %2746 = vmatprep.subr.mxu0 0.0
        %2747 = vmatpush2.msra.mxu0 0.0
        %2748 = vmatprep.mubr.f32.mxu0 0.0
        %2749 = vmatmul.mubr.f32.gmra.mxu0 %v2612
        %v2750 = vpop.f32.mrf.mxu0
        %v2751 = vadd.f32 %v2681, %v2750
        %v2752 = vpop.f32.mrf.mxu0
        %2753 = vdwg.mxu0
        %v2754 = vmul.f32 %v2751, %v2511
        %2755 = vrot.lane.b32.xlu0 %v326, 112
        %v2756 = vpop.permute.xlu0 %2755
        %2757 = vrot.lane.b32.xlu0 %v323, 80
        %v2758 = vpop.permute.xlu0 %2757
        %2759 = vrot.lane.b32.xlu0 %v434, 80
        %v2760 = vpop.permute.xlu0 %2759
        %2761 = vrot.lane.b32.xlu0 %v436, 80
        %v2762 = vpop.permute.xlu0 %2761
        %2763 = vrot.lane.b32.xlu0 %v438, 80
        %v2764 = vpop.permute.xlu0 %2763
        %2765 = vrot.lane.b32.xlu0 %v440, 80
        %v2766 = vpop.permute.xlu0 %2765
        %2767 = vrot.lane.b32.xlu0 %v442, 80
        %v2768 = vpop.permute.xlu0 %2767
        %2769 = vrot.lane.b32.xlu0 %v444, 80
        %v2770 = vpop.permute.xlu0 %2769
        %2771 = vrot.lane.b32.xlu0 %v446, 80
        %v2772 = vpop.permute.xlu0 %2771
        %2773 = vrot.lane.b32.xlu0 %v448, 80
        %v2774 = vpop.permute.xlu0 %2773
        %2775 = vrot.lane.b32.xlu0 %v450, 80
        %v2776 = vpop.permute.xlu0 %2775
        %2777 = vrot.lane.b32.xlu0 %v452, 80
        %v2778 = vpop.permute.xlu0 %2777
        %2779 = vrot.lane.b32.xlu0 %v454, 80
        %v2780 = vpop.permute.xlu0 %2779
        %2781 = vrot.lane.b32.xlu0 %v456, 80
        %v2782 = vpop.permute.xlu0 %2781
        %2783 = vrot.lane.b32.xlu0 %v458, 80
        %v2784 = vpop.permute.xlu0 %2783
        %2785 = vrot.lane.b32.xlu0 %v460, 80
        %v2786 = vpop.permute.xlu0 %2785
        %2787 = vrot.lane.b32.xlu0 %v462, 80
        %v2788 = vpop.permute.xlu0 %2787
        %2789 = vrot.lane.b32.xlu0 %v464, 80
        %v2790 = vpop.permute.xlu0 %2789
        %2791 = vrot.lane.b32.xlu0 %v466, 80
        %v2792 = vpop.permute.xlu0 %2791
        %2793 = vrot.lane.b32.xlu0 %v468, 80
        %v2794 = vpop.permute.xlu0 %2793
        %2795 = vrot.lane.b32.xlu0 %v470, 80
        %v2796 = vpop.permute.xlu0 %2795
        %2797 = vrot.lane.b32.xlu0 %v472, 80
        %v2798 = vpop.permute.xlu0 %2797
        %2799 = vrot.lane.b32.xlu0 %v474, 80
        %v2800 = vpop.permute.xlu0 %2799
        %2801 = vrot.lane.b32.xlu0 %v476, 80
        %v2802 = vpop.permute.xlu0 %2801
        %2803 = vrot.lane.b32.xlu0 %v478, 80
        %v2804 = vpop.permute.xlu0 %2803
        %2805 = vrot.lane.b32.xlu0 %v480, 80
        %v2806 = vpop.permute.xlu0 %2805
        %2807 = vrot.lane.b32.xlu0 %v482, 80
        %v2808 = vpop.permute.xlu0 %2807
        %2809 = vrot.lane.b32.xlu0 %v484, 80
        %v2810 = vpop.permute.xlu0 %2809
        %2811 = vrot.lane.b32.xlu0 %v486, 80
        %v2812 = vpop.permute.xlu0 %2811
        %2813 = vrot.lane.b32.xlu0 %v488, 80
        %v2814 = vpop.permute.xlu0 %2813
        %2815 = vrot.lane.b32.xlu0 %v490, 80
        %v2816 = vpop.permute.xlu0 %2815
        %2817 = vrot.lane.b32.xlu0 %v492, 80
        %v2818 = vpop.permute.xlu0 %2817
        %2819 = vrot.lane.b32.xlu0 %v494, 80
        %v2820 = vpop.permute.xlu0 %2819
        %2821 = vrot.lane.b32.xlu0 %v496, 80
        %v2822 = vpop.permute.xlu0 %2821
        %v2823 = vsel %vm660, %v2756, 0
        %v2825 = vsel %vm660, %v2758, 0
        %v2827 = vsel %vm660, %v2760, 0
        %v2829 = vsel %vm660, %v2762, 0
        %v2831 = vsel %vm660, %v2764, 0
        %v2833 = vsel %vm660, %v2766, 0
        %v2835 = vsel %vm660, %v2768, 0
        %v2837 = vsel %vm660, %v2770, 0
        %v2839 = vsel %vm660, %v2772, 0
        %v2841 = vsel %vm660, %v2774, 0
        %v2843 = vsel %vm660, %v2776, 0
        %v2845 = vsel %vm660, %v2778, 0
        %v2847 = vsel %vm660, %v2780, 0
        %v2849 = vsel %vm660, %v2782, 0
        %v2851 = vsel %vm660, %v2784, 0
        %v2853 = vsel %vm660, %v2786, 0
        %v2855 = vsel %vm660, %v2788, 0
        %v2857 = vsel %vm660, %v2790, 0
        %v2859 = vsel %vm660, %v2792, 0
        %v2861 = vsel %vm660, %v2794, 0
        %v2863 = vsel %vm660, %v2796, 0
        %v2865 = vsel %vm660, %v2798, 0
        %v2867 = vsel %vm660, %v2800, 0
        %v2869 = vsel %vm660, %v2802, 0
        %v2871 = vsel %vm660, %v2804, 0
        %v2873 = vsel %vm660, %v2806, 0
        %v2875 = vsel %vm660, %v2808, 0
        %v2877 = vsel %vm660, %v2810, 0
        %v2879 = vsel %vm660, %v2812, 0
        %v2881 = vsel %vm660, %v2814, 0
        %v2883 = vsel %vm660, %v2816, 0
        %v2885 = vsel %vm660, %v2818, 0
        %v2887 = vsel %vm660, %v2820, 0
        %v2889 = vsel %vm660, %v2822, 0
        %2891 = vmatprep.subr.mxu0 0.0
        %2892 = vmatpush1.xpose.msra.mxu0 %v2855
        %2893 = vmatprep.subr.mxu0 0.0
        %2894 = vmatpush1.xpose.msra.mxu0 %v2853
        %2895 = vmatprep.subr.mxu0 0.0
        %2896 = vmatpush1.xpose.msra.mxu0 %v2851
        %2897 = vmatprep.subr.mxu0 0.0
        %2898 = vmatpush1.xpose.msra.mxu0 %v2849
        %2899 = vmatprep.subr.mxu0 0.0
        %2900 = vmatpush1.xpose.msra.mxu0 %v2847
        %2901 = vmatprep.subr.mxu0 0.0
        %2902 = vmatpush1.xpose.msra.mxu0 %v2845
        %2903 = vmatprep.subr.mxu0 0.0
        %2904 = vmatpush1.xpose.msra.mxu0 %v2843
        %2905 = vmatprep.subr.mxu0 0.0
        %2906 = vmatpush1.xpose.msra.mxu0 %v2841
        %2907 = vmatprep.subr.mxu0 0.0
        %2908 = vmatpush1.xpose.msra.mxu0 %v2839
        %2909 = vmatprep.subr.mxu0 0.0
        %2910 = vmatpush1.xpose.msra.mxu0 %v2837
        %2911 = vmatprep.subr.mxu0 0.0
        %2912 = vmatpush1.xpose.msra.mxu0 %v2835
        %2913 = vmatprep.subr.mxu0 0.0
        %2914 = vmatpush1.xpose.msra.mxu0 %v2833
        %2915 = vmatprep.subr.mxu0 0.0
        %2916 = vmatpush1.xpose.msra.mxu0 %v2831
        %2917 = vmatprep.subr.mxu0 0.0
        %2918 = vmatpush1.xpose.msra.mxu0 %v2829
        %2919 = vmatprep.subr.mxu0 0.0
        %2920 = vmatpush1.xpose.msra.mxu0 %v2827
        %2921 = vmatprep.subr.mxu0 0.0
        %2922 = vmatpush1.xpose.msra.mxu0 %v2825
        %2923 = vmatprep.subr.mxu0 0.0
        %2924 = vmatpush2.xpose.msra.mxu0 %v2887
        %2925 = vmatprep.subr.mxu0 0.0
        %2926 = vmatpush2.xpose.msra.mxu0 %v2885
        %2927 = vmatprep.subr.mxu0 0.0
        %2928 = vmatpush2.xpose.msra.mxu0 %v2883
        %2929 = vmatprep.subr.mxu0 0.0
        %2930 = vmatpush2.xpose.msra.mxu0 %v2881
        %2931 = vmatprep.subr.mxu0 0.0
        %2932 = vmatpush2.xpose.msra.mxu0 %v2879
        %2933 = vmatprep.subr.mxu0 0.0
        %2934 = vmatpush2.xpose.msra.mxu0 %v2877
        %2935 = vmatprep.subr.mxu0 0.0
        %2936 = vmatpush2.xpose.msra.mxu0 %v2875
        %2937 = vmatprep.subr.mxu0 0.0
        %2938 = vmatpush2.xpose.msra.mxu0 %v2873
        %2939 = vmatprep.subr.mxu0 0.0
        %2940 = vmatpush2.xpose.msra.mxu0 %v2871
        %2941 = vmatprep.subr.mxu0 0.0
        %2942 = vmatpush2.xpose.msra.mxu0 %v2869
        %2943 = vmatprep.subr.mxu0 0.0
        %2944 = vmatpush2.xpose.msra.mxu0 %v2867
        %2945 = vmatprep.subr.mxu0 0.0
        %2946 = vmatpush2.xpose.msra.mxu0 %v2865
        %2947 = vmatprep.subr.mxu0 0.0
        %2948 = vmatpush2.xpose.msra.mxu0 %v2863
        %2949 = vmatprep.subr.mxu0 0.0
        %2950 = vmatpush2.xpose.msra.mxu0 %v2861
        %2951 = vmatprep.subr.mxu0 0.0
        %2952 = vmatpush2.xpose.msra.mxu0 %v2859
        %2953 = vmatprep.subr.mxu0 0.0
        %2954 = vmatpush2.xpose.msra.mxu0 %v2857
        %2955 = vmatprep.mubr.f32.mxu0 0.0
        %2956 = vmatmul.mubr.f32.gmra.mxu0 %v2823
        %v2957 = vpop.f32.mrf.mxu0
        %v2958 = vadd.f32 %v398, %v2957
        %v2959 = vpop.f32.mrf.mxu0
        %v2960 = vadd.f32 %v399, %v2959
        %2961 = vdwg.mxu0
        %2962 = vmatprep.subr.mxu0 0.0
        %2963 = vmatpush1.xpose.msra.mxu0 0.0
        %2964 = vmatprep.subr.mxu0 0.0
        %2965 = vmatpush1.xpose.msra.mxu0 0.0
        %2966 = vmatprep.subr.mxu0 0.0
        %2967 = vmatpush1.xpose.msra.mxu0 0.0
        %2968 = vmatprep.subr.mxu0 0.0
        %2969 = vmatpush1.xpose.msra.mxu0 0.0
        %2970 = vmatprep.subr.mxu0 0.0
        %2971 = vmatpush1.xpose.msra.mxu0 0.0
        %2972 = vmatprep.subr.mxu0 0.0
        %2973 = vmatpush1.xpose.msra.mxu0 0.0
        %2974 = vmatprep.subr.mxu0 0.0
        %2975 = vmatpush1.xpose.msra.mxu0 0.0
        %2976 = vmatprep.subr.mxu0 0.0
        %2977 = vmatpush1.xpose.msra.mxu0 0.0
        %2978 = vmatprep.subr.mxu0 0.0
        %2979 = vmatpush1.xpose.msra.mxu0 0.0
        %2980 = vmatprep.subr.mxu0 0.0
        %2981 = vmatpush1.xpose.msra.mxu0 0.0
        %2982 = vmatprep.subr.mxu0 0.0
        %2983 = vmatpush1.xpose.msra.mxu0 0.0
        %2984 = vmatprep.subr.mxu0 0.0
        %2985 = vmatpush1.xpose.msra.mxu0 0.0
        %2986 = vmatprep.subr.mxu0 0.0
        %2987 = vmatpush1.xpose.msra.mxu0 0.0
        %2988 = vmatprep.subr.mxu0 0.0
        %2989 = vmatpush1.xpose.msra.mxu0 0.0
        %2990 = vmatprep.subr.mxu0 0.0
        %2991 = vmatpush1.xpose.msra.mxu0 0.0
        %2992 = vmatprep.subr.mxu0 0.0
        %2993 = vmatpush1.xpose.msra.mxu0 %v2889
        %2994 = vmatprep.subr.mxu0 0.0
        %2995 = vmatpush2.xpose.msra.mxu0 0.0
        %2996 = vmatprep.subr.mxu0 0.0
        %2997 = vmatpush2.xpose.msra.mxu0 0.0
        %2998 = vmatprep.subr.mxu0 0.0
        %2999 = vmatpush2.xpose.msra.mxu0 0.0
        %3000 = vmatprep.subr.mxu0 0.0
        %3001 = vmatpush2.xpose.msra.mxu0 0.0
        %3002 = vmatprep.subr.mxu0 0.0
        %3003 = vmatpush2.xpose.msra.mxu0 0.0
        %3004 = vmatprep.subr.mxu0 0.0
        %3005 = vmatpush2.xpose.msra.mxu0 0.0
        %3006 = vmatprep.subr.mxu0 0.0
        %3007 = vmatpush2.xpose.msra.mxu0 0.0
        %3008 = vmatprep.subr.mxu0 0.0
        %3009 = vmatpush2.xpose.msra.mxu0 0.0
        %3010 = vmatprep.subr.mxu0 0.0
        %3011 = vmatpush2.xpose.msra.mxu0 0.0
        %3012 = vmatprep.subr.mxu0 0.0
        %3013 = vmatpush2.xpose.msra.mxu0 0.0
        %3014 = vmatprep.subr.mxu0 0.0
        %3015 = vmatpush2.xpose.msra.mxu0 0.0
        %3016 = vmatprep.subr.mxu0 0.0
        %3017 = vmatpush2.xpose.msra.mxu0 0.0
        %3018 = vmatprep.subr.mxu0 0.0
        %3019 = vmatpush2.xpose.msra.mxu0 0.0
        %3020 = vmatprep.subr.mxu0 0.0
        %3021 = vmatpush2.xpose.msra.mxu0 0.0
        %3022 = vmatprep.subr.mxu0 0.0
        %3023 = vmatpush2.xpose.msra.mxu0 0.0
        %3024 = vmatprep.subr.mxu0 0.0
        %3025 = vmatpush2.xpose.msra.mxu0 0.0
        %3026 = vmatprep.mubr.f32.mxu0 0.0
        %3027 = vmatmul.mubr.f32.gmra.mxu0 %v2823
        %v3028 = vpop.f32.mrf.mxu0
        %v3029 = vadd.f32 %v400, %v3028
        %v3030 = vpop.f32.mrf.mxu0
        %3031 = vdwg.mxu0
        %v3032 = vsel %vm871, %v3029, -inf
        %v3033 = vmax.f32 %v2958, %v2960
        %v3034 = vmax.f32 %v3033, %v3032
        %3035 = vmax.xlane.f32.xlu0 %v3034
        %v3036 = vpop.xlane.xlu0 %3035
        %v3037 = vsub.f32 %v2958, %v3036
        %v3038 = vsub.f32 %v2960, %v3036
        %v3039 = vsub.f32 %v3029, %v3036
        %v3040 = vmul.f32 %v3037, 1.442695
        %v3041 = vpow.pop %v3040
        %v3042 = vmul.f32 %v3038, 1.442695
        %v3043 = vpow.pop %v3042
        %v3044 = vmul.f32 %v3039, 1.442695
        %v3045 = vpow.pop %v3044
        %v3046 = vadd.f32 %v3041, %v3043
        %v3047 = vsel %vm871, %v3045, 0.0
        %v3048 = vadd.f32 %v3046, %v3047
        %3049 = vadd.xlane.f32.xlu0 %v3048
        %v3050 = vpop.xlane.xlu0 %3049
        %v3051 = vrcp.pop %v3050
        %3052 = vrot.lane.b32.xlu0 %v323, 48
        %v3053 = vpop.permute.xlu0 %3052
        %3054 = vrot.lane.b32.xlu0 %v530, 48
        %v3055 = vpop.permute.xlu0 %3054
        %3056 = vrot.lane.b32.xlu0 %v532, 48
        %v3057 = vpop.permute.xlu0 %3056
        %3058 = vrot.lane.b32.xlu0 %v534, 48
        %v3059 = vpop.permute.xlu0 %3058
        %3060 = vrot.lane.b32.xlu0 %v536, 48
        %v3061 = vpop.permute.xlu0 %3060
        %3062 = vrot.lane.b32.xlu0 %v538, 48
        %v3063 = vpop.permute.xlu0 %3062
        %3064 = vrot.lane.b32.xlu0 %v540, 48
        %v3065 = vpop.permute.xlu0 %3064
        %3066 = vrot.lane.b32.xlu0 %v542, 48
        %v3067 = vpop.permute.xlu0 %3066
        %3068 = vrot.lane.b32.xlu0 %v544, 48
        %v3069 = vpop.permute.xlu0 %3068
        %3070 = vrot.lane.b32.xlu0 %v546, 48
        %v3071 = vpop.permute.xlu0 %3070
        %3072 = vrot.lane.b32.xlu0 %v548, 48
        %v3073 = vpop.permute.xlu0 %3072
        %3074 = vrot.lane.b32.xlu0 %v550, 48
        %v3075 = vpop.permute.xlu0 %3074
        %3076 = vrot.lane.b32.xlu0 %v552, 48
        %v3077 = vpop.permute.xlu0 %3076
        %3078 = vrot.lane.b32.xlu0 %v554, 48
        %v3079 = vpop.permute.xlu0 %3078
        %3080 = vrot.lane.b32.xlu0 %v556, 48
        %v3081 = vpop.permute.xlu0 %3080
        %3082 = vrot.lane.b32.xlu0 %v558, 48
        %v3083 = vpop.permute.xlu0 %3082
        %3084 = vrot.lane.b32.xlu0 %v560, 48
        %v3085 = vpop.permute.xlu0 %3084
        %3086 = vrot.lane.b32.xlu0 %v562, 48
        %v3087 = vpop.permute.xlu0 %3086
        %3088 = vrot.lane.b32.xlu0 %v564, 48
        %v3089 = vpop.permute.xlu0 %3088
        %3090 = vrot.lane.b32.xlu0 %v566, 48
        %v3091 = vpop.permute.xlu0 %3090
        %3092 = vrot.lane.b32.xlu0 %v568, 48
        %v3093 = vpop.permute.xlu0 %3092
        %3094 = vrot.lane.b32.xlu0 %v570, 48
        %v3095 = vpop.permute.xlu0 %3094
        %3096 = vrot.lane.b32.xlu0 %v572, 48
        %v3097 = vpop.permute.xlu0 %3096
        %3098 = vrot.lane.b32.xlu0 %v574, 48
        %v3099 = vpop.permute.xlu0 %3098
        %3100 = vrot.lane.b32.xlu0 %v576, 48
        %v3101 = vpop.permute.xlu0 %3100
        %3102 = vrot.lane.b32.xlu0 %v578, 48
        %v3103 = vpop.permute.xlu0 %3102
        %3104 = vrot.lane.b32.xlu0 %v580, 48
        %v3105 = vpop.permute.xlu0 %3104
        %3106 = vrot.lane.b32.xlu0 %v582, 48
        %v3107 = vpop.permute.xlu0 %3106
        %3108 = vrot.lane.b32.xlu0 %v584, 48
        %v3109 = vpop.permute.xlu0 %3108
        %3110 = vrot.lane.b32.xlu0 %v586, 48
        %v3111 = vpop.permute.xlu0 %3110
        %3112 = vrot.lane.b32.xlu0 %v588, 48
        %v3113 = vpop.permute.xlu0 %3112
        %3114 = vrot.lane.b32.xlu0 %v590, 48
        %v3115 = vpop.permute.xlu0 %3114
        %3116 = vrot.lane.b32.xlu0 %v592, 48
        %v3117 = vpop.permute.xlu0 %3116
        %v3152 = vsel %vm871, %v3045, 0
        %3154 = vmatprep.subr.mxu0 0.0
        %3155 = vmatpush1.msra.mxu0 %v3083
        %3156 = vmatprep.subr.mxu0 0.0
        %3157 = vmatpush1.msra.mxu0 %v3081
        %3158 = vmatprep.subr.mxu0 0.0
        %3159 = vmatpush1.msra.mxu0 %v3079
        %3160 = vmatprep.subr.mxu0 0.0
        %3161 = vmatpush1.msra.mxu0 %v3077
        %3162 = vmatprep.subr.mxu0 0.0
        %3163 = vmatpush1.msra.mxu0 %v3075
        %3164 = vmatprep.subr.mxu0 0.0
        %3165 = vmatpush1.msra.mxu0 %v3073
        %3166 = vmatprep.subr.mxu0 0.0
        %3167 = vmatpush1.msra.mxu0 %v3071
        %3168 = vmatprep.subr.mxu0 0.0
        %3169 = vmatpush1.msra.mxu0 %v3069
        %3170 = vmatprep.subr.mxu0 0.0
        %3171 = vmatpush1.msra.mxu0 %v3067
        %3172 = vmatprep.subr.mxu0 0.0
        %3173 = vmatpush1.msra.mxu0 %v3065
        %3174 = vmatprep.subr.mxu0 0.0
        %3175 = vmatpush1.msra.mxu0 %v3063
        %3176 = vmatprep.subr.mxu0 0.0
        %3177 = vmatpush1.msra.mxu0 %v3061
        %3178 = vmatprep.subr.mxu0 0.0
        %3179 = vmatpush1.msra.mxu0 %v3059
        %3180 = vmatprep.subr.mxu0 0.0
        %3181 = vmatpush1.msra.mxu0 %v3057
        %3182 = vmatprep.subr.mxu0 0.0
        %3183 = vmatpush1.msra.mxu0 %v3055
        %3184 = vmatprep.subr.mxu0 0.0
        %3185 = vmatpush1.msra.mxu0 %v3053
        %3186 = vmatprep.subr.mxu0 0.0
        %3187 = vmatpush2.msra.mxu0 %v3115
        %3188 = vmatprep.subr.mxu0 0.0
        %3189 = vmatpush2.msra.mxu0 %v3113
        %3190 = vmatprep.subr.mxu0 0.0
        %3191 = vmatpush2.msra.mxu0 %v3111
        %3192 = vmatprep.subr.mxu0 0.0
        %3193 = vmatpush2.msra.mxu0 %v3109
        %3194 = vmatprep.subr.mxu0 0.0
        %3195 = vmatpush2.msra.mxu0 %v3107
        %3196 = vmatprep.subr.mxu0 0.0
        %3197 = vmatpush2.msra.mxu0 %v3105
        %3198 = vmatprep.subr.mxu0 0.0
        %3199 = vmatpush2.msra.mxu0 %v3103
        %3200 = vmatprep.subr.mxu0 0.0
        %3201 = vmatpush2.msra.mxu0 %v3101
        %3202 = vmatprep.subr.mxu0 0.0
        %3203 = vmatpush2.msra.mxu0 %v3099
        %3204 = vmatprep.subr.mxu0 0.0
        %3205 = vmatpush2.msra.mxu0 %v3097
        %3206 = vmatprep.subr.mxu0 0.0
        %3207 = vmatpush2.msra.mxu0 %v3095
        %3208 = vmatprep.subr.mxu0 0.0
        %3209 = vmatpush2.msra.mxu0 %v3093
        %3210 = vmatprep.subr.mxu0 0.0
        %3211 = vmatpush2.msra.mxu0 %v3091
        %3212 = vmatprep.subr.mxu0 0.0
        %3213 = vmatpush2.msra.mxu0 %v3089
        %3214 = vmatprep.subr.mxu0 0.0
        %3215 = vmatpush2.msra.mxu0 %v3087
        %3216 = vmatprep.subr.mxu0 0.0
        %3217 = vmatpush2.msra.mxu0 %v3085
        %3218 = vmatprep.mubr.f32.mxu0 %v3043
        %3219 = vmatmul.mubr.f32.gmra.mxu0 %v3041
        %v3220 = vpop.f32.mrf.mxu0
        %v3221 = vadd.f32 0.0, %v3220
        %v3222 = vpop.f32.mrf.mxu0
        %3223 = vdwg.mxu0
        %3224 = vmatprep.subr.mxu0 0.0
        %3225 = vmatpush1.msra.mxu0 0.0
        %3226 = vmatprep.subr.mxu0 0.0
        %3227 = vmatpush1.msra.mxu0 0.0
        %3228 = vmatprep.subr.mxu0 0.0
        %3229 = vmatpush1.msra.mxu0 0.0
        %3230 = vmatprep.subr.mxu0 0.0
        %3231 = vmatpush1.msra.mxu0 0.0
        %3232 = vmatprep.subr.mxu0 0.0
        %3233 = vmatpush1.msra.mxu0 0.0
        %3234 = vmatprep.subr.mxu0 0.0
        %3235 = vmatpush1.msra.mxu0 0.0
        %3236 = vmatprep.subr.mxu0 0.0
        %3237 = vmatpush1.msra.mxu0 0.0
        %3238 = vmatprep.subr.mxu0 0.0
        %3239 = vmatpush1.msra.mxu0 0.0
        %3240 = vmatprep.subr.mxu0 0.0
        %3241 = vmatpush1.msra.mxu0 0.0
        %3242 = vmatprep.subr.mxu0 0.0
        %3243 = vmatpush1.msra.mxu0 0.0
        %3244 = vmatprep.subr.mxu0 0.0
        %3245 = vmatpush1.msra.mxu0 0.0
        %3246 = vmatprep.subr.mxu0 0.0
        %3247 = vmatpush1.msra.mxu0 0.0
        %3248 = vmatprep.subr.mxu0 0.0
        %3249 = vmatpush1.msra.mxu0 0.0
        %3250 = vmatprep.subr.mxu0 0.0
        %3251 = vmatpush1.msra.mxu0 0.0
        %3252 = vmatprep.subr.mxu0 0.0
        %3253 = vmatpush1.msra.mxu0 0.0
        %3254 = vmatprep.subr.mxu0 0.0
        %3255 = vmatpush1.msra.mxu0 %v3117
        %3256 = vmatprep.subr.mxu0 0.0
        %3257 = vmatpush2.msra.mxu0 0.0
        %3258 = vmatprep.subr.mxu0 0.0
        %3259 = vmatpush2.msra.mxu0 0.0
        %3260 = vmatprep.subr.mxu0 0.0
        %3261 = vmatpush2.msra.mxu0 0.0
        %3262 = vmatprep.subr.mxu0 0.0
        %3263 = vmatpush2.msra.mxu0 0.0
        %3264 = vmatprep.subr.mxu0 0.0
        %3265 = vmatpush2.msra.mxu0 0.0
        %3266 = vmatprep.subr.mxu0 0.0
        %3267 = vmatpush2.msra.mxu0 0.0
        %3268 = vmatprep.subr.mxu0 0.0
        %3269 = vmatpush2.msra.mxu0 0.0
        %3270 = vmatprep.subr.mxu0 0.0
        %3271 = vmatpush2.msra.mxu0 0.0
        %3272 = vmatprep.subr.mxu0 0.0
        %3273 = vmatpush2.msra.mxu0 0.0
        %3274 = vmatprep.subr.mxu0 0.0
        %3275 = vmatpush2.msra.mxu0 0.0
        %3276 = vmatprep.subr.mxu0 0.0
        %3277 = vmatpush2.msra.mxu0 0.0
        %3278 = vmatprep.subr.mxu0 0.0
        %3279 = vmatpush2.msra.mxu0 0.0
        %3280 = vmatprep.subr.mxu0 0.0
        %3281 = vmatpush2.msra.mxu0 0.0
        %3282 = vmatprep.subr.mxu0 0.0
        %3283 = vmatpush2.msra.mxu0 0.0
        %3284 = vmatprep.subr.mxu0 0.0
        %3285 = vmatpush2.msra.mxu0 0.0
        %3286 = vmatprep.subr.mxu0 0.0
        %3287 = vmatpush2.msra.mxu0 0.0
        %3288 = vmatprep.mubr.f32.mxu0 0.0
        %3289 = vmatmul.mubr.f32.gmra.mxu0 %v3152
        %v3290 = vpop.f32.mrf.mxu0
        %v3291 = vadd.f32 %v3221, %v3290
        %v3292 = vpop.f32.mrf.mxu0
        %3293 = vdwg.mxu0
        %v3294 = vmul.f32 %v3291, %v3051
        %3295 = vrot.lane.b32.xlu0 %v326, 108
        %v3296 = vpop.permute.xlu0 %3295
        %3297 = vrot.lane.b32.xlu0 %v323, 76
        %v3298 = vpop.permute.xlu0 %3297
        %3299 = vrot.lane.b32.xlu0 %v434, 76
        %v3300 = vpop.permute.xlu0 %3299
        %3301 = vrot.lane.b32.xlu0 %v436, 76
        %v3302 = vpop.permute.xlu0 %3301
        %3303 = vrot.lane.b32.xlu0 %v438, 76
        %v3304 = vpop.permute.xlu0 %3303
        %3305 = vrot.lane.b32.xlu0 %v440, 76
        %v3306 = vpop.permute.xlu0 %3305
        %3307 = vrot.lane.b32.xlu0 %v442, 76
        %v3308 = vpop.permute.xlu0 %3307
        %3309 = vrot.lane.b32.xlu0 %v444, 76
        %v3310 = vpop.permute.xlu0 %3309
        %3311 = vrot.lane.b32.xlu0 %v446, 76
        %v3312 = vpop.permute.xlu0 %3311
        %3313 = vrot.lane.b32.xlu0 %v448, 76
        %v3314 = vpop.permute.xlu0 %3313
        %3315 = vrot.lane.b32.xlu0 %v450, 76
        %v3316 = vpop.permute.xlu0 %3315
        %3317 = vrot.lane.b32.xlu0 %v452, 76
        %v3318 = vpop.permute.xlu0 %3317
        %3319 = vrot.lane.b32.xlu0 %v454, 76
        %v3320 = vpop.permute.xlu0 %3319
        %3321 = vrot.lane.b32.xlu0 %v456, 76
        %v3322 = vpop.permute.xlu0 %3321
        %3323 = vrot.lane.b32.xlu0 %v458, 76
        %v3324 = vpop.permute.xlu0 %3323
        %3325 = vrot.lane.b32.xlu0 %v460, 76
        %v3326 = vpop.permute.xlu0 %3325
        %3327 = vrot.lane.b32.xlu0 %v462, 76
        %v3328 = vpop.permute.xlu0 %3327
        %3329 = vrot.lane.b32.xlu0 %v464, 76
        %v3330 = vpop.permute.xlu0 %3329
        %3331 = vrot.lane.b32.xlu0 %v466, 76
        %v3332 = vpop.permute.xlu0 %3331
        %3333 = vrot.lane.b32.xlu0 %v468, 76
        %v3334 = vpop.permute.xlu0 %3333
        %3335 = vrot.lane.b32.xlu0 %v470, 76
        %v3336 = vpop.permute.xlu0 %3335
        %3337 = vrot.lane.b32.xlu0 %v472, 76
        %v3338 = vpop.permute.xlu0 %3337
        %3339 = vrot.lane.b32.xlu0 %v474, 76
        %v3340 = vpop.permute.xlu0 %3339
        %3341 = vrot.lane.b32.xlu0 %v476, 76
        %v3342 = vpop.permute.xlu0 %3341
        %3343 = vrot.lane.b32.xlu0 %v478, 76
        %v3344 = vpop.permute.xlu0 %3343
        %3345 = vrot.lane.b32.xlu0 %v480, 76
        %v3346 = vpop.permute.xlu0 %3345
        %3347 = vrot.lane.b32.xlu0 %v482, 76
        %v3348 = vpop.permute.xlu0 %3347
        %3349 = vrot.lane.b32.xlu0 %v484, 76
        %v3350 = vpop.permute.xlu0 %3349
        %3351 = vrot.lane.b32.xlu0 %v486, 76
        %v3352 = vpop.permute.xlu0 %3351
        %3353 = vrot.lane.b32.xlu0 %v488, 76
        %v3354 = vpop.permute.xlu0 %3353
        %3355 = vrot.lane.b32.xlu0 %v490, 76
        %v3356 = vpop.permute.xlu0 %3355
        %3357 = vrot.lane.b32.xlu0 %v492, 76
        %v3358 = vpop.permute.xlu0 %3357
        %3359 = vrot.lane.b32.xlu0 %v494, 76
        %v3360 = vpop.permute.xlu0 %3359
        %3361 = vrot.lane.b32.xlu0 %v496, 76
        %v3362 = vpop.permute.xlu0 %3361
        %v3363 = vsel %vm660, %v3296, 0
        %v3365 = vsel %vm660, %v3298, 0
        %v3367 = vsel %vm660, %v3300, 0
        %v3369 = vsel %vm660, %v3302, 0
        %v3371 = vsel %vm660, %v3304, 0
        %v3373 = vsel %vm660, %v3306, 0
        %v3375 = vsel %vm660, %v3308, 0
        %v3377 = vsel %vm660, %v3310, 0
        %v3379 = vsel %vm660, %v3312, 0
        %v3381 = vsel %vm660, %v3314, 0
        %v3383 = vsel %vm660, %v3316, 0
        %v3385 = vsel %vm660, %v3318, 0
        %v3387 = vsel %vm660, %v3320, 0
        %v3389 = vsel %vm660, %v3322, 0
        %v3391 = vsel %vm660, %v3324, 0
        %v3393 = vsel %vm660, %v3326, 0
        %v3395 = vsel %vm660, %v3328, 0
        %v3397 = vsel %vm660, %v3330, 0
        %v3399 = vsel %vm660, %v3332, 0
        %v3401 = vsel %vm660, %v3334, 0
        %v3403 = vsel %vm660, %v3336, 0
        %v3405 = vsel %vm660, %v3338, 0
        %v3407 = vsel %vm660, %v3340, 0
        %v3409 = vsel %vm660, %v3342, 0
        %v3411 = vsel %vm660, %v3344, 0
        %v3413 = vsel %vm660, %v3346, 0
        %v3415 = vsel %vm660, %v3348, 0
        %v3417 = vsel %vm660, %v3350, 0
        %v3419 = vsel %vm660, %v3352, 0
        %v3421 = vsel %vm660, %v3354, 0
        %v3423 = vsel %vm660, %v3356, 0
        %v3425 = vsel %vm660, %v3358, 0
        %v3427 = vsel %vm660, %v3360, 0
        %v3429 = vsel %vm660, %v3362, 0
        %3431 = vmatprep.subr.mxu0 0.0
        %3432 = vmatpush1.xpose.msra.mxu0 %v3395
        %3433 = vmatprep.subr.mxu0 0.0
        %3434 = vmatpush1.xpose.msra.mxu0 %v3393
        %3435 = vmatprep.subr.mxu0 0.0
        %3436 = vmatpush1.xpose.msra.mxu0 %v3391
        %3437 = vmatprep.subr.mxu0 0.0
        %3438 = vmatpush1.xpose.msra.mxu0 %v3389
        %3439 = vmatprep.subr.mxu0 0.0
        %3440 = vmatpush1.xpose.msra.mxu0 %v3387
        %3441 = vmatprep.subr.mxu0 0.0
        %3442 = vmatpush1.xpose.msra.mxu0 %v3385
        %3443 = vmatprep.subr.mxu0 0.0
        %3444 = vmatpush1.xpose.msra.mxu0 %v3383
        %3445 = vmatprep.subr.mxu0 0.0
        %3446 = vmatpush1.xpose.msra.mxu0 %v3381
        %3447 = vmatprep.subr.mxu0 0.0
        %3448 = vmatpush1.xpose.msra.mxu0 %v3379
        %3449 = vmatprep.subr.mxu0 0.0
        %3450 = vmatpush1.xpose.msra.mxu0 %v3377
        %3451 = vmatprep.subr.mxu0 0.0
        %3452 = vmatpush1.xpose.msra.mxu0 %v3375
        %3453 = vmatprep.subr.mxu0 0.0
        %3454 = vmatpush1.xpose.msra.mxu0 %v3373
        %3455 = vmatprep.subr.mxu0 0.0
        %3456 = vmatpush1.xpose.msra.mxu0 %v3371
        %3457 = vmatprep.subr.mxu0 0.0
        %3458 = vmatpush1.xpose.msra.mxu0 %v3369
        %3459 = vmatprep.subr.mxu0 0.0
        %3460 = vmatpush1.xpose.msra.mxu0 %v3367
        %3461 = vmatprep.subr.mxu0 0.0
        %3462 = vmatpush1.xpose.msra.mxu0 %v3365
        %3463 = vmatprep.subr.mxu0 0.0
        %3464 = vmatpush2.xpose.msra.mxu0 %v3427
        %3465 = vmatprep.subr.mxu0 0.0
        %3466 = vmatpush2.xpose.msra.mxu0 %v3425
        %3467 = vmatprep.subr.mxu0 0.0
        %3468 = vmatpush2.xpose.msra.mxu0 %v3423
        %3469 = vmatprep.subr.mxu0 0.0
        %3470 = vmatpush2.xpose.msra.mxu0 %v3421
        %3471 = vmatprep.subr.mxu0 0.0
        %3472 = vmatpush2.xpose.msra.mxu0 %v3419
        %3473 = vmatprep.subr.mxu0 0.0
        %3474 = vmatpush2.xpose.msra.mxu0 %v3417
        %3475 = vmatprep.subr.mxu0 0.0
        %3476 = vmatpush2.xpose.msra.mxu0 %v3415
        %3477 = vmatprep.subr.mxu0 0.0
        %3478 = vmatpush2.xpose.msra.mxu0 %v3413
        %3479 = vmatprep.subr.mxu0 0.0
        %3480 = vmatpush2.xpose.msra.mxu0 %v3411
        %3481 = vmatprep.subr.mxu0 0.0
        %3482 = vmatpush2.xpose.msra.mxu0 %v3409
        %3483 = vmatprep.subr.mxu0 0.0
        %3484 = vmatpush2.xpose.msra.mxu0 %v3407
        %3485 = vmatprep.subr.mxu0 0.0
        %3486 = vmatpush2.xpose.msra.mxu0 %v3405
        %3487 = vmatprep.subr.mxu0 0.0
        %3488 = vmatpush2.xpose.msra.mxu0 %v3403
        %3489 = vmatprep.subr.mxu0 0.0
        %3490 = vmatpush2.xpose.msra.mxu0 %v3401
        %3491 = vmatprep.subr.mxu0 0.0
        %3492 = vmatpush2.xpose.msra.mxu0 %v3399
        %3493 = vmatprep.subr.mxu0 0.0
        %3494 = vmatpush2.xpose.msra.mxu0 %v3397
        %3495 = vmatprep.mubr.f32.mxu0 0.0
        %3496 = vmatmul.mubr.f32.gmra.mxu0 %v3363
        %v3497 = vpop.f32.mrf.mxu0
        %v3498 = vadd.f32 %v398, %v3497
        %v3499 = vpop.f32.mrf.mxu0
        %v3500 = vadd.f32 %v399, %v3499
        %3501 = vdwg.mxu0
        %3502 = vmatprep.subr.mxu0 0.0
        %3503 = vmatpush1.xpose.msra.mxu0 0.0
        %3504 = vmatprep.subr.mxu0 0.0
        %3505 = vmatpush1.xpose.msra.mxu0 0.0
        %3506 = vmatprep.subr.mxu0 0.0
        %3507 = vmatpush1.xpose.msra.mxu0 0.0
        %3508 = vmatprep.subr.mxu0 0.0
        %3509 = vmatpush1.xpose.msra.mxu0 0.0
        %3510 = vmatprep.subr.mxu0 0.0
        %3511 = vmatpush1.xpose.msra.mxu0 0.0
        %3512 = vmatprep.subr.mxu0 0.0
        %3513 = vmatpush1.xpose.msra.mxu0 0.0
        %3514 = vmatprep.subr.mxu0 0.0
        %3515 = vmatpush1.xpose.msra.mxu0 0.0
        %3516 = vmatprep.subr.mxu0 0.0
        %3517 = vmatpush1.xpose.msra.mxu0 0.0
        %3518 = vmatprep.subr.mxu0 0.0
        %3519 = vmatpush1.xpose.msra.mxu0 0.0
        %3520 = vmatprep.subr.mxu0 0.0
        %3521 = vmatpush1.xpose.msra.mxu0 0.0
        %3522 = vmatprep.subr.mxu0 0.0
        %3523 = vmatpush1.xpose.msra.mxu0 0.0
        %3524 = vmatprep.subr.mxu0 0.0
        %3525 = vmatpush1.xpose.msra.mxu0 0.0
        %3526 = vmatprep.subr.mxu0 0.0
        %3527 = vmatpush1.xpose.msra.mxu0 0.0
        %3528 = vmatprep.subr.mxu0 0.0
        %3529 = vmatpush1.xpose.msra.mxu0 0.0
        %3530 = vmatprep.subr.mxu0 0.0
        %3531 = vmatpush1.xpose.msra.mxu0 0.0
        %3532 = vmatprep.subr.mxu0 0.0
        %3533 = vmatpush1.xpose.msra.mxu0 %v3429
        %3534 = vmatprep.subr.mxu0 0.0
        %3535 = vmatpush2.xpose.msra.mxu0 0.0
        %3536 = vmatprep.subr.mxu0 0.0
        %3537 = vmatpush2.xpose.msra.mxu0 0.0
        %3538 = vmatprep.subr.mxu0 0.0
        %3539 = vmatpush2.xpose.msra.mxu0 0.0
        %3540 = vmatprep.subr.mxu0 0.0
        %3541 = vmatpush2.xpose.msra.mxu0 0.0
        %3542 = vmatprep.subr.mxu0 0.0
        %3543 = vmatpush2.xpose.msra.mxu0 0.0
        %3544 = vmatprep.subr.mxu0 0.0
        %3545 = vmatpush2.xpose.msra.mxu0 0.0
        %3546 = vmatprep.subr.mxu0 0.0
        %3547 = vmatpush2.xpose.msra.mxu0 0.0
        %3548 = vmatprep.subr.mxu0 0.0
        %3549 = vmatpush2.xpose.msra.mxu0 0.0
        %3550 = vmatprep.subr.mxu0 0.0
        %3551 = vmatpush2.xpose.msra.mxu0 0.0
        %3552 = vmatprep.subr.mxu0 0.0
        %3553 = vmatpush2.xpose.msra.mxu0 0.0
        %3554 = vmatprep.subr.mxu0 0.0
        %3555 = vmatpush2.xpose.msra.mxu0 0.0
        %3556 = vmatprep.subr.mxu0 0.0
        %3557 = vmatpush2.xpose.msra.mxu0 0.0
        %3558 = vmatprep.subr.mxu0 0.0
        %3559 = vmatpush2.xpose.msra.mxu0 0.0
        %3560 = vmatprep.subr.mxu0 0.0
        %3561 = vmatpush2.xpose.msra.mxu0 0.0
        %3562 = vmatprep.subr.mxu0 0.0
        %3563 = vmatpush2.xpose.msra.mxu0 0.0
        %3564 = vmatprep.subr.mxu0 0.0
        %3565 = vmatpush2.xpose.msra.mxu0 0.0
        %3566 = vmatprep.mubr.f32.mxu0 0.0
        %3567 = vmatmul.mubr.f32.gmra.mxu0 %v3363
        %v3568 = vpop.f32.mrf.mxu0
        %v3569 = vadd.f32 %v400, %v3568
        %v3570 = vpop.f32.mrf.mxu0
        %3571 = vdwg.mxu0
        %v3572 = vsel %vm871, %v3569, -inf
        %v3573 = vmax.f32 %v3498, %v3500
        %v3574 = vmax.f32 %v3573, %v3572
        %3575 = vmax.xlane.f32.xlu0 %v3574
        %v3576 = vpop.xlane.xlu0 %3575
        %v3577 = vsub.f32 %v3498, %v3576
        %v3578 = vsub.f32 %v3500, %v3576
        %v3579 = vsub.f32 %v3569, %v3576
        %v3580 = vmul.f32 %v3577, 1.442695
        %v3581 = vpow.pop %v3580
        %v3582 = vmul.f32 %v3578, 1.442695
        %v3583 = vpow.pop %v3582
        %v3584 = vmul.f32 %v3579, 1.442695
        %v3585 = vpow.pop %v3584
        %v3586 = vadd.f32 %v3581, %v3583
        %v3587 = vsel %vm871, %v3585, 0.0
        %v3588 = vadd.f32 %v3586, %v3587
        %3589 = vadd.xlane.f32.xlu0 %v3588
        %v3590 = vpop.xlane.xlu0 %3589
        %v3591 = vrcp.pop %v3590
        %3592 = vrot.lane.b32.xlu0 %v323, 44
        %v3593 = vpop.permute.xlu0 %3592
        %3594 = vrot.lane.b32.xlu0 %v530, 44
        %v3595 = vpop.permute.xlu0 %3594
        %3596 = vrot.lane.b32.xlu0 %v532, 44
        %v3597 = vpop.permute.xlu0 %3596
        %3598 = vrot.lane.b32.xlu0 %v534, 44
        %v3599 = vpop.permute.xlu0 %3598
        %3600 = vrot.lane.b32.xlu0 %v536, 44
        %v3601 = vpop.permute.xlu0 %3600
        %3602 = vrot.lane.b32.xlu0 %v538, 44
        %v3603 = vpop.permute.xlu0 %3602
        %3604 = vrot.lane.b32.xlu0 %v540, 44
        %v3605 = vpop.permute.xlu0 %3604
        %3606 = vrot.lane.b32.xlu0 %v542, 44
        %v3607 = vpop.permute.xlu0 %3606
        %3608 = vrot.lane.b32.xlu0 %v544, 44
        %v3609 = vpop.permute.xlu0 %3608
        %3610 = vrot.lane.b32.xlu0 %v546, 44
        %v3611 = vpop.permute.xlu0 %3610
        %3612 = vrot.lane.b32.xlu0 %v548, 44
        %v3613 = vpop.permute.xlu0 %3612
        %3614 = vrot.lane.b32.xlu0 %v550, 44
        %v3615 = vpop.permute.xlu0 %3614
        %3616 = vrot.lane.b32.xlu0 %v552, 44
        %v3617 = vpop.permute.xlu0 %3616
        %3618 = vrot.lane.b32.xlu0 %v554, 44
        %v3619 = vpop.permute.xlu0 %3618
        %3620 = vrot.lane.b32.xlu0 %v556, 44
        %v3621 = vpop.permute.xlu0 %3620
        %3622 = vrot.lane.b32.xlu0 %v558, 44
        %v3623 = vpop.permute.xlu0 %3622
        %3624 = vrot.lane.b32.xlu0 %v560, 44
        %v3625 = vpop.permute.xlu0 %3624
        %3626 = vrot.lane.b32.xlu0 %v562, 44
        %v3627 = vpop.permute.xlu0 %3626
        %3628 = vrot.lane.b32.xlu0 %v564, 44
        %v3629 = vpop.permute.xlu0 %3628
        %3630 = vrot.lane.b32.xlu0 %v566, 44
        %v3631 = vpop.permute.xlu0 %3630
        %3632 = vrot.lane.b32.xlu0 %v568, 44
        %v3633 = vpop.permute.xlu0 %3632
        %3634 = vrot.lane.b32.xlu0 %v570, 44
        %v3635 = vpop.permute.xlu0 %3634
        %3636 = vrot.lane.b32.xlu0 %v572, 44
        %v3637 = vpop.permute.xlu0 %3636
        %3638 = vrot.lane.b32.xlu0 %v574, 44
        %v3639 = vpop.permute.xlu0 %3638
        %3640 = vrot.lane.b32.xlu0 %v576, 44
        %v3641 = vpop.permute.xlu0 %3640
        %3642 = vrot.lane.b32.xlu0 %v578, 44
        %v3643 = vpop.permute.xlu0 %3642
        %3644 = vrot.lane.b32.xlu0 %v580, 44
        %v3645 = vpop.permute.xlu0 %3644
        %3646 = vrot.lane.b32.xlu0 %v582, 44
        %v3647 = vpop.permute.xlu0 %3646
        %3648 = vrot.lane.b32.xlu0 %v584, 44
        %v3649 = vpop.permute.xlu0 %3648
        %3650 = vrot.lane.b32.xlu0 %v586, 44
        %v3651 = vpop.permute.xlu0 %3650
        %3652 = vrot.lane.b32.xlu0 %v588, 44
        %v3653 = vpop.permute.xlu0 %3652
        %3654 = vrot.lane.b32.xlu0 %v590, 44
        %v3655 = vpop.permute.xlu0 %3654
        %3656 = vrot.lane.b32.xlu0 %v592, 44
        %v3657 = vpop.permute.xlu0 %3656
        %v3692 = vsel %vm871, %v3585, 0
        %3694 = vmatprep.subr.mxu0 0.0
        %3695 = vmatpush1.msra.mxu0 %v3623
        %3696 = vmatprep.subr.mxu0 0.0
        %3697 = vmatpush1.msra.mxu0 %v3621
        %3698 = vmatprep.subr.mxu0 0.0
        %3699 = vmatpush1.msra.mxu0 %v3619
        %3700 = vmatprep.subr.mxu0 0.0
        %3701 = vmatpush1.msra.mxu0 %v3617
        %3702 = vmatprep.subr.mxu0 0.0
        %3703 = vmatpush1.msra.mxu0 %v3615
        %3704 = vmatprep.subr.mxu0 0.0
        %3705 = vmatpush1.msra.mxu0 %v3613
        %3706 = vmatprep.subr.mxu0 0.0
        %3707 = vmatpush1.msra.mxu0 %v3611
        %3708 = vmatprep.subr.mxu0 0.0
        %3709 = vmatpush1.msra.mxu0 %v3609
        %3710 = vmatprep.subr.mxu0 0.0
        %3711 = vmatpush1.msra.mxu0 %v3607
        %3712 = vmatprep.subr.mxu0 0.0
        %3713 = vmatpush1.msra.mxu0 %v3605
        %3714 = vmatprep.subr.mxu0 0.0
        %3715 = vmatpush1.msra.mxu0 %v3603
        %3716 = vmatprep.subr.mxu0 0.0
        %3717 = vmatpush1.msra.mxu0 %v3601
        %3718 = vmatprep.subr.mxu0 0.0
        %3719 = vmatpush1.msra.mxu0 %v3599
        %3720 = vmatprep.subr.mxu0 0.0
        %3721 = vmatpush1.msra.mxu0 %v3597
        %3722 = vmatprep.subr.mxu0 0.0
        %3723 = vmatpush1.msra.mxu0 %v3595
        %3724 = vmatprep.subr.mxu0 0.0
        %3725 = vmatpush1.msra.mxu0 %v3593
        %3726 = vmatprep.subr.mxu0 0.0
        %3727 = vmatpush2.msra.mxu0 %v3655
        %3728 = vmatprep.subr.mxu0 0.0
        %3729 = vmatpush2.msra.mxu0 %v3653
        %3730 = vmatprep.subr.mxu0 0.0
        %3731 = vmatpush2.msra.mxu0 %v3651
        %3732 = vmatprep.subr.mxu0 0.0
        %3733 = vmatpush2.msra.mxu0 %v3649
        %3734 = vmatprep.subr.mxu0 0.0
        %3735 = vmatpush2.msra.mxu0 %v3647
        %3736 = vmatprep.subr.mxu0 0.0
        %3737 = vmatpush2.msra.mxu0 %v3645
        %3738 = vmatprep.subr.mxu0 0.0
        %3739 = vmatpush2.msra.mxu0 %v3643
        %3740 = vmatprep.subr.mxu0 0.0
        %3741 = vmatpush2.msra.mxu0 %v3641
        %3742 = vmatprep.subr.mxu0 0.0
        %3743 = vmatpush2.msra.mxu0 %v3639
        %3744 = vmatprep.subr.mxu0 0.0
        %3745 = vmatpush2.msra.mxu0 %v3637
        %3746 = vmatprep.subr.mxu0 0.0
        %3747 = vmatpush2.msra.mxu0 %v3635
        %3748 = vmatprep.subr.mxu0 0.0
        %3749 = vmatpush2.msra.mxu0 %v3633
        %3750 = vmatprep.subr.mxu0 0.0
        %3751 = vmatpush2.msra.mxu0 %v3631
        %3752 = vmatprep.subr.mxu0 0.0
        %3753 = vmatpush2.msra.mxu0 %v3629
        %3754 = vmatprep.subr.mxu0 0.0
        %3755 = vmatpush2.msra.mxu0 %v3627
        %3756 = vmatprep.subr.mxu0 0.0
        %3757 = vmatpush2.msra.mxu0 %v3625
        %3758 = vmatprep.mubr.f32.mxu0 %v3583
        %3759 = vmatmul.mubr.f32.gmra.mxu0 %v3581
        %v3760 = vpop.f32.mrf.mxu0
        %v3761 = vadd.f32 0.0, %v3760
        %v3762 = vpop.f32.mrf.mxu0
        %3763 = vdwg.mxu0
        %3764 = vmatprep.subr.mxu0 0.0
        %3765 = vmatpush1.msra.mxu0 0.0
        %3766 = vmatprep.subr.mxu0 0.0
        %3767 = vmatpush1.msra.mxu0 0.0
        %3768 = vmatprep.subr.mxu0 0.0
        %3769 = vmatpush1.msra.mxu0 0.0
        %3770 = vmatprep.subr.mxu0 0.0
        %3771 = vmatpush1.msra.mxu0 0.0
        %3772 = vmatprep.subr.mxu0 0.0
        %3773 = vmatpush1.msra.mxu0 0.0
        %3774 = vmatprep.subr.mxu0 0.0
        %3775 = vmatpush1.msra.mxu0 0.0
        %3776 = vmatprep.subr.mxu0 0.0
        %3777 = vmatpush1.msra.mxu0 0.0
        %3778 = vmatprep.subr.mxu0 0.0
        %3779 = vmatpush1.msra.mxu0 0.0
        %3780 = vmatprep.subr.mxu0 0.0
        %3781 = vmatpush1.msra.mxu0 0.0
        %3782 = vmatprep.subr.mxu0 0.0
        %3783 = vmatpush1.msra.mxu0 0.0
        %3784 = vmatprep.subr.mxu0 0.0
        %3785 = vmatpush1.msra.mxu0 0.0
        %3786 = vmatprep.subr.mxu0 0.0
        %3787 = vmatpush1.msra.mxu0 0.0
        %3788 = vmatprep.subr.mxu0 0.0
        %3789 = vmatpush1.msra.mxu0 0.0
        %3790 = vmatprep.subr.mxu0 0.0
        %3791 = vmatpush1.msra.mxu0 0.0
        %3792 = vmatprep.subr.mxu0 0.0
        %3793 = vmatpush1.msra.mxu0 0.0
        %3794 = vmatprep.subr.mxu0 0.0
        %3795 = vmatpush1.msra.mxu0 %v3657
        %3796 = vmatprep.subr.mxu0 0.0
        %3797 = vmatpush2.msra.mxu0 0.0
        %3798 = vmatprep.subr.mxu0 0.0
        %3799 = vmatpush2.msra.mxu0 0.0
        %3800 = vmatprep.subr.mxu0 0.0
        %3801 = vmatpush2.msra.mxu0 0.0
        %3802 = vmatprep.subr.mxu0 0.0
        %3803 = vmatpush2.msra.mxu0 0.0
        %3804 = vmatprep.subr.mxu0 0.0
        %3805 = vmatpush2.msra.mxu0 0.0
        %3806 = vmatprep.subr.mxu0 0.0
        %3807 = vmatpush2.msra.mxu0 0.0
        %3808 = vmatprep.subr.mxu0 0.0
        %3809 = vmatpush2.msra.mxu0 0.0
        %3810 = vmatprep.subr.mxu0 0.0
        %3811 = vmatpush2.msra.mxu0 0.0
        %3812 = vmatprep.subr.mxu0 0.0
        %3813 = vmatpush2.msra.mxu0 0.0
        %3814 = vmatprep.subr.mxu0 0.0
        %3815 = vmatpush2.msra.mxu0 0.0
        %3816 = vmatprep.subr.mxu0 0.0
        %3817 = vmatpush2.msra.mxu0 0.0
        %3818 = vmatprep.subr.mxu0 0.0
        %3819 = vmatpush2.msra.mxu0 0.0
        %3820 = vmatprep.subr.mxu0 0.0
        %3821 = vmatpush2.msra.mxu0 0.0
        %3822 = vmatprep.subr.mxu0 0.0
        %3823 = vmatpush2.msra.mxu0 0.0
        %3824 = vmatprep.subr.mxu0 0.0
        %3825 = vmatpush2.msra.mxu0 0.0
        %3826 = vmatprep.subr.mxu0 0.0
        %3827 = vmatpush2.msra.mxu0 0.0
        %3828 = vmatprep.mubr.f32.mxu0 0.0
        %3829 = vmatmul.mubr.f32.gmra.mxu0 %v3692
        %v3830 = vpop.f32.mrf.mxu0
        %v3831 = vadd.f32 %v3761, %v3830
        %v3832 = vpop.f32.mrf.mxu0
        %3833 = vdwg.mxu0
        %v3834 = vmul.f32 %v3831, %v3591
        %3835 = vrot.lane.b32.xlu0 %v326, 104
        %v3836 = vpop.permute.xlu0 %3835
        %3837 = vrot.lane.b32.xlu0 %v323, 72
        %v3838 = vpop.permute.xlu0 %3837
        %3839 = vrot.lane.b32.xlu0 %v434, 72
        %v3840 = vpop.permute.xlu0 %3839
        %3841 = vrot.lane.b32.xlu0 %v436, 72
        %v3842 = vpop.permute.xlu0 %3841
        %3843 = vrot.lane.b32.xlu0 %v438, 72
        %v3844 = vpop.permute.xlu0 %3843
        %3845 = vrot.lane.b32.xlu0 %v440, 72
        %v3846 = vpop.permute.xlu0 %3845
        %3847 = vrot.lane.b32.xlu0 %v442, 72
        %v3848 = vpop.permute.xlu0 %3847
        %3849 = vrot.lane.b32.xlu0 %v444, 72
        %v3850 = vpop.permute.xlu0 %3849
        %3851 = vrot.lane.b32.xlu0 %v446, 72
        %v3852 = vpop.permute.xlu0 %3851
        %3853 = vrot.lane.b32.xlu0 %v448, 72
        %v3854 = vpop.permute.xlu0 %3853
        %3855 = vrot.lane.b32.xlu0 %v450, 72
        %v3856 = vpop.permute.xlu0 %3855
        %3857 = vrot.lane.b32.xlu0 %v452, 72
        %v3858 = vpop.permute.xlu0 %3857
        %3859 = vrot.lane.b32.xlu0 %v454, 72
        %v3860 = vpop.permute.xlu0 %3859
        %3861 = vrot.lane.b32.xlu0 %v456, 72
        %v3862 = vpop.permute.xlu0 %3861
        %3863 = vrot.lane.b32.xlu0 %v458, 72
        %v3864 = vpop.permute.xlu0 %3863
        %3865 = vrot.lane.b32.xlu0 %v460, 72
        %v3866 = vpop.permute.xlu0 %3865
        %3867 = vrot.lane.b32.xlu0 %v462, 72
        %v3868 = vpop.permute.xlu0 %3867
        %3869 = vrot.lane.b32.xlu0 %v464, 72
        %v3870 = vpop.permute.xlu0 %3869
        %3871 = vrot.lane.b32.xlu0 %v466, 72
        %v3872 = vpop.permute.xlu0 %3871
        %3873 = vrot.lane.b32.xlu0 %v468, 72
        %v3874 = vpop.permute.xlu0 %3873
        %3875 = vrot.lane.b32.xlu0 %v470, 72
        %v3876 = vpop.permute.xlu0 %3875
        %3877 = vrot.lane.b32.xlu0 %v472, 72
        %v3878 = vpop.permute.xlu0 %3877
        %3879 = vrot.lane.b32.xlu0 %v474, 72
        %v3880 = vpop.permute.xlu0 %3879
        %3881 = vrot.lane.b32.xlu0 %v476, 72
        %v3882 = vpop.permute.xlu0 %3881
        %3883 = vrot.lane.b32.xlu0 %v478, 72
        %v3884 = vpop.permute.xlu0 %3883
        %3885 = vrot.lane.b32.xlu0 %v480, 72
        %v3886 = vpop.permute.xlu0 %3885
        %3887 = vrot.lane.b32.xlu0 %v482, 72
        %v3888 = vpop.permute.xlu0 %3887
        %3889 = vrot.lane.b32.xlu0 %v484, 72
        %v3890 = vpop.permute.xlu0 %3889
        %3891 = vrot.lane.b32.xlu0 %v486, 72
        %v3892 = vpop.permute.xlu0 %3891
        %3893 = vrot.lane.b32.xlu0 %v488, 72
        %v3894 = vpop.permute.xlu0 %3893
        %3895 = vrot.lane.b32.xlu0 %v490, 72
        %v3896 = vpop.permute.xlu0 %3895
        %3897 = vrot.lane.b32.xlu0 %v492, 72
        %v3898 = vpop.permute.xlu0 %3897
        %3899 = vrot.lane.b32.xlu0 %v494, 72
        %v3900 = vpop.permute.xlu0 %3899
        %3901 = vrot.lane.b32.xlu0 %v496, 72
        %v3902 = vpop.permute.xlu0 %3901
        %v3903 = vsel %vm660, %v3836, 0
        %v3905 = vsel %vm660, %v3838, 0
        %v3907 = vsel %vm660, %v3840, 0
        %v3909 = vsel %vm660, %v3842, 0
        %v3911 = vsel %vm660, %v3844, 0
        %v3913 = vsel %vm660, %v3846, 0
        %v3915 = vsel %vm660, %v3848, 0
        %v3917 = vsel %vm660, %v3850, 0
        %v3919 = vsel %vm660, %v3852, 0
        %v3921 = vsel %vm660, %v3854, 0
        %v3923 = vsel %vm660, %v3856, 0
        %v3925 = vsel %vm660, %v3858, 0
        %v3927 = vsel %vm660, %v3860, 0
        %v3929 = vsel %vm660, %v3862, 0
        %v3931 = vsel %vm660, %v3864, 0
        %v3933 = vsel %vm660, %v3866, 0
        %v3935 = vsel %vm660, %v3868, 0
        %v3937 = vsel %vm660, %v3870, 0
        %v3939 = vsel %vm660, %v3872, 0
        %v3941 = vsel %vm660, %v3874, 0
        %v3943 = vsel %vm660, %v3876, 0
        %v3945 = vsel %vm660, %v3878, 0
        %v3947 = vsel %vm660, %v3880, 0
        %v3949 = vsel %vm660, %v3882, 0
        %v3951 = vsel %vm660, %v3884, 0
        %v3953 = vsel %vm660, %v3886, 0
        %v3955 = vsel %vm660, %v3888, 0
        %v3957 = vsel %vm660, %v3890, 0
        %v3959 = vsel %vm660, %v3892, 0
        %v3961 = vsel %vm660, %v3894, 0
        %v3963 = vsel %vm660, %v3896, 0
        %v3965 = vsel %vm660, %v3898, 0
        %v3967 = vsel %vm660, %v3900, 0
        %v3969 = vsel %vm660, %v3902, 0
        %3971 = vmatprep.subr.mxu0 0.0
        %3972 = vmatpush1.xpose.msra.mxu0 %v3935
        %3973 = vmatprep.subr.mxu0 0.0
        %3974 = vmatpush1.xpose.msra.mxu0 %v3933
        %3975 = vmatprep.subr.mxu0 0.0
        %3976 = vmatpush1.xpose.msra.mxu0 %v3931
        %3977 = vmatprep.subr.mxu0 0.0
        %3978 = vmatpush1.xpose.msra.mxu0 %v3929
        %3979 = vmatprep.subr.mxu0 0.0
        %3980 = vmatpush1.xpose.msra.mxu0 %v3927
        %3981 = vmatprep.subr.mxu0 0.0
        %3982 = vmatpush1.xpose.msra.mxu0 %v3925
        %3983 = vmatprep.subr.mxu0 0.0
        %3984 = vmatpush1.xpose.msra.mxu0 %v3923
        %3985 = vmatprep.subr.mxu0 0.0
        %3986 = vmatpush1.xpose.msra.mxu0 %v3921
        %3987 = vmatprep.subr.mxu0 0.0
        %3988 = vmatpush1.xpose.msra.mxu0 %v3919
        %3989 = vmatprep.subr.mxu0 0.0
        %3990 = vmatpush1.xpose.msra.mxu0 %v3917
        %3991 = vmatprep.subr.mxu0 0.0
        %3992 = vmatpush1.xpose.msra.mxu0 %v3915
        %3993 = vmatprep.subr.mxu0 0.0
        %3994 = vmatpush1.xpose.msra.mxu0 %v3913
        %3995 = vmatprep.subr.mxu0 0.0
        %3996 = vmatpush1.xpose.msra.mxu0 %v3911
        %3997 = vmatprep.subr.mxu0 0.0
        %3998 = vmatpush1.xpose.msra.mxu0 %v3909
        %3999 = vmatprep.subr.mxu0 0.0
        %4000 = vmatpush1.xpose.msra.mxu0 %v3907
        %4001 = vmatprep.subr.mxu0 0.0
        %4002 = vmatpush1.xpose.msra.mxu0 %v3905
        %4003 = vmatprep.subr.mxu0 0.0
        %4004 = vmatpush2.xpose.msra.mxu0 %v3967
        %4005 = vmatprep.subr.mxu0 0.0
        %4006 = vmatpush2.xpose.msra.mxu0 %v3965
        %4007 = vmatprep.subr.mxu0 0.0
        %4008 = vmatpush2.xpose.msra.mxu0 %v3963
        %4009 = vmatprep.subr.mxu0 0.0
        %4010 = vmatpush2.xpose.msra.mxu0 %v3961
        %4011 = vmatprep.subr.mxu0 0.0
        %4012 = vmatpush2.xpose.msra.mxu0 %v3959
        %4013 = vmatprep.subr.mxu0 0.0
        %4014 = vmatpush2.xpose.msra.mxu0 %v3957
        %4015 = vmatprep.subr.mxu0 0.0
        %4016 = vmatpush2.xpose.msra.mxu0 %v3955
        %4017 = vmatprep.subr.mxu0 0.0
        %4018 = vmatpush2.xpose.msra.mxu0 %v3953
        %4019 = vmatprep.subr.mxu0 0.0
        %4020 = vmatpush2.xpose.msra.mxu0 %v3951
        %4021 = vmatprep.subr.mxu0 0.0
        %4022 = vmatpush2.xpose.msra.mxu0 %v3949
        %4023 = vmatprep.subr.mxu0 0.0
        %4024 = vmatpush2.xpose.msra.mxu0 %v3947
        %4025 = vmatprep.subr.mxu0 0.0
        %4026 = vmatpush2.xpose.msra.mxu0 %v3945
        %4027 = vmatprep.subr.mxu0 0.0
        %4028 = vmatpush2.xpose.msra.mxu0 %v3943
        %4029 = vmatprep.subr.mxu0 0.0
        %4030 = vmatpush2.xpose.msra.mxu0 %v3941
        %4031 = vmatprep.subr.mxu0 0.0
        %4032 = vmatpush2.xpose.msra.mxu0 %v3939
        %4033 = vmatprep.subr.mxu0 0.0
        %4034 = vmatpush2.xpose.msra.mxu0 %v3937
        %4035 = vmatprep.mubr.f32.mxu0 0.0
        %4036 = vmatmul.mubr.f32.gmra.mxu0 %v3903
        %v4037 = vpop.f32.mrf.mxu0
        %v4038 = vadd.f32 %v398, %v4037
        %v4039 = vpop.f32.mrf.mxu0
        %v4040 = vadd.f32 %v399, %v4039
        %4041 = vdwg.mxu0
        %4042 = vmatprep.subr.mxu0 0.0
        %4043 = vmatpush1.xpose.msra.mxu0 0.0
        %4044 = vmatprep.subr.mxu0 0.0
        %4045 = vmatpush1.xpose.msra.mxu0 0.0
        %4046 = vmatprep.subr.mxu0 0.0
        %4047 = vmatpush1.xpose.msra.mxu0 0.0
        %4048 = vmatprep.subr.mxu0 0.0
        %4049 = vmatpush1.xpose.msra.mxu0 0.0
        %4050 = vmatprep.subr.mxu0 0.0
        %4051 = vmatpush1.xpose.msra.mxu0 0.0
        %4052 = vmatprep.subr.mxu0 0.0
        %4053 = vmatpush1.xpose.msra.mxu0 0.0
        %4054 = vmatprep.subr.mxu0 0.0
        %4055 = vmatpush1.xpose.msra.mxu0 0.0
        %4056 = vmatprep.subr.mxu0 0.0
        %4057 = vmatpush1.xpose.msra.mxu0 0.0
        %4058 = vmatprep.subr.mxu0 0.0
        %4059 = vmatpush1.xpose.msra.mxu0 0.0
        %4060 = vmatprep.subr.mxu0 0.0
        %4061 = vmatpush1.xpose.msra.mxu0 0.0
        %4062 = vmatprep.subr.mxu0 0.0
        %4063 = vmatpush1.xpose.msra.mxu0 0.0
        %4064 = vmatprep.subr.mxu0 0.0
        %4065 = vmatpush1.xpose.msra.mxu0 0.0
        %4066 = vmatprep.subr.mxu0 0.0
        %4067 = vmatpush1.xpose.msra.mxu0 0.0
        %4068 = vmatprep.subr.mxu0 0.0
        %4069 = vmatpush1.xpose.msra.mxu0 0.0
        %4070 = vmatprep.subr.mxu0 0.0
        %4071 = vmatpush1.xpose.msra.mxu0 0.0
        %4072 = vmatprep.subr.mxu0 0.0
        %4073 = vmatpush1.xpose.msra.mxu0 %v3969
        %4074 = vmatprep.subr.mxu0 0.0
        %4075 = vmatpush2.xpose.msra.mxu0 0.0
        %4076 = vmatprep.subr.mxu0 0.0
        %4077 = vmatpush2.xpose.msra.mxu0 0.0
        %4078 = vmatprep.subr.mxu0 0.0
        %4079 = vmatpush2.xpose.msra.mxu0 0.0
        %4080 = vmatprep.subr.mxu0 0.0
        %4081 = vmatpush2.xpose.msra.mxu0 0.0
        %4082 = vmatprep.subr.mxu0 0.0
        %4083 = vmatpush2.xpose.msra.mxu0 0.0
        %4084 = vmatprep.subr.mxu0 0.0
        %4085 = vmatpush2.xpose.msra.mxu0 0.0
        %4086 = vmatprep.subr.mxu0 0.0
        %4087 = vmatpush2.xpose.msra.mxu0 0.0
        %4088 = vmatprep.subr.mxu0 0.0
        %4089 = vmatpush2.xpose.msra.mxu0 0.0
        %4090 = vmatprep.subr.mxu0 0.0
        %4091 = vmatpush2.xpose.msra.mxu0 0.0
        %4092 = vmatprep.subr.mxu0 0.0
        %4093 = vmatpush2.xpose.msra.mxu0 0.0
        %4094 = vmatprep.subr.mxu0 0.0
        %4095 = vmatpush2.xpose.msra.mxu0 0.0
        %4096 = vmatprep.subr.mxu0 0.0
        %4097 = vmatpush2.xpose.msra.mxu0 0.0
        %4098 = vmatprep.subr.mxu0 0.0
        %4099 = vmatpush2.xpose.msra.mxu0 0.0
        %4100 = vmatprep.subr.mxu0 0.0
        %4101 = vmatpush2.xpose.msra.mxu0 0.0
        %4102 = vmatprep.subr.mxu0 0.0
        %4103 = vmatpush2.xpose.msra.mxu0 0.0
        %4104 = vmatprep.subr.mxu0 0.0
        %4105 = vmatpush2.xpose.msra.mxu0 0.0
        %4106 = vmatprep.mubr.f32.mxu0 0.0
        %4107 = vmatmul.mubr.f32.gmra.mxu0 %v3903
        %v4108 = vpop.f32.mrf.mxu0
        %v4109 = vadd.f32 %v400, %v4108
        %v4110 = vpop.f32.mrf.mxu0
        %4111 = vdwg.mxu0
        %v4112 = vsel %vm871, %v4109, -inf
        %v4113 = vmax.f32 %v4038, %v4040
        %v4114 = vmax.f32 %v4113, %v4112
        %4115 = vmax.xlane.f32.xlu0 %v4114
        %v4116 = vpop.xlane.xlu0 %4115
        %v4117 = vsub.f32 %v4038, %v4116
        %v4118 = vsub.f32 %v4040, %v4116
        %v4119 = vsub.f32 %v4109, %v4116
        %v4120 = vmul.f32 %v4117, 1.442695
        %v4121 = vpow.pop %v4120
        %v4122 = vmul.f32 %v4118, 1.442695
        %v4123 = vpow.pop %v4122
        %v4124 = vmul.f32 %v4119, 1.442695
        %v4125 = vpow.pop %v4124
        %v4126 = vadd.f32 %v4121, %v4123
        %v4127 = vsel %vm871, %v4125, 0.0
        %v4128 = vadd.f32 %v4126, %v4127
        %4129 = vadd.xlane.f32.xlu0 %v4128
        %v4130 = vpop.xlane.xlu0 %4129
        %v4131 = vrcp.pop %v4130
        %4132 = vrot.lane.b32.xlu0 %v323, 40
        %v4133 = vpop.permute.xlu0 %4132
        %4134 = vrot.lane.b32.xlu0 %v530, 40
        %v4135 = vpop.permute.xlu0 %4134
        %4136 = vrot.lane.b32.xlu0 %v532, 40
        %v4137 = vpop.permute.xlu0 %4136
        %4138 = vrot.lane.b32.xlu0 %v534, 40
        %v4139 = vpop.permute.xlu0 %4138
        %4140 = vrot.lane.b32.xlu0 %v536, 40
        %v4141 = vpop.permute.xlu0 %4140
        %4142 = vrot.lane.b32.xlu0 %v538, 40
        %v4143 = vpop.permute.xlu0 %4142
        %4144 = vrot.lane.b32.xlu0 %v540, 40
        %v4145 = vpop.permute.xlu0 %4144
        %4146 = vrot.lane.b32.xlu0 %v542, 40
        %v4147 = vpop.permute.xlu0 %4146
        %4148 = vrot.lane.b32.xlu0 %v544, 40
        %v4149 = vpop.permute.xlu0 %4148
        %4150 = vrot.lane.b32.xlu0 %v546, 40
        %v4151 = vpop.permute.xlu0 %4150
        %4152 = vrot.lane.b32.xlu0 %v548, 40
        %v4153 = vpop.permute.xlu0 %4152
        %4154 = vrot.lane.b32.xlu0 %v550, 40
        %v4155 = vpop.permute.xlu0 %4154
        %4156 = vrot.lane.b32.xlu0 %v552, 40
        %v4157 = vpop.permute.xlu0 %4156
        %4158 = vrot.lane.b32.xlu0 %v554, 40
        %v4159 = vpop.permute.xlu0 %4158
        %4160 = vrot.lane.b32.xlu0 %v556, 40
        %v4161 = vpop.permute.xlu0 %4160
        %4162 = vrot.lane.b32.xlu0 %v558, 40
        %v4163 = vpop.permute.xlu0 %4162
        %4164 = vrot.lane.b32.xlu0 %v560, 40
        %v4165 = vpop.permute.xlu0 %4164
        %4166 = vrot.lane.b32.xlu0 %v562, 40
        %v4167 = vpop.permute.xlu0 %4166
        %4168 = vrot.lane.b32.xlu0 %v564, 40
        %v4169 = vpop.permute.xlu0 %4168
        %4170 = vrot.lane.b32.xlu0 %v566, 40
        %v4171 = vpop.permute.xlu0 %4170
        %4172 = vrot.lane.b32.xlu0 %v568, 40
        %v4173 = vpop.permute.xlu0 %4172
        %4174 = vrot.lane.b32.xlu0 %v570, 40
        %v4175 = vpop.permute.xlu0 %4174
        %4176 = vrot.lane.b32.xlu0 %v572, 40
        %v4177 = vpop.permute.xlu0 %4176
        %4178 = vrot.lane.b32.xlu0 %v574, 40
        %v4179 = vpop.permute.xlu0 %4178
        %4180 = vrot.lane.b32.xlu0 %v576, 40
        %v4181 = vpop.permute.xlu0 %4180
        %4182 = vrot.lane.b32.xlu0 %v578, 40
        %v4183 = vpop.permute.xlu0 %4182
        %4184 = vrot.lane.b32.xlu0 %v580, 40
        %v4185 = vpop.permute.xlu0 %4184
        %4186 = vrot.lane.b32.xlu0 %v582, 40
        %v4187 = vpop.permute.xlu0 %4186
        %4188 = vrot.lane.b32.xlu0 %v584, 40
        %v4189 = vpop.permute.xlu0 %4188
        %4190 = vrot.lane.b32.xlu0 %v586, 40
        %v4191 = vpop.permute.xlu0 %4190
        %4192 = vrot.lane.b32.xlu0 %v588, 40
        %v4193 = vpop.permute.xlu0 %4192
        %4194 = vrot.lane.b32.xlu0 %v590, 40
        %v4195 = vpop.permute.xlu0 %4194
        %4196 = vrot.lane.b32.xlu0 %v592, 40
        %v4197 = vpop.permute.xlu0 %4196
        %v4232 = vsel %vm871, %v4125, 0
        %4234 = vmatprep.subr.mxu0 0.0
        %4235 = vmatpush1.msra.mxu0 %v4163
        %4236 = vmatprep.subr.mxu0 0.0
        %4237 = vmatpush1.msra.mxu0 %v4161
        %4238 = vmatprep.subr.mxu0 0.0
        %4239 = vmatpush1.msra.mxu0 %v4159
        %4240 = vmatprep.subr.mxu0 0.0
        %4241 = vmatpush1.msra.mxu0 %v4157
        %4242 = vmatprep.subr.mxu0 0.0
        %4243 = vmatpush1.msra.mxu0 %v4155
        %4244 = vmatprep.subr.mxu0 0.0
        %4245 = vmatpush1.msra.mxu0 %v4153
        %4246 = vmatprep.subr.mxu0 0.0
        %4247 = vmatpush1.msra.mxu0 %v4151
        %4248 = vmatprep.subr.mxu0 0.0
        %4249 = vmatpush1.msra.mxu0 %v4149
        %4250 = vmatprep.subr.mxu0 0.0
        %4251 = vmatpush1.msra.mxu0 %v4147
        %4252 = vmatprep.subr.mxu0 0.0
        %4253 = vmatpush1.msra.mxu0 %v4145
        %4254 = vmatprep.subr.mxu0 0.0
        %4255 = vmatpush1.msra.mxu0 %v4143
        %4256 = vmatprep.subr.mxu0 0.0
        %4257 = vmatpush1.msra.mxu0 %v4141
        %4258 = vmatprep.subr.mxu0 0.0
        %4259 = vmatpush1.msra.mxu0 %v4139
        %4260 = vmatprep.subr.mxu0 0.0
        %4261 = vmatpush1.msra.mxu0 %v4137
        %4262 = vmatprep.subr.mxu0 0.0
        %4263 = vmatpush1.msra.mxu0 %v4135
        %4264 = vmatprep.subr.mxu0 0.0
        %4265 = vmatpush1.msra.mxu0 %v4133
        %4266 = vmatprep.subr.mxu0 0.0
        %4267 = vmatpush2.msra.mxu0 %v4195
        %4268 = vmatprep.subr.mxu0 0.0
        %4269 = vmatpush2.msra.mxu0 %v4193
        %4270 = vmatprep.subr.mxu0 0.0
        %4271 = vmatpush2.msra.mxu0 %v4191
        %4272 = vmatprep.subr.mxu0 0.0
        %4273 = vmatpush2.msra.mxu0 %v4189
        %4274 = vmatprep.subr.mxu0 0.0
        %4275 = vmatpush2.msra.mxu0 %v4187
        %4276 = vmatprep.subr.mxu0 0.0
        %4277 = vmatpush2.msra.mxu0 %v4185
        %4278 = vmatprep.subr.mxu0 0.0
        %4279 = vmatpush2.msra.mxu0 %v4183
        %4280 = vmatprep.subr.mxu0 0.0
        %4281 = vmatpush2.msra.mxu0 %v4181
        %4282 = vmatprep.subr.mxu0 0.0
        %4283 = vmatpush2.msra.mxu0 %v4179
        %4284 = vmatprep.subr.mxu0 0.0
        %4285 = vmatpush2.msra.mxu0 %v4177
        %4286 = vmatprep.subr.mxu0 0.0
        %4287 = vmatpush2.msra.mxu0 %v4175
        %4288 = vmatprep.subr.mxu0 0.0
        %4289 = vmatpush2.msra.mxu0 %v4173
        %4290 = vmatprep.subr.mxu0 0.0
        %4291 = vmatpush2.msra.mxu0 %v4171
        %4292 = vmatprep.subr.mxu0 0.0
        %4293 = vmatpush2.msra.mxu0 %v4169
        %4294 = vmatprep.subr.mxu0 0.0
        %4295 = vmatpush2.msra.mxu0 %v4167
        %4296 = vmatprep.subr.mxu0 0.0
        %4297 = vmatpush2.msra.mxu0 %v4165
        %4298 = vmatprep.mubr.f32.mxu0 %v4123
        %4299 = vmatmul.mubr.f32.gmra.mxu0 %v4121
        %v4300 = vpop.f32.mrf.mxu0
        %v4301 = vadd.f32 0.0, %v4300
        %v4302 = vpop.f32.mrf.mxu0
        %4303 = vdwg.mxu0
        %4304 = vmatprep.subr.mxu0 0.0
        %4305 = vmatpush1.msra.mxu0 0.0
        %4306 = vmatprep.subr.mxu0 0.0
        %4307 = vmatpush1.msra.mxu0 0.0
        %4308 = vmatprep.subr.mxu0 0.0
        %4309 = vmatpush1.msra.mxu0 0.0
        %4310 = vmatprep.subr.mxu0 0.0
        %4311 = vmatpush1.msra.mxu0 0.0
        %4312 = vmatprep.subr.mxu0 0.0
        %4313 = vmatpush1.msra.mxu0 0.0
        %4314 = vmatprep.subr.mxu0 0.0
        %4315 = vmatpush1.msra.mxu0 0.0
        %4316 = vmatprep.subr.mxu0 0.0
        %4317 = vmatpush1.msra.mxu0 0.0
        %4318 = vmatprep.subr.mxu0 0.0
        %4319 = vmatpush1.msra.mxu0 0.0
        %4320 = vmatprep.subr.mxu0 0.0
        %4321 = vmatpush1.msra.mxu0 0.0
        %4322 = vmatprep.subr.mxu0 0.0
        %4323 = vmatpush1.msra.mxu0 0.0
        %4324 = vmatprep.subr.mxu0 0.0
        %4325 = vmatpush1.msra.mxu0 0.0
        %4326 = vmatprep.subr.mxu0 0.0
        %4327 = vmatpush1.msra.mxu0 0.0
        %4328 = vmatprep.subr.mxu0 0.0
        %4329 = vmatpush1.msra.mxu0 0.0
        %4330 = vmatprep.subr.mxu0 0.0
        %4331 = vmatpush1.msra.mxu0 0.0
        %4332 = vmatprep.subr.mxu0 0.0
        %4333 = vmatpush1.msra.mxu0 0.0
        %4334 = vmatprep.subr.mxu0 0.0
        %4335 = vmatpush1.msra.mxu0 %v4197
        %4336 = vmatprep.subr.mxu0 0.0
        %4337 = vmatpush2.msra.mxu0 0.0
        %4338 = vmatprep.subr.mxu0 0.0
        %4339 = vmatpush2.msra.mxu0 0.0
        %4340 = vmatprep.subr.mxu0 0.0
        %4341 = vmatpush2.msra.mxu0 0.0
        %4342 = vmatprep.subr.mxu0 0.0
        %4343 = vmatpush2.msra.mxu0 0.0
        %4344 = vmatprep.subr.mxu0 0.0
        %4345 = vmatpush2.msra.mxu0 0.0
        %4346 = vmatprep.subr.mxu0 0.0
        %4347 = vmatpush2.msra.mxu0 0.0
        %4348 = vmatprep.subr.mxu0 0.0
        %4349 = vmatpush2.msra.mxu0 0.0
        %4350 = vmatprep.subr.mxu0 0.0
        %4351 = vmatpush2.msra.mxu0 0.0
        %4352 = vmatprep.subr.mxu0 0.0
        %4353 = vmatpush2.msra.mxu0 0.0
        %4354 = vmatprep.subr.mxu0 0.0
        %4355 = vmatpush2.msra.mxu0 0.0
        %4356 = vmatprep.subr.mxu0 0.0
        %4357 = vmatpush2.msra.mxu0 0.0
        %4358 = vmatprep.subr.mxu0 0.0
        %4359 = vmatpush2.msra.mxu0 0.0
        %4360 = vmatprep.subr.mxu0 0.0
        %4361 = vmatpush2.msra.mxu0 0.0
        %4362 = vmatprep.subr.mxu0 0.0
        %4363 = vmatpush2.msra.mxu0 0.0
        %4364 = vmatprep.subr.mxu0 0.0
        %4365 = vmatpush2.msra.mxu0 0.0
        %4366 = vmatprep.subr.mxu0 0.0
        %4367 = vmatpush2.msra.mxu0 0.0
        %4368 = vmatprep.mubr.f32.mxu0 0.0
        %4369 = vmatmul.mubr.f32.gmra.mxu0 %v4232
        %v4370 = vpop.f32.mrf.mxu0
        %v4371 = vadd.f32 %v4301, %v4370
        %v4372 = vpop.f32.mrf.mxu0
        %4373 = vdwg.mxu0
        %v4374 = vmul.f32 %v4371, %v4131
        %4375 = vrot.lane.b32.xlu0 %v326, 100
        %v4376 = vpop.permute.xlu0 %4375
        %4377 = vrot.lane.b32.xlu0 %v323, 68
        %v4378 = vpop.permute.xlu0 %4377
        %4379 = vrot.lane.b32.xlu0 %v434, 68
        %v4380 = vpop.permute.xlu0 %4379
        %4381 = vrot.lane.b32.xlu0 %v436, 68
        %v4382 = vpop.permute.xlu0 %4381
        %4383 = vrot.lane.b32.xlu0 %v438, 68
        %v4384 = vpop.permute.xlu0 %4383
        %4385 = vrot.lane.b32.xlu0 %v440, 68
        %v4386 = vpop.permute.xlu0 %4385
        %4387 = vrot.lane.b32.xlu0 %v442, 68
        %v4388 = vpop.permute.xlu0 %4387
        %4389 = vrot.lane.b32.xlu0 %v444, 68
        %v4390 = vpop.permute.xlu0 %4389
        %4391 = vrot.lane.b32.xlu0 %v446, 68
        %v4392 = vpop.permute.xlu0 %4391
        %4393 = vrot.lane.b32.xlu0 %v448, 68
        %v4394 = vpop.permute.xlu0 %4393
        %4395 = vrot.lane.b32.xlu0 %v450, 68
        %v4396 = vpop.permute.xlu0 %4395
        %4397 = vrot.lane.b32.xlu0 %v452, 68
        %v4398 = vpop.permute.xlu0 %4397
        %4399 = vrot.lane.b32.xlu0 %v454, 68
        %v4400 = vpop.permute.xlu0 %4399
        %4401 = vrot.lane.b32.xlu0 %v456, 68
        %v4402 = vpop.permute.xlu0 %4401
        %4403 = vrot.lane.b32.xlu0 %v458, 68
        %v4404 = vpop.permute.xlu0 %4403
        %4405 = vrot.lane.b32.xlu0 %v460, 68
        %v4406 = vpop.permute.xlu0 %4405
        %4407 = vrot.lane.b32.xlu0 %v462, 68
        %v4408 = vpop.permute.xlu0 %4407
        %4409 = vrot.lane.b32.xlu0 %v464, 68
        %v4410 = vpop.permute.xlu0 %4409
        %4411 = vrot.lane.b32.xlu0 %v466, 68
        %v4412 = vpop.permute.xlu0 %4411
        %4413 = vrot.lane.b32.xlu0 %v468, 68
        %v4414 = vpop.permute.xlu0 %4413
        %4415 = vrot.lane.b32.xlu0 %v470, 68
        %v4416 = vpop.permute.xlu0 %4415
        %4417 = vrot.lane.b32.xlu0 %v472, 68
        %v4418 = vpop.permute.xlu0 %4417
        %4419 = vrot.lane.b32.xlu0 %v474, 68
        %v4420 = vpop.permute.xlu0 %4419
        %4421 = vrot.lane.b32.xlu0 %v476, 68
        %v4422 = vpop.permute.xlu0 %4421
        %4423 = vrot.lane.b32.xlu0 %v478, 68
        %v4424 = vpop.permute.xlu0 %4423
        %4425 = vrot.lane.b32.xlu0 %v480, 68
        %v4426 = vpop.permute.xlu0 %4425
        %4427 = vrot.lane.b32.xlu0 %v482, 68
        %v4428 = vpop.permute.xlu0 %4427
        %4429 = vrot.lane.b32.xlu0 %v484, 68
        %v4430 = vpop.permute.xlu0 %4429
        %4431 = vrot.lane.b32.xlu0 %v486, 68
        %v4432 = vpop.permute.xlu0 %4431
        %4433 = vrot.lane.b32.xlu0 %v488, 68
        %v4434 = vpop.permute.xlu0 %4433
        %4435 = vrot.lane.b32.xlu0 %v490, 68
        %v4436 = vpop.permute.xlu0 %4435
        %4437 = vrot.lane.b32.xlu0 %v492, 68
        %v4438 = vpop.permute.xlu0 %4437
        %4439 = vrot.lane.b32.xlu0 %v494, 68
        %v4440 = vpop.permute.xlu0 %4439
        %4441 = vrot.lane.b32.xlu0 %v496, 68
        %v4442 = vpop.permute.xlu0 %4441
        %v4443 = vsel %vm660, %v4376, 0
        %v4445 = vsel %vm660, %v4378, 0
        %v4447 = vsel %vm660, %v4380, 0
        %v4449 = vsel %vm660, %v4382, 0
        %v4451 = vsel %vm660, %v4384, 0
        %v4453 = vsel %vm660, %v4386, 0
        %v4455 = vsel %vm660, %v4388, 0
        %v4457 = vsel %vm660, %v4390, 0
        %v4459 = vsel %vm660, %v4392, 0
        %v4461 = vsel %vm660, %v4394, 0
        %v4463 = vsel %vm660, %v4396, 0
        %v4465 = vsel %vm660, %v4398, 0
        %v4467 = vsel %vm660, %v4400, 0
        %v4469 = vsel %vm660, %v4402, 0
        %v4471 = vsel %vm660, %v4404, 0
        %v4473 = vsel %vm660, %v4406, 0
        %v4475 = vsel %vm660, %v4408, 0
        %v4477 = vsel %vm660, %v4410, 0
        %v4479 = vsel %vm660, %v4412, 0
        %v4481 = vsel %vm660, %v4414, 0
        %v4483 = vsel %vm660, %v4416, 0
        %v4485 = vsel %vm660, %v4418, 0
        %v4487 = vsel %vm660, %v4420, 0
        %v4489 = vsel %vm660, %v4422, 0
        %v4491 = vsel %vm660, %v4424, 0
        %v4493 = vsel %vm660, %v4426, 0
        %v4495 = vsel %vm660, %v4428, 0
        %v4497 = vsel %vm660, %v4430, 0
        %v4499 = vsel %vm660, %v4432, 0
        %v4501 = vsel %vm660, %v4434, 0
        %v4503 = vsel %vm660, %v4436, 0
        %v4505 = vsel %vm660, %v4438, 0
        %v4507 = vsel %vm660, %v4440, 0
        %v4509 = vsel %vm660, %v4442, 0
        %4511 = vmatprep.subr.mxu0 0.0
        %4512 = vmatpush1.xpose.msra.mxu0 %v4475
        %4513 = vmatprep.subr.mxu0 0.0
        %4514 = vmatpush1.xpose.msra.mxu0 %v4473
        %4515 = vmatprep.subr.mxu0 0.0
        %4516 = vmatpush1.xpose.msra.mxu0 %v4471
        %4517 = vmatprep.subr.mxu0 0.0
        %4518 = vmatpush1.xpose.msra.mxu0 %v4469
        %4519 = vmatprep.subr.mxu0 0.0
        %4520 = vmatpush1.xpose.msra.mxu0 %v4467
        %4521 = vmatprep.subr.mxu0 0.0
        %4522 = vmatpush1.xpose.msra.mxu0 %v4465
        %4523 = vmatprep.subr.mxu0 0.0
        %4524 = vmatpush1.xpose.msra.mxu0 %v4463
        %4525 = vmatprep.subr.mxu0 0.0
        %4526 = vmatpush1.xpose.msra.mxu0 %v4461
        %4527 = vmatprep.subr.mxu0 0.0
        %4528 = vmatpush1.xpose.msra.mxu0 %v4459
        %4529 = vmatprep.subr.mxu0 0.0
        %4530 = vmatpush1.xpose.msra.mxu0 %v4457
        %4531 = vmatprep.subr.mxu0 0.0
        %4532 = vmatpush1.xpose.msra.mxu0 %v4455
        %4533 = vmatprep.subr.mxu0 0.0
        %4534 = vmatpush1.xpose.msra.mxu0 %v4453
        %4535 = vmatprep.subr.mxu0 0.0
        %4536 = vmatpush1.xpose.msra.mxu0 %v4451
        %4537 = vmatprep.subr.mxu0 0.0
        %4538 = vmatpush1.xpose.msra.mxu0 %v4449
        %4539 = vmatprep.subr.mxu0 0.0
        %4540 = vmatpush1.xpose.msra.mxu0 %v4447
        %4541 = vmatprep.subr.mxu0 0.0
        %4542 = vmatpush1.xpose.msra.mxu0 %v4445
        %4543 = vmatprep.subr.mxu0 0.0
        %4544 = vmatpush2.xpose.msra.mxu0 %v4507
        %4545 = vmatprep.subr.mxu0 0.0
        %4546 = vmatpush2.xpose.msra.mxu0 %v4505
        %4547 = vmatprep.subr.mxu0 0.0
        %4548 = vmatpush2.xpose.msra.mxu0 %v4503
        %4549 = vmatprep.subr.mxu0 0.0
        %4550 = vmatpush2.xpose.msra.mxu0 %v4501
        %4551 = vmatprep.subr.mxu0 0.0
        %4552 = vmatpush2.xpose.msra.mxu0 %v4499
        %4553 = vmatprep.subr.mxu0 0.0
        %4554 = vmatpush2.xpose.msra.mxu0 %v4497
        %4555 = vmatprep.subr.mxu0 0.0
        %4556 = vmatpush2.xpose.msra.mxu0 %v4495
        %4557 = vmatprep.subr.mxu0 0.0
        %4558 = vmatpush2.xpose.msra.mxu0 %v4493
        %4559 = vmatprep.subr.mxu0 0.0
        %4560 = vmatpush2.xpose.msra.mxu0 %v4491
        %4561 = vmatprep.subr.mxu0 0.0
        %4562 = vmatpush2.xpose.msra.mxu0 %v4489
        %4563 = vmatprep.subr.mxu0 0.0
        %4564 = vmatpush2.xpose.msra.mxu0 %v4487
        %4565 = vmatprep.subr.mxu0 0.0
        %4566 = vmatpush2.xpose.msra.mxu0 %v4485
        %4567 = vmatprep.subr.mxu0 0.0
        %4568 = vmatpush2.xpose.msra.mxu0 %v4483
        %4569 = vmatprep.subr.mxu0 0.0
        %4570 = vmatpush2.xpose.msra.mxu0 %v4481
        %4571 = vmatprep.subr.mxu0 0.0
        %4572 = vmatpush2.xpose.msra.mxu0 %v4479
        %4573 = vmatprep.subr.mxu0 0.0
        %4574 = vmatpush2.xpose.msra.mxu0 %v4477
        %4575 = vmatprep.mubr.f32.mxu0 0.0
        %4576 = vmatmul.mubr.f32.gmra.mxu0 %v4443
        %v4577 = vpop.f32.mrf.mxu0
        %v4578 = vadd.f32 %v398, %v4577
        %v4579 = vpop.f32.mrf.mxu0
        %v4580 = vadd.f32 %v399, %v4579
        %4581 = vdwg.mxu0
        %4582 = vmatprep.subr.mxu0 0.0
        %4583 = vmatpush1.xpose.msra.mxu0 0.0
        %4584 = vmatprep.subr.mxu0 0.0
        %4585 = vmatpush1.xpose.msra.mxu0 0.0
        %4586 = vmatprep.subr.mxu0 0.0
        %4587 = vmatpush1.xpose.msra.mxu0 0.0
        %4588 = vmatprep.subr.mxu0 0.0
        %4589 = vmatpush1.xpose.msra.mxu0 0.0
        %4590 = vmatprep.subr.mxu0 0.0
        %4591 = vmatpush1.xpose.msra.mxu0 0.0
        %4592 = vmatprep.subr.mxu0 0.0
        %4593 = vmatpush1.xpose.msra.mxu0 0.0
        %4594 = vmatprep.subr.mxu0 0.0
        %4595 = vmatpush1.xpose.msra.mxu0 0.0
        %4596 = vmatprep.subr.mxu0 0.0
        %4597 = vmatpush1.xpose.msra.mxu0 0.0
        %4598 = vmatprep.subr.mxu0 0.0
        %4599 = vmatpush1.xpose.msra.mxu0 0.0
        %4600 = vmatprep.subr.mxu0 0.0
        %4601 = vmatpush1.xpose.msra.mxu0 0.0
        %4602 = vmatprep.subr.mxu0 0.0
        %4603 = vmatpush1.xpose.msra.mxu0 0.0
        %4604 = vmatprep.subr.mxu0 0.0
        %4605 = vmatpush1.xpose.msra.mxu0 0.0
        %4606 = vmatprep.subr.mxu0 0.0
        %4607 = vmatpush1.xpose.msra.mxu0 0.0
        %4608 = vmatprep.subr.mxu0 0.0
        %4609 = vmatpush1.xpose.msra.mxu0 0.0
        %4610 = vmatprep.subr.mxu0 0.0
        %4611 = vmatpush1.xpose.msra.mxu0 0.0
        %4612 = vmatprep.subr.mxu0 0.0
        %4613 = vmatpush1.xpose.msra.mxu0 %v4509
        %4614 = vmatprep.subr.mxu0 0.0
        %4615 = vmatpush2.xpose.msra.mxu0 0.0
        %4616 = vmatprep.subr.mxu0 0.0
        %4617 = vmatpush2.xpose.msra.mxu0 0.0
        %4618 = vmatprep.subr.mxu0 0.0
        %4619 = vmatpush2.xpose.msra.mxu0 0.0
        %4620 = vmatprep.subr.mxu0 0.0
        %4621 = vmatpush2.xpose.msra.mxu0 0.0
        %4622 = vmatprep.subr.mxu0 0.0
        %4623 = vmatpush2.xpose.msra.mxu0 0.0
        %4624 = vmatprep.subr.mxu0 0.0
        %4625 = vmatpush2.xpose.msra.mxu0 0.0
        %4626 = vmatprep.subr.mxu0 0.0
        %4627 = vmatpush2.xpose.msra.mxu0 0.0
        %4628 = vmatprep.subr.mxu0 0.0
        %4629 = vmatpush2.xpose.msra.mxu0 0.0
        %4630 = vmatprep.subr.mxu0 0.0
        %4631 = vmatpush2.xpose.msra.mxu0 0.0
        %4632 = vmatprep.subr.mxu0 0.0
        %4633 = vmatpush2.xpose.msra.mxu0 0.0
        %4634 = vmatprep.subr.mxu0 0.0
        %4635 = vmatpush2.xpose.msra.mxu0 0.0
        %4636 = vmatprep.subr.mxu0 0.0
        %4637 = vmatpush2.xpose.msra.mxu0 0.0
        %4638 = vmatprep.subr.mxu0 0.0
        %4639 = vmatpush2.xpose.msra.mxu0 0.0
        %4640 = vmatprep.subr.mxu0 0.0
        %4641 = vmatpush2.xpose.msra.mxu0 0.0
        %4642 = vmatprep.subr.mxu0 0.0
        %4643 = vmatpush2.xpose.msra.mxu0 0.0
        %4644 = vmatprep.subr.mxu0 0.0
        %4645 = vmatpush2.xpose.msra.mxu0 0.0
        %4646 = vmatprep.mubr.f32.mxu0 0.0
        %4647 = vmatmul.mubr.f32.gmra.mxu0 %v4443
        %v4648 = vpop.f32.mrf.mxu0
        %v4649 = vadd.f32 %v400, %v4648
        %v4650 = vpop.f32.mrf.mxu0
        %4651 = vdwg.mxu0
        %v4652 = vsel %vm871, %v4649, -inf
        %v4653 = vmax.f32 %v4578, %v4580
        %v4654 = vmax.f32 %v4653, %v4652
        %4655 = vmax.xlane.f32.xlu0 %v4654
        %v4656 = vpop.xlane.xlu0 %4655
        %v4657 = vsub.f32 %v4578, %v4656
        %v4658 = vsub.f32 %v4580, %v4656
        %v4659 = vsub.f32 %v4649, %v4656
        %v4660 = vmul.f32 %v4657, 1.442695
        %v4661 = vpow.pop %v4660
        %v4662 = vmul.f32 %v4658, 1.442695
        %v4663 = vpow.pop %v4662
        %v4664 = vmul.f32 %v4659, 1.442695
        %v4665 = vpow.pop %v4664
        %v4666 = vadd.f32 %v4661, %v4663
        %v4667 = vsel %vm871, %v4665, 0.0
        %v4668 = vadd.f32 %v4666, %v4667
        %4669 = vadd.xlane.f32.xlu0 %v4668
        %v4670 = vpop.xlane.xlu0 %4669
        %v4671 = vrcp.pop %v4670
        %4672 = vrot.lane.b32.xlu0 %v323, 36
        %v4673 = vpop.permute.xlu0 %4672
        %4674 = vrot.lane.b32.xlu0 %v530, 36
        %v4675 = vpop.permute.xlu0 %4674
        %4676 = vrot.lane.b32.xlu0 %v532, 36
        %v4677 = vpop.permute.xlu0 %4676
        %4678 = vrot.lane.b32.xlu0 %v534, 36
        %v4679 = vpop.permute.xlu0 %4678
        %4680 = vrot.lane.b32.xlu0 %v536, 36
        %v4681 = vpop.permute.xlu0 %4680
        %4682 = vrot.lane.b32.xlu0 %v538, 36
        %v4683 = vpop.permute.xlu0 %4682
        %4684 = vrot.lane.b32.xlu0 %v540, 36
        %v4685 = vpop.permute.xlu0 %4684
        %4686 = vrot.lane.b32.xlu0 %v542, 36
        %v4687 = vpop.permute.xlu0 %4686
        %4688 = vrot.lane.b32.xlu0 %v544, 36
        %v4689 = vpop.permute.xlu0 %4688
        %4690 = vrot.lane.b32.xlu0 %v546, 36
        %v4691 = vpop.permute.xlu0 %4690
        %4692 = vrot.lane.b32.xlu0 %v548, 36
        %v4693 = vpop.permute.xlu0 %4692
        %4694 = vrot.lane.b32.xlu0 %v550, 36
        %v4695 = vpop.permute.xlu0 %4694
        %4696 = vrot.lane.b32.xlu0 %v552, 36
        %v4697 = vpop.permute.xlu0 %4696
        %4698 = vrot.lane.b32.xlu0 %v554, 36
        %v4699 = vpop.permute.xlu0 %4698
        %4700 = vrot.lane.b32.xlu0 %v556, 36
        %v4701 = vpop.permute.xlu0 %4700
        %4702 = vrot.lane.b32.xlu0 %v558, 36
        %v4703 = vpop.permute.xlu0 %4702
        %4704 = vrot.lane.b32.xlu0 %v560, 36
        %v4705 = vpop.permute.xlu0 %4704
        %4706 = vrot.lane.b32.xlu0 %v562, 36
        %v4707 = vpop.permute.xlu0 %4706
        %4708 = vrot.lane.b32.xlu0 %v564, 36
        %v4709 = vpop.permute.xlu0 %4708
        %4710 = vrot.lane.b32.xlu0 %v566, 36
        %v4711 = vpop.permute.xlu0 %4710
        %4712 = vrot.lane.b32.xlu0 %v568, 36
        %v4713 = vpop.permute.xlu0 %4712
        %4714 = vrot.lane.b32.xlu0 %v570, 36
        %v4715 = vpop.permute.xlu0 %4714
        %4716 = vrot.lane.b32.xlu0 %v572, 36
        %v4717 = vpop.permute.xlu0 %4716
        %4718 = vrot.lane.b32.xlu0 %v574, 36
        %v4719 = vpop.permute.xlu0 %4718
        %4720 = vrot.lane.b32.xlu0 %v576, 36
        %v4721 = vpop.permute.xlu0 %4720
        %4722 = vrot.lane.b32.xlu0 %v578, 36
        %v4723 = vpop.permute.xlu0 %4722
        %4724 = vrot.lane.b32.xlu0 %v580, 36
        %v4725 = vpop.permute.xlu0 %4724
        %4726 = vrot.lane.b32.xlu0 %v582, 36
        %v4727 = vpop.permute.xlu0 %4726
        %4728 = vrot.lane.b32.xlu0 %v584, 36
        %v4729 = vpop.permute.xlu0 %4728
        %4730 = vrot.lane.b32.xlu0 %v586, 36
        %v4731 = vpop.permute.xlu0 %4730
        %4732 = vrot.lane.b32.xlu0 %v588, 36
        %v4733 = vpop.permute.xlu0 %4732
        %4734 = vrot.lane.b32.xlu0 %v590, 36
        %v4735 = vpop.permute.xlu0 %4734
        %4736 = vrot.lane.b32.xlu0 %v592, 36
        %v4737 = vpop.permute.xlu0 %4736
        %v4772 = vsel %vm871, %v4665, 0
        %4774 = vmatprep.subr.mxu0 0.0
        %4775 = vmatpush1.msra.mxu0 %v4703
        %4776 = vmatprep.subr.mxu0 0.0
        %4777 = vmatpush1.msra.mxu0 %v4701
        %4778 = vmatprep.subr.mxu0 0.0
        %4779 = vmatpush1.msra.mxu0 %v4699
        %4780 = vmatprep.subr.mxu0 0.0
        %4781 = vmatpush1.msra.mxu0 %v4697
        %4782 = vmatprep.subr.mxu0 0.0
        %4783 = vmatpush1.msra.mxu0 %v4695
        %4784 = vmatprep.subr.mxu0 0.0
        %4785 = vmatpush1.msra.mxu0 %v4693
        %4786 = vmatprep.subr.mxu0 0.0
        %4787 = vmatpush1.msra.mxu0 %v4691
        %4788 = vmatprep.subr.mxu0 0.0
        %4789 = vmatpush1.msra.mxu0 %v4689
        %4790 = vmatprep.subr.mxu0 0.0
        %4791 = vmatpush1.msra.mxu0 %v4687
        %4792 = vmatprep.subr.mxu0 0.0
        %4793 = vmatpush1.msra.mxu0 %v4685
        %4794 = vmatprep.subr.mxu0 0.0
        %4795 = vmatpush1.msra.mxu0 %v4683
        %4796 = vmatprep.subr.mxu0 0.0
        %4797 = vmatpush1.msra.mxu0 %v4681
        %4798 = vmatprep.subr.mxu0 0.0
        %4799 = vmatpush1.msra.mxu0 %v4679
        %4800 = vmatprep.subr.mxu0 0.0
        %4801 = vmatpush1.msra.mxu0 %v4677
        %4802 = vmatprep.subr.mxu0 0.0
        %4803 = vmatpush1.msra.mxu0 %v4675
        %4804 = vmatprep.subr.mxu0 0.0
        %4805 = vmatpush1.msra.mxu0 %v4673
        %4806 = vmatprep.subr.mxu0 0.0
        %4807 = vmatpush2.msra.mxu0 %v4735
        %4808 = vmatprep.subr.mxu0 0.0
        %4809 = vmatpush2.msra.mxu0 %v4733
        %4810 = vmatprep.subr.mxu0 0.0
        %4811 = vmatpush2.msra.mxu0 %v4731
        %4812 = vmatprep.subr.mxu0 0.0
        %4813 = vmatpush2.msra.mxu0 %v4729
        %4814 = vmatprep.subr.mxu0 0.0
        %4815 = vmatpush2.msra.mxu0 %v4727
        %4816 = vmatprep.subr.mxu0 0.0
        %4817 = vmatpush2.msra.mxu0 %v4725
        %4818 = vmatprep.subr.mxu0 0.0
        %4819 = vmatpush2.msra.mxu0 %v4723
        %4820 = vmatprep.subr.mxu0 0.0
        %4821 = vmatpush2.msra.mxu0 %v4721
        %4822 = vmatprep.subr.mxu0 0.0
        %4823 = vmatpush2.msra.mxu0 %v4719
        %4824 = vmatprep.subr.mxu0 0.0
        %4825 = vmatpush2.msra.mxu0 %v4717
        %4826 = vmatprep.subr.mxu0 0.0
        %4827 = vmatpush2.msra.mxu0 %v4715
        %4828 = vmatprep.subr.mxu0 0.0
        %4829 = vmatpush2.msra.mxu0 %v4713
        %4830 = vmatprep.subr.mxu0 0.0
        %4831 = vmatpush2.msra.mxu0 %v4711
        %4832 = vmatprep.subr.mxu0 0.0
        %4833 = vmatpush2.msra.mxu0 %v4709
        %4834 = vmatprep.subr.mxu0 0.0
        %4835 = vmatpush2.msra.mxu0 %v4707
        %4836 = vmatprep.subr.mxu0 0.0
        %4837 = vmatpush2.msra.mxu0 %v4705
        %4838 = vmatprep.mubr.f32.mxu0 %v4663
        %4839 = vmatmul.mubr.f32.gmra.mxu0 %v4661
        %v4840 = vpop.f32.mrf.mxu0
        %v4841 = vadd.f32 0.0, %v4840
        %v4842 = vpop.f32.mrf.mxu0
        %4843 = vdwg.mxu0
        %4844 = vmatprep.subr.mxu0 0.0
        %4845 = vmatpush1.msra.mxu0 0.0
        %4846 = vmatprep.subr.mxu0 0.0
        %4847 = vmatpush1.msra.mxu0 0.0
        %4848 = vmatprep.subr.mxu0 0.0
        %4849 = vmatpush1.msra.mxu0 0.0
        %4850 = vmatprep.subr.mxu0 0.0
        %4851 = vmatpush1.msra.mxu0 0.0
        %4852 = vmatprep.subr.mxu0 0.0
        %4853 = vmatpush1.msra.mxu0 0.0
        %4854 = vmatprep.subr.mxu0 0.0
        %4855 = vmatpush1.msra.mxu0 0.0
        %4856 = vmatprep.subr.mxu0 0.0
        %4857 = vmatpush1.msra.mxu0 0.0
        %4858 = vmatprep.subr.mxu0 0.0
        %4859 = vmatpush1.msra.mxu0 0.0
        %4860 = vmatprep.subr.mxu0 0.0
        %4861 = vmatpush1.msra.mxu0 0.0
        %4862 = vmatprep.subr.mxu0 0.0
        %4863 = vmatpush1.msra.mxu0 0.0
        %4864 = vmatprep.subr.mxu0 0.0
        %4865 = vmatpush1.msra.mxu0 0.0
        %4866 = vmatprep.subr.mxu0 0.0
        %4867 = vmatpush1.msra.mxu0 0.0
        %4868 = vmatprep.subr.mxu0 0.0
        %4869 = vmatpush1.msra.mxu0 0.0
        %4870 = vmatprep.subr.mxu0 0.0
        %4871 = vmatpush1.msra.mxu0 0.0
        %4872 = vmatprep.subr.mxu0 0.0
        %4873 = vmatpush1.msra.mxu0 0.0
        %4874 = vmatprep.subr.mxu0 0.0
        %4875 = vmatpush1.msra.mxu0 %v4737
        %4876 = vmatprep.subr.mxu0 0.0
        %4877 = vmatpush2.msra.mxu0 0.0
        %4878 = vmatprep.subr.mxu0 0.0
        %4879 = vmatpush2.msra.mxu0 0.0
        %4880 = vmatprep.subr.mxu0 0.0
        %4881 = vmatpush2.msra.mxu0 0.0
        %4882 = vmatprep.subr.mxu0 0.0
        %4883 = vmatpush2.msra.mxu0 0.0
        %4884 = vmatprep.subr.mxu0 0.0
        %4885 = vmatpush2.msra.mxu0 0.0
        %4886 = vmatprep.subr.mxu0 0.0
        %4887 = vmatpush2.msra.mxu0 0.0
        %4888 = vmatprep.subr.mxu0 0.0
        %4889 = vmatpush2.msra.mxu0 0.0
        %4890 = vmatprep.subr.mxu0 0.0
        %4891 = vmatpush2.msra.mxu0 0.0
        %4892 = vmatprep.subr.mxu0 0.0
        %4893 = vmatpush2.msra.mxu0 0.0
        %4894 = vmatprep.subr.mxu0 0.0
        %4895 = vmatpush2.msra.mxu0 0.0
        %4896 = vmatprep.subr.mxu0 0.0
        %4897 = vmatpush2.msra.mxu0 0.0
        %4898 = vmatprep.subr.mxu0 0.0
        %4899 = vmatpush2.msra.mxu0 0.0
        %4900 = vmatprep.subr.mxu0 0.0
        %4901 = vmatpush2.msra.mxu0 0.0
        %4902 = vmatprep.subr.mxu0 0.0
        %4903 = vmatpush2.msra.mxu0 0.0
        %4904 = vmatprep.subr.mxu0 0.0
        %4905 = vmatpush2.msra.mxu0 0.0
        %4906 = vmatprep.subr.mxu0 0.0
        %4907 = vmatpush2.msra.mxu0 0.0
        %4908 = vmatprep.mubr.f32.mxu0 0.0
        %4909 = vmatmul.mubr.f32.gmra.mxu0 %v4772
        %v4910 = vpop.f32.mrf.mxu0
        %v4911 = vadd.f32 %v4841, %v4910
        %v4912 = vpop.f32.mrf.mxu0
        %4913 = vdwg.mxu0
        %v4914 = vmul.f32 %v4911, %v4671
        %4916 = vrot.lane.b32.xlu0 %v1674, 4
        %v4917 = vpop.permute.xlu0 %4916
        %4920 = vrot.lane.b32.xlu0 %v2214, 8
        %v4921 = vpop.permute.xlu0 %4920
        %4924 = vrot.lane.b32.xlu0 %v2754, 12
        %v4925 = vpop.permute.xlu0 %4924
        %4928 = vrot.lane.b32.xlu0 %v3294, 16
        %v4929 = vpop.permute.xlu0 %4928
        %4932 = vrot.lane.b32.xlu0 %v3834, 20
        %v4933 = vpop.permute.xlu0 %4932
        %4936 = vrot.lane.b32.xlu0 %v4374, 24
        %v4937 = vpop.permute.xlu0 %4936
        %4940 = vrot.lane.b32.xlu0 %v4914, 28
        %v4941 = vpop.permute.xlu0 %4940
        %v4943 = vsel %vm660, %v1134, %v4917
        %v4944 = vsel %vm871, %v4943, %v4921
        %vm4945 = vcmask 97280
        %v4946 = vsel %vm4945, %v4944, %v4925
        %vm4947 = vcmask 130048
        %v4948 = vsel %vm4947, %v4946, %v4929
        %vm4949 = vcmask 162816
        %v4950 = vsel %vm4949, %v4948, %v4933
        %vm4951 = vcmask 195584
        %v4952 = vsel %vm4951, %v4950, %v4937
        %vm4953 = vcmask 228352
        %v4954 = vsel %vm4953, %v4952, %v4941
        %v4955 = vld [vmem:[%s2] sm:$0xff]
        %v4956 = vld [vmem:[%s2 + $0x8] sm:$0xff]
        %v4957 = vld [vmem:[%s2 + $0x10] sm:$0xff]
        %v4958 = vld [vmem:[%s2 + $0x18] sm:$0xff]
        %v4959 = vld [vmem:[%s3] sm:$0x1]
        %v4961 = vlaneseq
        %v4962 = vshrl.u32 %v4961, 7
        %v4963 = vsub.s32 0, %v4962
        %v4964 = vrot.slane %v4959, %v4963
        %v4967 = vsel %vm252, %v4954, 0
        %4969 = vmatprep.subr.mxu0 0.0
        %4970 = vmatpush1.msra.mxu0 0.0
        %4971 = vmatprep.subr.mxu0 0.0
        %4972 = vmatpush1.msra.mxu0 0.0
        %4973 = vmatprep.subr.mxu0 0.0
        %4974 = vmatpush1.msra.mxu0 0.0
        %4975 = vmatprep.subr.mxu0 0.0
        %4976 = vmatpush1.msra.mxu0 0.0
        %4977 = vmatprep.subr.mxu0 0.0
        %4978 = vmatpush1.msra.mxu0 0.0
        %4979 = vmatprep.subr.mxu0 0.0
        %4980 = vmatpush1.msra.mxu0 0.0
        %4981 = vmatprep.subr.mxu0 0.0
        %4982 = vmatpush1.msra.mxu0 0.0
        %4983 = vmatprep.subr.mxu0 0.0
        %4984 = vmatpush1.msra.mxu0 0.0
        %4985 = vmatprep.subr.mxu0 0.0
        %4986 = vmatpush1.msra.mxu0 0.0
        %4987 = vmatprep.subr.mxu0 0.0
        %4988 = vmatpush1.msra.mxu0 0.0
        %4989 = vmatprep.subr.mxu0 0.0
        %4990 = vmatpush1.msra.mxu0 0.0
        %4991 = vmatprep.subr.mxu0 0.0
        %4992 = vmatpush1.msra.mxu0 0.0
        %4993 = vmatprep.subr.mxu0 0.0
        %4994 = vmatpush1.msra.mxu0 %v4958
        %4995 = vmatprep.subr.mxu0 0.0
        %4996 = vmatpush1.msra.mxu0 %v4957
        %4997 = vmatprep.subr.mxu0 0.0
        %4998 = vmatpush1.msra.mxu0 %v4956
        %4999 = vmatprep.subr.mxu0 0.0
        %5000 = vmatpush1.msra.mxu0 %v4955
        %5001 = vmatprep.subr.mxu0 0.0
        %5002 = vmatpush2.msra.mxu0 0.0
        %5003 = vmatprep.subr.mxu0 0.0
        %5004 = vmatpush2.msra.mxu0 0.0
        %5005 = vmatprep.subr.mxu0 0.0
        %5006 = vmatpush2.msra.mxu0 0.0
        %5007 = vmatprep.subr.mxu0 0.0
        %5008 = vmatpush2.msra.mxu0 0.0
        %5009 = vmatprep.subr.mxu0 0.0
        %5010 = vmatpush2.msra.mxu0 0.0
        %5011 = vmatprep.subr.mxu0 0.0
        %5012 = vmatpush2.msra.mxu0 0.0
        %5013 = vmatprep.subr.mxu0 0.0
        %5014 = vmatpush2.msra.mxu0 0.0
        %5015 = vmatprep.subr.mxu0 0.0
        %5016 = vmatpush2.msra.mxu0 0.0
        %5017 = vmatprep.subr.mxu0 0.0
        %5018 = vmatpush2.msra.mxu0 0.0
        %5019 = vmatprep.subr.mxu0 0.0
        %5020 = vmatpush2.msra.mxu0 0.0
        %5021 = vmatprep.subr.mxu0 0.0
        %5022 = vmatpush2.msra.mxu0 0.0
        %5023 = vmatprep.subr.mxu0 0.0
        %5024 = vmatpush2.msra.mxu0 0.0
        %5025 = vmatprep.subr.mxu0 0.0
        %5026 = vmatpush2.msra.mxu0 0.0
        %5027 = vmatprep.subr.mxu0 0.0
        %5028 = vmatpush2.msra.mxu0 0.0
        %5029 = vmatprep.subr.mxu0 0.0
        %5030 = vmatpush2.msra.mxu0 0.0
        %5031 = vmatprep.subr.mxu0 0.0
        %5032 = vmatpush2.msra.mxu0 0.0
        %5033 = vmatprep.mubr.f32.mxu0 0.0
        %5034 = vmatmul.mubr.f32.gmra.mxu0 %v4967
        %v5035 = vpop.f32.mrf.mxu0
        %v5036 = vadd.f32 %v4964, %v5035
        %v5037 = vpop.f32.mrf.mxu0
        %5038 = vdwg.mxu0
        %5039 = vst.msk [vmem:[%s242] sm:$0xff] %vm252, %v5036
        %s5040 = sand.u32 %s159, 1
        %s5041 = scalar_lea.sflag [#allocation3], %s5040
        %s5042 = sand.u32 %s159, 1
        %s5043 = smul.addr %s5042, 8
        %s5044 = scalar_lea.vmem [#allocation2], %s5043
        // Predicated region
        $region45: #{tpu_custom_call.1} parent=43 // pred_check
          %p5045 = pneg %p169
        $region46: #{tpu_custom_call.1} parent=43 // pred_check_branch
          %5047 = sbr.rel (%p5045) target = $region48
        $region47: #{tpu_custom_call.1} parent=43 // pred_region
          %s5049 = ssub.s32 128, 128
          %5050 = vsyncadd %s5041, %s5049
          %s5051 = smul.addr %s20, 128
          %s5052 = scalar_lea.hbm %s6, %s5051
          %s5054 = sshll.u32 %s5044, 4
          %s5055 = int_to_ptr.vmem [resolvable:$true] %s5054
          %5057 = dma.vmem_to_hbm [thread:$0]  %s5055, 128, %s5052, %s5041
        $region48: #{tpu_custom_call.1} parent=43 // pred_fallthru
          _
      $region44: #{tpu_custom_call.1} parent=5 // pred_fallthru
        _
      %p5058 = scmp.le.s32.totalorder 2, %s15
      // Predicated region
      $region49: #{tpu_custom_call.1} parent=5 // pred_check
        %p5059 = pneg %p5058
      $region50: #{tpu_custom_call.1} parent=5 // pred_check_branch
        %5061 = sbr.rel (%p5059) target = $region52
      $region51: #{tpu_custom_call.1} parent=5 // pred_region
        %s5062 = ssub.s32 %s15, 2
        // Predicated region
        $region53: #{tpu_custom_call.1} parent=51 // pred_check
          %p5063 = pneg %p175
        $region54: #{tpu_custom_call.1} parent=51 // pred_check_branch
          %5065 = sbr.rel (%p5063) target = $region56
        $region55: #{tpu_custom_call.1} parent=51 // pred_region
          %s5066 = sand.u32 %s160, 1
          %s5067 = scalar_lea.sflag [#allocation3], %s5066
          %s5068 = sand.u32 %s160, 1
          %s5069 = smul.addr %s5068, 8
          %s5070 = scalar_lea.vmem [#allocation2], %s5069
          %5071 = dma.done %s5067, 128
        $region56: #{tpu_custom_call.1} parent=51 // pred_fallthru
          _
      $region52: #{tpu_custom_call.1} parent=5 // pred_fallthru
        _
    $region6: #{tpu_custom_call.1} parent=1 // loop_footer
      %s19 = sadd.s32 1, %s15
    $region7: #{tpu_custom_call.1} parent=1 // loop_footer_branch
      %14 = sbr.rel target = $region3
    $region8: #{tpu_custom_call.1} parent=1 // loop_exit
      _
    %5072 = vsyncpa [#allocation3], 1
    %s5073 = scalar_lea.sflag [#allocation3], 1
    %5074 = vsyncpa %s5073, 1

// kernel: tpu_custom_call.1
$region0: #{tpu_custom_call.1}
  #allocation0 [shape = 'u32[]', space=smem, size = 0x4, offset = 0x4, fixed_abs, tag = 'smem constant byte address 0x4 - core index']
  #allocation1 [shape = 'u32[144,128]{1,0:T(1,128)}', space=vmem, size = 0x12000, scoped, tag = 'internal scratch']
  %s0 = inlined_call_operand.vmem [shape: f32[16,32], index: 0, kind: input, shape index: {}]
  %s1 = inlined_call_operand.vmem [shape: f32[32,96], index: 1, kind: input, shape index: {}]
  %s2 = inlined_call_operand.vmem [shape: f32[32,32], index: 2, kind: input, shape index: {}]
  %s3 = inlined_call_operand.vmem [shape: f32[1,32], index: 3, kind: input, shape index: {}]
  %s4 = inlined_call_operand.vmem [shape: f32[256,32], index: 4, kind: input, shape index: {}]
  %s5 = inlined_call_operand.vmem [shape: f32[256,32], index: 5, kind: input, shape index: {}]
  %s6 = inlined_call_operand.hbm [shape: f32[16,32], index: 6, kind: output, shape index: {}]
  %s7 = sld [smem:[#allocation0]]
  $region57: #{tpu_custom_call.1} parent=0
    _
  %s9 = ssub.s32 1, %s7
  %s10 = scalar_select 0, %s9, %s7
  $region1: #{tpu_custom_call.1} parent=0
    #allocation2 [shape = 'u8[8192]{0}', space=vmem, size = 0x2000, scoped, tag = 'output window, operand 0']
    #allocation3 [shape = 's32[2]{0}', space=sflag, size = 0x8, scoped, tag = 'scoped memory for tpu_custom_call.1']
    %11 = vsyncpa [#allocation3], 0
    %s12 = scalar_lea.sflag [#allocation3], 1
    %13 = vsyncpa %s12, 0
    loop: start=0, step=1, limit=4
    $region2: #{tpu_custom_call.1} parent=1 // loop_pre_header
      _
    $region3: #{tpu_custom_call.1} parent=1 // loop_header
      %s15 = sphi 0, %s19
      %p16 = scmp.ge.s32.totalorder %s15, 4
      %s25 = sphi 0, %s27
      %s28 = sphi 0, %s25
      %s29 = sphi 0, %s28
      %s45 = sphi 0, %s29
      %s49 = sphi 0, %s49
      %s51 = sphi 0, %s49
      %s52 = sphi 0, %s51
      %s66 = sphi 0, %s52
      %s70 = sphi 0, %s70
      %s72 = sphi 0, %s70
      %s73 = sphi 0, %s72
      %s87 = sphi 0, %s73
      %s91 = sphi 0, %s91
      %s93 = sphi 0, %s91
      %s94 = sphi 0, %s93
      %s108 = sphi 0, %s94
      %s112 = sphi 0, %s112
      %s114 = sphi 0, %s112
      %s115 = sphi 0, %s114
      %s129 = sphi 0, %s115
      %s133 = sphi 0, %s133
      %s135 = sphi 0, %s133
      %s136 = sphi 0, %s135
      %s150 = sphi 0, %s136
      %s156 = sphi 0, %s158
      %s159 = sphi 0, %s156
      %s160 = sphi 0, %s159
      %s176 = sphi 0, %s160
    $region4: #{tpu_custom_call.1} parent=1 // loop_header_branch
      %18 = sbr.rel (%p16) target = $region8
    $region5: #{tpu_custom_call.1} parent=1 // loop_body
      %s20 = ssub.s32 %s15, 1
      %s21 = ssub.s32 %s15, 2
      %s22 = sadd.s32 %s15, 1
      %s23 = ssub.s32 %s15, %s22
      %p24 = scmp.eq.s32.totalorder %s23, 0
      %s26 = sadd.s32 %s25, 1
      %s27 = scalar_select %p24, %s25, %s26
      %p30 = pneg %p24
      %p31 = scmp.eq.s32.totalorder %s15, 1
      %p32 = por %p30, %p31
      %p33 = scmp.ne.s32.totalorder %s25, %s28
      %p34 = scmp.eq.s32.totalorder %s15, 0
      %p35 = por %p33, %p34
      %p36 = scmp.ne.s32.totalorder %s25, %s28
      %p37 = scmp.eq.s32.totalorder %s20, 1
      %p38 = por %p36, %p37
      %p39 = scmp.ne.s32.totalorder %s28, %s29
      %p40 = scmp.eq.s32.totalorder %s20, 0
      %p41 = por %p39, %p40
      %p42 = scmp.ne.s32.totalorder %s28, %s29
      %p43 = scmp.eq.s32.totalorder %s21, 1
      %p44 = por %p42, %p43
      %p46 = scmp.ne.s32.totalorder %s29, %s45
      %p47 = scmp.eq.s32.totalorder %s21, 0
      %p48 = por %p46, %p47
      %s50 = sadd.s32 %s49, 1
      %p53 = scmp.eq.s32.totalorder %s15, 1
      %p54 = scmp.ne.s32.totalorder %s49, %s51
      %p55 = scmp.eq.s32.totalorder %s15, 0
      %p56 = por %p54, %p55
      %p57 = scmp.ne.s32.totalorder %s49, %s51
      %p58 = scmp.eq.s32.totalorder %s20, 1
      %p59 = por %p57, %p58
      %p60 = scmp.ne.s32.totalorder %s51, %s52
      %p61 = scmp.eq.s32.totalorder %s20, 0
      %p62 = por %p60, %p61
      %p63 = scmp.ne.s32.totalorder %s51, %s52
      %p64 = scmp.eq.s32.totalorder %s21, 1
      %p65 = por %p63, %p64
      %p67 = scmp.ne.s32.totalorder %s52, %s66
      %p68 = scmp.eq.s32.totalorder %s21, 0
      %p69 = por %p67, %p68
      %s71 = sadd.s32 %s70, 1
      %p74 = scmp.eq.s32.totalorder %s15, 1
      %p75 = scmp.ne.s32.totalorder %s70, %s72
      %p76 = scmp.eq.s32.totalorder %s15, 0
      %p77 = por %p75, %p76
      %p78 = scmp.ne.s32.totalorder %s70, %s72
      %p79 = scmp.eq.s32.totalorder %s20, 1
      %p80 = por %p78, %p79
      %p81 = scmp.ne.s32.totalorder %s72, %s73
      %p82 = scmp.eq.s32.totalorder %s20, 0
      %p83 = por %p81, %p82
      %p84 = scmp.ne.s32.totalorder %s72, %s73
      %p85 = scmp.eq.s32.totalorder %s21, 1
      %p86 = por %p84, %p85
      %p88 = scmp.ne.s32.totalorder %s73, %s87
      %p89 = scmp.eq.s32.totalorder %s21, 0
      %p90 = por %p88, %p89
      %s92 = sadd.s32 %s91, 1
      %p95 = scmp.eq.s32.totalorder %s15, 1
      %p96 = scmp.ne.s32.totalorder %s91, %s93
      %p97 = scmp.eq.s32.totalorder %s15, 0
      %p98 = por %p96, %p97
      %p99 = scmp.ne.s32.totalorder %s91, %s93
      %p100 = scmp.eq.s32.totalorder %s20, 1
      %p101 = por %p99, %p100
      %p102 = scmp.ne.s32.totalorder %s93, %s94
      %p103 = scmp.eq.s32.totalorder %s20, 0
      %p104 = por %p102, %p103
      %p105 = scmp.ne.s32.totalorder %s93, %s94
      %p106 = scmp.eq.s32.totalorder %s21, 1
      %p107 = por %p105, %p106
      %p109 = scmp.ne.s32.totalorder %s94, %s108
      %p110 = scmp.eq.s32.totalorder %s21, 0
      %p111 = por %p109, %p110
      %s113 = sadd.s32 %s112, 1
      %p116 = scmp.eq.s32.totalorder %s15, 1
      %p117 = scmp.ne.s32.totalorder %s112, %s114
      %p118 = scmp.eq.s32.totalorder %s15, 0
      %p119 = por %p117, %p118
      %p120 = scmp.ne.s32.totalorder %s112, %s114
      %p121 = scmp.eq.s32.totalorder %s20, 1
      %p122 = por %p120, %p121
      %p123 = scmp.ne.s32.totalorder %s114, %s115
      %p124 = scmp.eq.s32.totalorder %s20, 0
      %p125 = por %p123, %p124
      %p126 = scmp.ne.s32.totalorder %s114, %s115
      %p127 = scmp.eq.s32.totalorder %s21, 1
      %p128 = por %p126, %p127
      %p130 = scmp.ne.s32.totalorder %s115, %s129
      %p131 = scmp.eq.s32.totalorder %s21, 0
      %p132 = por %p130, %p131
      %s134 = sadd.s32 %s133, 1
      %p137 = scmp.eq.s32.totalorder %s15, 1
      %p138 = scmp.ne.s32.totalorder %s133, %s135
      %p139 = scmp.eq.s32.totalorder %s15, 0
      %p140 = por %p138, %p139
      %p141 = scmp.ne.s32.totalorder %s133, %s135
      %p142 = scmp.eq.s32.totalorder %s20, 1
      %p143 = por %p141, %p142
      %p144 = scmp.ne.s32.totalorder %s135, %s136
      %p145 = scmp.eq.s32.totalorder %s20, 0
      %p146 = por %p144, %p145
      %p147 = scmp.ne.s32.totalorder %s135, %s136
      %p148 = scmp.eq.s32.totalorder %s21, 1
      %p149 = por %p147, %p148
      %p151 = scmp.ne.s32.totalorder %s136, %s150
      %p152 = scmp.eq.s32.totalorder %s21, 0
      %p153 = por %p151, %p152
      %s154 = ssub.s32 %s15, %s22
      %p155 = scmp.eq.s32.totalorder %s154, 0
      %s157 = sadd.s32 %s156, 1
      %s158 = scalar_select %p155, %s156, %s157
      %p161 = pneg %p155
      %p162 = scmp.eq.s32.totalorder %s15, 1
      %p163 = por %p161, %p162
      %p164 = scmp.ne.s32.totalorder %s156, %s159
      %p165 = scmp.eq.s32.totalorder %s15, 0
      %p166 = por %p164, %p165
      %p167 = scmp.ne.s32.totalorder %s156, %s159
      %p168 = scmp.eq.s32.totalorder %s20, 1
      %p169 = por %p167, %p168
      %p170 = scmp.ne.s32.totalorder %s159, %s160
      %p171 = scmp.eq.s32.totalorder %s20, 0
      %p172 = por %p170, %p171
      %p173 = scmp.ne.s32.totalorder %s159, %s160
      %p174 = scmp.eq.s32.totalorder %s21, 1
      %p175 = por %p173, %p174
      %p177 = scmp.ne.s32.totalorder %s160, %s176
      %p178 = scmp.eq.s32.totalorder %s21, 0
      %p179 = por %p177, %p178
      %p180 = scmp.le.s32.totalorder 1, %s15
      %p181 = scmp.lt.s32.totalorder %s15, 3
      %p182 = pnand %p180, %p181
      %p183 = pneg %p182
      // Predicated region
      $region9: #{tpu_custom_call.1} parent=5 // pred_check
        _
      $region10: #{tpu_custom_call.1} parent=5 // pred_check_branch
        %185 = sbr.rel (%p182) target = $region12
      $region11: #{tpu_custom_call.1} parent=5 // pred_region
        %s186 = ssub.s32 %s15, 1
        // Predicated region
        $region13: #{tpu_custom_call.1} parent=11 // pred_check
          %p187 = pneg %p62
        $region14: #{tpu_custom_call.1} parent=11 // pred_check_branch
          %189 = sbr.rel (%p187) target = $region16
        $region15: #{tpu_custom_call.1} parent=11 // pred_region
          _
        $region16: #{tpu_custom_call.1} parent=11 // pred_fallthru
          _
        // Predicated region
        $region17: #{tpu_custom_call.1} parent=11 // pred_check
          %p190 = pneg %p83
        $region18: #{tpu_custom_call.1} parent=11 // pred_check_branch
          %192 = sbr.rel (%p190) target = $region20
        $region19: #{tpu_custom_call.1} parent=11 // pred_region
          _
        $region20: #{tpu_custom_call.1} parent=11 // pred_fallthru
          _
        // Predicated region
        $region21: #{tpu_custom_call.1} parent=11 // pred_check
          %p193 = pneg %p104
        $region22: #{tpu_custom_call.1} parent=11 // pred_check_branch
          %195 = sbr.rel (%p193) target = $region24
        $region23: #{tpu_custom_call.1} parent=11 // pred_region
          _
        $region24: #{tpu_custom_call.1} parent=11 // pred_fallthru
          _
        // Predicated region
        $region25: #{tpu_custom_call.1} parent=11 // pred_check
          %p196 = pneg %p125
        $region26: #{tpu_custom_call.1} parent=11 // pred_check_branch
          %198 = sbr.rel (%p196) target = $region28
        $region27: #{tpu_custom_call.1} parent=11 // pred_region
          _
        $region28: #{tpu_custom_call.1} parent=11 // pred_fallthru
          _
        // Predicated region
        $region29: #{tpu_custom_call.1} parent=11 // pred_check
          %p199 = pneg %p146
        $region30: #{tpu_custom_call.1} parent=11 // pred_check_branch
          %201 = sbr.rel (%p199) target = $region32
        $region31: #{tpu_custom_call.1} parent=11 // pred_region
          _
        $region32: #{tpu_custom_call.1} parent=11 // pred_fallthru
          _
      $region12: #{tpu_custom_call.1} parent=5 // pred_fallthru
        _
      %p202 = scmp.lt.s32.totalorder %s15, 2
      // Predicated region
      $region33: #{tpu_custom_call.1} parent=5 // pred_check
        %p203 = pneg %p202
      $region34: #{tpu_custom_call.1} parent=5 // pred_check_branch
        %205 = sbr.rel (%p203) target = $region36
      $region35: #{tpu_custom_call.1} parent=5 // pred_region
        // Predicated region
        $region37: #{tpu_custom_call.1} parent=35 // pred_check
          %p206 = pneg %p35
        $region38: #{tpu_custom_call.1} parent=35 // pred_check_branch
          %208 = sbr.rel (%p206) target = $region40
        $region39: #{tpu_custom_call.1} parent=35 // pred_region
          %p209 = scmp.lt.s32.totalorder %s15, 1
          %s210 = scalar_select %p209, %s15, 1
          %s211 = smul.addr %s210, 8
          %s212 = scalar_lea.vmem %s0, %s211
        $region40: #{tpu_custom_call.1} parent=35 // pred_fallthru
          _
      $region36: #{tpu_custom_call.1} parent=5 // pred_fallthru
        _
      %p213 = scmp.le.s32.totalorder 1, %s15
      %p214 = scmp.lt.s32.totalorder %s15, 3
      %p215 = pnand %p213, %p214
      %p216 = pneg %p215
      // Predicated region
      $region41: #{tpu_custom_call.1} parent=5 // pred_check
        _
      $region42: #{tpu_custom_call.1} parent=5 // pred_check_branch
        %218 = sbr.rel (%p215) target = $region44
      $region43: #{tpu_custom_call.1} parent=5 // pred_region
        %s219 = ssub.s32 %s15, 1
        %p220 = scmp.lt.s32.totalorder %s20, 1
        %s221 = scalar_select %p220, %s20, 1
        %s222 = smul.addr %s221, 8
        %s223 = scalar_lea.vmem %s0, %s222
        %p224 = pneg %p41
        %p225 = pneg %p38
        %p226 = pneg %p62
        %p227 = pneg %p59
        %p228 = pneg %p83
        %p229 = pneg %p80
        %p230 = pneg %p104
        %p231 = pneg %p101
        %p232 = pneg %p125
        %p233 = pneg %p122
        %p234 = pneg %p146
        %p235 = pneg %p143
        %p236 = pneg %p172
        %p237 = pneg %p169
        %s238 = sand.u32 %s159, 1
        %s239 = scalar_lea.sflag [#allocation3], %s238
        %s240 = sand.u32 %s159, 1
        %s241 = smul.addr %s240, 8
        %s242 = scalar_lea.vmem [#allocation2], %s241
        %p243 = scmp.lt.s32.totalorder %s20, 1
        %s244 = scalar_select %p243, %s20, 1
        %s245 = smul.addr %s244, 8
        %s246 = scalar_lea.vmem %s0, %s245
        %v247 = vld [vmem:[%s246] sm:$0xff]
        %v248 = vld [vmem:[%s1] sm:$0xff]
        %v249 = vld [vmem:[%s1 + $0x8] sm:$0xff]
        %v250 = vld [vmem:[%s1 + $0x10] sm:$0xff]
        %v251 = vld [vmem:[%s1 + $0x18] sm:$0xff]
        %vm252 = vcmask 261120
        %v254 = vsel %vm252, %v247, 0
        %256 = vmatprep.subr.mxu0 0.0
        %257 = vmatpush1.msra.mxu0 0.0
        %258 = vmatprep.subr.mxu0 0.0
        %259 = vmatpush1.msra.mxu0 0.0
        %260 = vmatprep.subr.mxu0 0.0
        %261 = vmatpush1.msra.mxu0 0.0
        %262 = vmatprep.subr.mxu0 0.0
        %263 = vmatpush1.msra.mxu0 0.0
        %264 = vmatprep.subr.mxu0 0.0
        %265 = vmatpush1.msra.mxu0 0.0
        %266 = vmatprep.subr.mxu0 0.0
        %267 = vmatpush1.msra.mxu0 0.0
        %268 = vmatprep.subr.mxu0 0.0
        %269 = vmatpush1.msra.mxu0 0.0
        %270 = vmatprep.subr.mxu0 0.0
        %271 = vmatpush1.msra.mxu0 0.0
        %272 = vmatprep.subr.mxu0 0.0
        %273 = vmatpush1.msra.mxu0 0.0
        %274 = vmatprep.subr.mxu0 0.0
        %275 = vmatpush1.msra.mxu0 0.0
        %276 = vmatprep.subr.mxu0 0.0
        %277 = vmatpush1.msra.mxu0 0.0
        %278 = vmatprep.subr.mxu0 0.0
        %279 = vmatpush1.msra.mxu0 0.0
        %280 = vmatprep.subr.mxu0 0.0
        %281 = vmatpush1.msra.mxu0 %v251
        %282 = vmatprep.subr.mxu0 0.0
        %283 = vmatpush1.msra.mxu0 %v250
        %284 = vmatprep.subr.mxu0 0.0
        %285 = vmatpush1.msra.mxu0 %v249
        %286 = vmatprep.subr.mxu0 0.0
        %287 = vmatpush1.msra.mxu0 %v248
        %288 = vmatprep.subr.mxu0 0.0
        %289 = vmatpush2.msra.mxu0 0.0
        %290 = vmatprep.subr.mxu0 0.0
        %291 = vmatpush2.msra.mxu0 0.0
        %292 = vmatprep.subr.mxu0 0.0
        %293 = vmatpush2.msra.mxu0 0.0
        %294 = vmatprep.subr.mxu0 0.0
        %295 = vmatpush2.msra.mxu0 0.0
        %296 = vmatprep.subr.mxu0 0.0
        %297 = vmatpush2.msra.mxu0 0.0
        %298 = vmatprep.subr.mxu0 0.0
        %299 = vmatpush2.msra.mxu0 0.0
        %300 = vmatprep.subr.mxu0 0.0
        %301 = vmatpush2.msra.mxu0 0.0
        %302 = vmatprep.subr.mxu0 0.0
        %303 = vmatpush2.msra.mxu0 0.0
        %304 = vmatprep.subr.mxu0 0.0
        %305 = vmatpush2.msra.mxu0 0.0
        %306 = vmatprep.subr.mxu0 0.0
        %307 = vmatpush2.msra.mxu0 0.0
        %308 = vmatprep.subr.mxu0 0.0
        %309 = vmatpush2.msra.mxu0 0.0
        %310 = vmatprep.subr.mxu0 0.0
        %311 = vmatpush2.msra.mxu0 0.0
        %312 = vmatprep.subr.mxu0 0.0
        %313 = vmatpush2.msra.mxu0 0.0
        %314 = vmatprep.subr.mxu0 0.0
        %315 = vmatpush2.msra.mxu0 0.0
        %316 = vmatprep.subr.mxu0 0.0
        %317 = vmatpush2.msra.mxu0 0.0
        %318 = vmatprep.subr.mxu0 0.0
        %319 = vmatpush2.msra.mxu0 0.0
        %320 = vmatprep.mubr.f32.mxu0 0.0
        %321 = vmatmul.mubr.f32.gmra.mxu0 %v254
        %v322 = vpop.f32.mrf.mxu0
        %v323 = vadd.f32 0.0, %v322
        %v324 = vpop.f32.mrf.mxu0
        %325 = vdwg.mxu0
        %v326 = vmul.f32 %v323, 0.5
        %v327 = vld [vmem:[%s4] sm:$0xff]
        %v328 = vld [vmem:[%s4 + $0x8] sm:$0xff]
        %v329 = vld [vmem:[%s4 + $0x10] sm:$0xff]
        %v330 = vld [vmem:[%s4 + $0x18] sm:$0xff]
        %v331 = vld [vmem:[%s4 + $0x20] sm:$0xff]
        %v332 = vld [vmem:[%s4 + $0x28] sm:$0xff]
        %v333 = vld [vmem:[%s4 + $0x30] sm:$0xff]
        %v334 = vld [vmem:[%s4 + $0x38] sm:$0xff]
        %v335 = vld [vmem:[%s4 + $0x40] sm:$0xff]
        %v336 = vld [vmem:[%s4 + $0x48] sm:$0xff]
        %v337 = vld [vmem:[%s4 + $0x50] sm:$0xff]
        %v338 = vld [vmem:[%s4 + $0x58] sm:$0xff]
        %v339 = vld [vmem:[%s4 + $0x60] sm:$0xff]
        %v340 = vld [vmem:[%s4 + $0x68] sm:$0xff]
        %v341 = vld [vmem:[%s4 + $0x70] sm:$0xff]
        %v342 = vld [vmem:[%s4 + $0x78] sm:$0xff]
        %v343 = vld [vmem:[%s4 + $0x80] sm:$0xff]
        %v344 = vld [vmem:[%s4 + $0x88] sm:$0xff]
        %v345 = vld [vmem:[%s4 + $0x90] sm:$0xff]
        %v346 = vld [vmem:[%s4 + $0x98] sm:$0xff]
        %v347 = vld [vmem:[%s4 + $0xa0] sm:$0xff]
        %v348 = vld [vmem:[%s4 + $0xa8] sm:$0xff]
        %v349 = vld [vmem:[%s4 + $0xb0] sm:$0xff]
        %v350 = vld [vmem:[%s4 + $0xb8] sm:$0xff]
        %v351 = vld [vmem:[%s4 + $0xc0] sm:$0xff]
        %v352 = vld [vmem:[%s4 + $0xc8] sm:$0xff]
        %v353 = vld [vmem:[%s4 + $0xd0] sm:$0xff]
        %v354 = vld [vmem:[%s4 + $0xd8] sm:$0xff]
        %v355 = vld [vmem:[%s4 + $0xe0] sm:$0xff]
        %v356 = vld [vmem:[%s4 + $0xe8] sm:$0xff]
        %v357 = vld [vmem:[%s4 + $0xf0] sm:$0xff]
        %v358 = vld [vmem:[%s4 + $0xf8] sm:$0xff]
        %v359 = vld [vmem:[%s5] sm:$0xff]
        %v360 = vld [vmem:[%s5 + $0x8] sm:$0xff]
        %v361 = vld [vmem:[%s5 + $0x10] sm:$0xff]
        %v362 = vld [vmem:[%s5 + $0x18] sm:$0xff]
        %v363 = vld [vmem:[%s5 + $0x20] sm:$0xff]
        %v364 = vld [vmem:[%s5 + $0x28] sm:$0xff]
        %v365 = vld [vmem:[%s5 + $0x30] sm:$0xff]
        %v366 = vld [vmem:[%s5 + $0x38] sm:$0xff]
        %v367 = vld [vmem:[%s5 + $0x40] sm:$0xff]
        %v368 = vld [vmem:[%s5 + $0x48] sm:$0xff]
        %v369 = vld [vmem:[%s5 + $0x50] sm:$0xff]
        %v370 = vld [vmem:[%s5 + $0x58] sm:$0xff]
        %v371 = vld [vmem:[%s5 + $0x60] sm:$0xff]
        %v372 = vld [vmem:[%s5 + $0x68] sm:$0xff]
        %v373 = vld [vmem:[%s5 + $0x70] sm:$0xff]
        %v374 = vld [vmem:[%s5 + $0x78] sm:$0xff]
        %v375 = vld [vmem:[%s5 + $0x80] sm:$0xff]
        %v376 = vld [vmem:[%s5 + $0x88] sm:$0xff]
        %v377 = vld [vmem:[%s5 + $0x90] sm:$0xff]
        %v378 = vld [vmem:[%s5 + $0x98] sm:$0xff]
        %v379 = vld [vmem:[%s5 + $0xa0] sm:$0xff]
        %v380 = vld [vmem:[%s5 + $0xa8] sm:$0xff]
        %v381 = vld [vmem:[%s5 + $0xb0] sm:$0xff]
        %v382 = vld [vmem:[%s5 + $0xb8] sm:$0xff]
        %v383 = vld [vmem:[%s5 + $0xc0] sm:$0xff]
        %v384 = vld [vmem:[%s5 + $0xc8] sm:$0xff]
        %v385 = vld [vmem:[%s5 + $0xd0] sm:$0xff]
        %v386 = vld [vmem:[%s5 + $0xd8] sm:$0xff]
        %v387 = vld [vmem:[%s5 + $0xe0] sm:$0xff]
        %v388 = vld [vmem:[%s5 + $0xe8] sm:$0xff]
        %v389 = vld [vmem:[%s5 + $0xf0] sm:$0xff]
        %v390 = vld [vmem:[%s5 + $0xf8] sm:$0xff]
        %v391 = vlaneseq
        %v392 = vand.u32 %v391, 127
        %v393 = vadd.s32 %v392, 128
        %v394 = vadd.s32 %v392, 256
        %vm395 = vcmp.lt.s32.totalorder %v392, 204
        %vm396 = vcmp.lt.s32.totalorder %v393, 204
        %vm397 = vcmp.lt.s32.totalorder %v394, 204
        %v398 = vsel %vm395, 0.0, -1e+30
        %v399 = vsel %vm396, 0.0, -1e+30
        %v400 = vsel %vm397, 0.0, -1e+30
        %433 = vrot.lane.b32.xlu0 %v327, 32
        %v434 = vpop.permute.xlu0 %433
        %435 = vrot.lane.b32.xlu0 %v328, 32
        %v436 = vpop.permute.xlu0 %435
        %437 = vrot.lane.b32.xlu0 %v329, 32
        %v438 = vpop.permute.xlu0 %437
        %439 = vrot.lane.b32.xlu0 %v330, 32
        %v440 = vpop.permute.xlu0 %439
        %441 = vrot.lane.b32.xlu0 %v331, 32
        %v442 = vpop.permute.xlu0 %441
        %443 = vrot.lane.b32.xlu0 %v332, 32
        %v444 = vpop.permute.xlu0 %443
        %445 = vrot.lane.b32.xlu0 %v333, 32
        %v446 = vpop.permute.xlu0 %445
        %447 = vrot.lane.b32.xlu0 %v334, 32
        %v448 = vpop.permute.xlu0 %447
        %449 = vrot.lane.b32.xlu0 %v335, 32
        %v450 = vpop.permute.xlu0 %449
        %451 = vrot.lane.b32.xlu0 %v336, 32
        %v452 = vpop.permute.xlu0 %451
        %453 = vrot.lane.b32.xlu0 %v337, 32
        %v454 = vpop.permute.xlu0 %453
        %455 = vrot.lane.b32.xlu0 %v338, 32
        %v456 = vpop.permute.xlu0 %455
        %457 = vrot.lane.b32.xlu0 %v339, 32
        %v458 = vpop.permute.xlu0 %457
        %459 = vrot.lane.b32.xlu0 %v340, 32
        %v460 = vpop.permute.xlu0 %459
        %461 = vrot.lane.b32.xlu0 %v341, 32
        %v462 = vpop.permute.xlu0 %461
        %463 = vrot.lane.b32.xlu0 %v342, 32
        %v464 = vpop.permute.xlu0 %463
        %465 = vrot.lane.b32.xlu0 %v343, 32
        %v466 = vpop.permute.xlu0 %465
        %467 = vrot.lane.b32.xlu0 %v344, 32
        %v468 = vpop.permute.xlu0 %467
        %469 = vrot.lane.b32.xlu0 %v345, 32
        %v470 = vpop.permute.xlu0 %469
        %471 = vrot.lane.b32.xlu0 %v346, 32
        %v472 = vpop.permute.xlu0 %471
        %473 = vrot.lane.b32.xlu0 %v347, 32
        %v474 = vpop.permute.xlu0 %473
        %475 = vrot.lane.b32.xlu0 %v348, 32
        %v476 = vpop.permute.xlu0 %475
        %477 = vrot.lane.b32.xlu0 %v349, 32
        %v478 = vpop.permute.xlu0 %477
        %479 = vrot.lane.b32.xlu0 %v350, 32
        %v480 = vpop.permute.xlu0 %479
        %481 = vrot.lane.b32.xlu0 %v351, 32
        %v482 = vpop.permute.xlu0 %481
        %483 = vrot.lane.b32.xlu0 %v352, 32
        %v484 = vpop.permute.xlu0 %483
        %485 = vrot.lane.b32.xlu0 %v353, 32
        %v486 = vpop.permute.xlu0 %485
        %487 = vrot.lane.b32.xlu0 %v354, 32
        %v488 = vpop.permute.xlu0 %487
        %489 = vrot.lane.b32.xlu0 %v355, 32
        %v490 = vpop.permute.xlu0 %489
        %491 = vrot.lane.b32.xlu0 %v356, 32
        %v492 = vpop.permute.xlu0 %491
        %493 = vrot.lane.b32.xlu0 %v357, 32
        %v494 = vpop.permute.xlu0 %493
        %495 = vrot.lane.b32.xlu0 %v358, 32
        %v496 = vpop.permute.xlu0 %495
        %529 = vrot.lane.b32.xlu0 %v359, 64
        %v530 = vpop.permute.xlu0 %529
        %531 = vrot.lane.b32.xlu0 %v360, 64
        %v532 = vpop.permute.xlu0 %531
        %533 = vrot.lane.b32.xlu0 %v361, 64
        %v534 = vpop.permute.xlu0 %533
        %535 = vrot.lane.b32.xlu0 %v362, 64
        %v536 = vpop.permute.xlu0 %535
        %537 = vrot.lane.b32.xlu0 %v363, 64
        %v538 = vpop.permute.xlu0 %537
        %539 = vrot.lane.b32.xlu0 %v364, 64
        %v540 = vpop.permute.xlu0 %539
        %541 = vrot.lane.b32.xlu0 %v365, 64
        %v542 = vpop.permute.xlu0 %541
        %543 = vrot.lane.b32.xlu0 %v366, 64
        %v544 = vpop.permute.xlu0 %543
        %545 = vrot.lane.b32.xlu0 %v367, 64
        %v546 = vpop.permute.xlu0 %545
        %547 = vrot.lane.b32.xlu0 %v368, 64
        %v548 = vpop.permute.xlu0 %547
        %549 = vrot.lane.b32.xlu0 %v369, 64
        %v550 = vpop.permute.xlu0 %549
        %551 = vrot.lane.b32.xlu0 %v370, 64
        %v552 = vpop.permute.xlu0 %551
        %553 = vrot.lane.b32.xlu0 %v371, 64
        %v554 = vpop.permute.xlu0 %553
        %555 = vrot.lane.b32.xlu0 %v372, 64
        %v556 = vpop.permute.xlu0 %555
        %557 = vrot.lane.b32.xlu0 %v373, 64
        %v558 = vpop.permute.xlu0 %557
        %559 = vrot.lane.b32.xlu0 %v374, 64
        %v560 = vpop.permute.xlu0 %559
        %561 = vrot.lane.b32.xlu0 %v375, 64
        %v562 = vpop.permute.xlu0 %561
        %563 = vrot.lane.b32.xlu0 %v376, 64
        %v564 = vpop.permute.xlu0 %563
        %565 = vrot.lane.b32.xlu0 %v377, 64
        %v566 = vpop.permute.xlu0 %565
        %567 = vrot.lane.b32.xlu0 %v378, 64
        %v568 = vpop.permute.xlu0 %567
        %569 = vrot.lane.b32.xlu0 %v379, 64
        %v570 = vpop.permute.xlu0 %569
        %571 = vrot.lane.b32.xlu0 %v380, 64
        %v572 = vpop.permute.xlu0 %571
        %573 = vrot.lane.b32.xlu0 %v381, 64
        %v574 = vpop.permute.xlu0 %573
        %575 = vrot.lane.b32.xlu0 %v382, 64
        %v576 = vpop.permute.xlu0 %575
        %577 = vrot.lane.b32.xlu0 %v383, 64
        %v578 = vpop.permute.xlu0 %577
        %579 = vrot.lane.b32.xlu0 %v384, 64
        %v580 = vpop.permute.xlu0 %579
        %581 = vrot.lane.b32.xlu0 %v385, 64
        %v582 = vpop.permute.xlu0 %581
        %583 = vrot.lane.b32.xlu0 %v386, 64
        %v584 = vpop.permute.xlu0 %583
        %585 = vrot.lane.b32.xlu0 %v387, 64
        %v586 = vpop.permute.xlu0 %585
        %587 = vrot.lane.b32.xlu0 %v388, 64
        %v588 = vpop.permute.xlu0 %587
        %589 = vrot.lane.b32.xlu0 %v389, 64
        %v590 = vpop.permute.xlu0 %589
        %591 = vrot.lane.b32.xlu0 %v390, 64
        %v592 = vpop.permute.xlu0 %591
        %594 = vrot.lane.b32.xlu0 %v323, 96
        %v595 = vpop.permute.xlu0 %594
        %596 = vrot.lane.b32.xlu0 %v434, 96
        %v597 = vpop.permute.xlu0 %596
        %598 = vrot.lane.b32.xlu0 %v436, 96
        %v599 = vpop.permute.xlu0 %598
        %600 = vrot.lane.b32.xlu0 %v438, 96
        %v601 = vpop.permute.xlu0 %600
        %602 = vrot.lane.b32.xlu0 %v440, 96
        %v603 = vpop.permute.xlu0 %602
        %604 = vrot.lane.b32.xlu0 %v442, 96
        %v605 = vpop.permute.xlu0 %604
        %606 = vrot.lane.b32.xlu0 %v444, 96
        %v607 = vpop.permute.xlu0 %606
        %608 = vrot.lane.b32.xlu0 %v446, 96
        %v609 = vpop.permute.xlu0 %608
        %610 = vrot.lane.b32.xlu0 %v448, 96
        %v611 = vpop.permute.xlu0 %610
        %612 = vrot.lane.b32.xlu0 %v450, 96
        %v613 = vpop.permute.xlu0 %612
        %614 = vrot.lane.b32.xlu0 %v452, 96
        %v615 = vpop.permute.xlu0 %614
        %616 = vrot.lane.b32.xlu0 %v454, 96
        %v617 = vpop.permute.xlu0 %616
        %618 = vrot.lane.b32.xlu0 %v456, 96
        %v619 = vpop.permute.xlu0 %618
        %620 = vrot.lane.b32.xlu0 %v458, 96
        %v621 = vpop.permute.xlu0 %620
        %622 = vrot.lane.b32.xlu0 %v460, 96
        %v623 = vpop.permute.xlu0 %622
        %624 = vrot.lane.b32.xlu0 %v462, 96
        %v625 = vpop.permute.xlu0 %624
        %626 = vrot.lane.b32.xlu0 %v464, 96
        %v627 = vpop.permute.xlu0 %626
        %628 = vrot.lane.b32.xlu0 %v466, 96
        %v629 = vpop.permute.xlu0 %628
        %630 = vrot.lane.b32.xlu0 %v468, 96
        %v631 = vpop.permute.xlu0 %630
        %632 = vrot.lane.b32.xlu0 %v470, 96
        %v633 = vpop.permute.xlu0 %632
        %634 = vrot.lane.b32.xlu0 %v472, 96
        %v635 = vpop.permute.xlu0 %634
        %636 = vrot.lane.b32.xlu0 %v474, 96
        %v637 = vpop.permute.xlu0 %636
        %638 = vrot.lane.b32.xlu0 %v476, 96
        %v639 = vpop.permute.xlu0 %638
        %640 = vrot.lane.b32.xlu0 %v478, 96
        %v641 = vpop.permute.xlu0 %640
        %642 = vrot.lane.b32.xlu0 %v480, 96
        %v643 = vpop.permute.xlu0 %642
        %644 = vrot.lane.b32.xlu0 %v482, 96
        %v645 = vpop.permute.xlu0 %644
        %646 = vrot.lane.b32.xlu0 %v484, 96
        %v647 = vpop.permute.xlu0 %646
        %648 = vrot.lane.b32.xlu0 %v486, 96
        %v649 = vpop.permute.xlu0 %648
        %650 = vrot.lane.b32.xlu0 %v488, 96
        %v651 = vpop.permute.xlu0 %650
        %652 = vrot.lane.b32.xlu0 %v490, 96
        %v653 = vpop.permute.xlu0 %652
        %654 = vrot.lane.b32.xlu0 %v492, 96
        %v655 = vpop.permute.xlu0 %654
        %656 = vrot.lane.b32.xlu0 %v494, 96
        %v657 = vpop.permute.xlu0 %656
        %658 = vrot.lane.b32.xlu0 %v496, 96
        %v659 = vpop.permute.xlu0 %658
        %vm660 = vcmask 31744
        %v662 = vsel %vm660, %v326, 0
        %v664 = vsel %vm660, %v595, 0
        %v666 = vsel %vm660, %v597, 0
        %v668 = vsel %vm660, %v599, 0
        %v670 = vsel %vm660, %v601, 0
        %v672 = vsel %vm660, %v603, 0
        %v674 = vsel %vm660, %v605, 0
        %v676 = vsel %vm660, %v607, 0
        %v678 = vsel %vm660, %v609, 0
        %v680 = vsel %vm660, %v611, 0
        %v682 = vsel %vm660, %v613, 0
        %v684 = vsel %vm660, %v615, 0
        %v686 = vsel %vm660, %v617, 0
        %v688 = vsel %vm660, %v619, 0
        %v690 = vsel %vm660, %v621, 0
        %v692 = vsel %vm660, %v623, 0
        %v694 = vsel %vm660, %v625, 0
        %v696 = vsel %vm660, %v627, 0
        %v698 = vsel %vm660, %v629, 0
        %v700 = vsel %vm660, %v631, 0
        %v702 = vsel %vm660, %v633, 0
        %v704 = vsel %vm660, %v635, 0
        %v706 = vsel %vm660, %v637, 0
        %v708 = vsel %vm660, %v639, 0
        %v710 = vsel %vm660, %v641, 0
        %v712 = vsel %vm660, %v643, 0
        %v714 = vsel %vm660, %v645, 0
        %v716 = vsel %vm660, %v647, 0
        %v718 = vsel %vm660, %v649, 0
        %v720 = vsel %vm660, %v651, 0
        %v722 = vsel %vm660, %v653, 0
        %v724 = vsel %vm660, %v655, 0
        %v726 = vsel %vm660, %v657, 0
        %v728 = vsel %vm660, %v659, 0
        %730 = vmatprep.subr.mxu0 0.0
        %731 = vmatpush1.xpose.msra.mxu0 %v694
        %732 = vmatprep.subr.mxu0 0.0
        %733 = vmatpush1.xpose.msra.mxu0 %v692
        %734 = vmatprep.subr.mxu0 0.0
        %735 = vmatpush1.xpose.msra.mxu0 %v690
        %736 = vmatprep.subr.mxu0 0.0
        %737 = vmatpush1.xpose.msra.mxu0 %v688
        %738 = vmatprep.subr.mxu0 0.0
        %739 = vmatpush1.xpose.msra.mxu0 %v686
        %740 = vmatprep.subr.mxu0 0.0
        %741 = vmatpush1.xpose.msra.mxu0 %v684
        %742 = vmatprep.subr.mxu0 0.0
        %743 = vmatpush1.xpose.msra.mxu0 %v682
        %744 = vmatprep.subr.mxu0 0.0
        %745 = vmatpush1.xpose.msra.mxu0 %v680
        %746 = vmatprep.subr.mxu0 0.0
        %747 = vmatpush1.xpose.msra.mxu0 %v678
        %748 = vmatprep.subr.mxu0 0.0
        %749 = vmatpush1.xpose.msra.mxu0 %v676
        %750 = vmatprep.subr.mxu0 0.0
        %751 = vmatpush1.xpose.msra.mxu0 %v674
        %752 = vmatprep.subr.mxu0 0.0
        %753 = vmatpush1.xpose.msra.mxu0 %v672
        %754 = vmatprep.subr.mxu0 0.0
        %755 = vmatpush1.xpose.msra.mxu0 %v670
        %756 = vmatprep.subr.mxu0 0.0
        %757 = vmatpush1.xpose.msra.mxu0 %v668
        %758 = vmatprep.subr.mxu0 0.0
        %759 = vmatpush1.xpose.msra.mxu0 %v666
        %760 = vmatprep.subr.mxu0 0.0
        %761 = vmatpush1.xpose.msra.mxu0 %v664
        %762 = vmatprep.subr.mxu0 0.0
        %763 = vmatpush2.xpose.msra.mxu0 %v726
        %764 = vmatprep.subr.mxu0 0.0
        %765 = vmatpush2.xpose.msra.mxu0 %v724
        %766 = vmatprep.subr.mxu0 0.0
        %767 = vmatpush2.xpose.msra.mxu0 %v722
        %768 = vmatprep.subr.mxu0 0.0
        %769 = vmatpush2.xpose.msra.mxu0 %v720
        %770 = vmatprep.subr.mxu0 0.0
        %771 = vmatpush2.xpose.msra.mxu0 %v718
        %772 = vmatprep.subr.mxu0 0.0
        %773 = vmatpush2.xpose.msra.mxu0 %v716
        %774 = vmatprep.subr.mxu0 0.0
        %775 = vmatpush2.xpose.msra.mxu0 %v714
        %776 = vmatprep.subr.mxu0 0.0
        %777 = vmatpush2.xpose.msra.mxu0 %v712
        %778 = vmatprep.subr.mxu0 0.0
        %779 = vmatpush2.xpose.msra.mxu0 %v710
        %780 = vmatprep.subr.mxu0 0.0
        %781 = vmatpush2.xpose.msra.mxu0 %v708
        %782 = vmatprep.subr.mxu0 0.0
        %783 = vmatpush2.xpose.msra.mxu0 %v706
        %784 = vmatprep.subr.mxu0 0.0
        %785 = vmatpush2.xpose.msra.mxu0 %v704
        %786 = vmatprep.subr.mxu0 0.0
        %787 = vmatpush2.xpose.msra.mxu0 %v702
        %788 = vmatprep.subr.mxu0 0.0
        %789 = vmatpush2.xpose.msra.mxu0 %v700
        %790 = vmatprep.subr.mxu0 0.0
        %791 = vmatpush2.xpose.msra.mxu0 %v698
        %792 = vmatprep.subr.mxu0 0.0
        %793 = vmatpush2.xpose.msra.mxu0 %v696
        %794 = vmatprep.mubr.f32.mxu0 0.0
        %795 = vmatmul.mubr.f32.gmra.mxu0 %v662
        %v796 = vpop.f32.mrf.mxu0
        %v797 = vadd.f32 %v398, %v796
        %v798 = vpop.f32.mrf.mxu0
        %v799 = vadd.f32 %v399, %v798
        %800 = vdwg.mxu0
        %801 = vmatprep.subr.mxu0 0.0
        %802 = vmatpush1.xpose.msra.mxu0 0.0
        %803 = vmatprep.subr.mxu0 0.0
        %804 = vmatpush1.xpose.msra.mxu0 0.0
        %805 = vmatprep.subr.mxu0 0.0
        %806 = vmatpush1.xpose.msra.mxu0 0.0
        %807 = vmatprep.subr.mxu0 0.0
        %808 = vmatpush1.xpose.msra.mxu0 0.0
        %809 = vmatprep.subr.mxu0 0.0
        %810 = vmatpush1.xpose.msra.mxu0 0.0
        %811 = vmatprep.subr.mxu0 0.0
        %812 = vmatpush1.xpose.msra.mxu0 0.0
        %813 = vmatprep.subr.mxu0 0.0
        %814 = vmatpush1.xpose.msra.mxu0 0.0
        %815 = vmatprep.subr.mxu0 0.0
        %816 = vmatpush1.xpose.msra.mxu0 0.0
        %817 = vmatprep.subr.mxu0 0.0
        %818 = vmatpush1.xpose.msra.mxu0 0.0
        %819 = vmatprep.subr.mxu0 0.0
        %820 = vmatpush1.xpose.msra.mxu0 0.0
        %821 = vmatprep.subr.mxu0 0.0
        %822 = vmatpush1.xpose.msra.mxu0 0.0
        %823 = vmatprep.subr.mxu0 0.0
        %824 = vmatpush1.xpose.msra.mxu0 0.0
        %825 = vmatprep.subr.mxu0 0.0
        %826 = vmatpush1.xpose.msra.mxu0 0.0
        %827 = vmatprep.subr.mxu0 0.0
        %828 = vmatpush1.xpose.msra.mxu0 0.0
        %829 = vmatprep.subr.mxu0 0.0
        %830 = vmatpush1.xpose.msra.mxu0 0.0
        %831 = vmatprep.subr.mxu0 0.0
        %832 = vmatpush1.xpose.msra.mxu0 %v728
        %833 = vmatprep.subr.mxu0 0.0
        %834 = vmatpush2.xpose.msra.mxu0 0.0
        %835 = vmatprep.subr.mxu0 0.0
        %836 = vmatpush2.xpose.msra.mxu0 0.0
        %837 = vmatprep.subr.mxu0 0.0
        %838 = vmatpush2.xpose.msra.mxu0 0.0
        %839 = vmatprep.subr.mxu0 0.0
        %840 = vmatpush2.xpose.msra.mxu0 0.0
        %841 = vmatprep.subr.mxu0 0.0
        %842 = vmatpush2.xpose.msra.mxu0 0.0
        %843 = vmatprep.subr.mxu0 0.0
        %844 = vmatpush2.xpose.msra.mxu0 0.0
        %845 = vmatprep.subr.mxu0 0.0
        %846 = vmatpush2.xpose.msra.mxu0 0.0
        %847 = vmatprep.subr.mxu0 0.0
        %848 = vmatpush2.xpose.msra.mxu0 0.0
        %849 = vmatprep.subr.mxu0 0.0
        %850 = vmatpush2.xpose.msra.mxu0 0.0
        %851 = vmatprep.subr.mxu0 0.0
        %852 = vmatpush2.xpose.msra.mxu0 0.0
        %853 = vmatprep.subr.mxu0 0.0
        %854 = vmatpush2.xpose.msra.mxu0 0.0
        %855 = vmatprep.subr.mxu0 0.0
        %856 = vmatpush2.xpose.msra.mxu0 0.0
        %857 = vmatprep.subr.mxu0 0.0
        %858 = vmatpush2.xpose.msra.mxu0 0.0
        %859 = vmatprep.subr.mxu0 0.0
        %860 = vmatpush2.xpose.msra.mxu0 0.0
        %861 = vmatprep.subr.mxu0 0.0
        %862 = vmatpush2.xpose.msra.mxu0 0.0
        %863 = vmatprep.subr.mxu0 0.0
        %864 = vmatpush2.xpose.msra.mxu0 0.0
        %865 = vmatprep.mubr.f32.mxu0 0.0
        %866 = vmatmul.mubr.f32.gmra.mxu0 %v662
        %v867 = vpop.f32.mrf.mxu0
        %v868 = vadd.f32 %v400, %v867
        %v869 = vpop.f32.mrf.mxu0
        %870 = vdwg.mxu0
        %vm871 = vcmask 64512
        %v872 = vsel %vm871, %v868, -inf
        %v873 = vmax.f32 %v797, %v799
        %v874 = vmax.f32 %v873, %v872
        %875 = vmax.xlane.f32.xlu0 %v874
        %v876 = vpop.xlane.xlu0 %875
        %v877 = vsub.f32 %v797, %v876
        %v878 = vsub.f32 %v799, %v876
        %v879 = vsub.f32 %v868, %v876
        %v880 = vmul.f32 %v877, 1.442695
        %v881 = vpow.pop %v880
        %v882 = vmul.f32 %v878, 1.442695
        %v883 = vpow.pop %v882
        %v884 = vmul.f32 %v879, 1.442695
        %v885 = vpow.pop %v884
        %v886 = vadd.f32 %v881, %v883
        %v887 = vsel %vm871, %v885, 0.0
        %v888 = vadd.f32 %v886, %v887
        %889 = vadd.xlane.f32.xlu0 %v888
        %v890 = vpop.xlane.xlu0 %889
        %v891 = vrcp.pop %v890
        %892 = vrot.lane.b32.xlu0 %v323, 64
        %v893 = vpop.permute.xlu0 %892
        %894 = vrot.lane.b32.xlu0 %v530, 64
        %v895 = vpop.permute.xlu0 %894
        %896 = vrot.lane.b32.xlu0 %v532, 64
        %v897 = vpop.permute.xlu0 %896
        %898 = vrot.lane.b32.xlu0 %v534, 64
        %v899 = vpop.permute.xlu0 %898
        %900 = vrot.lane.b32.xlu0 %v536, 64
        %v901 = vpop.permute.xlu0 %900
        %902 = vrot.lane.b32.xlu0 %v538, 64
        %v903 = vpop.permute.xlu0 %902
        %904 = vrot.lane.b32.xlu0 %v540, 64
        %v905 = vpop.permute.xlu0 %904
        %906 = vrot.lane.b32.xlu0 %v542, 64
        %v907 = vpop.permute.xlu0 %906
        %908 = vrot.lane.b32.xlu0 %v544, 64
        %v909 = vpop.permute.xlu0 %908
        %910 = vrot.lane.b32.xlu0 %v546, 64
        %v911 = vpop.permute.xlu0 %910
        %912 = vrot.lane.b32.xlu0 %v548, 64
        %v913 = vpop.permute.xlu0 %912
        %914 = vrot.lane.b32.xlu0 %v550, 64
        %v915 = vpop.permute.xlu0 %914
        %916 = vrot.lane.b32.xlu0 %v552, 64
        %v917 = vpop.permute.xlu0 %916
        %918 = vrot.lane.b32.xlu0 %v554, 64
        %v919 = vpop.permute.xlu0 %918
        %920 = vrot.lane.b32.xlu0 %v556, 64
        %v921 = vpop.permute.xlu0 %920
        %922 = vrot.lane.b32.xlu0 %v558, 64
        %v923 = vpop.permute.xlu0 %922
        %924 = vrot.lane.b32.xlu0 %v560, 64
        %v925 = vpop.permute.xlu0 %924
        %926 = vrot.lane.b32.xlu0 %v562, 64
        %v927 = vpop.permute.xlu0 %926
        %928 = vrot.lane.b32.xlu0 %v564, 64
        %v929 = vpop.permute.xlu0 %928
        %930 = vrot.lane.b32.xlu0 %v566, 64
        %v931 = vpop.permute.xlu0 %930
        %932 = vrot.lane.b32.xlu0 %v568, 64
        %v933 = vpop.permute.xlu0 %932
        %934 = vrot.lane.b32.xlu0 %v570, 64
        %v935 = vpop.permute.xlu0 %934
        %936 = vrot.lane.b32.xlu0 %v572, 64
        %v937 = vpop.permute.xlu0 %936
        %938 = vrot.lane.b32.xlu0 %v574, 64
        %v939 = vpop.permute.xlu0 %938
        %940 = vrot.lane.b32.xlu0 %v576, 64
        %v941 = vpop.permute.xlu0 %940
        %942 = vrot.lane.b32.xlu0 %v578, 64
        %v943 = vpop.permute.xlu0 %942
        %944 = vrot.lane.b32.xlu0 %v580, 64
        %v945 = vpop.permute.xlu0 %944
        %946 = vrot.lane.b32.xlu0 %v582, 64
        %v947 = vpop.permute.xlu0 %946
        %948 = vrot.lane.b32.xlu0 %v584, 64
        %v949 = vpop.permute.xlu0 %948
        %950 = vrot.lane.b32.xlu0 %v586, 64
        %v951 = vpop.permute.xlu0 %950
        %952 = vrot.lane.b32.xlu0 %v588, 64
        %v953 = vpop.permute.xlu0 %952
        %954 = vrot.lane.b32.xlu0 %v590, 64
        %v955 = vpop.permute.xlu0 %954
        %956 = vrot.lane.b32.xlu0 %v592, 64
        %v957 = vpop.permute.xlu0 %956
        %v992 = vsel %vm871, %v885, 0
        %994 = vmatprep.subr.mxu0 0.0
        %995 = vmatpush1.msra.mxu0 %v923
        %996 = vmatprep.subr.mxu0 0.0
        %997 = vmatpush1.msra.mxu0 %v921
        %998 = vmatprep.subr.mxu0 0.0
        %999 = vmatpush1.msra.mxu0 %v919
        %1000 = vmatprep.subr.mxu0 0.0
        %1001 = vmatpush1.msra.mxu0 %v917
        %1002 = vmatprep.subr.mxu0 0.0
        %1003 = vmatpush1.msra.mxu0 %v915
        %1004 = vmatprep.subr.mxu0 0.0
        %1005 = vmatpush1.msra.mxu0 %v913
        %1006 = vmatprep.subr.mxu0 0.0
        %1007 = vmatpush1.msra.mxu0 %v911
        %1008 = vmatprep.subr.mxu0 0.0
        %1009 = vmatpush1.msra.mxu0 %v909
        %1010 = vmatprep.subr.mxu0 0.0
        %1011 = vmatpush1.msra.mxu0 %v907
        %1012 = vmatprep.subr.mxu0 0.0
        %1013 = vmatpush1.msra.mxu0 %v905
        %1014 = vmatprep.subr.mxu0 0.0
        %1015 = vmatpush1.msra.mxu0 %v903
        %1016 = vmatprep.subr.mxu0 0.0
        %1017 = vmatpush1.msra.mxu0 %v901
        %1018 = vmatprep.subr.mxu0 0.0
        %1019 = vmatpush1.msra.mxu0 %v899
        %1020 = vmatprep.subr.mxu0 0.0
        %1021 = vmatpush1.msra.mxu0 %v897
        %1022 = vmatprep.subr.mxu0 0.0
        %1023 = vmatpush1.msra.mxu0 %v895
        %1024 = vmatprep.subr.mxu0 0.0
        %1025 = vmatpush1.msra.mxu0 %v893
        %1026 = vmatprep.subr.mxu0 0.0
        %1027 = vmatpush2.msra.mxu0 %v955
        %1028 = vmatprep.subr.mxu0 0.0
        %1029 = vmatpush2.msra.mxu0 %v953
        %1030 = vmatprep.subr.mxu0 0.0
        %1031 = vmatpush2.msra.mxu0 %v951
        %1032 = vmatprep.subr.mxu0 0.0
        %1033 = vmatpush2.msra.mxu0 %v949
        %1034 = vmatprep.subr.mxu0 0.0
        %1035 = vmatpush2.msra.mxu0 %v947
        %1036 = vmatprep.subr.mxu0 0.0
        %1037 = vmatpush2.msra.mxu0 %v945
        %1038 = vmatprep.subr.mxu0 0.0
        %1039 = vmatpush2.msra.mxu0 %v943
        %1040 = vmatprep.subr.mxu0 0.0
        %1041 = vmatpush2.msra.mxu0 %v941
        %1042 = vmatprep.subr.mxu0 0.0
        %1043 = vmatpush2.msra.mxu0 %v939
        %1044 = vmatprep.subr.mxu0 0.0
        %1045 = vmatpush2.msra.mxu0 %v937
        %1046 = vmatprep.subr.mxu0 0.0
        %1047 = vmatpush2.msra.mxu0 %v935
        %1048 = vmatprep.subr.mxu0 0.0
        %1049 = vmatpush2.msra.mxu0 %v933
        %1050 = vmatprep.subr.mxu0 0.0
        %1051 = vmatpush2.msra.mxu0 %v931
        %1052 = vmatprep.subr.mxu0 0.0
        %1053 = vmatpush2.msra.mxu0 %v929
        %1054 = vmatprep.subr.mxu0 0.0
        %1055 = vmatpush2.msra.mxu0 %v927
        %1056 = vmatprep.subr.mxu0 0.0
        %1057 = vmatpush2.msra.mxu0 %v925
        %1058 = vmatprep.mubr.f32.mxu0 %v883
        %1059 = vmatmul.mubr.f32.gmra.mxu0 %v881
        %v1060 = vpop.f32.mrf.mxu0
        %v1061 = vadd.f32 0.0, %v1060
        %v1062 = vpop.f32.mrf.mxu0
        %1063 = vdwg.mxu0
        %1064 = vmatprep.subr.mxu0 0.0
        %1065 = vmatpush1.msra.mxu0 0.0
        %1066 = vmatprep.subr.mxu0 0.0
        %1067 = vmatpush1.msra.mxu0 0.0
        %1068 = vmatprep.subr.mxu0 0.0
        %1069 = vmatpush1.msra.mxu0 0.0
        %1070 = vmatprep.subr.mxu0 0.0
        %1071 = vmatpush1.msra.mxu0 0.0
        %1072 = vmatprep.subr.mxu0 0.0
        %1073 = vmatpush1.msra.mxu0 0.0
        %1074 = vmatprep.subr.mxu0 0.0
        %1075 = vmatpush1.msra.mxu0 0.0
        %1076 = vmatprep.subr.mxu0 0.0
        %1077 = vmatpush1.msra.mxu0 0.0
        %1078 = vmatprep.subr.mxu0 0.0
        %1079 = vmatpush1.msra.mxu0 0.0
        %1080 = vmatprep.subr.mxu0 0.0
        %1081 = vmatpush1.msra.mxu0 0.0
        %1082 = vmatprep.subr.mxu0 0.0
        %1083 = vmatpush1.msra.mxu0 0.0
        %1084 = vmatprep.subr.mxu0 0.0
        %1085 = vmatpush1.msra.mxu0 0.0
        %1086 = vmatprep.subr.mxu0 0.0
        %1087 = vmatpush1.msra.mxu0 0.0
        %1088 = vmatprep.subr.mxu0 0.0
        %1089 = vmatpush1.msra.mxu0 0.0
        %1090 = vmatprep.subr.mxu0 0.0
        %1091 = vmatpush1.msra.mxu0 0.0
        %1092 = vmatprep.subr.mxu0 0.0
        %1093 = vmatpush1.msra.mxu0 0.0
        %1094 = vmatprep.subr.mxu0 0.0
        %1095 = vmatpush1.msra.mxu0 %v957
        %1096 = vmatprep.subr.mxu0 0.0
        %1097 = vmatpush2.msra.mxu0 0.0
        %1098 = vmatprep.subr.mxu0 0.0
        %1099 = vmatpush2.msra.mxu0 0.0
        %1100 = vmatprep.subr.mxu0 0.0
        %1101 = vmatpush2.msra.mxu0 0.0
        %1102 = vmatprep.subr.mxu0 0.0
        %1103 = vmatpush2.msra.mxu0 0.0
        %1104 = vmatprep.subr.mxu0 0.0
        %1105 = vmatpush2.msra.mxu0 0.0
        %1106 = vmatprep.subr.mxu0 0.0
        %1107 = vmatpush2.msra.mxu0 0.0
        %1108 = vmatprep.subr.mxu0 0.0
        %1109 = vmatpush2.msra.mxu0 0.0
        %1110 = vmatprep.subr.mxu0 0.0
        %1111 = vmatpush2.msra.mxu0 0.0
        %1112 = vmatprep.subr.mxu0 0.0
        %1113 = vmatpush2.msra.mxu0 0.0
        %1114 = vmatprep.subr.mxu0 0.0
        %1115 = vmatpush2.msra.mxu0 0.0
        %1116 = vmatprep.subr.mxu0 0.0
        %1117 = vmatpush2.msra.mxu0 0.0
        %1118 = vmatprep.subr.mxu0 0.0
        %1119 = vmatpush2.msra.mxu0 0.0
        %1120 = vmatprep.subr.mxu0 0.0
        %1121 = vmatpush2.msra.mxu0 0.0
        %1122 = vmatprep.subr.mxu0 0.0
        %1123 = vmatpush2.msra.mxu0 0.0
        %1124 = vmatprep.subr.mxu0 0.0
        %1125 = vmatpush2.msra.mxu0 0.0
        %1126 = vmatprep.subr.mxu0 0.0
        %1127 = vmatpush2.msra.mxu0 0.0
        %1128 = vmatprep.mubr.f32.mxu0 0.0
        %1129 = vmatmul.mubr.f32.gmra.mxu0 %v992
        %v1130 = vpop.f32.mrf.mxu0
        %v1131 = vadd.f32 %v1061, %v1130
        %v1132 = vpop.f32.mrf.mxu0
        %1133 = vdwg.mxu0
        %v1134 = vmul.f32 %v1131, %v891
        %1135 = vrot.lane.b32.xlu0 %v326, 124
        %v1136 = vpop.permute.xlu0 %1135
        %1137 = vrot.lane.b32.xlu0 %v323, 92
        %v1138 = vpop.permute.xlu0 %1137
        %1139 = vrot.lane.b32.xlu0 %v434, 92
        %v1140 = vpop.permute.xlu0 %1139
        %1141 = vrot.lane.b32.xlu0 %v436, 92
        %v1142 = vpop.permute.xlu0 %1141
        %1143 = vrot.lane.b32.xlu0 %v438, 92
        %v1144 = vpop.permute.xlu0 %1143
        %1145 = vrot.lane.b32.xlu0 %v440, 92
        %v1146 = vpop.permute.xlu0 %1145
        %1147 = vrot.lane.b32.xlu0 %v442, 92
        %v1148 = vpop.permute.xlu0 %1147
        %1149 = vrot.lane.b32.xlu0 %v444, 92
        %v1150 = vpop.permute.xlu0 %1149
        %1151 = vrot.lane.b32.xlu0 %v446, 92
        %v1152 = vpop.permute.xlu0 %1151
        %1153 = vrot.lane.b32.xlu0 %v448, 92
        %v1154 = vpop.permute.xlu0 %1153
        %1155 = vrot.lane.b32.xlu0 %v450, 92
        %v1156 = vpop.permute.xlu0 %1155
        %1157 = vrot.lane.b32.xlu0 %v452, 92
        %v1158 = vpop.permute.xlu0 %1157
        %1159 = vrot.lane.b32.xlu0 %v454, 92
        %v1160 = vpop.permute.xlu0 %1159
        %1161 = vrot.lane.b32.xlu0 %v456, 92
        %v1162 = vpop.permute.xlu0 %1161
        %1163 = vrot.lane.b32.xlu0 %v458, 92
        %v1164 = vpop.permute.xlu0 %1163
        %1165 = vrot.lane.b32.xlu0 %v460, 92
        %v1166 = vpop.permute.xlu0 %1165
        %1167 = vrot.lane.b32.xlu0 %v462, 92
        %v1168 = vpop.permute.xlu0 %1167
        %1169 = vrot.lane.b32.xlu0 %v464, 92
        %v1170 = vpop.permute.xlu0 %1169
        %1171 = vrot.lane.b32.xlu0 %v466, 92
        %v1172 = vpop.permute.xlu0 %1171
        %1173 = vrot.lane.b32.xlu0 %v468, 92
        %v1174 = vpop.permute.xlu0 %1173
        %1175 = vrot.lane.b32.xlu0 %v470, 92
        %v1176 = vpop.permute.xlu0 %1175
        %1177 = vrot.lane.b32.xlu0 %v472, 92
        %v1178 = vpop.permute.xlu0 %1177
        %1179 = vrot.lane.b32.xlu0 %v474, 92
        %v1180 = vpop.permute.xlu0 %1179
        %1181 = vrot.lane.b32.xlu0 %v476, 92
        %v1182 = vpop.permute.xlu0 %1181
        %1183 = vrot.lane.b32.xlu0 %v478, 92
        %v1184 = vpop.permute.xlu0 %1183
        %1185 = vrot.lane.b32.xlu0 %v480, 92
        %v1186 = vpop.permute.xlu0 %1185
        %1187 = vrot.lane.b32.xlu0 %v482, 92
        %v1188 = vpop.permute.xlu0 %1187
        %1189 = vrot.lane.b32.xlu0 %v484, 92
        %v1190 = vpop.permute.xlu0 %1189
        %1191 = vrot.lane.b32.xlu0 %v486, 92
        %v1192 = vpop.permute.xlu0 %1191
        %1193 = vrot.lane.b32.xlu0 %v488, 92
        %v1194 = vpop.permute.xlu0 %1193
        %1195 = vrot.lane.b32.xlu0 %v490, 92
        %v1196 = vpop.permute.xlu0 %1195
        %1197 = vrot.lane.b32.xlu0 %v492, 92
        %v1198 = vpop.permute.xlu0 %1197
        %1199 = vrot.lane.b32.xlu0 %v494, 92
        %v1200 = vpop.permute.xlu0 %1199
        %1201 = vrot.lane.b32.xlu0 %v496, 92
        %v1202 = vpop.permute.xlu0 %1201
        %v1203 = vsel %vm660, %v1136, 0
        %v1205 = vsel %vm660, %v1138, 0
        %v1207 = vsel %vm660, %v1140, 0
        %v1209 = vsel %vm660, %v1142, 0
        %v1211 = vsel %vm660, %v1144, 0
        %v1213 = vsel %vm660, %v1146, 0
        %v1215 = vsel %vm660, %v1148, 0
        %v1217 = vsel %vm660, %v1150, 0
        %v1219 = vsel %vm660, %v1152, 0
        %v1221 = vsel %vm660, %v1154, 0
        %v1223 = vsel %vm660, %v1156, 0
        %v1225 = vsel %vm660, %v1158, 0
        %v1227 = vsel %vm660, %v1160, 0
        %v1229 = vsel %vm660, %v1162, 0
        %v1231 = vsel %vm660, %v1164, 0
        %v1233 = vsel %vm660, %v1166, 0
        %v1235 = vsel %vm660, %v1168, 0
        %v1237 = vsel %vm660, %v1170, 0
        %v1239 = vsel %vm660, %v1172, 0
        %v1241 = vsel %vm660, %v1174, 0
        %v1243 = vsel %vm660, %v1176, 0
        %v1245 = vsel %vm660, %v1178, 0
        %v1247 = vsel %vm660, %v1180, 0
        %v1249 = vsel %vm660, %v1182, 0
        %v1251 = vsel %vm660, %v1184, 0
        %v1253 = vsel %vm660, %v1186, 0
        %v1255 = vsel %vm660, %v1188, 0
        %v1257 = vsel %vm660, %v1190, 0
        %v1259 = vsel %vm660, %v1192, 0
        %v1261 = vsel %vm660, %v1194, 0
        %v1263 = vsel %vm660, %v1196, 0
        %v1265 = vsel %vm660, %v1198, 0
        %v1267 = vsel %vm660, %v1200, 0
        %v1269 = vsel %vm660, %v1202, 0
        %1271 = vmatprep.subr.mxu0 0.0
        %1272 = vmatpush1.xpose.msra.mxu0 %v1235
        %1273 = vmatprep.subr.mxu0 0.0
        %1274 = vmatpush1.xpose.msra.mxu0 %v1233
        %1275 = vmatprep.subr.mxu0 0.0
        %1276 = vmatpush1.xpose.msra.mxu0 %v1231
        %1277 = vmatprep.subr.mxu0 0.0
        %1278 = vmatpush1.xpose.msra.mxu0 %v1229
        %1279 = vmatprep.subr.mxu0 0.0
        %1280 = vmatpush1.xpose.msra.mxu0 %v1227
        %1281 = vmatprep.subr.mxu0 0.0
        %1282 = vmatpush1.xpose.msra.mxu0 %v1225
        %1283 = vmatprep.subr.mxu0 0.0
        %1284 = vmatpush1.xpose.msra.mxu0 %v1223
        %1285 = vmatprep.subr.mxu0 0.0
        %1286 = vmatpush1.xpose.msra.mxu0 %v1221
        %1287 = vmatprep.subr.mxu0 0.0
        %1288 = vmatpush1.xpose.msra.mxu0 %v1219
        %1289 = vmatprep.subr.mxu0 0.0
        %1290 = vmatpush1.xpose.msra.mxu0 %v1217
        %1291 = vmatprep.subr.mxu0 0.0
        %1292 = vmatpush1.xpose.msra.mxu0 %v1215
        %1293 = vmatprep.subr.mxu0 0.0
        %1294 = vmatpush1.xpose.msra.mxu0 %v1213
        %1295 = vmatprep.subr.mxu0 0.0
        %1296 = vmatpush1.xpose.msra.mxu0 %v1211
        %1297 = vmatprep.subr.mxu0 0.0
        %1298 = vmatpush1.xpose.msra.mxu0 %v1209
        %1299 = vmatprep.subr.mxu0 0.0
        %1300 = vmatpush1.xpose.msra.mxu0 %v1207
        %1301 = vmatprep.subr.mxu0 0.0
        %1302 = vmatpush1.xpose.msra.mxu0 %v1205
        %1303 = vmatprep.subr.mxu0 0.0
        %1304 = vmatpush2.xpose.msra.mxu0 %v1267
        %1305 = vmatprep.subr.mxu0 0.0
        %1306 = vmatpush2.xpose.msra.mxu0 %v1265
        %1307 = vmatprep.subr.mxu0 0.0
        %1308 = vmatpush2.xpose.msra.mxu0 %v1263
        %1309 = vmatprep.subr.mxu0 0.0
        %1310 = vmatpush2.xpose.msra.mxu0 %v1261
        %1311 = vmatprep.subr.mxu0 0.0
        %1312 = vmatpush2.xpose.msra.mxu0 %v1259
        %1313 = vmatprep.subr.mxu0 0.0
        %1314 = vmatpush2.xpose.msra.mxu0 %v1257
        %1315 = vmatprep.subr.mxu0 0.0
        %1316 = vmatpush2.xpose.msra.mxu0 %v1255
        %1317 = vmatprep.subr.mxu0 0.0
        %1318 = vmatpush2.xpose.msra.mxu0 %v1253
        %1319 = vmatprep.subr.mxu0 0.0
        %1320 = vmatpush2.xpose.msra.mxu0 %v1251
        %1321 = vmatprep.subr.mxu0 0.0
        %1322 = vmatpush2.xpose.msra.mxu0 %v1249
        %1323 = vmatprep.subr.mxu0 0.0
        %1324 = vmatpush2.xpose.msra.mxu0 %v1247
        %1325 = vmatprep.subr.mxu0 0.0
        %1326 = vmatpush2.xpose.msra.mxu0 %v1245
        %1327 = vmatprep.subr.mxu0 0.0
        %1328 = vmatpush2.xpose.msra.mxu0 %v1243
        %1329 = vmatprep.subr.mxu0 0.0
        %1330 = vmatpush2.xpose.msra.mxu0 %v1241
        %1331 = vmatprep.subr.mxu0 0.0
        %1332 = vmatpush2.xpose.msra.mxu0 %v1239
        %1333 = vmatprep.subr.mxu0 0.0
        %1334 = vmatpush2.xpose.msra.mxu0 %v1237
        %1335 = vmatprep.mubr.f32.mxu0 0.0
        %1336 = vmatmul.mubr.f32.gmra.mxu0 %v1203
        %v1337 = vpop.f32.mrf.mxu0
        %v1338 = vadd.f32 %v398, %v1337
        %v1339 = vpop.f32.mrf.mxu0
        %v1340 = vadd.f32 %v399, %v1339
        %1341 = vdwg.mxu0
        %1342 = vmatprep.subr.mxu0 0.0
        %1343 = vmatpush1.xpose.msra.mxu0 0.0
        %1344 = vmatprep.subr.mxu0 0.0
        %1345 = vmatpush1.xpose.msra.mxu0 0.0
        %1346 = vmatprep.subr.mxu0 0.0
        %1347 = vmatpush1.xpose.msra.mxu0 0.0
        %1348 = vmatprep.subr.mxu0 0.0
        %1349 = vmatpush1.xpose.msra.mxu0 0.0
        %1350 = vmatprep.subr.mxu0 0.0
        %1351 = vmatpush1.xpose.msra.mxu0 0.0
        %1352 = vmatprep.subr.mxu0 0.0
        %1353 = vmatpush1.xpose.msra.mxu0 0.0
        %1354 = vmatprep.subr.mxu0 0.0
        %1355 = vmatpush1.xpose.msra.mxu0 0.0
        %1356 = vmatprep.subr.mxu0 0.0
        %1357 = vmatpush1.xpose.msra.mxu0 0.0
        %1358 = vmatprep.subr.mxu0 0.0
        %1359 = vmatpush1.xpose.msra.mxu0 0.0
        %1360 = vmatprep.subr.mxu0 0.0
        %1361 = vmatpush1.xpose.msra.mxu0 0.0
        %1362 = vmatprep.subr.mxu0 0.0
        %1363 = vmatpush1.xpose.msra.mxu0 0.0
        %1364 = vmatprep.subr.mxu0 0.0
        %1365 = vmatpush1.xpose.msra.mxu0 0.0
        %1366 = vmatprep.subr.mxu0 0.0
        %1367 = vmatpush1.xpose.msra.mxu0 0.0
        %1368 = vmatprep.subr.mxu0 0.0
        %1369 = vmatpush1.xpose.msra.mxu0 0.0
        %1370 = vmatprep.subr.mxu0 0.0
        %1371 = vmatpush1.xpose.msra.mxu0 0.0
        %1372 = vmatprep.subr.mxu0 0.0
        %1373 = vmatpush1.xpose.msra.mxu0 %v1269
        %1374 = vmatprep.subr.mxu0 0.0
        %1375 = vmatpush2.xpose.msra.mxu0 0.0
        %1376 = vmatprep.subr.mxu0 0.0
        %1377 = vmatpush2.xpose.msra.mxu0 0.0
        %1378 = vmatprep.subr.mxu0 0.0
        %1379 = vmatpush2.xpose.msra.mxu0 0.0
        %1380 = vmatprep.subr.mxu0 0.0
        %1381 = vmatpush2.xpose.msra.mxu0 0.0
        %1382 = vmatprep.subr.mxu0 0.0
        %1383 = vmatpush2.xpose.msra.mxu0 0.0
        %1384 = vmatprep.subr.mxu0 0.0
        %1385 = vmatpush2.xpose.msra.mxu0 0.0
        %1386 = vmatprep.subr.mxu0 0.0
        %1387 = vmatpush2.xpose.msra.mxu0 0.0
        %1388 = vmatprep.subr.mxu0 0.0
        %1389 = vmatpush2.xpose.msra.mxu0 0.0
        %1390 = vmatprep.subr.mxu0 0.0
        %1391 = vmatpush2.xpose.msra.mxu0 0.0
        %1392 = vmatprep.subr.mxu0 0.0
        %1393 = vmatpush2.xpose.msra.mxu0 0.0
        %1394 = vmatprep.subr.mxu0 0.0
        %1395 = vmatpush2.xpose.msra.mxu0 0.0
        %1396 = vmatprep.subr.mxu0 0.0
        %1397 = vmatpush2.xpose.msra.mxu0 0.0
        %1398 = vmatprep.subr.mxu0 0.0
        %1399 = vmatpush2.xpose.msra.mxu0 0.0
        %1400 = vmatprep.subr.mxu0 0.0
        %1401 = vmatpush2.xpose.msra.mxu0 0.0
        %1402 = vmatprep.subr.mxu0 0.0
        %1403 = vmatpush2.xpose.msra.mxu0 0.0
        %1404 = vmatprep.subr.mxu0 0.0
        %1405 = vmatpush2.xpose.msra.mxu0 0.0
        %1406 = vmatprep.mubr.f32.mxu0 0.0
        %1407 = vmatmul.mubr.f32.gmra.mxu0 %v1203
        %v1408 = vpop.f32.mrf.mxu0
        %v1409 = vadd.f32 %v400, %v1408
        %v1410 = vpop.f32.mrf.mxu0
        %1411 = vdwg.mxu0
        %v1412 = vsel %vm871, %v1409, -inf
        %v1413 = vmax.f32 %v1338, %v1340
        %v1414 = vmax.f32 %v1413, %v1412
        %1415 = vmax.xlane.f32.xlu0 %v1414
        %v1416 = vpop.xlane.xlu0 %1415
        %v1417 = vsub.f32 %v1338, %v1416
        %v1418 = vsub.f32 %v1340, %v1416
        %v1419 = vsub.f32 %v1409, %v1416
        %v1420 = vmul.f32 %v1417, 1.442695
        %v1421 = vpow.pop %v1420
        %v1422 = vmul.f32 %v1418, 1.442695
        %v1423 = vpow.pop %v1422
        %v1424 = vmul.f32 %v1419, 1.442695
        %v1425 = vpow.pop %v1424
        %v1426 = vadd.f32 %v1421, %v1423
        %v1427 = vsel %vm871, %v1425, 0.0
        %v1428 = vadd.f32 %v1426, %v1427
        %1429 = vadd.xlane.f32.xlu0 %v1428
        %v1430 = vpop.xlane.xlu0 %1429
        %v1431 = vrcp.pop %v1430
        %1432 = vrot.lane.b32.xlu0 %v323, 60
        %v1433 = vpop.permute.xlu0 %1432
        %1434 = vrot.lane.b32.xlu0 %v530, 60
        %v1435 = vpop.permute.xlu0 %1434
        %1436 = vrot.lane.b32.xlu0 %v532, 60
        %v1437 = vpop.permute.xlu0 %1436
        %1438 = vrot.lane.b32.xlu0 %v534, 60
        %v1439 = vpop.permute.xlu0 %1438
        %1440 = vrot.lane.b32.xlu0 %v536, 60
        %v1441 = vpop.permute.xlu0 %1440
        %1442 = vrot.lane.b32.xlu0 %v538, 60
        %v1443 = vpop.permute.xlu0 %1442
        %1444 = vrot.lane.b32.xlu0 %v540, 60
        %v1445 = vpop.permute.xlu0 %1444
        %1446 = vrot.lane.b32.xlu0 %v542, 60
        %v1447 = vpop.permute.xlu0 %1446
        %1448 = vrot.lane.b32.xlu0 %v544, 60
        %v1449 = vpop.permute.xlu0 %1448
        %1450 = vrot.lane.b32.xlu0 %v546, 60
        %v1451 = vpop.permute.xlu0 %1450
        %1452 = vrot.lane.b32.xlu0 %v548, 60
        %v1453 = vpop.permute.xlu0 %1452
        %1454 = vrot.lane.b32.xlu0 %v550, 60
        %v1455 = vpop.permute.xlu0 %1454
        %1456 = vrot.lane.b32.xlu0 %v552, 60
        %v1457 = vpop.permute.xlu0 %1456
        %1458 = vrot.lane.b32.xlu0 %v554, 60
        %v1459 = vpop.permute.xlu0 %1458
        %1460 = vrot.lane.b32.xlu0 %v556, 60
        %v1461 = vpop.permute.xlu0 %1460
        %1462 = vrot.lane.b32.xlu0 %v558, 60
        %v1463 = vpop.permute.xlu0 %1462
        %1464 = vrot.lane.b32.xlu0 %v560, 60
        %v1465 = vpop.permute.xlu0 %1464
        %1466 = vrot.lane.b32.xlu0 %v562, 60
        %v1467 = vpop.permute.xlu0 %1466
        %1468 = vrot.lane.b32.xlu0 %v564, 60
        %v1469 = vpop.permute.xlu0 %1468
        %1470 = vrot.lane.b32.xlu0 %v566, 60
        %v1471 = vpop.permute.xlu0 %1470
        %1472 = vrot.lane.b32.xlu0 %v568, 60
        %v1473 = vpop.permute.xlu0 %1472
        %1474 = vrot.lane.b32.xlu0 %v570, 60
        %v1475 = vpop.permute.xlu0 %1474
        %1476 = vrot.lane.b32.xlu0 %v572, 60
        %v1477 = vpop.permute.xlu0 %1476
        %1478 = vrot.lane.b32.xlu0 %v574, 60
        %v1479 = vpop.permute.xlu0 %1478
        %1480 = vrot.lane.b32.xlu0 %v576, 60
        %v1481 = vpop.permute.xlu0 %1480
        %1482 = vrot.lane.b32.xlu0 %v578, 60
        %v1483 = vpop.permute.xlu0 %1482
        %1484 = vrot.lane.b32.xlu0 %v580, 60
        %v1485 = vpop.permute.xlu0 %1484
        %1486 = vrot.lane.b32.xlu0 %v582, 60
        %v1487 = vpop.permute.xlu0 %1486
        %1488 = vrot.lane.b32.xlu0 %v584, 60
        %v1489 = vpop.permute.xlu0 %1488
        %1490 = vrot.lane.b32.xlu0 %v586, 60
        %v1491 = vpop.permute.xlu0 %1490
        %1492 = vrot.lane.b32.xlu0 %v588, 60
        %v1493 = vpop.permute.xlu0 %1492
        %1494 = vrot.lane.b32.xlu0 %v590, 60
        %v1495 = vpop.permute.xlu0 %1494
        %1496 = vrot.lane.b32.xlu0 %v592, 60
        %v1497 = vpop.permute.xlu0 %1496
        %v1532 = vsel %vm871, %v1425, 0
        %1534 = vmatprep.subr.mxu0 0.0
        %1535 = vmatpush1.msra.mxu0 %v1463
        %1536 = vmatprep.subr.mxu0 0.0
        %1537 = vmatpush1.msra.mxu0 %v1461
        %1538 = vmatprep.subr.mxu0 0.0
        %1539 = vmatpush1.msra.mxu0 %v1459
        %1540 = vmatprep.subr.mxu0 0.0
        %1541 = vmatpush1.msra.mxu0 %v1457
        %1542 = vmatprep.subr.mxu0 0.0
        %1543 = vmatpush1.msra.mxu0 %v1455
        %1544 = vmatprep.subr.mxu0 0.0
        %1545 = vmatpush1.msra.mxu0 %v1453
        %1546 = vmatprep.subr.mxu0 0.0
        %1547 = vmatpush1.msra.mxu0 %v1451
        %1548 = vmatprep.subr.mxu0 0.0
        %1549 = vmatpush1.msra.mxu0 %v1449
        %1550 = vmatprep.subr.mxu0 0.0
        %1551 = vmatpush1.msra.mxu0 %v1447
        %1552 = vmatprep.subr.mxu0 0.0
        %1553 = vmatpush1.msra.mxu0 %v1445
        %1554 = vmatprep.subr.mxu0 0.0
        %1555 = vmatpush1.msra.mxu0 %v1443
        %1556 = vmatprep.subr.mxu0 0.0
        %1557 = vmatpush1.msra.mxu0 %v1441
        %1558 = vmatprep.subr.mxu0 0.0
        %1559 = vmatpush1.msra.mxu0 %v1439
        %1560 = vmatprep.subr.mxu0 0.0
        %1561 = vmatpush1.msra.mxu0 %v1437
        %1562 = vmatprep.subr.mxu0 0.0
        %1563 = vmatpush1.msra.mxu0 %v1435
        %1564 = vmatprep.subr.mxu0 0.0
        %1565 = vmatpush1.msra.mxu0 %v1433
        %1566 = vmatprep.subr.mxu0 0.0
        %1567 = vmatpush2.msra.mxu0 %v1495
        %1568 = vmatprep.subr.mxu0 0.0
        %1569 = vmatpush2.msra.mxu0 %v1493
        %1570 = vmatprep.subr.mxu0 0.0
        %1571 = vmatpush2.msra.mxu0 %v1491
        %1572 = vmatprep.subr.mxu0 0.0
        %1573 = vmatpush2.msra.mxu0 %v1489
        %1574 = vmatprep.subr.mxu0 0.0
        %1575 = vmatpush2.msra.mxu0 %v1487
        %1576 = vmatprep.subr.mxu0 0.0
        %1577 = vmatpush2.msra.mxu0 %v1485
        %1578 = vmatprep.subr.mxu0 0.0
        %1579 = vmatpush2.msra.mxu0 %v1483
        %1580 = vmatprep.subr.mxu0 0.0
        %1581 = vmatpush2.msra.mxu0 %v1481
        %1582 = vmatprep.subr.mxu0 0.0
        %1583 = vmatpush2.msra.mxu0 %v1479
        %1584 = vmatprep.subr.mxu0 0.0
        %1585 = vmatpush2.msra.mxu0 %v1477
        %1586 = vmatprep.subr.mxu0 0.0
        %1587 = vmatpush2.msra.mxu0 %v1475
        %1588 = vmatprep.subr.mxu0 0.0
        %1589 = vmatpush2.msra.mxu0 %v1473
        %1590 = vmatprep.subr.mxu0 0.0
        %1591 = vmatpush2.msra.mxu0 %v1471
        %1592 = vmatprep.subr.mxu0 0.0
        %1593 = vmatpush2.msra.mxu0 %v1469
        %1594 = vmatprep.subr.mxu0 0.0
        %1595 = vmatpush2.msra.mxu0 %v1467
        %1596 = vmatprep.subr.mxu0 0.0
        %1597 = vmatpush2.msra.mxu0 %v1465
        %1598 = vmatprep.mubr.f32.mxu0 %v1423
        %1599 = vmatmul.mubr.f32.gmra.mxu0 %v1421
        %v1600 = vpop.f32.mrf.mxu0
        %v1601 = vadd.f32 0.0, %v1600
        %v1602 = vpop.f32.mrf.mxu0
        %1603 = vdwg.mxu0
        %1604 = vmatprep.subr.mxu0 0.0
        %1605 = vmatpush1.msra.mxu0 0.0
        %1606 = vmatprep.subr.mxu0 0.0
        %1607 = vmatpush1.msra.mxu0 0.0
        %1608 = vmatprep.subr.mxu0 0.0
        %1609 = vmatpush1.msra.mxu0 0.0
        %1610 = vmatprep.subr.mxu0 0.0
        %1611 = vmatpush1.msra.mxu0 0.0
        %1612 = vmatprep.subr.mxu0 0.0
        %1613 = vmatpush1.msra.mxu0 0.0
        %1614 = vmatprep.subr.mxu0 0.0
        %1615 = vmatpush1.msra.mxu0 0.0
        %1616 = vmatprep.subr.mxu0 0.0
        %1617 = vmatpush1.msra.mxu0 0.0
        %1618 = vmatprep.subr.mxu0 0.0
        %1619 = vmatpush1.msra.mxu0 0.0
        %1620 = vmatprep.subr.mxu0 0.0
        %1621 = vmatpush1.msra.mxu0 0.0
        %1622 = vmatprep.subr.mxu0 0.0
        %1623 = vmatpush1.msra.mxu0 0.0
        %1624 = vmatprep.subr.mxu0 0.0
        %1625 = vmatpush1.msra.mxu0 0.0
        %1626 = vmatprep.subr.mxu0 0.0
        %1627 = vmatpush1.msra.mxu0 0.0
        %1628 = vmatprep.subr.mxu0 0.0
        %1629 = vmatpush1.msra.mxu0 0.0
        %1630 = vmatprep.subr.mxu0 0.0
        %1631 = vmatpush1.msra.mxu0 0.0
        %1632 = vmatprep.subr.mxu0 0.0
        %1633 = vmatpush1.msra.mxu0 0.0
        %1634 = vmatprep.subr.mxu0 0.0
        %1635 = vmatpush1.msra.mxu0 %v1497
        %1636 = vmatprep.subr.mxu0 0.0
        %1637 = vmatpush2.msra.mxu0 0.0
        %1638 = vmatprep.subr.mxu0 0.0
        %1639 = vmatpush2.msra.mxu0 0.0
        %1640 = vmatprep.subr.mxu0 0.0
        %1641 = vmatpush2.msra.mxu0 0.0
        %1642 = vmatprep.subr.mxu0 0.0
        %1643 = vmatpush2.msra.mxu0 0.0
        %1644 = vmatprep.subr.mxu0 0.0
        %1645 = vmatpush2.msra.mxu0 0.0
        %1646 = vmatprep.subr.mxu0 0.0
        %1647 = vmatpush2.msra.mxu0 0.0
        %1648 = vmatprep.subr.mxu0 0.0
        %1649 = vmatpush2.msra.mxu0 0.0
        %1650 = vmatprep.subr.mxu0 0.0
        %1651 = vmatpush2.msra.mxu0 0.0
        %1652 = vmatprep.subr.mxu0 0.0
        %1653 = vmatpush2.msra.mxu0 0.0
        %1654 = vmatprep.subr.mxu0 0.0
        %1655 = vmatpush2.msra.mxu0 0.0
        %1656 = vmatprep.subr.mxu0 0.0
        %1657 = vmatpush2.msra.mxu0 0.0
        %1658 = vmatprep.subr.mxu0 0.0
        %1659 = vmatpush2.msra.mxu0 0.0
        %1660 = vmatprep.subr.mxu0 0.0
        %1661 = vmatpush2.msra.mxu0 0.0
        %1662 = vmatprep.subr.mxu0 0.0
        %1663 = vmatpush2.msra.mxu0 0.0
        %1664 = vmatprep.subr.mxu0 0.0
        %1665 = vmatpush2.msra.mxu0 0.0
        %1666 = vmatprep.subr.mxu0 0.0
        %1667 = vmatpush2.msra.mxu0 0.0
        %1668 = vmatprep.mubr.f32.mxu0 0.0
        %1669 = vmatmul.mubr.f32.gmra.mxu0 %v1532
        %v1670 = vpop.f32.mrf.mxu0
        %v1671 = vadd.f32 %v1601, %v1670
        %v1672 = vpop.f32.mrf.mxu0
        %1673 = vdwg.mxu0
        %v1674 = vmul.f32 %v1671, %v1431
        %1675 = vrot.lane.b32.xlu0 %v326, 120
        %v1676 = vpop.permute.xlu0 %1675
        %1677 = vrot.lane.b32.xlu0 %v323, 88
        %v1678 = vpop.permute.xlu0 %1677
        %1679 = vrot.lane.b32.xlu0 %v434, 88
        %v1680 = vpop.permute.xlu0 %1679
        %1681 = vrot.lane.b32.xlu0 %v436, 88
        %v1682 = vpop.permute.xlu0 %1681
        %1683 = vrot.lane.b32.xlu0 %v438, 88
        %v1684 = vpop.permute.xlu0 %1683
        %1685 = vrot.lane.b32.xlu0 %v440, 88
        %v1686 = vpop.permute.xlu0 %1685
        %1687 = vrot.lane.b32.xlu0 %v442, 88
        %v1688 = vpop.permute.xlu0 %1687
        %1689 = vrot.lane.b32.xlu0 %v444, 88
        %v1690 = vpop.permute.xlu0 %1689
        %1691 = vrot.lane.b32.xlu0 %v446, 88
        %v1692 = vpop.permute.xlu0 %1691
        %1693 = vrot.lane.b32.xlu0 %v448, 88
        %v1694 = vpop.permute.xlu0 %1693
        %1695 = vrot.lane.b32.xlu0 %v450, 88
        %v1696 = vpop.permute.xlu0 %1695
        %1697 = vrot.lane.b32.xlu0 %v452, 88
        %v1698 = vpop.permute.xlu0 %1697
        %1699 = vrot.lane.b32.xlu0 %v454, 88
        %v1700 = vpop.permute.xlu0 %1699
        %1701 = vrot.lane.b32.xlu0 %v456, 88
        %v1702 = vpop.permute.xlu0 %1701
        %1703 = vrot.lane.b32.xlu0 %v458, 88
        %v1704 = vpop.permute.xlu0 %1703
        %1705 = vrot.lane.b32.xlu0 %v460, 88
        %v1706 = vpop.permute.xlu0 %1705
        %1707 = vrot.lane.b32.xlu0 %v462, 88
        %v1708 = vpop.permute.xlu0 %1707
        %1709 = vrot.lane.b32.xlu0 %v464, 88
        %v1710 = vpop.permute.xlu0 %1709
        %1711 = vrot.lane.b32.xlu0 %v466, 88
        %v1712 = vpop.permute.xlu0 %1711
        %1713 = vrot.lane.b32.xlu0 %v468, 88
        %v1714 = vpop.permute.xlu0 %1713
        %1715 = vrot.lane.b32.xlu0 %v470, 88
        %v1716 = vpop.permute.xlu0 %1715
        %1717 = vrot.lane.b32.xlu0 %v472, 88
        %v1718 = vpop.permute.xlu0 %1717
        %1719 = vrot.lane.b32.xlu0 %v474, 88
        %v1720 = vpop.permute.xlu0 %1719
        %1721 = vrot.lane.b32.xlu0 %v476, 88
        %v1722 = vpop.permute.xlu0 %1721
        %1723 = vrot.lane.b32.xlu0 %v478, 88
        %v1724 = vpop.permute.xlu0 %1723
        %1725 = vrot.lane.b32.xlu0 %v480, 88
        %v1726 = vpop.permute.xlu0 %1725
        %1727 = vrot.lane.b32.xlu0 %v482, 88
        %v1728 = vpop.permute.xlu0 %1727
        %1729 = vrot.lane.b32.xlu0 %v484, 88
        %v1730 = vpop.permute.xlu0 %1729
        %1731 = vrot.lane.b32.xlu0 %v486, 88
        %v1732 = vpop.permute.xlu0 %1731
        %1733 = vrot.lane.b32.xlu0 %v488, 88
        %v1734 = vpop.permute.xlu0 %1733
        %1735 = vrot.lane.b32.xlu0 %v490, 88
        %v1736 = vpop.permute.xlu0 %1735
        %1737 = vrot.lane.b32.xlu0 %v492, 88
        %v1738 = vpop.permute.xlu0 %1737
        %1739 = vrot.lane.b32.xlu0 %v494, 88
        %v1740 = vpop.permute.xlu0 %1739
        %1741 = vrot.lane.b32.xlu0 %v496, 88
        %v1742 = vpop.permute.xlu0 %1741
        %v1743 = vsel %vm660, %v1676, 0
        %v1745 = vsel %vm660, %v1678, 0
        %v1747 = vsel %vm660, %v1680, 0
        %v1749 = vsel %vm660, %v1682, 0
        %v1751 = vsel %vm660, %v1684, 0
        %v1753 = vsel %vm660, %v1686, 0
        %v1755 = vsel %vm660, %v1688, 0
        %v1757 = vsel %vm660, %v1690, 0
        %v1759 = vsel %vm660, %v1692, 0
        %v1761 = vsel %vm660, %v1694, 0
        %v1763 = vsel %vm660, %v1696, 0
        %v1765 = vsel %vm660, %v1698, 0
        %v1767 = vsel %vm660, %v1700, 0
        %v1769 = vsel %vm660, %v1702, 0
        %v1771 = vsel %vm660, %v1704, 0
        %v1773 = vsel %vm660, %v1706, 0
        %v1775 = vsel %vm660, %v1708, 0
        %v1777 = vsel %vm660, %v1710, 0
        %v1779 = vsel %vm660, %v1712, 0
        %v1781 = vsel %vm660, %v1714, 0
        %v1783 = vsel %vm660, %v1716, 0
        %v1785 = vsel %vm660, %v1718, 0
        %v1787 = vsel %vm660, %v1720, 0
        %v1789 = vsel %vm660, %v1722, 0
        %v1791 = vsel %vm660, %v1724, 0
        %v1793 = vsel %vm660, %v1726, 0
        %v1795 = vsel %vm660, %v1728, 0
        %v1797 = vsel %vm660, %v1730, 0
        %v1799 = vsel %vm660, %v1732, 0
        %v1801 = vsel %vm660, %v1734, 0
        %v1803 = vsel %vm660, %v1736, 0
        %v1805 = vsel %vm660, %v1738, 0
        %v1807 = vsel %vm660, %v1740, 0
        %v1809 = vsel %vm660, %v1742, 0
        %1811 = vmatprep.subr.mxu0 0.0
        %1812 = vmatpush1.xpose.msra.mxu0 %v1775
        %1813 = vmatprep.subr.mxu0 0.0
        %1814 = vmatpush1.xpose.msra.mxu0 %v1773
        %1815 = vmatprep.subr.mxu0 0.0
        %1816 = vmatpush1.xpose.msra.mxu0 %v1771
        %1817 = vmatprep.subr.mxu0 0.0
        %1818 = vmatpush1.xpose.msra.mxu0 %v1769
        %1819 = vmatprep.subr.mxu0 0.0
        %1820 = vmatpush1.xpose.msra.mxu0 %v1767
        %1821 = vmatprep.subr.mxu0 0.0
        %1822 = vmatpush1.xpose.msra.mxu0 %v1765
        %1823 = vmatprep.subr.mxu0 0.0
        %1824 = vmatpush1.xpose.msra.mxu0 %v1763
        %1825 = vmatprep.subr.mxu0 0.0
        %1826 = vmatpush1.xpose.msra.mxu0 %v1761
        %1827 = vmatprep.subr.mxu0 0.0
        %1828 = vmatpush1.xpose.msra.mxu0 %v1759
        %1829 = vmatprep.subr.mxu0 0.0
        %1830 = vmatpush1.xpose.msra.mxu0 %v1757
        %1831 = vmatprep.subr.mxu0 0.0
        %1832 = vmatpush1.xpose.msra.mxu0 %v1755
        %1833 = vmatprep.subr.mxu0 0.0
        %1834 = vmatpush1.xpose.msra.mxu0 %v1753
        %1835 = vmatprep.subr.mxu0 0.0
        %1836 = vmatpush1.xpose.msra.mxu0 %v1751
        %1837 = vmatprep.subr.mxu0 0.0
        %1838 = vmatpush1.xpose.msra.mxu0 %v1749
        %1839 = vmatprep.subr.mxu0 0.0
        %1840 = vmatpush1.xpose.msra.mxu0 %v1747
        %1841 = vmatprep.subr.mxu0 0.0
        %1842 = vmatpush1.xpose.msra.mxu0 %v1745
        %1843 = vmatprep.subr.mxu0 0.0
        %1844 = vmatpush2.xpose.msra.mxu0 %v1807
        %1845 = vmatprep.subr.mxu0 0.0
        %1846 = vmatpush2.xpose.msra.mxu0 %v1805
        %1847 = vmatprep.subr.mxu0 0.0
        %1848 = vmatpush2.xpose.msra.mxu0 %v1803
        %1849 = vmatprep.subr.mxu0 0.0
        %1850 = vmatpush2.xpose.msra.mxu0 %v1801
        %1851 = vmatprep.subr.mxu0 0.0
        %1852 = vmatpush2.xpose.msra.mxu0 %v1799
        %1853 = vmatprep.subr.mxu0 0.0
        %1854 = vmatpush2.xpose.msra.mxu0 %v1797
        %1855 = vmatprep.subr.mxu0 0.0
        %1856 = vmatpush2.xpose.msra.mxu0 %v1795
        %1857 = vmatprep.subr.mxu0 0.0
        %1858 = vmatpush2.xpose.msra.mxu0 %v1793
        %1859 = vmatprep.subr.mxu0 0.0
        %1860 = vmatpush2.xpose.msra.mxu0 %v1791
        %1861 = vmatprep.subr.mxu0 0.0
        %1862 = vmatpush2.xpose.msra.mxu0 %v1789
        %1863 = vmatprep.subr.mxu0 0.0
        %1864 = vmatpush2.xpose.msra.mxu0 %v1787
        %1865 = vmatprep.subr.mxu0 0.0
        %1866 = vmatpush2.xpose.msra.mxu0 %v1785
        %1867 = vmatprep.subr.mxu0 0.0
        %1868 = vmatpush2.xpose.msra.mxu0 %v1783
        %1869 = vmatprep.subr.mxu0 0.0
        %1870 = vmatpush2.xpose.msra.mxu0 %v1781
        %1871 = vmatprep.subr.mxu0 0.0
        %1872 = vmatpush2.xpose.msra.mxu0 %v1779
        %1873 = vmatprep.subr.mxu0 0.0
        %1874 = vmatpush2.xpose.msra.mxu0 %v1777
        %1875 = vmatprep.mubr.f32.mxu0 0.0
        %1876 = vmatmul.mubr.f32.gmra.mxu0 %v1743
        %v1877 = vpop.f32.mrf.mxu0
        %v1878 = vadd.f32 %v398, %v1877
        %v1879 = vpop.f32.mrf.mxu0
        %v1880 = vadd.f32 %v399, %v1879
        %1881 = vdwg.mxu0
        %1882 = vmatprep.subr.mxu0 0.0
        %1883 = vmatpush1.xpose.msra.mxu0 0.0
        %1884 = vmatprep.subr.mxu0 0.0
        %1885 = vmatpush1.xpose.msra.mxu0 0.0
        %1886 = vmatprep.subr.mxu0 0.0
        %1887 = vmatpush1.xpose.msra.mxu0 0.0
        %1888 = vmatprep.subr.mxu0 0.0
        %1889 = vmatpush1.xpose.msra.mxu0 0.0
        %1890 = vmatprep.subr.mxu0 0.0
        %1891 = vmatpush1.xpose.msra.mxu0 0.0
        %1892 = vmatprep.subr.mxu0 0.0
        %1893 = vmatpush1.xpose.msra.mxu0 0.0
        %1894 = vmatprep.subr.mxu0 0.0
        %1895 = vmatpush1.xpose.msra.mxu0 0.0
        %1896 = vmatprep.subr.mxu0 0.0
        %1897 = vmatpush1.xpose.msra.mxu0 0.0
        %1898 = vmatprep.subr.mxu0 0.0
        %1899 = vmatpush1.xpose.msra.mxu0 0.0
        %1900 = vmatprep.subr.mxu0 0.0
        %1901 = vmatpush1.xpose.msra.mxu0 0.0
        %1902 = vmatprep.subr.mxu0 0.0
        %1903 = vmatpush1.xpose.msra.mxu0 0.0
        %1904 = vmatprep.subr.mxu0 0.0
        %1905 = vmatpush1.xpose.msra.mxu0 0.0
        %1906 = vmatprep.subr.mxu0 0.0
        %1907 = vmatpush1.xpose.msra.mxu0 0.0
        %1908 = vmatprep.subr.mxu0 0.0
        %1909 = vmatpush1.xpose.msra.mxu0 0.0
        %1910 = vmatprep.subr.mxu0 0.0
        %1911 = vmatpush1.xpose.msra.mxu0 0.0
        %1912 = vmatprep.subr.mxu0 0.0
        %1913 = vmatpush1.xpose.msra.mxu0 %v1809
        %1914 = vmatprep.subr.mxu0 0.0
        %1915 = vmatpush2.xpose.msra.mxu0 0.0
        %1916 = vmatprep.subr.mxu0 0.0
        %1917 = vmatpush2.xpose.msra.mxu0 0.0
        %1918 = vmatprep.subr.mxu0 0.0
        %1919 = vmatpush2.xpose.msra.mxu0 0.0
        %1920 = vmatprep.subr.mxu0 0.0
        %1921 = vmatpush2.xpose.msra.mxu0 0.0
        %1922 = vmatprep.subr.mxu0 0.0
        %1923 = vmatpush2.xpose.msra.mxu0 0.0
        %1924 = vmatprep.subr.mxu0 0.0
        %1925 = vmatpush2.xpose.msra.mxu0 0.0
        %1926 = vmatprep.subr.mxu0 0.0
        %1927 = vmatpush2.xpose.msra.mxu0 0.0
        %1928 = vmatprep.subr.mxu0 0.0
        %1929 = vmatpush2.xpose.msra.mxu0 0.0
        %1930 = vmatprep.subr.mxu0 0.0
        %1931 = vmatpush2.xpose.msra.mxu0 0.0
        %1932 = vmatprep.subr.mxu0 0.0
        %1933 = vmatpush2.xpose.msra.mxu0 0.0
        %1934 = vmatprep.subr.mxu0 0.0
        %1935 = vmatpush2.xpose.msra.mxu0 0.0
        %1936 = vmatprep.subr.mxu0 0.0
        %1937 = vmatpush2.xpose.msra.mxu0 0.0
        %1938 = vmatprep.subr.mxu0 0.0
        %1939 = vmatpush2.xpose.msra.mxu0 0.0
        %1940 = vmatprep.subr.mxu0 0.0
        %1941 = vmatpush2.xpose.msra.mxu0 0.0
        %1942 = vmatprep.subr.mxu0 0.0
        %1943 = vmatpush2.xpose.msra.mxu0 0.0
        %1944 = vmatprep.subr.mxu0 0.0
        %1945 = vmatpush2.xpose.msra.mxu0 0.0
        %1946 = vmatprep.mubr.f32.mxu0 0.0
        %1947 = vmatmul.mubr.f32.gmra.mxu0 %v1743
        %v1948 = vpop.f32.mrf.mxu0
        %v1949 = vadd.f32 %v400, %v1948
        %v1950 = vpop.f32.mrf.mxu0
        %1951 = vdwg.mxu0
        %v1952 = vsel %vm871, %v1949, -inf
        %v1953 = vmax.f32 %v1878, %v1880
        %v1954 = vmax.f32 %v1953, %v1952
        %1955 = vmax.xlane.f32.xlu0 %v1954
        %v1956 = vpop.xlane.xlu0 %1955
        %v1957 = vsub.f32 %v1878, %v1956
        %v1958 = vsub.f32 %v1880, %v1956
        %v1959 = vsub.f32 %v1949, %v1956
        %v1960 = vmul.f32 %v1957, 1.442695
        %v1961 = vpow.pop %v1960
        %v1962 = vmul.f32 %v1958, 1.442695
        %v1963 = vpow.pop %v1962
        %v1964 = vmul.f32 %v1959, 1.442695
        %v1965 = vpow.pop %v1964
        %v1966 = vadd.f32 %v1961, %v1963
        %v1967 = vsel %vm871, %v1965, 0.0
        %v1968 = vadd.f32 %v1966, %v1967
        %1969 = vadd.xlane.f32.xlu0 %v1968
        %v1970 = vpop.xlane.xlu0 %1969
        %v1971 = vrcp.pop %v1970
        %1972 = vrot.lane.b32.xlu0 %v323, 56
        %v1973 = vpop.permute.xlu0 %1972
        %1974 = vrot.lane.b32.xlu0 %v530, 56
        %v1975 = vpop.permute.xlu0 %1974
        %1976 = vrot.lane.b32.xlu0 %v532, 56
        %v1977 = vpop.permute.xlu0 %1976
        %1978 = vrot.lane.b32.xlu0 %v534, 56
        %v1979 = vpop.permute.xlu0 %1978
        %1980 = vrot.lane.b32.xlu0 %v536, 56
        %v1981 = vpop.permute.xlu0 %1980
        %1982 = vrot.lane.b32.xlu0 %v538, 56
        %v1983 = vpop.permute.xlu0 %1982
        %1984 = vrot.lane.b32.xlu0 %v540, 56
        %v1985 = vpop.permute.xlu0 %1984
        %1986 = vrot.lane.b32.xlu0 %v542, 56
        %v1987 = vpop.permute.xlu0 %1986
        %1988 = vrot.lane.b32.xlu0 %v544, 56
        %v1989 = vpop.permute.xlu0 %1988
        %1990 = vrot.lane.b32.xlu0 %v546, 56
        %v1991 = vpop.permute.xlu0 %1990
        %1992 = vrot.lane.b32.xlu0 %v548, 56
        %v1993 = vpop.permute.xlu0 %1992
        %1994 = vrot.lane.b32.xlu0 %v550, 56
        %v1995 = vpop.permute.xlu0 %1994
        %1996 = vrot.lane.b32.xlu0 %v552, 56
        %v1997 = vpop.permute.xlu0 %1996
        %1998 = vrot.lane.b32.xlu0 %v554, 56
        %v1999 = vpop.permute.xlu0 %1998
        %2000 = vrot.lane.b32.xlu0 %v556, 56
        %v2001 = vpop.permute.xlu0 %2000
        %2002 = vrot.lane.b32.xlu0 %v558, 56
        %v2003 = vpop.permute.xlu0 %2002
        %2004 = vrot.lane.b32.xlu0 %v560, 56
        %v2005 = vpop.permute.xlu0 %2004
        %2006 = vrot.lane.b32.xlu0 %v562, 56
        %v2007 = vpop.permute.xlu0 %2006
        %2008 = vrot.lane.b32.xlu0 %v564, 56
        %v2009 = vpop.permute.xlu0 %2008
        %2010 = vrot.lane.b32.xlu0 %v566, 56
        %v2011 = vpop.permute.xlu0 %2010
        %2012 = vrot.lane.b32.xlu0 %v568, 56
        %v2013 = vpop.permute.xlu0 %2012
        %2014 = vrot.lane.b32.xlu0 %v570, 56
        %v2015 = vpop.permute.xlu0 %2014
        %2016 = vrot.lane.b32.xlu0 %v572, 56
        %v2017 = vpop.permute.xlu0 %2016
        %2018 = vrot.lane.b32.xlu0 %v574, 56
        %v2019 = vpop.permute.xlu0 %2018
        %2020 = vrot.lane.b32.xlu0 %v576, 56
        %v2021 = vpop.permute.xlu0 %2020
        %2022 = vrot.lane.b32.xlu0 %v578, 56
        %v2023 = vpop.permute.xlu0 %2022
        %2024 = vrot.lane.b32.xlu0 %v580, 56
        %v2025 = vpop.permute.xlu0 %2024
        %2026 = vrot.lane.b32.xlu0 %v582, 56
        %v2027 = vpop.permute.xlu0 %2026
        %2028 = vrot.lane.b32.xlu0 %v584, 56
        %v2029 = vpop.permute.xlu0 %2028
        %2030 = vrot.lane.b32.xlu0 %v586, 56
        %v2031 = vpop.permute.xlu0 %2030
        %2032 = vrot.lane.b32.xlu0 %v588, 56
        %v2033 = vpop.permute.xlu0 %2032
        %2034 = vrot.lane.b32.xlu0 %v590, 56
        %v2035 = vpop.permute.xlu0 %2034
        %2036 = vrot.lane.b32.xlu0 %v592, 56
        %v2037 = vpop.permute.xlu0 %2036
        %v2072 = vsel %vm871, %v1965, 0
        %2074 = vmatprep.subr.mxu0 0.0
        %2075 = vmatpush1.msra.mxu0 %v2003
        %2076 = vmatprep.subr.mxu0 0.0
        %2077 = vmatpush1.msra.mxu0 %v2001
        %2078 = vmatprep.subr.mxu0 0.0
        %2079 = vmatpush1.msra.mxu0 %v1999
        %2080 = vmatprep.subr.mxu0 0.0
        %2081 = vmatpush1.msra.mxu0 %v1997
        %2082 = vmatprep.subr.mxu0 0.0
        %2083 = vmatpush1.msra.mxu0 %v1995
        %2084 = vmatprep.subr.mxu0 0.0
        %2085 = vmatpush1.msra.mxu0 %v1993
        %2086 = vmatprep.subr.mxu0 0.0
        %2087 = vmatpush1.msra.mxu0 %v1991
        %2088 = vmatprep.subr.mxu0 0.0
        %2089 = vmatpush1.msra.mxu0 %v1989
        %2090 = vmatprep.subr.mxu0 0.0
        %2091 = vmatpush1.msra.mxu0 %v1987
        %2092 = vmatprep.subr.mxu0 0.0
        %2093 = vmatpush1.msra.mxu0 %v1985
        %2094 = vmatprep.subr.mxu0 0.0
        %2095 = vmatpush1.msra.mxu0 %v1983
        %2096 = vmatprep.subr.mxu0 0.0
        %2097 = vmatpush1.msra.mxu0 %v1981
        %2098 = vmatprep.subr.mxu0 0.0
        %2099 = vmatpush1.msra.mxu0 %v1979
        %2100 = vmatprep.subr.mxu0 0.0
        %2101 = vmatpush1.msra.mxu0 %v1977
        %2102 = vmatprep.subr.mxu0 0.0
        %2103 = vmatpush1.msra.mxu0 %v1975
        %2104 = vmatprep.subr.mxu0 0.0
        %2105 = vmatpush1.msra.mxu0 %v1973
        %2106 = vmatprep.subr.mxu0 0.0
        %2107 = vmatpush2.msra.mxu0 %v2035
        %2108 = vmatprep.subr.mxu0 0.0
        %2109 = vmatpush2.msra.mxu0 %v2033
        %2110 = vmatprep.subr.mxu0 0.0
        %2111 = vmatpush2.msra.mxu0 %v2031
        %2112 = vmatprep.subr.mxu0 0.0
        %2113 = vmatpush2.msra.mxu0 %v2029
        %2114 = vmatprep.subr.mxu0 0.0
        %2115 = vmatpush2.msra.mxu0 %v2027
        %2116 = vmatprep.subr.mxu0 0.0
        %2117 = vmatpush2.msra.mxu0 %v2025
        %2118 = vmatprep.subr.mxu0 0.0
        %2119 = vmatpush2.msra.mxu0 %v2023
        %2120 = vmatprep.subr.mxu0 0.0
        %2121 = vmatpush2.msra.mxu0 %v2021
        %2122 = vmatprep.subr.mxu0 0.0
        %2123 = vmatpush2.msra.mxu0 %v2019
        %2124 = vmatprep.subr.mxu0 0.0
        %2125 = vmatpush2.msra.mxu0 %v2017
        %2126 = vmatprep.subr.mxu0 0.0
        %2127 = vmatpush2.msra.mxu0 %v2015
        %2128 = vmatprep.subr.mxu0 0.0
        %2129 = vmatpush2.msra.mxu0 %v2013
        %2130 = vmatprep.subr.mxu0 0.0
        %2131 = vmatpush2.msra.mxu0 %v2011
        %2132 = vmatprep.subr.mxu0 0.0
        %2133 = vmatpush2.msra.mxu0 %v2009
        %2134 = vmatprep.subr.mxu0 0.0
        %2135 = vmatpush2.msra.mxu0 %v2007
        %2136 = vmatprep.subr.mxu0 0.0
        %2137 = vmatpush2.msra.mxu0 %v2005
        %2138 = vmatprep.mubr.f32.mxu0 %v1963
        %2139 = vmatmul.mubr.f32.gmra.mxu0 %v1961
        %v2140 = vpop.f32.mrf.mxu0
        %v2141 = vadd.f32 0.0, %v2140
        %v2142 = vpop.f32.mrf.mxu0
        %2143 = vdwg.mxu0
        %2144 = vmatprep.subr.mxu0 0.0
        %2145 = vmatpush1.msra.mxu0 0.0
        %2146 = vmatprep.subr.mxu0 0.0
        %2147 = vmatpush1.msra.mxu0 0.0
        %2148 = vmatprep.subr.mxu0 0.0
        %2149 = vmatpush1.msra.mxu0 0.0
        %2150 = vmatprep.subr.mxu0 0.0
        %2151 = vmatpush1.msra.mxu0 0.0
        %2152 = vmatprep.subr.mxu0 0.0
        %2153 = vmatpush1.msra.mxu0 0.0
        %2154 = vmatprep.subr.mxu0 0.0
        %2155 = vmatpush1.msra.mxu0 0.0
        %2156 = vmatprep.subr.mxu0 0.0
        %2157 = vmatpush1.msra.mxu0 0.0
        %2158 = vmatprep.subr.mxu0 0.0
        %2159 = vmatpush1.msra.mxu0 0.0
        %2160 = vmatprep.subr.mxu0 0.0
        %2161 = vmatpush1.msra.mxu0 0.0
        %2162 = vmatprep.subr.mxu0 0.0
        %2163 = vmatpush1.msra.mxu0 0.0
        %2164 = vmatprep.subr.mxu0 0.0
        %2165 = vmatpush1.msra.mxu0 0.0
        %2166 = vmatprep.subr.mxu0 0.0
        %2167 = vmatpush1.msra.mxu0 0.0
        %2168 = vmatprep.subr.mxu0 0.0
        %2169 = vmatpush1.msra.mxu0 0.0
        %2170 = vmatprep.subr.mxu0 0.0
        %2171 = vmatpush1.msra.mxu0 0.0
        %2172 = vmatprep.subr.mxu0 0.0
        %2173 = vmatpush1.msra.mxu0 0.0
        %2174 = vmatprep.subr.mxu0 0.0
        %2175 = vmatpush1.msra.mxu0 %v2037
        %2176 = vmatprep.subr.mxu0 0.0
        %2177 = vmatpush2.msra.mxu0 0.0
        %2178 = vmatprep.subr.mxu0 0.0
        %2179 = vmatpush2.msra.mxu0 0.0
        %2180 = vmatprep.subr.mxu0 0.0
        %2181 = vmatpush2.msra.mxu0 0.0
        %2182 = vmatprep.subr.mxu0 0.0
        %2183 = vmatpush2.msra.mxu0 0.0
        %2184 = vmatprep.subr.mxu0 0.0
        %2185 = vmatpush2.msra.mxu0 0.0
        %2186 = vmatprep.subr.mxu0 0.0
        %2187 = vmatpush2.msra.mxu0 0.0
        %2188 = vmatprep.subr.mxu0 0.0
        %2189 = vmatpush2.msra.mxu0 0.0
        %2190 = vmatprep.subr.mxu0 0.0
        %2191 = vmatpush2.msra.mxu0 0.0
        %2192 = vmatprep.subr.mxu0 0.0
        %2193 = vmatpush2.msra.mxu0 0.0
        %2194 = vmatprep.subr.mxu0 0.0
        %2195 = vmatpush2.msra.mxu0 0.0
        %2196 = vmatprep.subr.mxu0 0.0
        %2197 = vmatpush2.msra.mxu0 0.0
        %2198 = vmatprep.subr.mxu0 0.0
        %2199 = vmatpush2.msra.mxu0 0.0
        %2200 = vmatprep.subr.mxu0 0.0
        %2201 = vmatpush2.msra.mxu0 0.0
        %2202 = vmatprep.subr.mxu0 0.0
        %2203 = vmatpush2.msra.mxu0 0.0
        %2204 = vmatprep.subr.mxu0 0.0
        %2205 = vmatpush2.msra.mxu0 0.0
        %2206 = vmatprep.subr.mxu0 0.0
        %2207 = vmatpush2.msra.mxu0 0.0
        %2208 = vmatprep.mubr.f32.mxu0 0.0
        %2209 = vmatmul.mubr.f32.gmra.mxu0 %v2072
        %v2210 = vpop.f32.mrf.mxu0
        %v2211 = vadd.f32 %v2141, %v2210
        %v2212 = vpop.f32.mrf.mxu0
        %2213 = vdwg.mxu0
        %v2214 = vmul.f32 %v2211, %v1971
        %2215 = vrot.lane.b32.xlu0 %v326, 116
        %v2216 = vpop.permute.xlu0 %2215
        %2217 = vrot.lane.b32.xlu0 %v323, 84
        %v2218 = vpop.permute.xlu0 %2217
        %2219 = vrot.lane.b32.xlu0 %v434, 84
        %v2220 = vpop.permute.xlu0 %2219
        %2221 = vrot.lane.b32.xlu0 %v436, 84
        %v2222 = vpop.permute.xlu0 %2221
        %2223 = vrot.lane.b32.xlu0 %v438, 84
        %v2224 = vpop.permute.xlu0 %2223
        %2225 = vrot.lane.b32.xlu0 %v440, 84
        %v2226 = vpop.permute.xlu0 %2225
        %2227 = vrot.lane.b32.xlu0 %v442, 84
        %v2228 = vpop.permute.xlu0 %2227
        %2229 = vrot.lane.b32.xlu0 %v444, 84
        %v2230 = vpop.permute.xlu0 %2229
        %2231 = vrot.lane.b32.xlu0 %v446, 84
        %v2232 = vpop.permute.xlu0 %2231
        %2233 = vrot.lane.b32.xlu0 %v448, 84
        %v2234 = vpop.permute.xlu0 %2233
        %2235 = vrot.lane.b32.xlu0 %v450, 84
        %v2236 = vpop.permute.xlu0 %2235
        %2237 = vrot.lane.b32.xlu0 %v452, 84
        %v2238 = vpop.permute.xlu0 %2237
        %2239 = vrot.lane.b32.xlu0 %v454, 84
        %v2240 = vpop.permute.xlu0 %2239
        %2241 = vrot.lane.b32.xlu0 %v456, 84
        %v2242 = vpop.permute.xlu0 %2241
        %2243 = vrot.lane.b32.xlu0 %v458, 84
        %v2244 = vpop.permute.xlu0 %2243
        %2245 = vrot.lane.b32.xlu0 %v460, 84
        %v2246 = vpop.permute.xlu0 %2245
        %2247 = vrot.lane.b32.xlu0 %v462, 84
        %v2248 = vpop.permute.xlu0 %2247
        %2249 = vrot.lane.b32.xlu0 %v464, 84
        %v2250 = vpop.permute.xlu0 %2249
        %2251 = vrot.lane.b32.xlu0 %v466, 84
        %v2252 = vpop.permute.xlu0 %2251
        %2253 = vrot.lane.b32.xlu0 %v468, 84
        %v2254 = vpop.permute.xlu0 %2253
        %2255 = vrot.lane.b32.xlu0 %v470, 84
        %v2256 = vpop.permute.xlu0 %2255
        %2257 = vrot.lane.b32.xlu0 %v472, 84
        %v2258 = vpop.permute.xlu0 %2257
        %2259 = vrot.lane.b32.xlu0 %v474, 84
        %v2260 = vpop.permute.xlu0 %2259
        %2261 = vrot.lane.b32.xlu0 %v476, 84
        %v2262 = vpop.permute.xlu0 %2261
        %2263 = vrot.lane.b32.xlu0 %v478, 84
        %v2264 = vpop.permute.xlu0 %2263
        %2265 = vrot.lane.b32.xlu0 %v480, 84
        %v2266 = vpop.permute.xlu0 %2265
        %2267 = vrot.lane.b32.xlu0 %v482, 84
        %v2268 = vpop.permute.xlu0 %2267
        %2269 = vrot.lane.b32.xlu0 %v484, 84
        %v2270 = vpop.permute.xlu0 %2269
        %2271 = vrot.lane.b32.xlu0 %v486, 84
        %v2272 = vpop.permute.xlu0 %2271
        %2273 = vrot.lane.b32.xlu0 %v488, 84
        %v2274 = vpop.permute.xlu0 %2273
        %2275 = vrot.lane.b32.xlu0 %v490, 84
        %v2276 = vpop.permute.xlu0 %2275
        %2277 = vrot.lane.b32.xlu0 %v492, 84
        %v2278 = vpop.permute.xlu0 %2277
        %2279 = vrot.lane.b32.xlu0 %v494, 84
        %v2280 = vpop.permute.xlu0 %2279
        %2281 = vrot.lane.b32.xlu0 %v496, 84
        %v2282 = vpop.permute.xlu0 %2281
        %v2283 = vsel %vm660, %v2216, 0
        %v2285 = vsel %vm660, %v2218, 0
        %v2287 = vsel %vm660, %v2220, 0
        %v2289 = vsel %vm660, %v2222, 0
        %v2291 = vsel %vm660, %v2224, 0
        %v2293 = vsel %vm660, %v2226, 0
        %v2295 = vsel %vm660, %v2228, 0
        %v2297 = vsel %vm660, %v2230, 0
        %v2299 = vsel %vm660, %v2232, 0
        %v2301 = vsel %vm660, %v2234, 0
        %v2303 = vsel %vm660, %v2236, 0
        %v2305 = vsel %vm660, %v2238, 0
        %v2307 = vsel %vm660, %v2240, 0
        %v2309 = vsel %vm660, %v2242, 0
        %v2311 = vsel %vm660, %v2244, 0
        %v2313 = vsel %vm660, %v2246, 0
        %v2315 = vsel %vm660, %v2248, 0
        %v2317 = vsel %vm660, %v2250, 0
        %v2319 = vsel %vm660, %v2252, 0
        %v2321 = vsel %vm660, %v2254, 0
        %v2323 = vsel %vm660, %v2256, 0
        %v2325 = vsel %vm660, %v2258, 0
        %v2327 = vsel %vm660, %v2260, 0
        %v2329 = vsel %vm660, %v2262, 0
        %v2331 = vsel %vm660, %v2264, 0
        %v2333 = vsel %vm660, %v2266, 0
        %v2335 = vsel %vm660, %v2268, 0
        %v2337 = vsel %vm660, %v2270, 0
        %v2339 = vsel %vm660, %v2272, 0
        %v2341 = vsel %vm660, %v2274, 0
        %v2343 = vsel %vm660, %v2276, 0
        %v2345 = vsel %vm660, %v2278, 0
        %v2347 = vsel %vm660, %v2280, 0
        %v2349 = vsel %vm660, %v2282, 0
        %2351 = vmatprep.subr.mxu0 0.0
        %2352 = vmatpush1.xpose.msra.mxu0 %v2315
        %2353 = vmatprep.subr.mxu0 0.0
        %2354 = vmatpush1.xpose.msra.mxu0 %v2313
        %2355 = vmatprep.subr.mxu0 0.0
        %2356 = vmatpush1.xpose.msra.mxu0 %v2311
        %2357 = vmatprep.subr.mxu0 0.0
        %2358 = vmatpush1.xpose.msra.mxu0 %v2309
        %2359 = vmatprep.subr.mxu0 0.0
        %2360 = vmatpush1.xpose.msra.mxu0 %v2307
        %2361 = vmatprep.subr.mxu0 0.0
        %2362 = vmatpush1.xpose.msra.mxu0 %v2305
        %2363 = vmatprep.subr.mxu0 0.0
        %2364 = vmatpush1.xpose.msra.mxu0 %v2303
        %2365 = vmatprep.subr.mxu0 0.0
        %2366 = vmatpush1.xpose.msra.mxu0 %v2301
        %2367 = vmatprep.subr.mxu0 0.0
        %2368 = vmatpush1.xpose.msra.mxu0 %v2299
        %2369 = vmatprep.subr.mxu0 0.0
        %2370 = vmatpush1.xpose.msra.mxu0 %v2297
        %2371 = vmatprep.subr.mxu0 0.0
        %2372 = vmatpush1.xpose.msra.mxu0 %v2295
        %2373 = vmatprep.subr.mxu0 0.0
        %2374 = vmatpush1.xpose.msra.mxu0 %v2293
        %2375 = vmatprep.subr.mxu0 0.0
        %2376 = vmatpush1.xpose.msra.mxu0 %v2291
        %2377 = vmatprep.subr.mxu0 0.0
        %2378 = vmatpush1.xpose.msra.mxu0 %v2289
        %2379 = vmatprep.subr.mxu0 0.0
        %2380 = vmatpush1.xpose.msra.mxu0 %v2287
        %2381 = vmatprep.subr.mxu0 0.0
        %2382 = vmatpush1.xpose.msra.mxu0 %v2285
        %2383 = vmatprep.subr.mxu0 0.0
        %2384 = vmatpush2.xpose.msra.mxu0 %v2347
        %2385 = vmatprep.subr.mxu0 0.0
        %2386 = vmatpush2.xpose.msra.mxu0 %v2345
        %2387 = vmatprep.subr.mxu0 0.0
        %2388 = vmatpush2.xpose.msra.mxu0 %v2343
        %2389 = vmatprep.subr.mxu0 0.0
        %2390 = vmatpush2.xpose.msra.mxu0 %v2341
        %2391 = vmatprep.subr.mxu0 0.0
        %2392 = vmatpush2.xpose.msra.mxu0 %v2339
        %2393 = vmatprep.subr.mxu0 0.0
        %2394 = vmatpush2.xpose.msra.mxu0 %v2337
        %2395 = vmatprep.subr.mxu0 0.0
        %2396 = vmatpush2.xpose.msra.mxu0 %v2335
        %2397 = vmatprep.subr.mxu0 0.0
        %2398 = vmatpush2.xpose.msra.mxu0 %v2333
        %2399 = vmatprep.subr.mxu0 0.0
        %2400 = vmatpush2.xpose.msra.mxu0 %v2331
        %2401 = vmatprep.subr.mxu0 0.0
        %2402 = vmatpush2.xpose.msra.mxu0 %v2329
        %2403 = vmatprep.subr.mxu0 0.0
        %2404 = vmatpush2.xpose.msra.mxu0 %v2327
        %2405 = vmatprep.subr.mxu0 0.0
        %2406 = vmatpush2.xpose.msra.mxu0 %v2325
        %2407 = vmatprep.subr.mxu0 0.0
        %2408 = vmatpush2.xpose.msra.mxu0 %v2323
        %2409 = vmatprep.subr.mxu0 0.0
        %2410 = vmatpush2.xpose.msra.mxu0 %v2321
        %2411 = vmatprep.subr.mxu0 0.0
        %2412 = vmatpush2.xpose.msra.mxu0 %v2319
        %2413 = vmatprep.subr.mxu0 0.0
        %2414 = vmatpush2.xpose.msra.mxu0 %v2317
        %2415 = vmatprep.mubr.f32.mxu0 0.0
        %2416 = vmatmul.mubr.f32.gmra.mxu0 %v2283
        %v2417 = vpop.f32.mrf.mxu0
        %v2418 = vadd.f32 %v398, %v2417
        %v2419 = vpop.f32.mrf.mxu0
        %v2420 = vadd.f32 %v399, %v2419
        %2421 = vdwg.mxu0
        %2422 = vmatprep.subr.mxu0 0.0
        %2423 = vmatpush1.xpose.msra.mxu0 0.0
        %2424 = vmatprep.subr.mxu0 0.0
        %2425 = vmatpush1.xpose.msra.mxu0 0.0
        %2426 = vmatprep.subr.mxu0 0.0
        %2427 = vmatpush1.xpose.msra.mxu0 0.0
        %2428 = vmatprep.subr.mxu0 0.0
        %2429 = vmatpush1.xpose.msra.mxu0 0.0
        %2430 = vmatprep.subr.mxu0 0.0
        %2431 = vmatpush1.xpose.msra.mxu0 0.0
        %2432 = vmatprep.subr.mxu0 0.0
        %2433 = vmatpush1.xpose.msra.mxu0 0.0
        %2434 = vmatprep.subr.mxu0 0.0
        %2435 = vmatpush1.xpose.msra.mxu0 0.0
        %2436 = vmatprep.subr.mxu0 0.0
        %2437 = vmatpush1.xpose.msra.mxu0 0.0
        %2438 = vmatprep.subr.mxu0 0.0
        %2439 = vmatpush1.xpose.msra.mxu0 0.0
        %2440 = vmatprep.subr.mxu0 0.0
        %2441 = vmatpush1.xpose.msra.mxu0 0.0
        %2442 = vmatprep.subr.mxu0 0.0
        %2443 = vmatpush1.xpose.msra.mxu0 0.0
        %2444 = vmatprep.subr.mxu0 0.0
        %2445 = vmatpush1.xpose.msra.mxu0 0.0
        %2446 = vmatprep.subr.mxu0 0.0
        %2447 = vmatpush1.xpose.msra.mxu0 0.0
        %2448 = vmatprep.subr.mxu0 0.0
        %2449 = vmatpush1.xpose.msra.mxu0 0.0
        %2450 = vmatprep.subr.mxu0 0.0
        %2451 = vmatpush1.xpose.msra.mxu0 0.0
        %2452 = vmatprep.subr.mxu0 0.0
        %2453 = vmatpush1.xpose.msra.mxu0 %v2349
        %2454 = vmatprep.subr.mxu0 0.0
        %2455 = vmatpush2.xpose.msra.mxu0 0.0
        %2456 = vmatprep.subr.mxu0 0.0
        %2457 = vmatpush2.xpose.msra.mxu0 0.0
        %2458 = vmatprep.subr.mxu0 0.0
        %2459 = vmatpush2.xpose.msra.mxu0 0.0
        %2460 = vmatprep.subr.mxu0 0.0
        %2461 = vmatpush2.xpose.msra.mxu0 0.0
        %2462 = vmatprep.subr.mxu0 0.0
        %2463 = vmatpush2.xpose.msra.mxu0 0.0
        %2464 = vmatprep.subr.mxu0 0.0
        %2465 = vmatpush2.xpose.msra.mxu0 0.0
        %2466 = vmatprep.subr.mxu0 0.0
        %2467 = vmatpush2.xpose.msra.mxu0 0.0
        %2468 = vmatprep.subr.mxu0 0.0
        %2469 = vmatpush2.xpose.msra.mxu0 0.0
        %2470 = vmatprep.subr.mxu0 0.0
        %2471 = vmatpush2.xpose.msra.mxu0 0.0
        %2472 = vmatprep.subr.mxu0 0.0
        %2473 = vmatpush2.xpose.msra.mxu0 0.0
        %2474 = vmatprep.subr.mxu0 0.0
        %2475 = vmatpush2.xpose.msra.mxu0 0.0
        %2476 = vmatprep.subr.mxu0 0.0
        %2477 = vmatpush2.xpose.msra.mxu0 0.0
        %2478 = vmatprep.subr.mxu0 0.0
        %2479 = vmatpush2.xpose.msra.mxu0 0.0
        %2480 = vmatprep.subr.mxu0 0.0
        %2481 = vmatpush2.xpose.msra.mxu0 0.0
        %2482 = vmatprep.subr.mxu0 0.0
        %2483 = vmatpush2.xpose.msra.mxu0 0.0
        %2484 = vmatprep.subr.mxu0 0.0
        %2485 = vmatpush2.xpose.msra.mxu0 0.0
        %2486 = vmatprep.mubr.f32.mxu0 0.0
        %2487 = vmatmul.mubr.f32.gmra.mxu0 %v2283
        %v2488 = vpop.f32.mrf.mxu0
        %v2489 = vadd.f32 %v400, %v2488
        %v2490 = vpop.f32.mrf.mxu0
        %2491 = vdwg.mxu0
        %v2492 = vsel %vm871, %v2489, -inf
        %v2493 = vmax.f32 %v2418, %v2420
        %v2494 = vmax.f32 %v2493, %v2492
        %2495 = vmax.xlane.f32.xlu0 %v2494
        %v2496 = vpop.xlane.xlu0 %2495
        %v2497 = vsub.f32 %v2418, %v2496
        %v2498 = vsub.f32 %v2420, %v2496
        %v2499 = vsub.f32 %v2489, %v2496
        %v2500 = vmul.f32 %v2497, 1.442695
        %v2501 = vpow.pop %v2500
        %v2502 = vmul.f32 %v2498, 1.442695
        %v2503 = vpow.pop %v2502
        %v2504 = vmul.f32 %v2499, 1.442695
        %v2505 = vpow.pop %v2504
        %v2506 = vadd.f32 %v2501, %v2503
        %v2507 = vsel %vm871, %v2505, 0.0
        %v2508 = vadd.f32 %v2506, %v2507
        %2509 = vadd.xlane.f32.xlu0 %v2508
        %v2510 = vpop.xlane.xlu0 %2509
        %v2511 = vrcp.pop %v2510
        %2512 = vrot.lane.b32.xlu0 %v323, 52
        %v2513 = vpop.permute.xlu0 %2512
        %2514 = vrot.lane.b32.xlu0 %v530, 52
        %v2515 = vpop.permute.xlu0 %2514
        %2516 = vrot.lane.b32.xlu0 %v532, 52
        %v2517 = vpop.permute.xlu0 %2516
        %2518 = vrot.lane.b32.xlu0 %v534, 52
        %v2519 = vpop.permute.xlu0 %2518
        %2520 = vrot.lane.b32.xlu0 %v536, 52
        %v2521 = vpop.permute.xlu0 %2520
        %2522 = vrot.lane.b32.xlu0 %v538, 52
        %v2523 = vpop.permute.xlu0 %2522
        %2524 = vrot.lane.b32.xlu0 %v540, 52
        %v2525 = vpop.permute.xlu0 %2524
        %2526 = vrot.lane.b32.xlu0 %v542, 52
        %v2527 = vpop.permute.xlu0 %2526
        %2528 = vrot.lane.b32.xlu0 %v544, 52
        %v2529 = vpop.permute.xlu0 %2528
        %2530 = vrot.lane.b32.xlu0 %v546, 52
        %v2531 = vpop.permute.xlu0 %2530
        %2532 = vrot.lane.b32.xlu0 %v548, 52
        %v2533 = vpop.permute.xlu0 %2532
        %2534 = vrot.lane.b32.xlu0 %v550, 52
        %v2535 = vpop.permute.xlu0 %2534
        %2536 = vrot.lane.b32.xlu0 %v552, 52
        %v2537 = vpop.permute.xlu0 %2536
        %2538 = vrot.lane.b32.xlu0 %v554, 52
        %v2539 = vpop.permute.xlu0 %2538
        %2540 = vrot.lane.b32.xlu0 %v556, 52
        %v2541 = vpop.permute.xlu0 %2540
        %2542 = vrot.lane.b32.xlu0 %v558, 52
        %v2543 = vpop.permute.xlu0 %2542
        %2544 = vrot.lane.b32.xlu0 %v560, 52
        %v2545 = vpop.permute.xlu0 %2544
        %2546 = vrot.lane.b32.xlu0 %v562, 52
        %v2547 = vpop.permute.xlu0 %2546
        %2548 = vrot.lane.b32.xlu0 %v564, 52
        %v2549 = vpop.permute.xlu0 %2548
        %2550 = vrot.lane.b32.xlu0 %v566, 52
        %v2551 = vpop.permute.xlu0 %2550
        %2552 = vrot.lane.b32.xlu0 %v568, 52
        %v2553 = vpop.permute.xlu0 %2552
        %2554 = vrot.lane.b32.xlu0 %v570, 52
        %v2555 = vpop.permute.xlu0 %2554
        %2556 = vrot.lane.b32.xlu0 %v572, 52
        %v2557 = vpop.permute.xlu0 %2556
        %2558 = vrot.lane.b32.xlu0 %v574, 52
        %v2559 = vpop.permute.xlu0 %2558
        %2560 = vrot.lane.b32.xlu0 %v576, 52
        %v2561 = vpop.permute.xlu0 %2560
        %2562 = vrot.lane.b32.xlu0 %v578, 52
        %v2563 = vpop.permute.xlu0 %2562
        %2564 = vrot.lane.b32.xlu0 %v580, 52
        %v2565 = vpop.permute.xlu0 %2564
        %2566 = vrot.lane.b32.xlu0 %v582, 52
        %v2567 = vpop.permute.xlu0 %2566
        %2568 = vrot.lane.b32.xlu0 %v584, 52
        %v2569 = vpop.permute.xlu0 %2568
        %2570 = vrot.lane.b32.xlu0 %v586, 52
        %v2571 = vpop.permute.xlu0 %2570
        %2572 = vrot.lane.b32.xlu0 %v588, 52
        %v2573 = vpop.permute.xlu0 %2572
        %2574 = vrot.lane.b32.xlu0 %v590, 52
        %v2575 = vpop.permute.xlu0 %2574
        %2576 = vrot.lane.b32.xlu0 %v592, 52
        %v2577 = vpop.permute.xlu0 %2576
        %v2612 = vsel %vm871, %v2505, 0
        %2614 = vmatprep.subr.mxu0 0.0
        %2615 = vmatpush1.msra.mxu0 %v2543
        %2616 = vmatprep.subr.mxu0 0.0
        %2617 = vmatpush1.msra.mxu0 %v2541
        %2618 = vmatprep.subr.mxu0 0.0
        %2619 = vmatpush1.msra.mxu0 %v2539
        %2620 = vmatprep.subr.mxu0 0.0
        %2621 = vmatpush1.msra.mxu0 %v2537
        %2622 = vmatprep.subr.mxu0 0.0
        %2623 = vmatpush1.msra.mxu0 %v2535
        %2624 = vmatprep.subr.mxu0 0.0
        %2625 = vmatpush1.msra.mxu0 %v2533
        %2626 = vmatprep.subr.mxu0 0.0
        %2627 = vmatpush1.msra.mxu0 %v2531
        %2628 = vmatprep.subr.mxu0 0.0
        %2629 = vmatpush1.msra.mxu0 %v2529
        %2630 = vmatprep.subr.mxu0 0.0
        %2631 = vmatpush1.msra.mxu0 %v2527
        %2632 = vmatprep.subr.mxu0 0.0
        %2633 = vmatpush1.msra.mxu0 %v2525
        %2634 = vmatprep.subr.mxu0 0.0
        %2635 = vmatpush1.msra.mxu0 %v2523
        %2636 = vmatprep.subr.mxu0 0.0
        %2637 = vmatpush1.msra.mxu0 %v2521
        %2638 = vmatprep.subr.mxu0 0.0
        %2639 = vmatpush1.msra.mxu0 %v2519
        %2640 = vmatprep.subr.mxu0 0.0
        %2641 = vmatpush1.msra.mxu0 %v2517
        %2642 = vmatprep.subr.mxu0 0.0
        %2643 = vmatpush1.msra.mxu0 %v2515
        %2644 = vmatprep.subr.mxu0 0.0
        %2645 = vmatpush1.msra.mxu0 %v2513
        %2646 = vmatprep.subr.mxu0 0.0
        %2647 = vmatpush2.msra.mxu0 %v2575
        %2648 = vmatprep.subr.mxu0 0.0
        %2649 = vmatpush2.msra.mxu0 %v2573
        %2650 = vmatprep.subr.mxu0 0.0
        %2651 = vmatpush2.msra.mxu0 %v2571
        %2652 = vmatprep.subr.mxu0 0.0
        %2653 = vmatpush2.msra.mxu0 %v2569
        %2654 = vmatprep.subr.mxu0 0.0
        %2655 = vmatpush2.msra.mxu0 %v2567
        %2656 = vmatprep.subr.mxu0 0.0
        %2657 = vmatpush2.msra.mxu0 %v2565
        %2658 = vmatprep.subr.mxu0 0.0
        %2659 = vmatpush2.msra.mxu0 %v2563
        %2660 = vmatprep.subr.mxu0 0.0
        %2661 = vmatpush2.msra.mxu0 %v2561
        %2662 = vmatprep.subr.mxu0 0.0
        %2663 = vmatpush2.msra.mxu0 %v2559
        %2664 = vmatprep.subr.mxu0 0.0
        %2665 = vmatpush2.msra.mxu0 %v2557
        %2666 = vmatprep.subr.mxu0 0.0
        %2667 = vmatpush2.msra.mxu0 %v2555
        %2668 = vmatprep.subr.mxu0 0.0
        %2669 = vmatpush2.msra.mxu0 %v2553
        %2670 = vmatprep.subr.mxu0 0.0
        %2671 = vmatpush2.msra.mxu0 %v2551
        %2672 = vmatprep.subr.mxu0 0.0
        %2673 = vmatpush2.msra.mxu0 %v2549
        %2674 = vmatprep.subr.mxu0 0.0
        %2675 = vmatpush2.msra.mxu0 %v2547
        %2676 = vmatprep.subr.mxu0 0.0
        %2677 = vmatpush2.msra.mxu0 %v2545
        %2678 = vmatprep.mubr.f32.mxu0 %v2503
        %2679 = vmatmul.mubr.f32.gmra.mxu0 %v2501
        %v2680 = vpop.f32.mrf.mxu0
        %v2681 = vadd.f32 0.0, %v2680
        %v2682 = vpop.f32.mrf.mxu0
        %2683 = vdwg.mxu0
        %2684 = vmatprep.subr.mxu0 0.0
        %2685 = vmatpush1.msra.mxu0 0.0
        %2686 = vmatprep.subr.mxu0 0.0
        %2687 = vmatpush1.msra.mxu0 0.0
        %2688 = vmatprep.subr.mxu0 0.0
        %2689 = vmatpush1.msra.mxu0 0.0
        %2690 = vmatprep.subr.mxu0 0.0
        %2691 = vmatpush1.msra.mxu0 0.0
        %2692 = vmatprep.subr.mxu0 0.0
        %2693 = vmatpush1.msra.mxu0 0.0
        %2694 = vmatprep.subr.mxu0 0.0
        %2695 = vmatpush1.msra.mxu0 0.0
        %2696 = vmatprep.subr.mxu0 0.0
        %2697 = vmatpush1.msra.mxu0 0.0
        %2698 = vmatprep.subr.mxu0 0.0
        %2699 = vmatpush1.msra.mxu0 0.0
        %2700 = vmatprep.subr.mxu0 0.0
        %2701 = vmatpush1.msra.mxu0 0.0
        %2702 = vmatprep.subr.mxu0 0.0
        %2703 = vmatpush1.msra.mxu0 0.0
        %2704 = vmatprep.subr.mxu0 0.0
        %2705 = vmatpush1.msra.mxu0 0.0
        %2706 = vmatprep.subr.mxu0 0.0
        %2707 = vmatpush1.msra.mxu0 0.0
        %2708 = vmatprep.subr.mxu0 0.0
        %2709 = vmatpush1.msra.mxu0 0.0
        %2710 = vmatprep.subr.mxu0 0.0
        %2711 = vmatpush1.msra.mxu0 0.0
        %2712 = vmatprep.subr.mxu0 0.0
        %2713 = vmatpush1.msra.mxu0 0.0
        %2714 = vmatprep.subr.mxu0 0.0
        %2715 = vmatpush1.msra.mxu0 %v2577
        %2716 = vmatprep.subr.mxu0 0.0
        %2717 = vmatpush2.msra.mxu0 0.0
        %2718 = vmatprep.subr.mxu0 0.0
        %2719 = vmatpush2.msra.mxu0 0.0
        %2720 = vmatprep.subr.mxu0 0.0
        %2721 = vmatpush2.msra.mxu0 0.0
        %2722 = vmatprep.subr.mxu0 0.0
        %2723 = vmatpush2.msra.mxu0 0.0
        %2724 = vmatprep.subr.mxu0 0.0
        %2725 = vmatpush2.msra.mxu0 0.0
        %2726 = vmatprep.subr.mxu0 0.0
        %2727 = vmatpush2.msra.mxu0 0.0
        %2728 = vmatprep.subr.mxu0 0.0
        %2729 = vmatpush2.msra.mxu0 0.0
        %2730 = vmatprep.subr.mxu0 0.0
        %2731 = vmatpush2.msra.mxu0 0.0
        %2732 = vmatprep.subr.mxu0 0.0
        %2733 = vmatpush2.msra.mxu0 0.0
        %2734 = vmatprep.subr.mxu0 0.0
        %2735 = vmatpush2.msra.mxu0 0.0
        %2736 = vmatprep.subr.mxu0 0.0
        %2737 = vmatpush2.msra.mxu0 0.0
        %2738 = vmatprep.subr.mxu0 0.0
        %2739 = vmatpush2.msra.mxu0 0.0
        %2740 = vmatprep.subr.mxu0 0.0
        %2741 = vmatpush2.msra.mxu0 0.0
        %2742 = vmatprep.subr.mxu0 0.0
        %2743 = vmatpush2.msra.mxu0 0.0
        %2744 = vmatprep.subr.mxu0 0.0
        %2745 = vmatpush2.msra.mxu0 0.0
        %2746 = vmatprep.subr.mxu0 0.0
        %2747 = vmatpush2.msra.mxu0 0.0
        %2748 = vmatprep.mubr.f32.mxu0 0.0
        %2749 = vmatmul.mubr.f32.gmra.mxu0 %v2612
        %v2750 = vpop.f32.mrf.mxu0
        %v2751 = vadd.f32 %v2681, %v2750
        %v2752 = vpop.f32.mrf.mxu0
        %2753 = vdwg.mxu0
        %v2754 = vmul.f32 %v2751, %v2511
        %2755 = vrot.lane.b32.xlu0 %v326, 112
        %v2756 = vpop.permute.xlu0 %2755
        %2757 = vrot.lane.b32.xlu0 %v323, 80
        %v2758 = vpop.permute.xlu0 %2757
        %2759 = vrot.lane.b32.xlu0 %v434, 80
        %v2760 = vpop.permute.xlu0 %2759
        %2761 = vrot.lane.b32.xlu0 %v436, 80
        %v2762 = vpop.permute.xlu0 %2761
        %2763 = vrot.lane.b32.xlu0 %v438, 80
        %v2764 = vpop.permute.xlu0 %2763
        %2765 = vrot.lane.b32.xlu0 %v440, 80
        %v2766 = vpop.permute.xlu0 %2765
        %2767 = vrot.lane.b32.xlu0 %v442, 80
        %v2768 = vpop.permute.xlu0 %2767
        %2769 = vrot.lane.b32.xlu0 %v444, 80
        %v2770 = vpop.permute.xlu0 %2769
        %2771 = vrot.lane.b32.xlu0 %v446, 80
        %v2772 = vpop.permute.xlu0 %2771
        %2773 = vrot.lane.b32.xlu0 %v448, 80
        %v2774 = vpop.permute.xlu0 %2773
        %2775 = vrot.lane.b32.xlu0 %v450, 80
        %v2776 = vpop.permute.xlu0 %2775
        %2777 = vrot.lane.b32.xlu0 %v452, 80
        %v2778 = vpop.permute.xlu0 %2777
        %2779 = vrot.lane.b32.xlu0 %v454, 80
        %v2780 = vpop.permute.xlu0 %2779
        %2781 = vrot.lane.b32.xlu0 %v456, 80
        %v2782 = vpop.permute.xlu0 %2781
        %2783 = vrot.lane.b32.xlu0 %v458, 80
        %v2784 = vpop.permute.xlu0 %2783
        %2785 = vrot.lane.b32.xlu0 %v460, 80
        %v2786 = vpop.permute.xlu0 %2785
        %2787 = vrot.lane.b32.xlu0 %v462, 80
        %v2788 = vpop.permute.xlu0 %2787
        %2789 = vrot.lane.b32.xlu0 %v464, 80
        %v2790 = vpop.permute.xlu0 %2789
        %2791 = vrot.lane.b32.xlu0 %v466, 80
        %v2792 = vpop.permute.xlu0 %2791
        %2793 = vrot.lane.b32.xlu0 %v468, 80
        %v2794 = vpop.permute.xlu0 %2793
        %2795 = vrot.lane.b32.xlu0 %v470, 80
        %v2796 = vpop.permute.xlu0 %2795
        %2797 = vrot.lane.b32.xlu0 %v472, 80
        %v2798 = vpop.permute.xlu0 %2797
        %2799 = vrot.lane.b32.xlu0 %v474, 80
        %v2800 = vpop.permute.xlu0 %2799
        %2801 = vrot.lane.b32.xlu0 %v476, 80
        %v2802 = vpop.permute.xlu0 %2801
        %2803 = vrot.lane.b32.xlu0 %v478, 80
        %v2804 = vpop.permute.xlu0 %2803
        %2805 = vrot.lane.b32.xlu0 %v480, 80
        %v2806 = vpop.permute.xlu0 %2805
        %2807 = vrot.lane.b32.xlu0 %v482, 80
        %v2808 = vpop.permute.xlu0 %2807
        %2809 = vrot.lane.b32.xlu0 %v484, 80
        %v2810 = vpop.permute.xlu0 %2809
        %2811 = vrot.lane.b32.xlu0 %v486, 80
        %v2812 = vpop.permute.xlu0 %2811
        %2813 = vrot.lane.b32.xlu0 %v488, 80
        %v2814 = vpop.permute.xlu0 %2813
        %2815 = vrot.lane.b32.xlu0 %v490, 80
        %v2816 = vpop.permute.xlu0 %2815
        %2817 = vrot.lane.b32.xlu0 %v492, 80
        %v2818 = vpop.permute.xlu0 %2817
        %2819 = vrot.lane.b32.xlu0 %v494, 80
        %v2820 = vpop.permute.xlu0 %2819
        %2821 = vrot.lane.b32.xlu0 %v496, 80
        %v2822 = vpop.permute.xlu0 %2821
        %v2823 = vsel %vm660, %v2756, 0
        %v2825 = vsel %vm660, %v2758, 0
        %v2827 = vsel %vm660, %v2760, 0
        %v2829 = vsel %vm660, %v2762, 0
        %v2831 = vsel %vm660, %v2764, 0
        %v2833 = vsel %vm660, %v2766, 0
        %v2835 = vsel %vm660, %v2768, 0
        %v2837 = vsel %vm660, %v2770, 0
        %v2839 = vsel %vm660, %v2772, 0
        %v2841 = vsel %vm660, %v2774, 0
        %v2843 = vsel %vm660, %v2776, 0
        %v2845 = vsel %vm660, %v2778, 0
        %v2847 = vsel %vm660, %v2780, 0
        %v2849 = vsel %vm660, %v2782, 0
        %v2851 = vsel %vm660, %v2784, 0
        %v2853 = vsel %vm660, %v2786, 0
        %v2855 = vsel %vm660, %v2788, 0
        %v2857 = vsel %vm660, %v2790, 0
        %v2859 = vsel %vm660, %v2792, 0
        %v2861 = vsel %vm660, %v2794, 0
        %v2863 = vsel %vm660, %v2796, 0
        %v2865 = vsel %vm660, %v2798, 0
        %v2867 = vsel %vm660, %v2800, 0
        %v2869 = vsel %vm660, %v2802, 0
        %v2871 = vsel %vm660, %v2804, 0
        %v2873 = vsel %vm660, %v2806, 0
        %v2875 = vsel %vm660, %v2808, 0
        %v2877 = vsel %vm660, %v2810, 0
        %v2879 = vsel %vm660, %v2812, 0
        %v2881 = vsel %vm660, %v2814, 0
        %v2883 = vsel %vm660, %v2816, 0
        %v2885 = vsel %vm660, %v2818, 0
        %v2887 = vsel %vm660, %v2820, 0
        %v2889 = vsel %vm660, %v2822, 0
        %2891 = vmatprep.subr.mxu0 0.0
        %2892 = vmatpush1.xpose.msra.mxu0 %v2855
        %2893 = vmatprep.subr.mxu0 0.0
        %2894 = vmatpush1.xpose.msra.mxu0 %v2853
        %2895 = vmatprep.subr.mxu0 0.0
        %2896 = vmatpush1.xpose.msra.mxu0 %v2851
        %2897 = vmatprep.subr.mxu0 0.0
        %2898 = vmatpush1.xpose.msra.mxu0 %v2849
        %2899 = vmatprep.subr.mxu0 0.0
        %2900 = vmatpush1.xpose.msra.mxu0 %v2847
        %2901 = vmatprep.subr.mxu0 0.0
        %2902 = vmatpush1.xpose.msra.mxu0 %v2845
        %2903 = vmatprep.subr.mxu0 0.0
        %2904 = vmatpush1.xpose.msra.mxu0 %v2843
        %2905 = vmatprep.subr.mxu0 0.0
        %2906 = vmatpush1.xpose.msra.mxu0 %v2841
        %2907 = vmatprep.subr.mxu0 0.0
        %2908 = vmatpush1.xpose.msra.mxu0 %v2839
        %2909 = vmatprep.subr.mxu0 0.0
        %2910 = vmatpush1.xpose.msra.mxu0 %v2837
        %2911 = vmatprep.subr.mxu0 0.0
        %2912 = vmatpush1.xpose.msra.mxu0 %v2835
        %2913 = vmatprep.subr.mxu0 0.0
        %2914 = vmatpush1.xpose.msra.mxu0 %v2833
        %2915 = vmatprep.subr.mxu0 0.0
        %2916 = vmatpush1.xpose.msra.mxu0 %v2831
        %2917 = vmatprep.subr.mxu0 0.0
        %2918 = vmatpush1.xpose.msra.mxu0 %v2829
        %2919 = vmatprep.subr.mxu0 0.0
        %2920 = vmatpush1.xpose.msra.mxu0 %v2827
        %2921 = vmatprep.subr.mxu0 0.0
        %2922 = vmatpush1.xpose.msra.mxu0 %v2825
        %2923 = vmatprep.subr.mxu0 0.0
        %2924 = vmatpush2.xpose.msra.mxu0 %v2887
        %2925 = vmatprep.subr.mxu0 0.0
        %2926 = vmatpush2.xpose.msra.mxu0 %v2885
        %2927 = vmatprep.subr.mxu0 0.0
        %2928 = vmatpush2.xpose.msra.mxu0 %v2883
        %2929 = vmatprep.subr.mxu0 0.0
        %2930 = vmatpush2.xpose.msra.mxu0 %v2881
        %2931 = vmatprep.subr.mxu0 0.0
        %2932 = vmatpush2.xpose.msra.mxu0 %v2879
        %2933 = vmatprep.subr.mxu0 0.0
        %2934 = vmatpush2.xpose.msra.mxu0 %v2877
        %2935 = vmatprep.subr.mxu0 0.0
        %2936 = vmatpush2.xpose.msra.mxu0 %v2875
        %2937 = vmatprep.subr.mxu0 0.0
        %2938 = vmatpush2.xpose.msra.mxu0 %v2873
        %2939 = vmatprep.subr.mxu0 0.0
        %2940 = vmatpush2.xpose.msra.mxu0 %v2871
        %2941 = vmatprep.subr.mxu0 0.0
        %2942 = vmatpush2.xpose.msra.mxu0 %v2869
        %2943 = vmatprep.subr.mxu0 0.0
        %2944 = vmatpush2.xpose.msra.mxu0 %v2867
        %2945 = vmatprep.subr.mxu0 0.0
        %2946 = vmatpush2.xpose.msra.mxu0 %v2865
        %2947 = vmatprep.subr.mxu0 0.0
        %2948 = vmatpush2.xpose.msra.mxu0 %v2863
        %2949 = vmatprep.subr.mxu0 0.0
        %2950 = vmatpush2.xpose.msra.mxu0 %v2861
        %2951 = vmatprep.subr.mxu0 0.0
        %2952 = vmatpush2.xpose.msra.mxu0 %v2859
        %2953 = vmatprep.subr.mxu0 0.0
        %2954 = vmatpush2.xpose.msra.mxu0 %v2857
        %2955 = vmatprep.mubr.f32.mxu0 0.0
        %2956 = vmatmul.mubr.f32.gmra.mxu0 %v2823
        %v2957 = vpop.f32.mrf.mxu0
        %v2958 = vadd.f32 %v398, %v2957
        %v2959 = vpop.f32.mrf.mxu0
        %v2960 = vadd.f32 %v399, %v2959
        %2961 = vdwg.mxu0
        %2962 = vmatprep.subr.mxu0 0.0
        %2963 = vmatpush1.xpose.msra.mxu0 0.0
        %2964 = vmatprep.subr.mxu0 0.0
        %2965 = vmatpush1.xpose.msra.mxu0 0.0
        %2966 = vmatprep.subr.mxu0 0.0
        %2967 = vmatpush1.xpose.msra.mxu0 0.0
        %2968 = vmatprep.subr.mxu0 0.0
        %2969 = vmatpush1.xpose.msra.mxu0 0.0
        %2970 = vmatprep.subr.mxu0 0.0
        %2971 = vmatpush1.xpose.msra.mxu0 0.0
        %2972 = vmatprep.subr.mxu0 0.0
        %2973 = vmatpush1.xpose.msra.mxu0 0.0
        %2974 = vmatprep.subr.mxu0 0.0
        %2975 = vmatpush1.xpose.msra.mxu0 0.0
        %2976 = vmatprep.subr.mxu0 0.0
        %2977 = vmatpush1.xpose.msra.mxu0 0.0
        %2978 = vmatprep.subr.mxu0 0.0
        %2979 = vmatpush1.xpose.msra.mxu0 0.0
        %2980 = vmatprep.subr.mxu0 0.0
        %2981 = vmatpush1.xpose.msra.mxu0 0.0
        %2982 = vmatprep.subr.mxu0 0.0
        %2983 = vmatpush1.xpose.msra.mxu0 0.0
        %2984 = vmatprep.subr.mxu0 0.0
        %2985 = vmatpush1.xpose.msra.mxu0 0.0
        %2986 = vmatprep.subr.mxu0 0.0
        %2987 = vmatpush1.xpose.msra.mxu0 0.0
        %2988 = vmatprep.subr.mxu0 0.0
        %2989 = vmatpush1.xpose.msra.mxu0 0.0
        %2990 = vmatprep.subr.mxu0 0.0
        %2991 = vmatpush1.xpose.msra.mxu0 0.0
        %2992 = vmatprep.subr.mxu0 0.0
        %2993 = vmatpush1.xpose.msra.mxu0 %v2889
        %2994 = vmatprep.subr.mxu0 0.0
        %2995 = vmatpush2.xpose.msra.mxu0 0.0
        %2996 = vmatprep.subr.mxu0 0.0
        %2997 = vmatpush2.xpose.msra.mxu0 0.0
        %2998 = vmatprep.subr.mxu0 0.0
        %2999 = vmatpush2.xpose.msra.mxu0 0.0
        %3000 = vmatprep.subr.mxu0 0.0
        %3001 = vmatpush2.xpose.msra.mxu0 0.0
        %3002 = vmatprep.subr.mxu0 0.0
        %3003 = vmatpush2.xpose.msra.mxu0 0.0
        %3004 = vmatprep.subr.mxu0 0.0
        %3005 = vmatpush2.xpose.msra.mxu0 0.0
        %3006 = vmatprep.subr.mxu0 0.0
        %3007 = vmatpush2.xpose.msra.mxu0 0.0
        %3008 = vmatprep.subr.mxu0 0.0
        %3009 = vmatpush2.xpose.msra.mxu0 0.0
        %3010 = vmatprep.subr.mxu0 0.0
        %3011 = vmatpush2.xpose.msra.mxu0 0.0
        %3012 = vmatprep.subr.mxu0 0.0
        %3013 = vmatpush2.xpose.msra.mxu0 0.0
        %3014 = vmatprep.subr.mxu0 0.0
        %3015 = vmatpush2.xpose.msra.mxu0 0.0
        %3016 = vmatprep.subr.mxu0 0.0
        %3017 = vmatpush2.xpose.msra.mxu0 0.0
        %3018 = vmatprep.subr.mxu0 0.0
        %3019 = vmatpush2.xpose.msra.mxu0 0.0
        %3020 = vmatprep.subr.mxu0 0.0
        %3021 = vmatpush2.xpose.msra.mxu0 0.0
        %3022 = vmatprep.subr.mxu0 0.0
        %3023 = vmatpush2.xpose.msra.mxu0 0.0
        %3024 = vmatprep.subr.mxu0 0.0
        %3025 = vmatpush2.xpose.msra.mxu0 0.0
        %3026 = vmatprep.mubr.f32.mxu0 0.0
        %3027 = vmatmul.mubr.f32.gmra.mxu0 %v2823
        %v3028 = vpop.f32.mrf.mxu0
        %v3029 = vadd.f32 %v400, %v3028
        %v3030 = vpop.f32.mrf.mxu0
        %3031 = vdwg.mxu0
        %v3032 = vsel %vm871, %v3029, -inf
        %v3033 = vmax.f32 %v2958, %v2960
        %v3034 = vmax.f32 %v3033, %v3032
        %3035 = vmax.xlane.f32.xlu0 %v3034
        %v3036 = vpop.xlane.xlu0 %3035
        %v3037 = vsub.f32 %v2958, %v3036
        %v3038 = vsub.f32 %v2960, %v3036
        %v3039 = vsub.f32 %v3029, %v3036
        %v3040 = vmul.f32 %v3037, 1.442695
        %v3041 = vpow.pop %v3040
        %v3042 = vmul.f32 %v3038, 1.442695
        %v3043 = vpow.pop %v3042
        %v3044 = vmul.f32 %v3039, 1.442695
        %v3045 = vpow.pop %v3044
        %v3046 = vadd.f32 %v3041, %v3043
        %v3047 = vsel %vm871, %v3045, 0.0
        %v3048 = vadd.f32 %v3046, %v3047
        %3049 = vadd.xlane.f32.xlu0 %v3048
        %v3050 = vpop.xlane.xlu0 %3049
        %v3051 = vrcp.pop %v3050
        %3052 = vrot.lane.b32.xlu0 %v323, 48
        %v3053 = vpop.permute.xlu0 %3052
        %3054 = vrot.lane.b32.xlu0 %v530, 48
        %v3055 = vpop.permute.xlu0 %3054
        %3056 = vrot.lane.b32.xlu0 %v532, 48
        %v3057 = vpop.permute.xlu0 %3056
        %3058 = vrot.lane.b32.xlu0 %v534, 48
        %v3059 = vpop.permute.xlu0 %3058
        %3060 = vrot.lane.b32.xlu0 %v536, 48
        %v3061 = vpop.permute.xlu0 %3060
        %3062 = vrot.lane.b32.xlu0 %v538, 48
        %v3063 = vpop.permute.xlu0 %3062
        %3064 = vrot.lane.b32.xlu0 %v540, 48
        %v3065 = vpop.permute.xlu0 %3064
        %3066 = vrot.lane.b32.xlu0 %v542, 48
        %v3067 = vpop.permute.xlu0 %3066
        %3068 = vrot.lane.b32.xlu0 %v544, 48
        %v3069 = vpop.permute.xlu0 %3068
        %3070 = vrot.lane.b32.xlu0 %v546, 48
        %v3071 = vpop.permute.xlu0 %3070
        %3072 = vrot.lane.b32.xlu0 %v548, 48
        %v3073 = vpop.permute.xlu0 %3072
        %3074 = vrot.lane.b32.xlu0 %v550, 48
        %v3075 = vpop.permute.xlu0 %3074
        %3076 = vrot.lane.b32.xlu0 %v552, 48
        %v3077 = vpop.permute.xlu0 %3076
        %3078 = vrot.lane.b32.xlu0 %v554, 48
        %v3079 = vpop.permute.xlu0 %3078
        %3080 = vrot.lane.b32.xlu0 %v556, 48
        %v3081 = vpop.permute.xlu0 %3080
        %3082 = vrot.lane.b32.xlu0 %v558, 48
        %v3083 = vpop.permute.xlu0 %3082
        %3084 = vrot.lane.b32.xlu0 %v560, 48
        %v3085 = vpop.permute.xlu0 %3084
        %3086 = vrot.lane.b32.xlu0 %v562, 48
        %v3087 = vpop.permute.xlu0 %3086
        %3088 = vrot.lane.b32.xlu0 %v564, 48
        %v3089 = vpop.permute.xlu0 %3088
        %3090 = vrot.lane.b32.xlu0 %v566, 48
        %v3091 = vpop.permute.xlu0 %3090
        %3092 = vrot.lane.b32.xlu0 %v568, 48
        %v3093 = vpop.permute.xlu0 %3092
        %3094 = vrot.lane.b32.xlu0 %v570, 48
        %v3095 = vpop.permute.xlu0 %3094
        %3096 = vrot.lane.b32.xlu0 %v572, 48
        %v3097 = vpop.permute.xlu0 %3096
        %3098 = vrot.lane.b32.xlu0 %v574, 48
        %v3099 = vpop.permute.xlu0 %3098
        %3100 = vrot.lane.b32.xlu0 %v576, 48
        %v3101 = vpop.permute.xlu0 %3100
        %3102 = vrot.lane.b32.xlu0 %v578, 48
        %v3103 = vpop.permute.xlu0 %3102
        %3104 = vrot.lane.b32.xlu0 %v580, 48
        %v3105 = vpop.permute.xlu0 %3104
        %3106 = vrot.lane.b32.xlu0 %v582, 48
        %v3107 = vpop.permute.xlu0 %3106
        %3108 = vrot.lane.b32.xlu0 %v584, 48
        %v3109 = vpop.permute.xlu0 %3108
        %3110 = vrot.lane.b32.xlu0 %v586, 48
        %v3111 = vpop.permute.xlu0 %3110
        %3112 = vrot.lane.b32.xlu0 %v588, 48
        %v3113 = vpop.permute.xlu0 %3112
        %3114 = vrot.lane.b32.xlu0 %v590, 48
        %v3115 = vpop.permute.xlu0 %3114
        %3116 = vrot.lane.b32.xlu0 %v592, 48
        %v3117 = vpop.permute.xlu0 %3116
        %v3152 = vsel %vm871, %v3045, 0
        %3154 = vmatprep.subr.mxu0 0.0
        %3155 = vmatpush1.msra.mxu0 %v3083
        %3156 = vmatprep.subr.mxu0 0.0
        %3157 = vmatpush1.msra.mxu0 %v3081
        %3158 = vmatprep.subr.mxu0 0.0
        %3159 = vmatpush1.msra.mxu0 %v3079
        %3160 = vmatprep.subr.mxu0 0.0
        %3161 = vmatpush1.msra.mxu0 %v3077
        %3162 = vmatprep.subr.mxu0 0.0
        %3163 = vmatpush1.msra.mxu0 %v3075
        %3164 = vmatprep.subr.mxu0 0.0
        %3165 = vmatpush1.msra.mxu0 %v3073
        %3166 = vmatprep.subr.mxu0 0.0
        %3167 = vmatpush1.msra.mxu0 %v3071
        %3168 = vmatprep.subr.mxu0 0.0
        %3169 = vmatpush1.msra.mxu0 %v3069
        %3170 = vmatprep.subr.mxu0 0.0
        %3171 = vmatpush1.msra.mxu0 %v3067
        %3172 = vmatprep.subr.mxu0 0.0
        %3173 = vmatpush1.msra.mxu0 %v3065
        %3174 = vmatprep.subr.mxu0 0.0
        %3175 = vmatpush1.msra.mxu0 %v3063
        %3176 = vmatprep.subr.mxu0 0.0
        %3177 = vmatpush1.msra.mxu0 %v3061
        %3178 = vmatprep.subr.mxu0 0.0
        %3179 = vmatpush1.msra.mxu0 %v3059
        %3180 = vmatprep.subr.mxu0 0.0
        %3181 = vmatpush1.msra.mxu0 %v3057
        %3182 = vmatprep.subr.mxu0 0.0
        %3183 = vmatpush1.msra.mxu0 %v3055
        %3184 = vmatprep.subr.mxu0 0.0
        %3185 = vmatpush1.msra.mxu0 %v3053
        %3186 = vmatprep.subr.mxu0 0.0
        %3187 = vmatpush2.msra.mxu0 %v3115
        %3188 = vmatprep.subr.mxu0 0.0
        %3189 = vmatpush2.msra.mxu0 %v3113
        %3190 = vmatprep.subr.mxu0 0.0
        %3191 = vmatpush2.msra.mxu0 %v3111
        %3192 = vmatprep.subr.mxu0 0.0
        %3193 = vmatpush2.msra.mxu0 %v3109
        %3194 = vmatprep.subr.mxu0 0.0
        %3195 = vmatpush2.msra.mxu0 %v3107
        %3196 = vmatprep.subr.mxu0 0.0
        %3197 = vmatpush2.msra.mxu0 %v3105
        %3198 = vmatprep.subr.mxu0 0.0
        %3199 = vmatpush2.msra.mxu0 %v3103
        %3200 = vmatprep.subr.mxu0 0.0
        %3201 = vmatpush2.msra.mxu0 %v3101
        %3202 = vmatprep.subr.mxu0 0.0
        %3203 = vmatpush2.msra.mxu0 %v3099
        %3204 = vmatprep.subr.mxu0 0.0
        %3205 = vmatpush2.msra.mxu0 %v3097
        %3206 = vmatprep.subr.mxu0 0.0
        %3207 = vmatpush2.msra.mxu0 %v3095
        %3208 = vmatprep.subr.mxu0 0.0
        %3209 = vmatpush2.msra.mxu0 %v3093
        %3210 = vmatprep.subr.mxu0 0.0
        %3211 = vmatpush2.msra.mxu0 %v3091
        %3212 = vmatprep.subr.mxu0 0.0
        %3213 = vmatpush2.msra.mxu0 %v3089
        %3214 = vmatprep.subr.mxu0 0.0
        %3215 = vmatpush2.msra.mxu0 %v3087
        %3216 = vmatprep.subr.mxu0 0.0
        %3217 = vmatpush2.msra.mxu0 %v3085
        %3218 = vmatprep.mubr.f32.mxu0 %v3043
        %3219 = vmatmul.mubr.f32.gmra.mxu0 %v3041
        %v3220 = vpop.f32.mrf.mxu0
        %v3221 = vadd.f32 0.0, %v3220
        %v3222 = vpop.f32.mrf.mxu0
        %3223 = vdwg.mxu0
        %3224 = vmatprep.subr.mxu0 0.0
        %3225 = vmatpush1.msra.mxu0 0.0
        %3226 = vmatprep.subr.mxu0 0.0
        %3227 = vmatpush1.msra.mxu0 0.0
        %3228 = vmatprep.subr.mxu0 0.0
        %3229 = vmatpush1.msra.mxu0 0.0
        %3230 = vmatprep.subr.mxu0 0.0
        %3231 = vmatpush1.msra.mxu0 0.0
        %3232 = vmatprep.subr.mxu0 0.0
        %3233 = vmatpush1.msra.mxu0 0.0
        %3234 = vmatprep.subr.mxu0 0.0
        %3235 = vmatpush1.msra.mxu0 0.0
        %3236 = vmatprep.subr.mxu0 0.0
        %3237 = vmatpush1.msra.mxu0 0.0
        %3238 = vmatprep.subr.mxu0 0.0
        %3239 = vmatpush1.msra.mxu0 0.0
        %3240 = vmatprep.subr.mxu0 0.0
        %3241 = vmatpush1.msra.mxu0 0.0
        %3242 = vmatprep.subr.mxu0 0.0
        %3243 = vmatpush1.msra.mxu0 0.0
        %3244 = vmatprep.subr.mxu0 0.0
        %3245 = vmatpush1.msra.mxu0 0.0
        %3246 = vmatprep.subr.mxu0 0.0
        %3247 = vmatpush1.msra.mxu0 0.0
        %3248 = vmatprep.subr.mxu0 0.0
        %3249 = vmatpush1.msra.mxu0 0.0
        %3250 = vmatprep.subr.mxu0 0.0
        %3251 = vmatpush1.msra.mxu0 0.0
        %3252 = vmatprep.subr.mxu0 0.0
        %3253 = vmatpush1.msra.mxu0 0.0
        %3254 = vmatprep.subr.mxu0 0.0
        %3255 = vmatpush1.msra.mxu0 %v3117
        %3256 = vmatprep.subr.mxu0 0.0
        %3257 = vmatpush2.msra.mxu0 0.0
        %3258 = vmatprep.subr.mxu0 0.0
        %3259 = vmatpush2.msra.mxu0 0.0
        %3260 = vmatprep.subr.mxu0 0.0
        %3261 = vmatpush2.msra.mxu0 0.0
        %3262 = vmatprep.subr.mxu0 0.0
        %3263 = vmatpush2.msra.mxu0 0.0
        %3264 = vmatprep.subr.mxu0 0.0
        %3265 = vmatpush2.msra.mxu0 0.0
        %3266 = vmatprep.subr.mxu0 0.0
        %3267 = vmatpush2.msra.mxu0 0.0
        %3268 = vmatprep.subr.mxu0 0.0
        %3269 = vmatpush2.msra.mxu0 0.0
        %3270 = vmatprep.subr.mxu0 0.0
        %3271 = vmatpush2.msra.mxu0 0.0
        %3272 = vmatprep.subr.mxu0 0.0
        %3273 = vmatpush2.msra.mxu0 0.0
        %3274 = vmatprep.subr.mxu0 0.0
        %3275 = vmatpush2.msra.mxu0 0.0
        %3276 = vmatprep.subr.mxu0 0.0
        %3277 = vmatpush2.msra.mxu0 0.0
        %3278 = vmatprep.subr.mxu0 0.0
        %3279 = vmatpush2.msra.mxu0 0.0
        %3280 = vmatprep.subr.mxu0 0.0
        %3281 = vmatpush2.msra.mxu0 0.0
        %3282 = vmatprep.subr.mxu0 0.0
        %3283 = vmatpush2.msra.mxu0 0.0
        %3284 = vmatprep.subr.mxu0 0.0
        %3285 = vmatpush2.msra.mxu0 0.0
        %3286 = vmatprep.subr.mxu0 0.0
        %3287 = vmatpush2.msra.mxu0 0.0
        %3288 = vmatprep.mubr.f32.mxu0 0.0
        %3289 = vmatmul.mubr.f32.gmra.mxu0 %v3152
        %v3290 = vpop.f32.mrf.mxu0
        %v3291 = vadd.f32 %v3221, %v3290
        %v3292 = vpop.f32.mrf.mxu0
        %3293 = vdwg.mxu0
        %v3294 = vmul.f32 %v3291, %v3051
        %3295 = vrot.lane.b32.xlu0 %v326, 108
        %v3296 = vpop.permute.xlu0 %3295
        %3297 = vrot.lane.b32.xlu0 %v323, 76
        %v3298 = vpop.permute.xlu0 %3297
        %3299 = vrot.lane.b32.xlu0 %v434, 76
        %v3300 = vpop.permute.xlu0 %3299
        %3301 = vrot.lane.b32.xlu0 %v436, 76
        %v3302 = vpop.permute.xlu0 %3301
        %3303 = vrot.lane.b32.xlu0 %v438, 76
        %v3304 = vpop.permute.xlu0 %3303
        %3305 = vrot.lane.b32.xlu0 %v440, 76
        %v3306 = vpop.permute.xlu0 %3305
        %3307 = vrot.lane.b32.xlu0 %v442, 76
        %v3308 = vpop.permute.xlu0 %3307
        %3309 = vrot.lane.b32.xlu0 %v444, 76
        %v3310 = vpop.permute.xlu0 %3309
        %3311 = vrot.lane.b32.xlu0 %v446, 76
        %v3312 = vpop.permute.xlu0 %3311
        %3313 = vrot.lane.b32.xlu0 %v448, 76
        %v3314 = vpop.permute.xlu0 %3313
        %3315 = vrot.lane.b32.xlu0 %v450, 76
        %v3316 = vpop.permute.xlu0 %3315
        %3317 = vrot.lane.b32.xlu0 %v452, 76
        %v3318 = vpop.permute.xlu0 %3317
        %3319 = vrot.lane.b32.xlu0 %v454, 76
        %v3320 = vpop.permute.xlu0 %3319
        %3321 = vrot.lane.b32.xlu0 %v456, 76
        %v3322 = vpop.permute.xlu0 %3321
        %3323 = vrot.lane.b32.xlu0 %v458, 76
        %v3324 = vpop.permute.xlu0 %3323
        %3325 = vrot.lane.b32.xlu0 %v460, 76
        %v3326 = vpop.permute.xlu0 %3325
        %3327 = vrot.lane.b32.xlu0 %v462, 76
        %v3328 = vpop.permute.xlu0 %3327
        %3329 = vrot.lane.b32.xlu0 %v464, 76
        %v3330 = vpop.permute.xlu0 %3329
        %3331 = vrot.lane.b32.xlu0 %v466, 76
        %v3332 = vpop.permute.xlu0 %3331
        %3333 = vrot.lane.b32.xlu0 %v468, 76
        %v3334 = vpop.permute.xlu0 %3333
        %3335 = vrot.lane.b32.xlu0 %v470, 76
        %v3336 = vpop.permute.xlu0 %3335
        %3337 = vrot.lane.b32.xlu0 %v472, 76
        %v3338 = vpop.permute.xlu0 %3337
        %3339 = vrot.lane.b32.xlu0 %v474, 76
        %v3340 = vpop.permute.xlu0 %3339
        %3341 = vrot.lane.b32.xlu0 %v476, 76
        %v3342 = vpop.permute.xlu0 %3341
        %3343 = vrot.lane.b32.xlu0 %v478, 76
        %v3344 = vpop.permute.xlu0 %3343
        %3345 = vrot.lane.b32.xlu0 %v480, 76
        %v3346 = vpop.permute.xlu0 %3345
        %3347 = vrot.lane.b32.xlu0 %v482, 76
        %v3348 = vpop.permute.xlu0 %3347
        %3349 = vrot.lane.b32.xlu0 %v484, 76
        %v3350 = vpop.permute.xlu0 %3349
        %3351 = vrot.lane.b32.xlu0 %v486, 76
        %v3352 = vpop.permute.xlu0 %3351
        %3353 = vrot.lane.b32.xlu0 %v488, 76
        %v3354 = vpop.permute.xlu0 %3353
        %3355 = vrot.lane.b32.xlu0 %v490, 76
        %v3356 = vpop.permute.xlu0 %3355
        %3357 = vrot.lane.b32.xlu0 %v492, 76
        %v3358 = vpop.permute.xlu0 %3357
        %3359 = vrot.lane.b32.xlu0 %v494, 76
        %v3360 = vpop.permute.xlu0 %3359
        %3361 = vrot.lane.b32.xlu0 %v496, 76
        %v3362 = vpop.permute.xlu0 %3361
        %v3363 = vsel %vm660, %v3296, 0
        %v3365 = vsel %vm660, %v3298, 0
        %v3367 = vsel %vm660, %v3300, 0
        %v3369 = vsel %vm660, %v3302, 0
        %v3371 = vsel %vm660, %v3304, 0
        %v3373 = vsel %vm660, %v3306, 0
        %v3375 = vsel %vm660, %v3308, 0
        %v3377 = vsel %vm660, %v3310, 0
        %v3379 = vsel %vm660, %v3312, 0
        %v3381 = vsel %vm660, %v3314, 0
        %v3383 = vsel %vm660, %v3316, 0
        %v3385 = vsel %vm660, %v3318, 0
        %v3387 = vsel %vm660, %v3320, 0
        %v3389 = vsel %vm660, %v3322, 0
        %v3391 = vsel %vm660, %v3324, 0
        %v3393 = vsel %vm660, %v3326, 0
        %v3395 = vsel %vm660, %v3328, 0
        %v3397 = vsel %vm660, %v3330, 0
        %v3399 = vsel %vm660, %v3332, 0
        %v3401 = vsel %vm660, %v3334, 0
        %v3403 = vsel %vm660, %v3336, 0
        %v3405 = vsel %vm660, %v3338, 0
        %v3407 = vsel %vm660, %v3340, 0
        %v3409 = vsel %vm660, %v3342, 0
        %v3411 = vsel %vm660, %v3344, 0
        %v3413 = vsel %vm660, %v3346, 0
        %v3415 = vsel %vm660, %v3348, 0
        %v3417 = vsel %vm660, %v3350, 0
        %v3419 = vsel %vm660, %v3352, 0
        %v3421 = vsel %vm660, %v3354, 0
        %v3423 = vsel %vm660, %v3356, 0
        %v3425 = vsel %vm660, %v3358, 0
        %v3427 = vsel %vm660, %v3360, 0
        %v3429 = vsel %vm660, %v3362, 0
        %3431 = vmatprep.subr.mxu0 0.0
        %3432 = vmatpush1.xpose.msra.mxu0 %v3395
        %3433 = vmatprep.subr.mxu0 0.0
        %3434 = vmatpush1.xpose.msra.mxu0 %v3393
        %3435 = vmatprep.subr.mxu0 0.0
        %3436 = vmatpush1.xpose.msra.mxu0 %v3391
        %3437 = vmatprep.subr.mxu0 0.0
        %3438 = vmatpush1.xpose.msra.mxu0 %v3389
        %3439 = vmatprep.subr.mxu0 0.0
        %3440 = vmatpush1.xpose.msra.mxu0 %v3387
        %3441 = vmatprep.subr.mxu0 0.0
        %3442 = vmatpush1.xpose.msra.mxu0 %v3385
        %3443 = vmatprep.subr.mxu0 0.0
        %3444 = vmatpush1.xpose.msra.mxu0 %v3383
        %3445 = vmatprep.subr.mxu0 0.0
        %3446 = vmatpush1.xpose.msra.mxu0 %v3381
        %3447 = vmatprep.subr.mxu0 0.0
        %3448 = vmatpush1.xpose.msra.mxu0 %v3379
        %3449 = vmatprep.subr.mxu0 0.0
        %3450 = vmatpush1.xpose.msra.mxu0 %v3377
        %3451 = vmatprep.subr.mxu0 0.0
        %3452 = vmatpush1.xpose.msra.mxu0 %v3375
        %3453 = vmatprep.subr.mxu0 0.0
        %3454 = vmatpush1.xpose.msra.mxu0 %v3373
        %3455 = vmatprep.subr.mxu0 0.0
        %3456 = vmatpush1.xpose.msra.mxu0 %v3371
        %3457 = vmatprep.subr.mxu0 0.0
        %3458 = vmatpush1.xpose.msra.mxu0 %v3369
        %3459 = vmatprep.subr.mxu0 0.0
        %3460 = vmatpush1.xpose.msra.mxu0 %v3367
        %3461 = vmatprep.subr.mxu0 0.0
        %3462 = vmatpush1.xpose.msra.mxu0 %v3365
        %3463 = vmatprep.subr.mxu0 0.0
        %3464 = vmatpush2.xpose.msra.mxu0 %v3427
        %3465 = vmatprep.subr.mxu0 0.0
        %3466 = vmatpush2.xpose.msra.mxu0 %v3425
        %3467 = vmatprep.subr.mxu0 0.0
        %3468 = vmatpush2.xpose.msra.mxu0 %v3423
        %3469 = vmatprep.subr.mxu0 0.0
        %3470 = vmatpush2.xpose.msra.mxu0 %v3421
        %3471 = vmatprep.subr.mxu0 0.0
        %3472 = vmatpush2.xpose.msra.mxu0 %v3419
        %3473 = vmatprep.subr.mxu0 0.0
        %3474 = vmatpush2.xpose.msra.mxu0 %v3417
        %3475 = vmatprep.subr.mxu0 0.0
        %3476 = vmatpush2.xpose.msra.mxu0 %v3415
        %3477 = vmatprep.subr.mxu0 0.0
        %3478 = vmatpush2.xpose.msra.mxu0 %v3413
        %3479 = vmatprep.subr.mxu0 0.0
        %3480 = vmatpush2.xpose.msra.mxu0 %v3411
        %3481 = vmatprep.subr.mxu0 0.0
        %3482 = vmatpush2.xpose.msra.mxu0 %v3409
        %3483 = vmatprep.subr.mxu0 0.0
        %3484 = vmatpush2.xpose.msra.mxu0 %v3407
        %3485 = vmatprep.subr.mxu0 0.0
        %3486 = vmatpush2.xpose.msra.mxu0 %v3405
        %3487 = vmatprep.subr.mxu0 0.0
        %3488 = vmatpush2.xpose.msra.mxu0 %v3403
        %3489 = vmatprep.subr.mxu0 0.0
        %3490 = vmatpush2.xpose.msra.mxu0 %v3401
        %3491 = vmatprep.subr.mxu0 0.0
        %3492 = vmatpush2.xpose.msra.mxu0 %v3399
        %3493 = vmatprep.subr.mxu0 0.0
        %3494 = vmatpush2.xpose.msra.mxu0 %v3397
        %3495 = vmatprep.mubr.f32.mxu0 0.0
        %3496 = vmatmul.mubr.f32.gmra.mxu0 %v3363
        %v3497 = vpop.f32.mrf.mxu0
        %v3498 = vadd.f32 %v398, %v3497
        %v3499 = vpop.f32.mrf.mxu0
        %v3500 = vadd.f32 %v399, %v3499
        %3501 = vdwg.mxu0
        %3502 = vmatprep.subr.mxu0 0.0
        %3503 = vmatpush1.xpose.msra.mxu0 0.0
        %3504 = vmatprep.subr.mxu0 0.0
        %3505 = vmatpush1.xpose.msra.mxu0 0.0
        %3506 = vmatprep.subr.mxu0 0.0
        %3507 = vmatpush1.xpose.msra.mxu0 0.0
        %3508 = vmatprep.subr.mxu0 0.0
        %3509 = vmatpush1.xpose.msra.mxu0 0.0
        %3510 = vmatprep.subr.mxu0 0.0
        %3511 = vmatpush1.xpose.msra.mxu0 0.0
        %3512 = vmatprep.subr.mxu0 0.0
        %3513 = vmatpush1.xpose.msra.mxu0 0.0
        %3514 = vmatprep.subr.mxu0 0.0
        %3515 = vmatpush1.xpose.msra.mxu0 0.0
        %3516 = vmatprep.subr.mxu0 0.0
        %3517 = vmatpush1.xpose.msra.mxu0 0.0
        %3518 = vmatprep.subr.mxu0 0.0
        %3519 = vmatpush1.xpose.msra.mxu0 0.0
        %3520 = vmatprep.subr.mxu0 0.0
        %3521 = vmatpush1.xpose.msra.mxu0 0.0
        %3522 = vmatprep.subr.mxu0 0.0
        %3523 = vmatpush1.xpose.msra.mxu0 0.0
        %3524 = vmatprep.subr.mxu0 0.0
        %3525 = vmatpush1.xpose.msra.mxu0 0.0
        %3526 = vmatprep.subr.mxu0 0.0
        %3527 = vmatpush1.xpose.msra.mxu0 0.0
        %3528 = vmatprep.subr.mxu0 0.0
        %3529 = vmatpush1.xpose.msra.mxu0 0.0
        %3530 = vmatprep.subr.mxu0 0.0
        %3531 = vmatpush1.xpose.msra.mxu0 0.0
        %3532 = vmatprep.subr.mxu0 0.0
        %3533 = vmatpush1.xpose.msra.mxu0 %v3429
        %3534 = vmatprep.subr.mxu0 0.0
        %3535 = vmatpush2.xpose.msra.mxu0 0.0
        %3536 = vmatprep.subr.mxu0 0.0
        %3537 = vmatpush2.xpose.msra.mxu0 0.0
        %3538 = vmatprep.subr.mxu0 0.0
        %3539 = vmatpush2.xpose.msra.mxu0 0.0
        %3540 = vmatprep.subr.mxu0 0.0
        %3541 = vmatpush2.xpose.msra.mxu0 0.0
        %3542 = vmatprep.subr.mxu0 0.0
        %3543 = vmatpush2.xpose.msra.mxu0 0.0
        %3544 = vmatprep.subr.mxu0 0.0
        %3545 = vmatpush2.xpose.msra.mxu0 0.0
        %3546 = vmatprep.subr.mxu0 0.0
        %3547 = vmatpush2.xpose.msra.mxu0 0.0
        %3548 = vmatprep.subr.mxu0 0.0
        %3549 = vmatpush2.xpose.msra.mxu0 0.0
        %3550 = vmatprep.subr.mxu0 0.0
        %3551 = vmatpush2.xpose.msra.mxu0 0.0
        %3552 = vmatprep.subr.mxu0 0.0
        %3553 = vmatpush2.xpose.msra.mxu0 0.0
        %3554 = vmatprep.subr.mxu0 0.0
        %3555 = vmatpush2.xpose.msra.mxu0 0.0
        %3556 = vmatprep.subr.mxu0 0.0
        %3557 = vmatpush2.xpose.msra.mxu0 0.0
        %3558 = vmatprep.subr.mxu0 0.0
        %3559 = vmatpush2.xpose.msra.mxu0 0.0
        %3560 = vmatprep.subr.mxu0 0.0
        %3561 = vmatpush2.xpose.msra.mxu0 0.0
        %3562 = vmatprep.subr.mxu0 0.0
        %3563 = vmatpush2.xpose.msra.mxu0 0.0
        %3564 = vmatprep.subr.mxu0 0.0
        %3565 = vmatpush2.xpose.msra.mxu0 0.0
        %3566 = vmatprep.mubr.f32.mxu0 0.0
        %3567 = vmatmul.mubr.f32.gmra.mxu0 %v3363
        %v3568 = vpop.f32.mrf.mxu0
        %v3569 = vadd.f32 %v400, %v3568
        %v3570 = vpop.f32.mrf.mxu0
        %3571 = vdwg.mxu0
        %v3572 = vsel %vm871, %v3569, -inf
        %v3573 = vmax.f32 %v3498, %v3500
        %v3574 = vmax.f32 %v3573, %v3572
        %3575 = vmax.xlane.f32.xlu0 %v3574
        %v3576 = vpop.xlane.xlu0 %3575
        %v3577 = vsub.f32 %v3498, %v3576
        %v3578 = vsub.f32 %v3500, %v3576
        %v3579 = vsub.f32 %v3569, %v3576
        %v3580 = vmul.f32 %v3577, 1.442695
        %v3581 = vpow.pop %v3580
        %v3582 = vmul.f32 %v3578, 1.442695
        %v3583 = vpow.pop %v3582
        %v3584 = vmul.f32 %v3579, 1.442695
        %v3585 = vpow.pop %v3584
        %v3586 = vadd.f32 %v3581, %v3583
        %v3587 = vsel %vm871, %v3585, 0.0
        %v3588 = vadd.f32 %v3586, %v3587
        %3589 = vadd.xlane.f32.xlu0 %v3588
        %v3590 = vpop.xlane.xlu0 %3589
        %v3591 = vrcp.pop %v3590
        %3592 = vrot.lane.b32.xlu0 %v323, 44
        %v3593 = vpop.permute.xlu0 %3592
        %3594 = vrot.lane.b32.xlu0 %v530, 44
        %v3595 = vpop.permute.xlu0 %3594
        %3596 = vrot.lane.b32.xlu0 %v532, 44
        %v3597 = vpop.permute.xlu0 %3596
        %3598 = vrot.lane.b32.xlu0 %v534, 44
        %v3599 = vpop.permute.xlu0 %3598
        %3600 = vrot.lane.b32.xlu0 %v536, 44
        %v3601 = vpop.permute.xlu0 %3600
        %3602 = vrot.lane.b32.xlu0 %v538, 44
        %v3603 = vpop.permute.xlu0 %3602
        %3604 = vrot.lane.b32.xlu0 %v540, 44
        %v3605 = vpop.permute.xlu0 %3604
        %3606 = vrot.lane.b32.xlu0 %v542, 44
        %v3607 = vpop.permute.xlu0 %3606
        %3608 = vrot.lane.b32.xlu0 %v544, 44
        %v3609 = vpop.permute.xlu0 %3608
        %3610 = vrot.lane.b32.xlu0 %v546, 44
        %v3611 = vpop.permute.xlu0 %3610
        %3612 = vrot.lane.b32.xlu0 %v548, 44
        %v3613 = vpop.permute.xlu0 %3612
        %3614 = vrot.lane.b32.xlu0 %v550, 44
        %v3615 = vpop.permute.xlu0 %3614
        %3616 = vrot.lane.b32.xlu0 %v552, 44
        %v3617 = vpop.permute.xlu0 %3616
        %3618 = vrot.lane.b32.xlu0 %v554, 44
        %v3619 = vpop.permute.xlu0 %3618
        %3620 = vrot.lane.b32.xlu0 %v556, 44
        %v3621 = vpop.permute.xlu0 %3620
        %3622 = vrot.lane.b32.xlu0 %v558, 44
        %v3623 = vpop.permute.xlu0 %3622
        %3624 = vrot.lane.b32.xlu0 %v560, 44
        %v3625 = vpop.permute.xlu0 %3624
        %3626 = vrot.lane.b32.xlu0 %v562, 44
        %v3627 = vpop.permute.xlu0 %3626
        %3628 = vrot.lane.b32.xlu0 %v564, 44
        %v3629 = vpop.permute.xlu0 %3628
        %3630 = vrot.lane.b32.xlu0 %v566, 44
        %v3631 = vpop.permute.xlu0 %3630
        %3632 = vrot.lane.b32.xlu0 %v568, 44
        %v3633 = vpop.permute.xlu0 %3632
        %3634 = vrot.lane.b32.xlu0 %v570, 44
        %v3635 = vpop.permute.xlu0 %3634
        %3636 = vrot.lane.b32.xlu0 %v572, 44
        %v3637 = vpop.permute.xlu0 %3636
        %3638 = vrot.lane.b32.xlu0 %v574, 44
        %v3639 = vpop.permute.xlu0 %3638
        %3640 = vrot.lane.b32.xlu0 %v576, 44
        %v3641 = vpop.permute.xlu0 %3640
        %3642 = vrot.lane.b32.xlu0 %v578, 44
        %v3643 = vpop.permute.xlu0 %3642
        %3644 = vrot.lane.b32.xlu0 %v580, 44
        %v3645 = vpop.permute.xlu0 %3644
        %3646 = vrot.lane.b32.xlu0 %v582, 44
        %v3647 = vpop.permute.xlu0 %3646
        %3648 = vrot.lane.b32.xlu0 %v584, 44
        %v3649 = vpop.permute.xlu0 %3648
        %3650 = vrot.lane.b32.xlu0 %v586, 44
        %v3651 = vpop.permute.xlu0 %3650
        %3652 = vrot.lane.b32.xlu0 %v588, 44
        %v3653 = vpop.permute.xlu0 %3652
        %3654 = vrot.lane.b32.xlu0 %v590, 44
        %v3655 = vpop.permute.xlu0 %3654
        %3656 = vrot.lane.b32.xlu0 %v592, 44
        %v3657 = vpop.permute.xlu0 %3656
        %v3692 = vsel %vm871, %v3585, 0
        %3694 = vmatprep.subr.mxu0 0.0
        %3695 = vmatpush1.msra.mxu0 %v3623
        %3696 = vmatprep.subr.mxu0 0.0
        %3697 = vmatpush1.msra.mxu0 %v3621
        %3698 = vmatprep.subr.mxu0 0.0
        %3699 = vmatpush1.msra.mxu0 %v3619
        %3700 = vmatprep.subr.mxu0 0.0
        %3701 = vmatpush1.msra.mxu0 %v3617
        %3702 = vmatprep.subr.mxu0 0.0
        %3703 = vmatpush1.msra.mxu0 %v3615
        %3704 = vmatprep.subr.mxu0 0.0
        %3705 = vmatpush1.msra.mxu0 %v3613
        %3706 = vmatprep.subr.mxu0 0.0
        %3707 = vmatpush1.msra.mxu0 %v3611
        %3708 = vmatprep.subr.mxu0 0.0
        %3709 = vmatpush1.msra.mxu0 %v3609
        %3710 = vmatprep.subr.mxu0 0.0
        %3711 = vmatpush1.msra.mxu0 %v3607
        %3712 = vmatprep.subr.mxu0 0.0
        %3713 = vmatpush1.msra.mxu0 %v3605
        %3714 = vmatprep.subr.mxu0 0.0
        %3715 = vmatpush1.msra.mxu0 %v3603
        %3716 = vmatprep.subr.mxu0 0.0
        %3717 = vmatpush1.msra.mxu0 %v3601
        %3718 = vmatprep.subr.mxu0 0.0
        %3719 = vmatpush1.msra.mxu0 %v3599
        %3720 = vmatprep.subr.mxu0 0.0
        %3721 = vmatpush1.msra.mxu0 %v3597
        %3722 = vmatprep.subr.mxu0 0.0
        %3723 = vmatpush1.msra.mxu0 %v3595
        %3724 = vmatprep.subr.mxu0 0.0
        %3725 = vmatpush1.msra.mxu0 %v3593
        %3726 = vmatprep.subr.mxu0 0.0
        %3727 = vmatpush2.msra.mxu0 %v3655
        %3728 = vmatprep.subr.mxu0 0.0
        %3729 = vmatpush2.msra.mxu0 %v3653
        %3730 = vmatprep.subr.mxu0 0.0
        %3731 = vmatpush2.msra.mxu0 %v3651
        %3732 = vmatprep.subr.mxu0 0.0
        %3733 = vmatpush2.msra.mxu0 %v3649
        %3734 = vmatprep.subr.mxu0 0.0
        %3735 = vmatpush2.msra.mxu0 %v3647
        %3736 = vmatprep.subr.mxu0 0.0
        %3737 = vmatpush2.msra.mxu0 %v3645
        %3738 = vmatprep.subr.mxu0 0.0
        %3739 = vmatpush2.msra.mxu0 %v3643
        %3740 = vmatprep.subr.mxu0 0.0
        %3741 = vmatpush2.msra.mxu0 %v3641
        %3742 = vmatprep.subr.mxu0 0.0
        %3743 = vmatpush2.msra.mxu0 %v3639
        %3744 = vmatprep.subr.mxu0 0.0
        %3745 = vmatpush2.msra.mxu0 %v3637
        %3746 = vmatprep.subr.mxu0 0.0
        %3747 = vmatpush2.msra.mxu0 %v3635
        %3748 = vmatprep.subr.mxu0 0.0
        %3749 = vmatpush2.msra.mxu0 %v3633
        %3750 = vmatprep.subr.mxu0 0.0
        %3751 = vmatpush2.msra.mxu0 %v3631
        %3752 = vmatprep.subr.mxu0 0.0
        %3753 = vmatpush2.msra.mxu0 %v3629
        %3754 = vmatprep.subr.mxu0 0.0
        %3755 = vmatpush2.msra.mxu0 %v3627
        %3756 = vmatprep.subr.mxu0 0.0
        %3757 = vmatpush2.msra.mxu0 %v3625
        %3758 = vmatprep.mubr.f32.mxu0 %v3583
        %3759 = vmatmul.mubr.f32.gmra.mxu0 %v3581
        %v3760 = vpop.f32.mrf.mxu0
        %v3761 = vadd.f32 0.0, %v3760
        %v3762 = vpop.f32.mrf.mxu0
        %3763 = vdwg.mxu0
        %3764 = vmatprep.subr.mxu0 0.0
        %3765 = vmatpush1.msra.mxu0 0.0
        %3766 = vmatprep.subr.mxu0 0.0
        %3767 = vmatpush1.msra.mxu0 0.0
        %3768 = vmatprep.subr.mxu0 0.0
        %3769 = vmatpush1.msra.mxu0 0.0
        %3770 = vmatprep.subr.mxu0 0.0
        %3771 = vmatpush1.msra.mxu0 0.0
        %3772 = vmatprep.subr.mxu0 0.0
        %3773 = vmatpush1.msra.mxu0 0.0
        %3774 = vmatprep.subr.mxu0 0.0
        %3775 = vmatpush1.msra.mxu0 0.0
        %3776 = vmatprep.subr.mxu0 0.0
        %3777 = vmatpush1.msra.mxu0 0.0
        %3778 = vmatprep.subr.mxu0 0.0
        %3779 = vmatpush1.msra.mxu0 0.0
        %3780 = vmatprep.subr.mxu0 0.0
        %3781 = vmatpush1.msra.mxu0 0.0
        %3782 = vmatprep.subr.mxu0 0.0
        %3783 = vmatpush1.msra.mxu0 0.0
        %3784 = vmatprep.subr.mxu0 0.0
        %3785 = vmatpush1.msra.mxu0 0.0
        %3786 = vmatprep.subr.mxu0 0.0
        %3787 = vmatpush1.msra.mxu0 0.0
        %3788 = vmatprep.subr.mxu0 0.0
        %3789 = vmatpush1.msra.mxu0 0.0
        %3790 = vmatprep.subr.mxu0 0.0
        %3791 = vmatpush1.msra.mxu0 0.0
        %3792 = vmatprep.subr.mxu0 0.0
        %3793 = vmatpush1.msra.mxu0 0.0
        %3794 = vmatprep.subr.mxu0 0.0
        %3795 = vmatpush1.msra.mxu0 %v3657
        %3796 = vmatprep.subr.mxu0 0.0
        %3797 = vmatpush2.msra.mxu0 0.0
        %3798 = vmatprep.subr.mxu0 0.0
        %3799 = vmatpush2.msra.mxu0 0.0
        %3800 = vmatprep.subr.mxu0 0.0
        %3801 = vmatpush2.msra.mxu0 0.0
        %3802 = vmatprep.subr.mxu0 0.0
        %3803 = vmatpush2.msra.mxu0 0.0
        %3804 = vmatprep.subr.mxu0 0.0
        %3805 = vmatpush2.msra.mxu0 0.0
        %3806 = vmatprep.subr.mxu0 0.0
        %3807 = vmatpush2.msra.mxu0 0.0
        %3808 = vmatprep.subr.mxu0 0.0
        %3809 = vmatpush2.msra.mxu0 0.0
        %3810 = vmatprep.subr.mxu0 0.0
        %3811 = vmatpush2.msra.mxu0 0.0
        %3812 = vmatprep.subr.mxu0 0.0
        %3813 = vmatpush2.msra.mxu0 0.0
        %3814 = vmatprep.subr.mxu0 0.0
        %3815 = vmatpush2.msra.mxu0 0.0
        %3816 = vmatprep.subr.mxu0 0.0
        %3817 = vmatpush2.msra.mxu0 0.0
        %3818 = vmatprep.subr.mxu0 0.0
        %3819 = vmatpush2.msra.mxu0 0.0
        %3820 = vmatprep.subr.mxu0 0.0
        %3821 = vmatpush2.msra.mxu0 0.0
        %3822 = vmatprep.subr.mxu0 0.0
        %3823 = vmatpush2.msra.mxu0 0.0
        %3824 = vmatprep.subr.mxu0 0.0
        %3825 = vmatpush2.msra.mxu0 0.0
        %3826 = vmatprep.subr.mxu0 0.0
        %3827 = vmatpush2.msra.mxu0 0.0
        %3828 = vmatprep.mubr.f32.mxu0 0.0
        %3829 = vmatmul.mubr.f32.gmra.mxu0 %v3692
        %v3830 = vpop.f32.mrf.mxu0
        %v3831 = vadd.f32 %v3761, %v3830
        %v3832 = vpop.f32.mrf.mxu0
        %3833 = vdwg.mxu0
        %v3834 = vmul.f32 %v3831, %v3591
        %3835 = vrot.lane.b32.xlu0 %v326, 104
        %v3836 = vpop.permute.xlu0 %3835
        %3837 = vrot.lane.b32.xlu0 %v323, 72
        %v3838 = vpop.permute.xlu0 %3837
        %3839 = vrot.lane.b32.xlu0 %v434, 72
        %v3840 = vpop.permute.xlu0 %3839
        %3841 = vrot.lane.b32.xlu0 %v436, 72
        %v3842 = vpop.permute.xlu0 %3841
        %3843 = vrot.lane.b32.xlu0 %v438, 72
        %v3844 = vpop.permute.xlu0 %3843
        %3845 = vrot.lane.b32.xlu0 %v440, 72
        %v3846 = vpop.permute.xlu0 %3845
        %3847 = vrot.lane.b32.xlu0 %v442, 72
        %v3848 = vpop.permute.xlu0 %3847
        %3849 = vrot.lane.b32.xlu0 %v444, 72
        %v3850 = vpop.permute.xlu0 %3849
        %3851 = vrot.lane.b32.xlu0 %v446, 72
        %v3852 = vpop.permute.xlu0 %3851
        %3853 = vrot.lane.b32.xlu0 %v448, 72
        %v3854 = vpop.permute.xlu0 %3853
        %3855 = vrot.lane.b32.xlu0 %v450, 72
        %v3856 = vpop.permute.xlu0 %3855
        %3857 = vrot.lane.b32.xlu0 %v452, 72
        %v3858 = vpop.permute.xlu0 %3857
        %3859 = vrot.lane.b32.xlu0 %v454, 72
        %v3860 = vpop.permute.xlu0 %3859
        %3861 = vrot.lane.b32.xlu0 %v456, 72
        %v3862 = vpop.permute.xlu0 %3861
        %3863 = vrot.lane.b32.xlu0 %v458, 72
        %v3864 = vpop.permute.xlu0 %3863
        %3865 = vrot.lane.b32.xlu0 %v460, 72
        %v3866 = vpop.permute.xlu0 %3865
        %3867 = vrot.lane.b32.xlu0 %v462, 72
        %v3868 = vpop.permute.xlu0 %3867
        %3869 = vrot.lane.b32.xlu0 %v464, 72
        %v3870 = vpop.permute.xlu0 %3869
        %3871 = vrot.lane.b32.xlu0 %v466, 72
        %v3872 = vpop.permute.xlu0 %3871
        %3873 = vrot.lane.b32.xlu0 %v468, 72
        %v3874 = vpop.permute.xlu0 %3873
        %3875 = vrot.lane.b32.xlu0 %v470, 72
        %v3876 = vpop.permute.xlu0 %3875
        %3877 = vrot.lane.b32.xlu0 %v472, 72
        %v3878 = vpop.permute.xlu0 %3877
        %3879 = vrot.lane.b32.xlu0 %v474, 72
        %v3880 = vpop.permute.xlu0 %3879
        %3881 = vrot.lane.b32.xlu0 %v476, 72
        %v3882 = vpop.permute.xlu0 %3881
        %3883 = vrot.lane.b32.xlu0 %v478, 72
        %v3884 = vpop.permute.xlu0 %3883
        %3885 = vrot.lane.b32.xlu0 %v480, 72
        %v3886 = vpop.permute.xlu0 %3885
        %3887 = vrot.lane.b32.xlu0 %v482, 72
        %v3888 = vpop.permute.xlu0 %3887
        %3889 = vrot.lane.b32.xlu0 %v484, 72
        %v3890 = vpop.permute.xlu0 %3889
        %3891 = vrot.lane.b32.xlu0 %v486, 72
        %v3892 = vpop.permute.xlu0 %3891
        %3893 = vrot.lane.b32.xlu0 %v488, 72
        %v3894 = vpop.permute.xlu0 %3893
        %3895 = vrot.lane.b32.xlu0 %v490, 72
        %v3896 = vpop.permute.xlu0 %3895
        %3897 = vrot.lane.b32.xlu0 %v492, 72
        %v3898 = vpop.permute.xlu0 %3897
        %3899 = vrot.lane.b32.xlu0 %v494, 72
        %v3900 = vpop.permute.xlu0 %3899
        %3901 = vrot.lane.b32.xlu0 %v496, 72
        %v3902 = vpop.permute.xlu0 %3901
        %v3903 = vsel %vm660, %v3836, 0
        %v3905 = vsel %vm660, %v3838, 0
        %v3907 = vsel %vm660, %v3840, 0
        %v3909 = vsel %vm660, %v3842, 0
        %v3911 = vsel %vm660, %v3844, 0
        %v3913 = vsel %vm660, %v3846, 0
        %v3915 = vsel %vm660, %v3848, 0
        %v3917 = vsel %vm660, %v3850, 0
        %v3919 = vsel %vm660, %v3852, 0
        %v3921 = vsel %vm660, %v3854, 0
        %v3923 = vsel %vm660, %v3856, 0
        %v3925 = vsel %vm660, %v3858, 0
        %v3927 = vsel %vm660, %v3860, 0
        %v3929 = vsel %vm660, %v3862, 0
        %v3931 = vsel %vm660, %v3864, 0
        %v3933 = vsel %vm660, %v3866, 0
        %v3935 = vsel %vm660, %v3868, 0
        %v3937 = vsel %vm660, %v3870, 0
        %v3939 = vsel %vm660, %v3872, 0
        %v3941 = vsel %vm660, %v3874, 0
        %v3943 = vsel %vm660, %v3876, 0
        %v3945 = vsel %vm660, %v3878, 0
        %v3947 = vsel %vm660, %v3880, 0
        %v3949 = vsel %vm660, %v3882, 0
        %v3951 = vsel %vm660, %v3884, 0
        %v3953 = vsel %vm660, %v3886, 0
        %v3955 = vsel %vm660, %v3888, 0
        %v3957 = vsel %vm660, %v3890, 0
        %v3959 = vsel %vm660, %v3892, 0
        %v3961 = vsel %vm660, %v3894, 0
        %v3963 = vsel %vm660, %v3896, 0
        %v3965 = vsel %vm660, %v3898, 0
        %v3967 = vsel %vm660, %v3900, 0
        %v3969 = vsel %vm660, %v3902, 0
        %3971 = vmatprep.subr.mxu0 0.0
        %3972 = vmatpush1.xpose.msra.mxu0 %v3935
        %3973 = vmatprep.subr.mxu0 0.0
        %3974 = vmatpush1.xpose.msra.mxu0 %v3933
        %3975 = vmatprep.subr.mxu0 0.0
        %3976 = vmatpush1.xpose.msra.mxu0 %v3931
        %3977 = vmatprep.subr.mxu0 0.0
        %3978 = vmatpush1.xpose.msra.mxu0 %v3929
        %3979 = vmatprep.subr.mxu0 0.0
        %3980 = vmatpush1.xpose.msra.mxu0 %v3927
        %3981 = vmatprep.subr.mxu0 0.0
        %3982 = vmatpush1.xpose.msra.mxu0 %v3925
        %3983 = vmatprep.subr.mxu0 0.0
        %3984 = vmatpush1.xpose.msra.mxu0 %v3923
        %3985 = vmatprep.subr.mxu0 0.0
        %3986 = vmatpush1.xpose.msra.mxu0 %v3921
        %3987 = vmatprep.subr.mxu0 0.0
        %3988 = vmatpush1.xpose.msra.mxu0 %v3919
        %3989 = vmatprep.subr.mxu0 0.0
        %3990 = vmatpush1.xpose.msra.mxu0 %v3917
        %3991 = vmatprep.subr.mxu0 0.0
        %3992 = vmatpush1.xpose.msra.mxu0 %v3915
        %3993 = vmatprep.subr.mxu0 0.0
        %3994 = vmatpush1.xpose.msra.mxu0 %v3913
        %3995 = vmatprep.subr.mxu0 0.0
        %3996 = vmatpush1.xpose.msra.mxu0 %v3911
        %3997 = vmatprep.subr.mxu0 0.0
        %3998 = vmatpush1.xpose.msra.mxu0 %v3909
        %3999 = vmatprep.subr.mxu0 0.0
        %4000 = vmatpush1.xpose.msra.mxu0 %v3907
        %4001 = vmatprep.subr.mxu0 0.0
        %4002 = vmatpush1.xpose.msra.mxu0 %v3905
        %4003 = vmatprep.subr.mxu0 0.0
        %4004 = vmatpush2.xpose.msra.mxu0 %v3967
        %4005 = vmatprep.subr.mxu0 0.0
        %4006 = vmatpush2.xpose.msra.mxu0 %v3965
        %4007 = vmatprep.subr.mxu0 0.0
        %4008 = vmatpush2.xpose.msra.mxu0 %v3963
        %4009 = vmatprep.subr.mxu0 0.0
        %4010 = vmatpush2.xpose.msra.mxu0 %v3961
        %4011 = vmatprep.subr.mxu0 0.0
        %4012 = vmatpush2.xpose.msra.mxu0 %v3959
        %4013 = vmatprep.subr.mxu0 0.0
        %4014 = vmatpush2.xpose.msra.mxu0 %v3957
        %4015 = vmatprep.subr.mxu0 0.0
        %4016 = vmatpush2.xpose.msra.mxu0 %v3955
        %4017 = vmatprep.subr.mxu0 0.0
        %4018 = vmatpush2.xpose.msra.mxu0 %v3953
        %4019 = vmatprep.subr.mxu0 0.0
        %4020 = vmatpush2.xpose.msra.mxu0 %v3951
        %4021 = vmatprep.subr.mxu0 0.0
        %4022 = vmatpush2.xpose.msra.mxu0 %v3949
        %4023 = vmatprep.subr.mxu0 0.0
        %4024 = vmatpush2.xpose.msra.mxu0 %v3947
        %4025 = vmatprep.subr.mxu0 0.0
        %4026 = vmatpush2.xpose.msra.mxu0 %v3945
        %4027 = vmatprep.subr.mxu0 0.0
        %4028 = vmatpush2.xpose.msra.mxu0 %v3943
        %4029 = vmatprep.subr.mxu0 0.0
        %4030 = vmatpush2.xpose.msra.mxu0 %v3941
        %4031 = vmatprep.subr.mxu0 0.0
        %4032 = vmatpush2.xpose.msra.mxu0 %v3939
        %4033 = vmatprep.subr.mxu0 0.0
        %4034 = vmatpush2.xpose.msra.mxu0 %v3937
        %4035 = vmatprep.mubr.f32.mxu0 0.0
        %4036 = vmatmul.mubr.f32.gmra.mxu0 %v3903
        %v4037 = vpop.f32.mrf.mxu0
        %v4038 = vadd.f32 %v398, %v4037
        %v4039 = vpop.f32.mrf.mxu0
        %v4040 = vadd.f32 %v399, %v4039
        %4041 = vdwg.mxu0
        %4042 = vmatprep.subr.mxu0 0.0
        %4043 = vmatpush1.xpose.msra.mxu0 0.0
        %4044 = vmatprep.subr.mxu0 0.0
        %4045 = vmatpush1.xpose.msra.mxu0 0.0
        %4046 = vmatprep.subr.mxu0 0.0
        %4047 = vmatpush1.xpose.msra.mxu0 0.0
        %4048 = vmatprep.subr.mxu0 0.0
        %4049 = vmatpush1.xpose.msra.mxu0 0.0
        %4050 = vmatprep.subr.mxu0 0.0
        %4051 = vmatpush1.xpose.msra.mxu0 0.0
        %4052 = vmatprep.subr.mxu0 0.0
        %4053 = vmatpush1.xpose.msra.mxu0 0.0
        %4054 = vmatprep.subr.mxu0 0.0
        %4055 = vmatpush1.xpose.msra.mxu0 0.0
        %4056 = vmatprep.subr.mxu0 0.0
        %4057 = vmatpush1.xpose.msra.mxu0 0.0
        %4058 = vmatprep.subr.mxu0 0.0
        %4059 = vmatpush1.xpose.msra.mxu0 0.0
        %4060 = vmatprep.subr.mxu0 0.0
        %4061 = vmatpush1.xpose.msra.mxu0 0.0
        %4062 = vmatprep.subr.mxu0 0.0
        %4063 = vmatpush1.xpose.msra.mxu0 0.0
        %4064 = vmatprep.subr.mxu0 0.0
        %4065 = vmatpush1.xpose.msra.mxu0 0.0
        %4066 = vmatprep.subr.mxu0 0.0
        %4067 = vmatpush1.xpose.msra.mxu0 0.0
        %4068 = vmatprep.subr.mxu0 0.0
        %4069 = vmatpush1.xpose.msra.mxu0 0.0
        %4070 = vmatprep.subr.mxu0 0.0
        %4071 = vmatpush1.xpose.msra.mxu0 0.0
        %4072 = vmatprep.subr.mxu0 0.0
        %4073 = vmatpush1.xpose.msra.mxu0 %v3969
        %4074 = vmatprep.subr.mxu0 0.0
        %4075 = vmatpush2.xpose.msra.mxu0 0.0
        %4076 = vmatprep.subr.mxu0 0.0
        %4077 = vmatpush2.xpose.msra.mxu0 0.0
        %4078 = vmatprep.subr.mxu0 0.0
        %4079 = vmatpush2.xpose.msra.mxu0 0.0
        %4080 = vmatprep.subr.mxu0 0.0
        %4081 = vmatpush2.xpose.msra.mxu0 0.0
        %4082 = vmatprep.subr.mxu0 0.0
        %4083 = vmatpush2.xpose.msra.mxu0 0.0
        %4084 = vmatprep.subr.mxu0 0.0
        %4085 = vmatpush2.xpose.msra.mxu0 0.0
        %4086 = vmatprep.subr.mxu0 0.0
        %4087 = vmatpush2.xpose.msra.mxu0 0.0
        %4088 = vmatprep.subr.mxu0 0.0
        %4089 = vmatpush2.xpose.msra.mxu0 0.0
        %4090 = vmatprep.subr.mxu0 0.0
        %4091 = vmatpush2.xpose.msra.mxu0 0.0
        %4092 = vmatprep.subr.mxu0 0.0
        %4093 = vmatpush2.xpose.msra.mxu0 0.0
        %4094 = vmatprep.subr.mxu0 0.0
        %4095 = vmatpush2.xpose.msra.mxu0 0.0
        %4096 = vmatprep.subr.mxu0 0.0
        %4097 = vmatpush2.xpose.msra.mxu0 0.0
        %4098 = vmatprep.subr.mxu0 0.0
        %4099 = vmatpush2.xpose.msra.mxu0 0.0
        %4100 = vmatprep.subr.mxu0 0.0
        %4101 = vmatpush2.xpose.msra.mxu0 0.0
        %4102 = vmatprep.subr.mxu0 0.0
        %4103 = vmatpush2.xpose.msra.mxu0 0.0
        %4104 = vmatprep.subr.mxu0 0.0
        %4105 = vmatpush2.xpose.msra.mxu0 0.0
        %4106 = vmatprep.mubr.f32.mxu0 0.0
        %4107 = vmatmul.mubr.f32.gmra.mxu0 %v3903
        %v4108 = vpop.f32.mrf.mxu0
        %v4109 = vadd.f32 %v400, %v4108
        %v4110 = vpop.f32.mrf.mxu0
        %4111 = vdwg.mxu0
        %v4112 = vsel %vm871, %v4109, -inf
        %v4113 = vmax.f32 %v4038, %v4040
        %v4114 = vmax.f32 %v4113, %v4112
        %4115 = vmax.xlane.f32.xlu0 %v4114
        %v4116 = vpop.xlane.xlu0 %4115
        %v4117 = vsub.f32 %v4038, %v4116
        %v4118 = vsub.f32 %v4040, %v4116
        %v4119 = vsub.f32 %v4109, %v4116
        %v4120 = vmul.f32 %v4117, 1.442695
        %v4121 = vpow.pop %v4120
        %v4122 = vmul.f32 %v4118, 1.442695
        %v4123 = vpow.pop %v4122
        %v4124 = vmul.f32 %v4119, 1.442695
        %v4125 = vpow.pop %v4124
        %v4126 = vadd.f32 %v4121, %v4123
        %v4127 = vsel %vm871, %v4125, 0.0
        %v4128 = vadd.f32 %v4126, %v4127
        %4129 = vadd.xlane.f32.xlu0 %v4128
        %v4130 = vpop.xlane.xlu0 %4129
        %v4131 = vrcp.pop %v4130
        %4132 = vrot.lane.b32.xlu0 %v323, 40
        %v4133 = vpop.permute.xlu0 %4132
        %4134 = vrot.lane.b32.xlu0 %v530, 40
        %v4135 = vpop.permute.xlu0 %4134
        %4136 = vrot.lane.b32.xlu0 %v532, 40
        %v4137 = vpop.permute.xlu0 %4136
        %4138 = vrot.lane.b32.xlu0 %v534, 40
        %v4139 = vpop.permute.xlu0 %4138
        %4140 = vrot.lane.b32.xlu0 %v536, 40
        %v4141 = vpop.permute.xlu0 %4140
        %4142 = vrot.lane.b32.xlu0 %v538, 40
        %v4143 = vpop.permute.xlu0 %4142
        %4144 = vrot.lane.b32.xlu0 %v540, 40
        %v4145 = vpop.permute.xlu0 %4144
        %4146 = vrot.lane.b32.xlu0 %v542, 40
        %v4147 = vpop.permute.xlu0 %4146
        %4148 = vrot.lane.b32.xlu0 %v544, 40
        %v4149 = vpop.permute.xlu0 %4148
        %4150 = vrot.lane.b32.xlu0 %v546, 40
        %v4151 = vpop.permute.xlu0 %4150
        %4152 = vrot.lane.b32.xlu0 %v548, 40
        %v4153 = vpop.permute.xlu0 %4152
        %4154 = vrot.lane.b32.xlu0 %v550, 40
        %v4155 = vpop.permute.xlu0 %4154
        %4156 = vrot.lane.b32.xlu0 %v552, 40
        %v4157 = vpop.permute.xlu0 %4156
        %4158 = vrot.lane.b32.xlu0 %v554, 40
        %v4159 = vpop.permute.xlu0 %4158
        %4160 = vrot.lane.b32.xlu0 %v556, 40
        %v4161 = vpop.permute.xlu0 %4160
        %4162 = vrot.lane.b32.xlu0 %v558, 40
        %v4163 = vpop.permute.xlu0 %4162
        %4164 = vrot.lane.b32.xlu0 %v560, 40
        %v4165 = vpop.permute.xlu0 %4164
        %4166 = vrot.lane.b32.xlu0 %v562, 40
        %v4167 = vpop.permute.xlu0 %4166
        %4168 = vrot.lane.b32.xlu0 %v564, 40
        %v4169 = vpop.permute.xlu0 %4168
        %4170 = vrot.lane.b32.xlu0 %v566, 40
        %v4171 = vpop.permute.xlu0 %4170
        %4172 = vrot.lane.b32.xlu0 %v568, 40
        %v4173 = vpop.permute.xlu0 %4172
        %4174 = vrot.lane.b32.xlu0 %v570, 40
        %v4175 = vpop.permute.xlu0 %4174
        %4176 = vrot.lane.b32.xlu0 %v572, 40
        %v4177 = vpop.permute.xlu0 %4176
        %4178 = vrot.lane.b32.xlu0 %v574, 40
        %v4179 = vpop.permute.xlu0 %4178
        %4180 = vrot.lane.b32.xlu0 %v576, 40
        %v4181 = vpop.permute.xlu0 %4180
        %4182 = vrot.lane.b32.xlu0 %v578, 40
        %v4183 = vpop.permute.xlu0 %4182
        %4184 = vrot.lane.b32.xlu0 %v580, 40
        %v4185 = vpop.permute.xlu0 %4184
        %4186 = vrot.lane.b32.xlu0 %v582, 40
        %v4187 = vpop.permute.xlu0 %4186
        %4188 = vrot.lane.b32.xlu0 %v584, 40
        %v4189 = vpop.permute.xlu0 %4188
        %4190 = vrot.lane.b32.xlu0 %v586, 40
        %v4191 = vpop.permute.xlu0 %4190
        %4192 = vrot.lane.b32.xlu0 %v588, 40
        %v4193 = vpop.permute.xlu0 %4192
        %4194 = vrot.lane.b32.xlu0 %v590, 40
        %v4195 = vpop.permute.xlu0 %4194
        %4196 = vrot.lane.b32.xlu0 %v592, 40
        %v4197 = vpop.permute.xlu0 %4196
        %v4232 = vsel %vm871, %v4125, 0
        %4234 = vmatprep.subr.mxu0 0.0
        %4235 = vmatpush1.msra.mxu0 %v4163
        %4236 = vmatprep.subr.mxu0 0.0
        %4237 = vmatpush1.msra.mxu0 %v4161
        %4238 = vmatprep.subr.mxu0 0.0
        %4239 = vmatpush1.msra.mxu0 %v4159
        %4240 = vmatprep.subr.mxu0 0.0
        %4241 = vmatpush1.msra.mxu0 %v4157
        %4242 = vmatprep.subr.mxu0 0.0
        %4243 = vmatpush1.msra.mxu0 %v4155
        %4244 = vmatprep.subr.mxu0 0.0
        %4245 = vmatpush1.msra.mxu0 %v4153
        %4246 = vmatprep.subr.mxu0 0.0
        %4247 = vmatpush1.msra.mxu0 %v4151
        %4248 = vmatprep.subr.mxu0 0.0
        %4249 = vmatpush1.msra.mxu0 %v4149
        %4250 = vmatprep.subr.mxu0 0.0
        %4251 = vmatpush1.msra.mxu0 %v4147
        %4252 = vmatprep.subr.mxu0 0.0
        %4253 = vmatpush1.msra.mxu0 %v4145
        %4254 = vmatprep.subr.mxu0 0.0
        %4255 = vmatpush1.msra.mxu0 %v4143
        %4256 = vmatprep.subr.mxu0 0.0
        %4257 = vmatpush1.msra.mxu0 %v4141
        %4258 = vmatprep.subr.mxu0 0.0
        %4259 = vmatpush1.msra.mxu0 %v4139
        %4260 = vmatprep.subr.mxu0 0.0
        %4261 = vmatpush1.msra.mxu0 %v4137
        %4262 = vmatprep.subr.mxu0 0.0
        %4263 = vmatpush1.msra.mxu0 %v4135
        %4264 = vmatprep.subr.mxu0 0.0
        %4265 = vmatpush1.msra.mxu0 %v4133
        %4266 = vmatprep.subr.mxu0 0.0
        %4267 = vmatpush2.msra.mxu0 %v4195
        %4268 = vmatprep.subr.mxu0 0.0
        %4269 = vmatpush2.msra.mxu0 %v4193
        %4270 = vmatprep.subr.mxu0 0.0
        %4271 = vmatpush2.msra.mxu0 %v4191
        %4272 = vmatprep.subr.mxu0 0.0
        %4273 = vmatpush2.msra.mxu0 %v4189
        %4274 = vmatprep.subr.mxu0 0.0
        %4275 = vmatpush2.msra.mxu0 %v4187
        %4276 = vmatprep.subr.mxu0 0.0
        %4277 = vmatpush2.msra.mxu0 %v4185
        %4278 = vmatprep.subr.mxu0 0.0
        %4279 = vmatpush2.msra.mxu0 %v4183
        %4280 = vmatprep.subr.mxu0 0.0
        %4281 = vmatpush2.msra.mxu0 %v4181
        %4282 = vmatprep.subr.mxu0 0.0
        %4283 = vmatpush2.msra.mxu0 %v4179
        %4284 = vmatprep.subr.mxu0 0.0
        %4285 = vmatpush2.msra.mxu0 %v4177
        %4286 = vmatprep.subr.mxu0 0.0
        %4287 = vmatpush2.msra.mxu0 %v4175
        %4288 = vmatprep.subr.mxu0 0.0
        %4289 = vmatpush2.msra.mxu0 %v4173
        %4290 = vmatprep.subr.mxu0 0.0
        %4291 = vmatpush2.msra.mxu0 %v4171
        %4292 = vmatprep.subr.mxu0 0.0
        %4293 = vmatpush2.msra.mxu0 %v4169
        %4294 = vmatprep.subr.mxu0 0.0
        %4295 = vmatpush2.msra.mxu0 %v4167
        %4296 = vmatprep.subr.mxu0 0.0
        %4297 = vmatpush2.msra.mxu0 %v4165
        %4298 = vmatprep.mubr.f32.mxu0 %v4123
        %4299 = vmatmul.mubr.f32.gmra.mxu0 %v4121
        %v4300 = vpop.f32.mrf.mxu0
        %v4301 = vadd.f32 0.0, %v4300
        %v4302 = vpop.f32.mrf.mxu0
        %4303 = vdwg.mxu0
        %4304 = vmatprep.subr.mxu0 0.0
        %4305 = vmatpush1.msra.mxu0 0.0
        %4306 = vmatprep.subr.mxu0 0.0
        %4307 = vmatpush1.msra.mxu0 0.0
        %4308 = vmatprep.subr.mxu0 0.0
        %4309 = vmatpush1.msra.mxu0 0.0
        %4310 = vmatprep.subr.mxu0 0.0
        %4311 = vmatpush1.msra.mxu0 0.0
        %4312 = vmatprep.subr.mxu0 0.0
        %4313 = vmatpush1.msra.mxu0 0.0
        %4314 = vmatprep.subr.mxu0 0.0
        %4315 = vmatpush1.msra.mxu0 0.0
        %4316 = vmatprep.subr.mxu0 0.0
        %4317 = vmatpush1.msra.mxu0 0.0
        %4318 = vmatprep.subr.mxu0 0.0
        %4319 = vmatpush1.msra.mxu0 0.0
        %4320 = vmatprep.subr.mxu0 0.0
        %4321 = vmatpush1.msra.mxu0 0.0
        %4322 = vmatprep.subr.mxu0 0.0
        %4323 = vmatpush1.msra.mxu0 0.0
        %4324 = vmatprep.subr.mxu0 0.0
        %4325 = vmatpush1.msra.mxu0 0.0
        %4326 = vmatprep.subr.mxu0 0.0
        %4327 = vmatpush1.msra.mxu0 0.0
        %4328 = vmatprep.subr.mxu0 0.0
        %4329 = vmatpush1.msra.mxu0 0.0
        %4330 = vmatprep.subr.mxu0 0.0
        %4331 = vmatpush1.msra.mxu0 0.0
        %4332 = vmatprep.subr.mxu0 0.0
        %4333 = vmatpush1.msra.mxu0 0.0
        %4334 = vmatprep.subr.mxu0 0.0
        %4335 = vmatpush1.msra.mxu0 %v4197
        %4336 = vmatprep.subr.mxu0 0.0
        %4337 = vmatpush2.msra.mxu0 0.0
        %4338 = vmatprep.subr.mxu0 0.0
        %4339 = vmatpush2.msra.mxu0 0.0
        %4340 = vmatprep.subr.mxu0 0.0
        %4341 = vmatpush2.msra.mxu0 0.0
        %4342 = vmatprep.subr.mxu0 0.0
        %4343 = vmatpush2.msra.mxu0 0.0
        %4344 = vmatprep.subr.mxu0 0.0
        %4345 = vmatpush2.msra.mxu0 0.0
        %4346 = vmatprep.subr.mxu0 0.0
        %4347 = vmatpush2.msra.mxu0 0.0
        %4348 = vmatprep.subr.mxu0 0.0
        %4349 = vmatpush2.msra.mxu0 0.0
        %4350 = vmatprep.subr.mxu0 0.0
        %4351 = vmatpush2.msra.mxu0 0.0
        %4352 = vmatprep.subr.mxu0 0.0
        %4353 = vmatpush2.msra.mxu0 0.0
        %4354 = vmatprep.subr.mxu0 0.0
        %4355 = vmatpush2.msra.mxu0 0.0
        %4356 = vmatprep.subr.mxu0 0.0
        %4357 = vmatpush2.msra.mxu0 0.0
        %4358 = vmatprep.subr.mxu0 0.0
        %4359 = vmatpush2.msra.mxu0 0.0
        %4360 = vmatprep.subr.mxu0 0.0
        %4361 = vmatpush2.msra.mxu0 0.0
        %4362 = vmatprep.subr.mxu0 0.0
        %4363 = vmatpush2.msra.mxu0 0.0
        %4364 = vmatprep.subr.mxu0 0.0
        %4365 = vmatpush2.msra.mxu0 0.0
        %4366 = vmatprep.subr.mxu0 0.0
        %4367 = vmatpush2.msra.mxu0 0.0
        %4368 = vmatprep.mubr.f32.mxu0 0.0
        %4369 = vmatmul.mubr.f32.gmra.mxu0 %v4232
        %v4370 = vpop.f32.mrf.mxu0
        %v4371 = vadd.f32 %v4301, %v4370
        %v4372 = vpop.f32.mrf.mxu0
        %4373 = vdwg.mxu0
        %v4374 = vmul.f32 %v4371, %v4131
        %4375 = vrot.lane.b32.xlu0 %v326, 100
        %v4376 = vpop.permute.xlu0 %4375
        %4377 = vrot.lane.b32.xlu0 %v323, 68
        %v4378 = vpop.permute.xlu0 %4377
        %4379 = vrot.lane.b32.xlu0 %v434, 68
        %v4380 = vpop.permute.xlu0 %4379
        %4381 = vrot.lane.b32.xlu0 %v436, 68
        %v4382 = vpop.permute.xlu0 %4381
        %4383 = vrot.lane.b32.xlu0 %v438, 68
        %v4384 = vpop.permute.xlu0 %4383
        %4385 = vrot.lane.b32.xlu0 %v440, 68
        %v4386 = vpop.permute.xlu0 %4385
        %4387 = vrot.lane.b32.xlu0 %v442, 68
        %v4388 = vpop.permute.xlu0 %4387
        %4389 = vrot.lane.b32.xlu0 %v444, 68
        %v4390 = vpop.permute.xlu0 %4389
        %4391 = vrot.lane.b32.xlu0 %v446, 68
        %v4392 = vpop.permute.xlu0 %4391
        %4393 = vrot.lane.b32.xlu0 %v448, 68
        %v4394 = vpop.permute.xlu0 %4393
        %4395 = vrot.lane.b32.xlu0 %v450, 68
        %v4396 = vpop.permute.xlu0 %4395
        %4397 = vrot.lane.b32.xlu0 %v452, 68
        %v4398 = vpop.permute.xlu0 %4397
        %4399 = vrot.lane.b32.xlu0 %v454, 68
        %v4400 = vpop.permute.xlu0 %4399
        %4401 = vrot.lane.b32.xlu0 %v456, 68
        %v4402 = vpop.permute.xlu0 %4401
        %4403 = vrot.lane.b32.xlu0 %v458, 68
        %v4404 = vpop.permute.xlu0 %4403
        %4405 = vrot.lane.b32.xlu0 %v460, 68
        %v4406 = vpop.permute.xlu0 %4405
        %4407 = vrot.lane.b32.xlu0 %v462, 68
        %v4408 = vpop.permute.xlu0 %4407
        %4409 = vrot.lane.b32.xlu0 %v464, 68
        %v4410 = vpop.permute.xlu0 %4409
        %4411 = vrot.lane.b32.xlu0 %v466, 68
        %v4412 = vpop.permute.xlu0 %4411
        %4413 = vrot.lane.b32.xlu0 %v468, 68
        %v4414 = vpop.permute.xlu0 %4413
        %4415 = vrot.lane.b32.xlu0 %v470, 68
        %v4416 = vpop.permute.xlu0 %4415
        %4417 = vrot.lane.b32.xlu0 %v472, 68
        %v4418 = vpop.permute.xlu0 %4417
        %4419 = vrot.lane.b32.xlu0 %v474, 68
        %v4420 = vpop.permute.xlu0 %4419
        %4421 = vrot.lane.b32.xlu0 %v476, 68
        %v4422 = vpop.permute.xlu0 %4421
        %4423 = vrot.lane.b32.xlu0 %v478, 68
        %v4424 = vpop.permute.xlu0 %4423
        %4425 = vrot.lane.b32.xlu0 %v480, 68
        %v4426 = vpop.permute.xlu0 %4425
        %4427 = vrot.lane.b32.xlu0 %v482, 68
        %v4428 = vpop.permute.xlu0 %4427
        %4429 = vrot.lane.b32.xlu0 %v484, 68
        %v4430 = vpop.permute.xlu0 %4429
        %4431 = vrot.lane.b32.xlu0 %v486, 68
        %v4432 = vpop.permute.xlu0 %4431
        %4433 = vrot.lane.b32.xlu0 %v488, 68
        %v4434 = vpop.permute.xlu0 %4433
        %4435 = vrot.lane.b32.xlu0 %v490, 68
        %v4436 = vpop.permute.xlu0 %4435
        %4437 = vrot.lane.b32.xlu0 %v492, 68
        %v4438 = vpop.permute.xlu0 %4437
        %4439 = vrot.lane.b32.xlu0 %v494, 68
        %v4440 = vpop.permute.xlu0 %4439
        %4441 = vrot.lane.b32.xlu0 %v496, 68
        %v4442 = vpop.permute.xlu0 %4441
        %v4443 = vsel %vm660, %v4376, 0
        %v4445 = vsel %vm660, %v4378, 0
        %v4447 = vsel %vm660, %v4380, 0
        %v4449 = vsel %vm660, %v4382, 0
        %v4451 = vsel %vm660, %v4384, 0
        %v4453 = vsel %vm660, %v4386, 0
        %v4455 = vsel %vm660, %v4388, 0
        %v4457 = vsel %vm660, %v4390, 0
        %v4459 = vsel %vm660, %v4392, 0
        %v4461 = vsel %vm660, %v4394, 0
        %v4463 = vsel %vm660, %v4396, 0
        %v4465 = vsel %vm660, %v4398, 0
        %v4467 = vsel %vm660, %v4400, 0
        %v4469 = vsel %vm660, %v4402, 0
        %v4471 = vsel %vm660, %v4404, 0
        %v4473 = vsel %vm660, %v4406, 0
        %v4475 = vsel %vm660, %v4408, 0
        %v4477 = vsel %vm660, %v4410, 0
        %v4479 = vsel %vm660, %v4412, 0
        %v4481 = vsel %vm660, %v4414, 0
        %v4483 = vsel %vm660, %v4416, 0
        %v4485 = vsel %vm660, %v4418, 0
        %v4487 = vsel %vm660, %v4420, 0
        %v4489 = vsel %vm660, %v4422, 0
        %v4491 = vsel %vm660, %v4424, 0
        %v4493 = vsel %vm660, %v4426, 0
        %v4495 = vsel %vm660, %v4428, 0
        %v4497 = vsel %vm660, %v4430, 0
        %v4499 = vsel %vm660, %v4432, 0
        %v4501 = vsel %vm660, %v4434, 0
        %v4503 = vsel %vm660, %v4436, 0
        %v4505 = vsel %vm660, %v4438, 0
        %v4507 = vsel %vm660, %v4440, 0
        %v4509 = vsel %vm660, %v4442, 0
        %4511 = vmatprep.subr.mxu0 0.0
        %4512 = vmatpush1.xpose.msra.mxu0 %v4475
        %4513 = vmatprep.subr.mxu0 0.0
        %4514 = vmatpush1.xpose.msra.mxu0 %v4473
        %4515 = vmatprep.subr.mxu0 0.0
        %4516 = vmatpush1.xpose.msra.mxu0 %v4471
        %4517 = vmatprep.subr.mxu0 0.0
        %4518 = vmatpush1.xpose.msra.mxu0 %v4469
        %4519 = vmatprep.subr.mxu0 0.0
        %4520 = vmatpush1.xpose.msra.mxu0 %v4467
        %4521 = vmatprep.subr.mxu0 0.0
        %4522 = vmatpush1.xpose.msra.mxu0 %v4465
        %4523 = vmatprep.subr.mxu0 0.0
        %4524 = vmatpush1.xpose.msra.mxu0 %v4463
        %4525 = vmatprep.subr.mxu0 0.0
        %4526 = vmatpush1.xpose.msra.mxu0 %v4461
        %4527 = vmatprep.subr.mxu0 0.0
        %4528 = vmatpush1.xpose.msra.mxu0 %v4459
        %4529 = vmatprep.subr.mxu0 0.0
        %4530 = vmatpush1.xpose.msra.mxu0 %v4457
        %4531 = vmatprep.subr.mxu0 0.0
        %4532 = vmatpush1.xpose.msra.mxu0 %v4455
        %4533 = vmatprep.subr.mxu0 0.0
        %4534 = vmatpush1.xpose.msra.mxu0 %v4453
        %4535 = vmatprep.subr.mxu0 0.0
        %4536 = vmatpush1.xpose.msra.mxu0 %v4451
        %4537 = vmatprep.subr.mxu0 0.0
        %4538 = vmatpush1.xpose.msra.mxu0 %v4449
        %4539 = vmatprep.subr.mxu0 0.0
        %4540 = vmatpush1.xpose.msra.mxu0 %v4447
        %4541 = vmatprep.subr.mxu0 0.0
        %4542 = vmatpush1.xpose.msra.mxu0 %v4445
        %4543 = vmatprep.subr.mxu0 0.0
        %4544 = vmatpush2.xpose.msra.mxu0 %v4507
        %4545 = vmatprep.subr.mxu0 0.0
        %4546 = vmatpush2.xpose.msra.mxu0 %v4505
        %4547 = vmatprep.subr.mxu0 0.0
        %4548 = vmatpush2.xpose.msra.mxu0 %v4503
        %4549 = vmatprep.subr.mxu0 0.0
        %4550 = vmatpush2.xpose.msra.mxu0 %v4501
        %4551 = vmatprep.subr.mxu0 0.0
        %4552 = vmatpush2.xpose.msra.mxu0 %v4499
        %4553 = vmatprep.subr.mxu0 0.0
        %4554 = vmatpush2.xpose.msra.mxu0 %v4497
        %4555 = vmatprep.subr.mxu0 0.0
        %4556 = vmatpush2.xpose.msra.mxu0 %v4495
        %4557 = vmatprep.subr.mxu0 0.0
        %4558 = vmatpush2.xpose.msra.mxu0 %v4493
        %4559 = vmatprep.subr.mxu0 0.0
        %4560 = vmatpush2.xpose.msra.mxu0 %v4491
        %4561 = vmatprep.subr.mxu0 0.0
        %4562 = vmatpush2.xpose.msra.mxu0 %v4489
        %4563 = vmatprep.subr.mxu0 0.0
        %4564 = vmatpush2.xpose.msra.mxu0 %v4487
        %4565 = vmatprep.subr.mxu0 0.0
        %4566 = vmatpush2.xpose.msra.mxu0 %v4485
        %4567 = vmatprep.subr.mxu0 0.0
        %4568 = vmatpush2.xpose.msra.mxu0 %v4483
        %4569 = vmatprep.subr.mxu0 0.0
        %4570 = vmatpush2.xpose.msra.mxu0 %v4481
        %4571 = vmatprep.subr.mxu0 0.0
        %4572 = vmatpush2.xpose.msra.mxu0 %v4479
        %4573 = vmatprep.subr.mxu0 0.0
        %4574 = vmatpush2.xpose.msra.mxu0 %v4477
        %4575 = vmatprep.mubr.f32.mxu0 0.0
        %4576 = vmatmul.mubr.f32.gmra.mxu0 %v4443
        %v4577 = vpop.f32.mrf.mxu0
        %v4578 = vadd.f32 %v398, %v4577
        %v4579 = vpop.f32.mrf.mxu0
        %v4580 = vadd.f32 %v399, %v4579
        %4581 = vdwg.mxu0
        %4582 = vmatprep.subr.mxu0 0.0
        %4583 = vmatpush1.xpose.msra.mxu0 0.0
        %4584 = vmatprep.subr.mxu0 0.0
        %4585 = vmatpush1.xpose.msra.mxu0 0.0
        %4586 = vmatprep.subr.mxu0 0.0
        %4587 = vmatpush1.xpose.msra.mxu0 0.0
        %4588 = vmatprep.subr.mxu0 0.0
        %4589 = vmatpush1.xpose.msra.mxu0 0.0
        %4590 = vmatprep.subr.mxu0 0.0
        %4591 = vmatpush1.xpose.msra.mxu0 0.0
        %4592 = vmatprep.subr.mxu0 0.0
        %4593 = vmatpush1.xpose.msra.mxu0 0.0
        %4594 = vmatprep.subr.mxu0 0.0
        %4595 = vmatpush1.xpose.msra.mxu0 0.0
        %4596 = vmatprep.subr.mxu0 0.0
        %4597 = vmatpush1.xpose.msra.mxu0 0.0
        %4598 = vmatprep.subr.mxu0 0.0
        %4599 = vmatpush1.xpose.msra.mxu0 0.0
        %4600 = vmatprep.subr.mxu0 0.0
        %4601 = vmatpush1.xpose.msra.mxu0 0.0
        %4602 = vmatprep.subr.mxu0 0.0
        %4603 = vmatpush1.xpose.msra.mxu0 0.0
        %4604 = vmatprep.subr.mxu0 0.0
        %4605 = vmatpush1.xpose.msra.mxu0 0.0
        %4606 = vmatprep.subr.mxu0 0.0
        %4607 = vmatpush1.xpose.msra.mxu0 0.0
        %4608 = vmatprep.subr.mxu0 0.0
        %4609 = vmatpush1.xpose.msra.mxu0 0.0
        %4610 = vmatprep.subr.mxu0 0.0
        %4611 = vmatpush1.xpose.msra.mxu0 0.0
        %4612 = vmatprep.subr.mxu0 0.0
        %4613 = vmatpush1.xpose.msra.mxu0 %v4509
        %4614 = vmatprep.subr.mxu0 0.0
        %4615 = vmatpush2.xpose.msra.mxu0 0.0
        %4616 = vmatprep.subr.mxu0 0.0
        %4617 = vmatpush2.xpose.msra.mxu0 0.0
        %4618 = vmatprep.subr.mxu0 0.0
        %4619 = vmatpush2.xpose.msra.mxu0 0.0
        %4620 = vmatprep.subr.mxu0 0.0
        %4621 = vmatpush2.xpose.msra.mxu0 0.0
        %4622 = vmatprep.subr.mxu0 0.0
        %4623 = vmatpush2.xpose.msra.mxu0 0.0
        %4624 = vmatprep.subr.mxu0 0.0
        %4625 = vmatpush2.xpose.msra.mxu0 0.0
        %4626 = vmatprep.subr.mxu0 0.0
        %4627 = vmatpush2.xpose.msra.mxu0 0.0
        %4628 = vmatprep.subr.mxu0 0.0
        %4629 = vmatpush2.xpose.msra.mxu0 0.0
        %4630 = vmatprep.subr.mxu0 0.0
        %4631 = vmatpush2.xpose.msra.mxu0 0.0
        %4632 = vmatprep.subr.mxu0 0.0
        %4633 = vmatpush2.xpose.msra.mxu0 0.0
        %4634 = vmatprep.subr.mxu0 0.0
        %4635 = vmatpush2.xpose.msra.mxu0 0.0
        %4636 = vmatprep.subr.mxu0 0.0
        %4637 = vmatpush2.xpose.msra.mxu0 0.0
        %4638 = vmatprep.subr.mxu0 0.0
        %4639 = vmatpush2.xpose.msra.mxu0 0.0
        %4640 = vmatprep.subr.mxu0 0.0
        %4641 = vmatpush2.xpose.msra.mxu0 0.0
        %4642 = vmatprep.subr.mxu0 0.0
        %4643 = vmatpush2.xpose.msra.mxu0 0.0
        %4644 = vmatprep.subr.mxu0 0.0
        %4645 = vmatpush2.xpose.msra.mxu0 0.0
        %4646 = vmatprep.mubr.f32.mxu0 0.0
        %4647 = vmatmul.mubr.f32.gmra.mxu0 %v4443
        %v4648 = vpop.f32.mrf.mxu0
        %v4649 = vadd.f32 %v400, %v4648
        %v4650 = vpop.f32.mrf.mxu0
        %4651 = vdwg.mxu0
        %v4652 = vsel %vm871, %v4649, -inf
        %v4653 = vmax.f32 %v4578, %v4580
        %v4654 = vmax.f32 %v4653, %v4652
        %4655 = vmax.xlane.f32.xlu0 %v4654
        %v4656 = vpop.xlane.xlu0 %4655
        %v4657 = vsub.f32 %v4578, %v4656
        %v4658 = vsub.f32 %v4580, %v4656
        %v4659 = vsub.f32 %v4649, %v4656
        %v4660 = vmul.f32 %v4657, 1.442695
        %v4661 = vpow.pop %v4660
        %v4662 = vmul.f32 %v4658, 1.442695
        %v4663 = vpow.pop %v4662
        %v4664 = vmul.f32 %v4659, 1.442695
        %v4665 = vpow.pop %v4664
        %v4666 = vadd.f32 %v4661, %v4663
        %v4667 = vsel %vm871, %v4665, 0.0
        %v4668 = vadd.f32 %v4666, %v4667
        %4669 = vadd.xlane.f32.xlu0 %v4668
        %v4670 = vpop.xlane.xlu0 %4669
        %v4671 = vrcp.pop %v4670
        %4672 = vrot.lane.b32.xlu0 %v323, 36
        %v4673 = vpop.permute.xlu0 %4672
        %4674 = vrot.lane.b32.xlu0 %v530, 36
        %v4675 = vpop.permute.xlu0 %4674
        %4676 = vrot.lane.b32.xlu0 %v532, 36
        %v4677 = vpop.permute.xlu0 %4676
        %4678 = vrot.lane.b32.xlu0 %v534, 36
        %v4679 = vpop.permute.xlu0 %4678
        %4680 = vrot.lane.b32.xlu0 %v536, 36
        %v4681 = vpop.permute.xlu0 %4680
        %4682 = vrot.lane.b32.xlu0 %v538, 36
        %v4683 = vpop.permute.xlu0 %4682
        %4684 = vrot.lane.b32.xlu0 %v540, 36
        %v4685 = vpop.permute.xlu0 %4684
        %4686 = vrot.lane.b32.xlu0 %v542, 36
        %v4687 = vpop.permute.xlu0 %4686
        %4688 = vrot.lane.b32.xlu0 %v544, 36
        %v4689 = vpop.permute.xlu0 %4688
        %4690 = vrot.lane.b32.xlu0 %v546, 36
        %v4691 = vpop.permute.xlu0 %4690
        %4692 = vrot.lane.b32.xlu0 %v548, 36
        %v4693 = vpop.permute.xlu0 %4692
        %4694 = vrot.lane.b32.xlu0 %v550, 36
        %v4695 = vpop.permute.xlu0 %4694
        %4696 = vrot.lane.b32.xlu0 %v552, 36
        %v4697 = vpop.permute.xlu0 %4696
        %4698 = vrot.lane.b32.xlu0 %v554, 36
        %v4699 = vpop.permute.xlu0 %4698
        %4700 = vrot.lane.b32.xlu0 %v556, 36
        %v4701 = vpop.permute.xlu0 %4700
        %4702 = vrot.lane.b32.xlu0 %v558, 36
        %v4703 = vpop.permute.xlu0 %4702
        %4704 = vrot.lane.b32.xlu0 %v560, 36
        %v4705 = vpop.permute.xlu0 %4704
        %4706 = vrot.lane.b32.xlu0 %v562, 36
        %v4707 = vpop.permute.xlu0 %4706
        %4708 = vrot.lane.b32.xlu0 %v564, 36
        %v4709 = vpop.permute.xlu0 %4708
        %4710 = vrot.lane.b32.xlu0 %v566, 36
        %v4711 = vpop.permute.xlu0 %4710
        %4712 = vrot.lane.b32.xlu0 %v568, 36
        %v4713 = vpop.permute.xlu0 %4712
        %4714 = vrot.lane.b32.xlu0 %v570, 36
        %v4715 = vpop.permute.xlu0 %4714
        %4716 = vrot.lane.b32.xlu0 %v572, 36
        %v4717 = vpop.permute.xlu0 %4716
        %4718 = vrot.lane.b32.xlu0 %v574, 36
        %v4719 = vpop.permute.xlu0 %4718
        %4720 = vrot.lane.b32.xlu0 %v576, 36
        %v4721 = vpop.permute.xlu0 %4720
        %4722 = vrot.lane.b32.xlu0 %v578, 36
        %v4723 = vpop.permute.xlu0 %4722
        %4724 = vrot.lane.b32.xlu0 %v580, 36
        %v4725 = vpop.permute.xlu0 %4724
        %4726 = vrot.lane.b32.xlu0 %v582, 36
        %v4727 = vpop.permute.xlu0 %4726
        %4728 = vrot.lane.b32.xlu0 %v584, 36
        %v4729 = vpop.permute.xlu0 %4728
        %4730 = vrot.lane.b32.xlu0 %v586, 36
        %v4731 = vpop.permute.xlu0 %4730
        %4732 = vrot.lane.b32.xlu0 %v588, 36
        %v4733 = vpop.permute.xlu0 %4732
        %4734 = vrot.lane.b32.xlu0 %v590, 36
        %v4735 = vpop.permute.xlu0 %4734
        %4736 = vrot.lane.b32.xlu0 %v592, 36
        %v4737 = vpop.permute.xlu0 %4736
        %v4772 = vsel %vm871, %v4665, 0
        %4774 = vmatprep.subr.mxu0 0.0
        %4775 = vmatpush1.msra.mxu0 %v4703
        %4776 = vmatprep.subr.mxu0 0.0
        %4777 = vmatpush1.msra.mxu0 %v4701
        %4778 = vmatprep.subr.mxu0 0.0
        %4779 = vmatpush1.msra.mxu0 %v4699
        %4780 = vmatprep.subr.mxu0 0.0
        %4781 = vmatpush1.msra.mxu0 %v4697
        %4782 = vmatprep.subr.mxu0 0.0
        %4783 = vmatpush1.msra.mxu0 %v4695
        %4784 = vmatprep.subr.mxu0 0.0
        %4785 = vmatpush1.msra.mxu0 %v4693
        %4786 = vmatprep.subr.mxu0 0.0
        %4787 = vmatpush1.msra.mxu0 %v4691
        %4788 = vmatprep.subr.mxu0 0.0
        %4789 = vmatpush1.msra.mxu0 %v4689
        %4790 = vmatprep.subr.mxu0 0.0
        %4791 = vmatpush1.msra.mxu0 %v4687
        %4792 = vmatprep.subr.mxu0 0.0
        %4793 = vmatpush1.msra.mxu0 %v4685
        %4794 = vmatprep.subr.mxu0 0.0
        %4795 = vmatpush1.msra.mxu0 %v4683
        %4796 = vmatprep.subr.mxu0 0.0
        %4797 = vmatpush1.msra.mxu0 %v4681
        %4798 = vmatprep.subr.mxu0 0.0
        %4799 = vmatpush1.msra.mxu0 %v4679
        %4800 = vmatprep.subr.mxu0 0.0
        %4801 = vmatpush1.msra.mxu0 %v4677
        %4802 = vmatprep.subr.mxu0 0.0
        %4803 = vmatpush1.msra.mxu0 %v4675
        %4804 = vmatprep.subr.mxu0 0.0
        %4805 = vmatpush1.msra.mxu0 %v4673
        %4806 = vmatprep.subr.mxu0 0.0
        %4807 = vmatpush2.msra.mxu0 %v4735
        %4808 = vmatprep.subr.mxu0 0.0
        %4809 = vmatpush2.msra.mxu0 %v4733
        %4810 = vmatprep.subr.mxu0 0.0
        %4811 = vmatpush2.msra.mxu0 %v4731
        %4812 = vmatprep.subr.mxu0 0.0
        %4813 = vmatpush2.msra.mxu0 %v4729
        %4814 = vmatprep.subr.mxu0 0.0
        %4815 = vmatpush2.msra.mxu0 %v4727
        %4816 = vmatprep.subr.mxu0 0.0
        %4817 = vmatpush2.msra.mxu0 %v4725
        %4818 = vmatprep.subr.mxu0 0.0
        %4819 = vmatpush2.msra.mxu0 %v4723
        %4820 = vmatprep.subr.mxu0 0.0
        %4821 = vmatpush2.msra.mxu0 %v4721
        %4822 = vmatprep.subr.mxu0 0.0
        %4823 = vmatpush2.msra.mxu0 %v4719
        %4824 = vmatprep.subr.mxu0 0.0
        %4825 = vmatpush2.msra.mxu0 %v4717
        %4826 = vmatprep.subr.mxu0 0.0
        %4827 = vmatpush2.msra.mxu0 %v4715
        %4828 = vmatprep.subr.mxu0 0.0
        %4829 = vmatpush2.msra.mxu0 %v4713
        %4830 = vmatprep.subr.mxu0 0.0
        %4831 = vmatpush2.msra.mxu0 %v4711
        %4832 = vmatprep.subr.mxu0 0.0
        %4833 = vmatpush2.msra.mxu0 %v4709
        %4834 = vmatprep.subr.mxu0 0.0
        %4835 = vmatpush2.msra.mxu0 %v4707
        %4836 = vmatprep.subr.mxu0 0.0
        %4837 = vmatpush2.msra.mxu0 %v4705
        %4838 = vmatprep.mubr.f32.mxu0 %v4663
        %4839 = vmatmul.mubr.f32.gmra.mxu0 %v4661
        %v4840 = vpop.f32.mrf.mxu0
        %v4841 = vadd.f32 0.0, %v4840
        %v4842 = vpop.f32.mrf.mxu0
        %4843 = vdwg.mxu0
        %4844 = vmatprep.subr.mxu0 0.0
        %4845 = vmatpush1.msra.mxu0 0.0
        %4846 = vmatprep.subr.mxu0 0.0
        %4847 = vmatpush1.msra.mxu0 0.0
        %4848 = vmatprep.subr.mxu0 0.0
        %4849 = vmatpush1.msra.mxu0 0.0
        %4850 = vmatprep.subr.mxu0 0.0
        %4851 = vmatpush1.msra.mxu0 0.0
        %4852 = vmatprep.subr.mxu0 0.0
        %4853 = vmatpush1.msra.mxu0 0.0
        %4854 = vmatprep.subr.mxu0 0.0
        %4855 = vmatpush1.msra.mxu0 0.0
        %4856 = vmatprep.subr.mxu0 0.0
        %4857 = vmatpush1.msra.mxu0 0.0
        %4858 = vmatprep.subr.mxu0 0.0
        %4859 = vmatpush1.msra.mxu0 0.0
        %4860 = vmatprep.subr.mxu0 0.0
        %4861 = vmatpush1.msra.mxu0 0.0
        %4862 = vmatprep.subr.mxu0 0.0
        %4863 = vmatpush1.msra.mxu0 0.0
        %4864 = vmatprep.subr.mxu0 0.0
        %4865 = vmatpush1.msra.mxu0 0.0
        %4866 = vmatprep.subr.mxu0 0.0
        %4867 = vmatpush1.msra.mxu0 0.0
        %4868 = vmatprep.subr.mxu0 0.0
        %4869 = vmatpush1.msra.mxu0 0.0
        %4870 = vmatprep.subr.mxu0 0.0
        %4871 = vmatpush1.msra.mxu0 0.0
        %4872 = vmatprep.subr.mxu0 0.0
        %4873 = vmatpush1.msra.mxu0 0.0
        %4874 = vmatprep.subr.mxu0 0.0
        %4875 = vmatpush1.msra.mxu0 %v4737
        %4876 = vmatprep.subr.mxu0 0.0
        %4877 = vmatpush2.msra.mxu0 0.0
        %4878 = vmatprep.subr.mxu0 0.0
        %4879 = vmatpush2.msra.mxu0 0.0
        %4880 = vmatprep.subr.mxu0 0.0
        %4881 = vmatpush2.msra.mxu0 0.0
        %4882 = vmatprep.subr.mxu0 0.0
        %4883 = vmatpush2.msra.mxu0 0.0
        %4884 = vmatprep.subr.mxu0 0.0
        %4885 = vmatpush2.msra.mxu0 0.0
        %4886 = vmatprep.subr.mxu0 0.0
        %4887 = vmatpush2.msra.mxu0 0.0
        %4888 = vmatprep.subr.mxu0 0.0
        %4889 = vmatpush2.msra.mxu0 0.0
        %4890 = vmatprep.subr.mxu0 0.0
        %4891 = vmatpush2.msra.mxu0 0.0
        %4892 = vmatprep.subr.mxu0 0.0
        %4893 = vmatpush2.msra.mxu0 0.0
        %4894 = vmatprep.subr.mxu0 0.0
        %4895 = vmatpush2.msra.mxu0 0.0
        %4896 = vmatprep.subr.mxu0 0.0
        %4897 = vmatpush2.msra.mxu0 0.0
        %4898 = vmatprep.subr.mxu0 0.0
        %4899 = vmatpush2.msra.mxu0 0.0
        %4900 = vmatprep.subr.mxu0 0.0
        %4901 = vmatpush2.msra.mxu0 0.0
        %4902 = vmatprep.subr.mxu0 0.0
        %4903 = vmatpush2.msra.mxu0 0.0
        %4904 = vmatprep.subr.mxu0 0.0
        %4905 = vmatpush2.msra.mxu0 0.0
        %4906 = vmatprep.subr.mxu0 0.0
        %4907 = vmatpush2.msra.mxu0 0.0
        %4908 = vmatprep.mubr.f32.mxu0 0.0
        %4909 = vmatmul.mubr.f32.gmra.mxu0 %v4772
        %v4910 = vpop.f32.mrf.mxu0
        %v4911 = vadd.f32 %v4841, %v4910
        %v4912 = vpop.f32.mrf.mxu0
        %4913 = vdwg.mxu0
        %v4914 = vmul.f32 %v4911, %v4671
        %4916 = vrot.lane.b32.xlu0 %v1674, 4
        %v4917 = vpop.permute.xlu0 %4916
        %4920 = vrot.lane.b32.xlu0 %v2214, 8
        %v4921 = vpop.permute.xlu0 %4920
        %4924 = vrot.lane.b32.xlu0 %v2754, 12
        %v4925 = vpop.permute.xlu0 %4924
        %4928 = vrot.lane.b32.xlu0 %v3294, 16
        %v4929 = vpop.permute.xlu0 %4928
        %4932 = vrot.lane.b32.xlu0 %v3834, 20
        %v4933 = vpop.permute.xlu0 %4932
        %4936 = vrot.lane.b32.xlu0 %v4374, 24
        %v4937 = vpop.permute.xlu0 %4936
        %4940 = vrot.lane.b32.xlu0 %v4914, 28
        %v4941 = vpop.permute.xlu0 %4940
        %v4943 = vsel %vm660, %v1134, %v4917
        %v4944 = vsel %vm871, %v4943, %v4921
        %vm4945 = vcmask 97280
        %v4946 = vsel %vm4945, %v4944, %v4925
        %vm4947 = vcmask 130048
        %v4948 = vsel %vm4947, %v4946, %v4929
        %vm4949 = vcmask 162816
        %v4950 = vsel %vm4949, %v4948, %v4933
        %vm4951 = vcmask 195584
        %v4952 = vsel %vm4951, %v4950, %v4937
        %vm4953 = vcmask 228352
        %v4954 = vsel %vm4953, %v4952, %v4941
        %v4955 = vld [vmem:[%s2] sm:$0xff]
        %v4956 = vld [vmem:[%s2 + $0x8] sm:$0xff]
        %v4957 = vld [vmem:[%s2 + $0x10] sm:$0xff]
        %v4958 = vld [vmem:[%s2 + $0x18] sm:$0xff]
        %v4959 = vld [vmem:[%s3] sm:$0x1]
        %v4961 = vlaneseq
        %v4962 = vshrl.u32 %v4961, 7
        %v4963 = vsub.s32 0, %v4962
        %v4964 = vrot.slane %v4959, %v4963
        %v4967 = vsel %vm252, %v4954, 0
        %4969 = vmatprep.subr.mxu0 0.0
        %4970 = vmatpush1.msra.mxu0 0.0
        %4971 = vmatprep.subr.mxu0 0.0
        %4972 = vmatpush1.msra.mxu0 0.0
        %4973 = vmatprep.subr.mxu0 0.0
        %4974 = vmatpush1.msra.mxu0 0.0
        %4975 = vmatprep.subr.mxu0 0.0
        %4976 = vmatpush1.msra.mxu0 0.0
        %4977 = vmatprep.subr.mxu0 0.0
        %4978 = vmatpush1.msra.mxu0 0.0
        %4979 = vmatprep.subr.mxu0 0.0
        %4980 = vmatpush1.msra.mxu0 0.0
        %4981 = vmatprep.subr.mxu0 0.0
        %4982 = vmatpush1.msra.mxu0 0.0
        %4983 = vmatprep.subr.mxu0 0.0
        %4984 = vmatpush1.msra.mxu0 0.0
        %4985 = vmatprep.subr.mxu0 0.0
        %4986 = vmatpush1.msra.mxu0 0.0
        %4987 = vmatprep.subr.mxu0 0.0
        %4988 = vmatpush1.msra.mxu0 0.0
        %4989 = vmatprep.subr.mxu0 0.0
        %4990 = vmatpush1.msra.mxu0 0.0
        %4991 = vmatprep.subr.mxu0 0.0
        %4992 = vmatpush1.msra.mxu0 0.0
        %4993 = vmatprep.subr.mxu0 0.0
        %4994 = vmatpush1.msra.mxu0 %v4958
        %4995 = vmatprep.subr.mxu0 0.0
        %4996 = vmatpush1.msra.mxu0 %v4957
        %4997 = vmatprep.subr.mxu0 0.0
        %4998 = vmatpush1.msra.mxu0 %v4956
        %4999 = vmatprep.subr.mxu0 0.0
        %5000 = vmatpush1.msra.mxu0 %v4955
        %5001 = vmatprep.subr.mxu0 0.0
        %5002 = vmatpush2.msra.mxu0 0.0
        %5003 = vmatprep.subr.mxu0 0.0
        %5004 = vmatpush2.msra.mxu0 0.0
        %5005 = vmatprep.subr.mxu0 0.0
        %5006 = vmatpush2.msra.mxu0 0.0
        %5007 = vmatprep.subr.mxu0 0.0
        %5008 = vmatpush2.msra.mxu0 0.0
        %5009 = vmatprep.subr.mxu0 0.0
        %5010 = vmatpush2.msra.mxu0 0.0
        %5011 = vmatprep.subr.mxu0 0.0
        %5012 = vmatpush2.msra.mxu0 0.0
        %5013 = vmatprep.subr.mxu0 0.0
        %5014 = vmatpush2.msra.mxu0 0.0
        %5015 = vmatprep.subr.mxu0 0.0
        %5016 = vmatpush2.msra.mxu0 0.0
        %5017 = vmatprep.subr.mxu0 0.0
        %5018 = vmatpush2.msra.mxu0 0.0
        %5019 = vmatprep.subr.mxu0 0.0
        %5020 = vmatpush2.msra.mxu0 0.0
        %5021 = vmatprep.subr.mxu0 0.0
        %5022 = vmatpush2.msra.mxu0 0.0
        %5023 = vmatprep.subr.mxu0 0.0
        %5024 = vmatpush2.msra.mxu0 0.0
        %5025 = vmatprep.subr.mxu0 0.0
        %5026 = vmatpush2.msra.mxu0 0.0
        %5027 = vmatprep.subr.mxu0 0.0
        %5028 = vmatpush2.msra.mxu0 0.0
        %5029 = vmatprep.subr.mxu0 0.0
        %5030 = vmatpush2.msra.mxu0 0.0
        %5031 = vmatprep.subr.mxu0 0.0
        %5032 = vmatpush2.msra.mxu0 0.0
        %5033 = vmatprep.mubr.f32.mxu0 0.0
        %5034 = vmatmul.mubr.f32.gmra.mxu0 %v4967
        %v5035 = vpop.f32.mrf.mxu0
        %v5036 = vadd.f32 %v4964, %v5035
        %v5037 = vpop.f32.mrf.mxu0
        %5038 = vdwg.mxu0
        %5039 = vst.msk [vmem:[%s242] sm:$0xff] %vm252, %v5036
        %s5040 = sand.u32 %s159, 1
        %s5041 = scalar_lea.sflag [#allocation3], %s5040
        %s5042 = sand.u32 %s159, 1
        %s5043 = smul.addr %s5042, 8
        %s5044 = scalar_lea.vmem [#allocation2], %s5043
        // Predicated region
        $region45: #{tpu_custom_call.1} parent=43 // pred_check
          %p5045 = pneg %p169
        $region46: #{tpu_custom_call.1} parent=43 // pred_check_branch
          %5047 = sbr.rel (%p5045) target = $region48
        $region47: #{tpu_custom_call.1} parent=43 // pred_region
          %s5049 = ssub.s32 128, 128
          %5050 = vsyncadd %s5041, %s5049
          %s5051 = smul.addr %s20, 128
          %s5052 = scalar_lea.hbm %s6, %s5051
          %s5054 = sshll.u32 %s5044, 4
          %s5055 = int_to_ptr.vmem [resolvable:$true] %s5054
          %5057 = dma.vmem_to_hbm [thread:$0]  %s5055, 128, %s5052, %s5041
        $region48: #{tpu_custom_call.1} parent=43 // pred_fallthru
          _
      $region44: #{tpu_custom_call.1} parent=5 // pred_fallthru
        _
      %p5058 = scmp.le.s32.totalorder 2, %s15
      // Predicated region
      $region49: #{tpu_custom_call.1} parent=5 // pred_check
        %p5059 = pneg %p5058
      $region50: #{tpu_custom_call.1} parent=5 // pred_check_branch
        %5061 = sbr.rel (%p5059) target = $region52
      $region51: #{tpu_custom_call.1} parent=5 // pred_region
        %s5062 = ssub.s32 %s15, 2
        // Predicated region
        $region53: #{tpu_custom_call.1} parent=51 // pred_check
          %p5063 = pneg %p175
        $region54: #{tpu_custom_call.1} parent=51 // pred_check_branch
          %5065 = sbr.rel (%p5063) target = $region56
        $region55: #{tpu_custom_call.1} parent=51 // pred_region
          %s5066 = sand.u32 %s160, 1
          %s5067 = scalar_lea.sflag [#allocation3], %s5066
          %s5068 = sand.u32 %s160, 1
          %s5069 = smul.addr %s5068, 8
          %s5070 = scalar_lea.vmem [#allocation2], %s5069
          %5071 = dma.done %s5067, 128
        $region56: #{tpu_custom_call.1} parent=51 // pred_fallthru
          _
      $region52: #{tpu_custom_call.1} parent=5 // pred_fallthru
        _
    $region6: #{tpu_custom_call.1} parent=1 // loop_footer
      %s19 = sadd.s32 1, %s15
    $region7: #{tpu_custom_call.1} parent=1 // loop_footer_branch
      %14 = sbr.rel target = $region3
    $region8: #{tpu_custom_call.1} parent=1 // loop_exit
      _
    %5072 = vsyncpa [#allocation3], 1
    %s5073 = scalar_lea.sflag [#allocation3], 1
    %5074 = vsyncpa %s5073, 1

</llo_original>
